<compile_context>
chip_gen: v6e
topology: v6e:2x2x1
jax: 0.10.0
libtpu: 0.0.40
codegen_flags: <defaults>
</compile_context>

<pallas_src>
import jax
import jax.numpy as jnp
from jax import lax
from jax.experimental import pallas as pl
from jax.experimental.pallas import tpu as pltpu

CROP = 224
RESIZE = 256
NUM_CLASSES = 10
C = 3
HW = CROP * CROP               # 50176
K = C * HW                     # 150528
TILE_K = 37632                 # 294 * 128; K / TILE_K = 4 grid steps
K_TILES = K // TILE_K
NC_PAD = 16                    # classes padded to one bf16 sublane tile


def predictor_kernel(x_ref, wT_ref, b_ref, o_ref):
    kc = pl.program_id(0)

    @pl.when(kc == 0)
    def _init():
        o_ref[...] = jnp.zeros_like(o_ref)

    # o[b, n] += sum_k x[b, k] * W'^T[n, k]   (Normalize already folded into W')
    o_ref[...] += lax.dot_general(
        x_ref[...], wT_ref[...],
        dimension_numbers=(((1,), (1,)), ((), ())),
        preferred_element_type=jnp.float32)

    @pl.when(kc == pl.num_programs(0) - 1)
    def _finalize():
        # Bias (padded class slots carry -1e30 -> exp underflows to 0), softmax.
        logits = o_ref[...] + b_ref[...]
        m = jnp.max(logits, axis=-1, keepdims=True)
        e = jnp.exp(logits - m)
        o_ref[...] = e * pl.reciprocal(jnp.sum(e, axis=-1, keepdims=True),
                                       approx=False)


@jax.jit
def _predictor_core(x_flat, wT, b_pad):
    bsz = x_flat.shape[0]
    return pl.pallas_call(
        predictor_kernel,
        out_shape=jax.ShapeDtypeStruct((bsz, NC_PAD), jnp.float32),
        grid_spec=pltpu.PrefetchScalarGridSpec(
            num_scalar_prefetch=0,
            grid=(K_TILES,),
            in_specs=[
                pl.BlockSpec((bsz, TILE_K), lambda kc: (0, kc)),      # x (bf16)
                pl.BlockSpec((NC_PAD, TILE_K), lambda kc: (0, kc)),   # W'^T (bf16)
                pl.BlockSpec((1, NC_PAD), lambda kc: (0, 0)),         # bias' (f32)
            ],
            # Constant out index_map + single "arbitrary" reduction axis keeps
            # the output block VMEM-resident for the whole grid (accumulator),
            # with a single HBM writeback at the end.
            out_specs=pl.BlockSpec((bsz, NC_PAD), lambda kc: (0, 0)),
        ),
        compiler_params=pltpu.CompilerParams(
            dimension_semantics=("arbitrary",)),
    )(x_flat, wT, b_pad)


# ----- plain-JAX glue: shape fixup, resize, center-crop -----------------------

def _resize_shorter_edge(x, size):
    # Matches torchvision T.Resize([size]) shape semantics (shorter edge -> size,
    # longer edge = int(size * long / short), truncated like torchvision).
    # TODO(synk): torchvision defaults to antialiased bilinear on tensors;
    # jax.image.resize here is plain bilinear, so interpolated values differ
    # slightly from torch (and uint8 inputs are converted to float before the
    # resize instead of after, skipping torchvision's intermediate rounding).
    b, c, h, w = x.shape
    if w <= h:
        new_w, new_h = size, int(size * h / w)
    else:
        new_h, new_w = size, int(size * w / h)
    return jax.image.resize(x, (b, c, new_h, new_w), method="bilinear")


def _center_crop(x, size):
    b, c, h, w = x.shape
    top = (h - size) // 2
    left = (w - size) // 2
    return x[:, :, top:top + size, left:left + size]


def predictor_forward(x, params):
    wT, b_pad = params
    if x.ndim == 3:            # CHW -> 1CHW
        x = x[None]
    elif x.ndim == 5:          # B1CHW -> BCHW
        x = jnp.squeeze(x, axis=1)
    # T.ConvertImageDtype(torch.float): uint8 images are scaled by 1/255.
    if x.dtype == jnp.uint8:
        x = x.astype(jnp.float32) / 255.0
    else:
        x = x.astype(jnp.float32)
    x = _resize_shorter_edge(x, RESIZE)
    x = _center_crop(x, CROP)
    b = x.shape[0]
    # Channel-major flatten (NCHW -> (B, C*H*W)); bf16 for the MXU fast path.
    # XLA fuses this cast into the crop/flatten copy, so x HBM traffic is bf16.
    x_flat = x.reshape(b, K).astype(jnp.bfloat16)
    out = _predictor_core(x_flat, wT, b_pad)
    return out[:, :NUM_CLASSES]


def init_params(key):
    kw, kb = jax.random.split(key)
    w = jax.random.normal(kw, (K, NUM_CLASSES), jnp.float32) * 0.01
    bias = jax.random.normal(kb, (NUM_CLASSES,), jnp.float32) * 0.01
    mean = jnp.array([0.485, 0.456, 0.406], jnp.float32)
    std = jnp.array([0.229, 0.224, 0.225], jnp.float32)
    inv_std = 1.0 / std

    # Per-k channel factors (channel-major flatten: k = c*HW + hw).
    mean_k = jnp.repeat(mean, HW)          # (K,)
    invstd_k = jnp.repeat(inv_std, HW)     # (K,)

    # Fold Normalize into the linear layer (exact algebraic fold, done in f32):
    #   ((x_k - m_k) * is_k) @ W = x_k @ (is_k * W) - sum_k m_k * is_k * W[k,:]
    w_fold = w * invstd_k[:, None]                                     # (K, NC)
    b_fold = bias - jnp.sum((mean_k * invstd_k)[:, None] * w, axis=0)  # (NC,)

    # Transposed, class-padded weights in bf16: (NC_PAD, K).  Padded class rows
    # stay exactly zero so their logits remain at the -1e30 padded bias.
    wT = jnp.zeros((NC_PAD, K), jnp.float32).at[:NUM_CLASSES, :].set(w_fold.T)
    wT = wT.astype(jnp.bfloat16)
    b_pad = jnp.full((1, NC_PAD), -1e30, jnp.float32).at[0, :NUM_CLASSES].set(b_fold)
    return wT, b_pad


if __name__ == "__main__":
    key = jax.random.PRNGKey(0)
    kx, kp = jax.random.split(key)
    # Small float image batch in [0, 1], NCHW.
    x = jax.random.uniform(kx, (2, 3, 64, 48), jnp.float32)
    params = init_params(kp)

    probs = jax.block_until_ready(predictor_forward(x, params))

    assert probs.shape == (2, NUM_CLASSES)
    assert bool(jnp.all(jnp.isfinite(probs)))
    assert bool(jnp.allclose(jnp.sum(probs, axis=1), 1.0, atol=1e-4))
    print("KERNEL_OK")
</pallas_src>

<mosaic_0001>
module attributes {stable_mosaic.version = 11 : i64} {
  func.func @predictor_kernel(%arg0: i32, %arg1: memref<2x37632xbf16, #tpu.memory_space<vmem>>, %arg2: memref<16x37632xbf16, #tpu.memory_space<vmem>>, %arg3: memref<1x16xf32, #tpu.memory_space<vmem>>, %arg4: memref<2x16xf32, #tpu.memory_space<vmem>>) attributes {dimension_semantics = [#tpu.dimension_semantics<arbitrary>], iteration_bounds = array<i64: 4>, scalar_prefetch = 0 : i64, scratch_operands = 0 : i64, tpu.core_type = #tpu.core_type<tc>, window_params = [{transform_indices = @transform_0, window_bounds = array<i64: 2, 37632>}, {transform_indices = @transform_1, window_bounds = array<i64: 16, 37632>}, {pipeline_mode = #tpu.pipeline_mode<synchronous>, transform_indices = @transform_2, window_bounds = array<i64: 1, 16>}, {pipeline_mode = #tpu.pipeline_mode<synchronous>, transform_indices = @transform_3, window_bounds = array<i64: 2, 16>}]} {
    %c0_i32 = arith.constant 0 : i32
    %0 = arith.cmpi eq, %arg0, %c0_i32 : i32
    %1 = arith.extui %0 : i1 to i32
    %c0_i32_0 = arith.constant 0 : i32
    %2 = arith.cmpi ne, %1, %c0_i32_0 : i32
    scf.if %2 {
      %cst_9 = arith.constant 0.000000e+00 : f32
      %12 = vector.broadcast %cst_9 : f32 to vector<2x16xf32>
      %c0_10 = arith.constant 0 : index
      %c0_11 = arith.constant 0 : index
      %13 = vector.load %arg4[%c0_10, %c0_11] : memref<2x16xf32, #tpu.memory_space<vmem>>, vector<2x16xf32>
      tpu.vector_store %arg4[%c0_10, %c0_11], %12 {strides = array<i32>} : memref<2x16xf32, #tpu.memory_space<vmem>>, vector<2x16xf32>,
    } else {
    }
    %c0 = arith.constant 0 : index
    %c0_1 = arith.constant 0 : index
    %3 = vector.load %arg4[%c0, %c0_1] : memref<2x16xf32, #tpu.memory_space<vmem>>, vector<2x16xf32>
    %c0_2 = arith.constant 0 : index
    %c0_3 = arith.constant 0 : index
    %4 = vector.load %arg1[%c0_2, %c0_3] : memref<2x37632xbf16, #tpu.memory_space<vmem>>, vector<2x37632xbf16>
    %c0_4 = arith.constant 0 : index
    %c0_5 = arith.constant 0 : index
    %5 = vector.load %arg2[%c0_4, %c0_5] : memref<16x37632xbf16, #tpu.memory_space<vmem>>, vector<16x37632xbf16>
    %cst = arith.constant dense<0.000000e+00> : vector<2x16xf32>
    %6 = tpu.matmul %4, %5, %cst {dimension_numbers = #tpu.dot_dimension_numbers<[1], [1], [0], [0], [0, 0, 1, 0], [], []>} : vector<2x37632xbf16>, vector<16x37632xbf16>, vector<2x16xf32> -> vector<2x16xf32>
    %7 = arith.addf %3, %6 : vector<2x16xf32>
    %c0_6 = arith.constant 0 : index
    %c0_7 = arith.constant 0 : index
    %8 = vector.load %arg4[%c0_6, %c0_7] : memref<2x16xf32, #tpu.memory_space<vmem>>, vector<2x16xf32>
    tpu.vector_store %arg4[%c0_6, %c0_7], %7 {strides = array<i32>} : memref<2x16xf32, #tpu.memory_space<vmem>>, vector<2x16xf32>,
    %c3_i32 = arith.constant 3 : i32
    %9 = arith.cmpi eq, %arg0, %c3_i32 : i32
    %10 = arith.extui %9 : i1 to i32
    %c0_i32_8 = arith.constant 0 : i32
    %11 = arith.cmpi ne, %10, %c0_i32_8 : i32
    scf.if %11 {
      %c0_9 = arith.constant 0 : index
      %c0_10 = arith.constant 0 : index
      %12 = vector.load %arg4[%c0_9, %c0_10] : memref<2x16xf32, #tpu.memory_space<vmem>>, vector<2x16xf32>
      %c0_11 = arith.constant 0 : index
      %c0_12 = arith.constant 0 : index
      %13 = vector.load %arg3[%c0_11, %c0_12] : memref<1x16xf32, #tpu.memory_space<vmem>>, vector<1x16xf32>
      %14 = vector.broadcast %13 : vector<1x16xf32> to vector<2x16xf32>
      %15 = arith.addf %12, %14 : vector<2x16xf32>
      %cst_13 = arith.constant dense<0xFF800000> : vector<2xf32>
      %16 = vector.multi_reduction <maximumf>, %15, %cst_13 [1] : vector<2x16xf32> to vector<2xf32>
      %17 = vector.shape_cast %16 : vector<2xf32> to vector<2x1xf32>
      %18 = vector.broadcast %17 : vector<2x1xf32> to vector<2x16xf32>
      %19 = arith.subf %15, %18 : vector<2x16xf32>
      %20 = math.exp %19 : vector<2x16xf32>
      %cst_14 = arith.constant dense<0.000000e+00> : vector<2xf32>
      %21 = vector.multi_reduction <add>, %20, %cst_14 [1] : vector<2x16xf32> to vector<2xf32>
      %22 = vector.shape_cast %21 : vector<2xf32> to vector<2x1xf32>
      %23 = tpu.reciprocal %22 : vector<2x1xf32> -> vector<2x1xf32>
      %24 = vector.broadcast %23 : vector<2x1xf32> to vector<2x16xf32>
      %25 = arith.mulf %20, %24 : vector<2x16xf32>
      %c0_15 = arith.constant 0 : index
      %c0_16 = arith.constant 0 : index
      %26 = vector.load %arg4[%c0_15, %c0_16] : memref<2x16xf32, #tpu.memory_space<vmem>>, vector<2x16xf32>
      tpu.vector_store %arg4[%c0_15, %c0_16], %25 {strides = array<i32>} : memref<2x16xf32, #tpu.memory_space<vmem>>, vector<2x16xf32>,
    } else {
    }
    return
  }
  func.func @transform_0(%arg0: i32) -> (i32, i32) {
    %c0_i32 = arith.constant 0 : i32
    %c0_i32_0 = arith.constant 0 : i32
    return %c0_i32, %arg0 : i32, i32
  }
  func.func @transform_1(%arg0: i32) -> (i32, i32) {
    %c0_i32 = arith.constant 0 : i32
    %c0_i32_0 = arith.constant 0 : i32
    return %c0_i32, %arg0 : i32, i32
  }
  func.func @transform_2(%arg0: i32) -> (i32, i32) {
    %c0_i32 = arith.constant 0 : i32
    %c0_i32_0 = arith.constant 0 : i32
    %c0_i32_1 = arith.constant 0 : i32
    return %c0_i32, %c0_i32_0 : i32, i32
  }
  func.func @transform_3(%arg0: i32) -> (i32, i32) {
    %c0_i32 = arith.constant 0 : i32
    %c0_i32_0 = arith.constant 0 : i32
    %c0_i32_1 = arith.constant 0 : i32
    return %c0_i32, %c0_i32_0 : i32, i32
  }
}

</mosaic_0001>

<llo_original>
// kernel: _predictor_core.1
$region0: #{_predictor_core.1}
  #allocation0 [shape = 'u32[]', space=smem, size = 0x4, offset = 0x4, fixed_abs, tag = 'smem constant byte address 0x4 - core index']
  #allocation1 [shape = 'u32[144,128]{1,0:T(1,128)}', space=vmem, size = 0x12000, scoped, tag = 'internal scratch']
  %s0 = inlined_call_operand.hbm [shape: bf16[2,150528], index: 0, kind: input, shape index: {}]
  %s1 = inlined_call_operand.hbm [shape: bf16[16,150528], index: 1, kind: input, shape index: {}]
  %s2 = inlined_call_operand.hbm [shape: f32[1,16], index: 2, kind: input, shape index: {}]
  %s3 = inlined_call_operand.hbm [shape: f32[2,16], index: 3, kind: output, shape index: {}]
  %s4 = sld [smem:[#allocation0]]
  $region65: #{_predictor_core.1} parent=0
    _
  %s6 = ssub.s32 1, %s4
  %s7 = scalar_select 0, %s6, %s4
  $region1: #{_predictor_core.1} parent=0
    #allocation2 [shape = 'u8[301056]{0}', space=vmem, size = 0x49800, scoped, tag = 'input window, operand 0']
    #allocation3 [shape = 's32[2]{0}', space=sflag, size = 0x8, scoped, tag = 'scoped memory for _predictor_core.1']
    #allocation4 [shape = 's32[2]{0}', space=sflag, size = 0x8, scoped, tag = 'scoped memory for _predictor_core.1']
    #allocation5 [shape = 'u8[2408448]{0}', space=vmem, size = 0x24c000, scoped, tag = 'input window, operand 1']
    #allocation6 [shape = 's32[2]{0}', space=sflag, size = 0x8, scoped, tag = 'scoped memory for _predictor_core.1']
    #allocation7 [shape = 'u8[512]{0}', space=vmem, size = 0x400, scoped, tag = 'input window, operand 2, single buffered']
    #allocation8 [shape = 'u8[1024]{0}', space=vmem, size = 0x400, scoped, tag = 'output window, operand 0, single buffered']
    %8 = vsyncpa [#allocation3], 0
    %s9 = scalar_lea.sflag [#allocation3], 1
    %10 = vsyncpa %s9, 0
    %11 = vsyncpa [#allocation6], 0
    %s12 = scalar_lea.sflag [#allocation6], 1
    %13 = vsyncpa %s12, 0
    %14 = vsyncpa [#allocation4], 0
    loop: start=0, step=1, limit=6
    $region2: #{_predictor_core.1} parent=1 // loop_pre_header
      _
    $region3: #{_predictor_core.1} parent=1 // loop_header
      %s16 = sphi 0, %s20
      %p17 = scmp.ge.s32.totalorder %s16, 6
      %s26 = sphi 0, %s28
      %s29 = sphi 0, %s26
      %s30 = sphi 0, %s29
      %s46 = sphi 0, %s30
      %s52 = sphi 0, %s54
      %s55 = sphi 0, %s52
      %s56 = sphi 0, %s55
      %s72 = sphi 0, %s56
      %s76 = sphi 0, %s76
      %s78 = sphi 0, %s76
      %s79 = sphi 0, %s78
      %s93 = sphi 0, %s79
      %s97 = sphi 0, %s97
      %s99 = sphi 0, %s97
      %s100 = sphi 0, %s99
      %s114 = sphi 0, %s100
    $region4: #{_predictor_core.1} parent=1 // loop_header_branch
      %19 = sbr.rel (%p17) target = $region8
    $region5: #{_predictor_core.1} parent=1 // loop_body
      %s21 = ssub.s32 %s16, 1
      %s22 = ssub.s32 %s16, 2
      %s23 = sadd.s32 %s16, 1
      %s24 = ssub.s32 %s16, %s23
      %p25 = scmp.eq.s32.totalorder %s24, 0
      %s27 = sadd.s32 %s26, 1
      %s28 = scalar_select %p25, %s26, %s27
      %p31 = pneg %p25
      %p32 = scmp.eq.s32.totalorder %s16, 3
      %p33 = por %p31, %p32
      %p34 = scmp.ne.s32.totalorder %s26, %s29
      %p35 = scmp.eq.s32.totalorder %s16, 0
      %p36 = por %p34, %p35
      %p37 = scmp.ne.s32.totalorder %s26, %s29
      %p38 = scmp.eq.s32.totalorder %s21, 3
      %p39 = por %p37, %p38
      %p40 = scmp.ne.s32.totalorder %s29, %s30
      %p41 = scmp.eq.s32.totalorder %s21, 0
      %p42 = por %p40, %p41
      %p43 = scmp.ne.s32.totalorder %s29, %s30
      %p44 = scmp.eq.s32.totalorder %s22, 3
      %p45 = por %p43, %p44
      %p47 = scmp.ne.s32.totalorder %s30, %s46
      %p48 = scmp.eq.s32.totalorder %s22, 0
      %p49 = por %p47, %p48
      %s50 = ssub.s32 %s16, %s23
      %p51 = scmp.eq.s32.totalorder %s50, 0
      %s53 = sadd.s32 %s52, 1
      %s54 = scalar_select %p51, %s52, %s53
      %p57 = pneg %p51
      %p58 = scmp.eq.s32.totalorder %s16, 3
      %p59 = por %p57, %p58
      %p60 = scmp.ne.s32.totalorder %s52, %s55
      %p61 = scmp.eq.s32.totalorder %s16, 0
      %p62 = por %p60, %p61
      %p63 = scmp.ne.s32.totalorder %s52, %s55
      %p64 = scmp.eq.s32.totalorder %s21, 3
      %p65 = por %p63, %p64
      %p66 = scmp.ne.s32.totalorder %s55, %s56
      %p67 = scmp.eq.s32.totalorder %s21, 0
      %p68 = por %p66, %p67
      %p69 = scmp.ne.s32.totalorder %s55, %s56
      %p70 = scmp.eq.s32.totalorder %s22, 3
      %p71 = por %p69, %p70
      %p73 = scmp.ne.s32.totalorder %s56, %s72
      %p74 = scmp.eq.s32.totalorder %s22, 0
      %p75 = por %p73, %p74
      %s77 = sadd.s32 %s76, 1
      %p80 = scmp.eq.s32.totalorder %s16, 3
      %p81 = scmp.ne.s32.totalorder %s76, %s78
      %p82 = scmp.eq.s32.totalorder %s16, 0
      %p83 = por %p81, %p82
      %p84 = scmp.ne.s32.totalorder %s76, %s78
      %p85 = scmp.eq.s32.totalorder %s21, 3
      %p86 = por %p84, %p85
      %p87 = scmp.ne.s32.totalorder %s78, %s79
      %p88 = scmp.eq.s32.totalorder %s21, 0
      %p89 = por %p87, %p88
      %p90 = scmp.ne.s32.totalorder %s78, %s79
      %p91 = scmp.eq.s32.totalorder %s22, 3
      %p92 = por %p90, %p91
      %p94 = scmp.ne.s32.totalorder %s79, %s93
      %p95 = scmp.eq.s32.totalorder %s22, 0
      %p96 = por %p94, %p95
      %s98 = sadd.s32 %s97, 1
      %p101 = scmp.eq.s32.totalorder %s16, 3
      %p102 = scmp.ne.s32.totalorder %s97, %s99
      %p103 = scmp.eq.s32.totalorder %s16, 0
      %p104 = por %p102, %p103
      %p105 = scmp.ne.s32.totalorder %s97, %s99
      %p106 = scmp.eq.s32.totalorder %s21, 3
      %p107 = por %p105, %p106
      %p108 = scmp.ne.s32.totalorder %s99, %s100
      %p109 = scmp.eq.s32.totalorder %s21, 0
      %p110 = por %p108, %p109
      %p111 = scmp.ne.s32.totalorder %s99, %s100
      %p112 = scmp.eq.s32.totalorder %s22, 3
      %p113 = por %p111, %p112
      %p115 = scmp.ne.s32.totalorder %s100, %s114
      %p116 = scmp.eq.s32.totalorder %s22, 0
      %p117 = por %p115, %p116
      %p118 = scmp.le.s32.totalorder 1, %s16
      %p119 = scmp.lt.s32.totalorder %s16, 5
      %p120 = pnand %p118, %p119
      %p121 = pneg %p120
      // Predicated region
      $region9: #{_predictor_core.1} parent=5 // pred_check
        _
      $region10: #{_predictor_core.1} parent=5 // pred_check_branch
        %123 = sbr.rel (%p120) target = $region12
      $region11: #{_predictor_core.1} parent=5 // pred_region
        %s124 = ssub.s32 %s16, 1
        // Predicated region
        $region13: #{_predictor_core.1} parent=11 // pred_check
          %p125 = pneg %p89
        $region14: #{_predictor_core.1} parent=11 // pred_check_branch
          %127 = sbr.rel (%p125) target = $region16
        $region15: #{_predictor_core.1} parent=11 // pred_region
          %s129 = ssub.s32 16, 16
          %130 = vsyncadd [#allocation6], %s129
          %s132 = sshll.u32 [#allocation7], 4
          %s133 = int_to_ptr.vmem [resolvable:$true] %s132
          %135 = dma.hbm_to_vmem [thread:$0]  %s2, 16, %s133, [#allocation6]
        $region16: #{_predictor_core.1} parent=11 // pred_fallthru
          _
      $region12: #{_predictor_core.1} parent=5 // pred_fallthru
        _
      %p136 = scmp.lt.s32.totalorder %s16, 4
      // Predicated region
      $region17: #{_predictor_core.1} parent=5 // pred_check
        %p137 = pneg %p136
      $region18: #{_predictor_core.1} parent=5 // pred_check_branch
        %139 = sbr.rel (%p137) target = $region20
      $region19: #{_predictor_core.1} parent=5 // pred_region
        // Predicated region
        $region21: #{_predictor_core.1} parent=19 // pred_check
          %p140 = pneg %p36
        $region22: #{_predictor_core.1} parent=19 // pred_check_branch
          %142 = sbr.rel (%p140) target = $region24
        $region23: #{_predictor_core.1} parent=19 // pred_region
          %s143 = sand.u32 %s26, 1
          %s144 = scalar_lea.sflag [#allocation3], %s143
          %s145 = sand.u32 %s26, 1
          %s146 = smul.addr %s145, 294
          %s147 = scalar_lea.vmem [#allocation2], %s146
          %s148 = smul.u32 294, %s16
          %s150 = ssub.s32 4704, 4704
          %151 = vsyncadd %s144, %s150
          %s152 = smul.addr %s148, 16
          %s153 = scalar_lea.hbm %s0, %s152
          %s155 = sshll.u32 %s147, 4
          %s156 = int_to_ptr.vmem [resolvable:$true] %s155
          %158 = dma.hbm_to_vmem [thread:$0]  %s153, 4704, %s156, %s144
        $region24: #{_predictor_core.1} parent=19 // pred_fallthru
          _
        // Predicated region
        $region25: #{_predictor_core.1} parent=19 // pred_check
          %p159 = pneg %p62
        $region26: #{_predictor_core.1} parent=19 // pred_check_branch
          %161 = sbr.rel (%p159) target = $region28
        $region27: #{_predictor_core.1} parent=19 // pred_region
          %s162 = sand.u32 %s16, 1
          %s163 = scalar_lea.sflag [#allocation6], %s162
          %s164 = sand.u32 %s52, 1
          %s165 = smul.addr %s164, 2352
          %s166 = scalar_lea.vmem [#allocation5], %s165
          %s167 = smul.u32 294, %s16
          %s169 = ssub.s32 37632, 37632
          %170 = vsyncadd %s163, %s169
          %s171 = smul.addr %s167, 64
          %s172 = scalar_lea.hbm %s1, %s171
          %s173 = sshll.u32 %s166, 4
          %s174 = int_to_ptr.vmem [resolvable:$true] %s173
          %179 = dma.hbm_to_vmem [thread:$0]  %s172, 37632, %s174, %s163, 75264, 18816, 1176
        $region28: #{_predictor_core.1} parent=19 // pred_fallthru
          _
      $region20: #{_predictor_core.1} parent=5 // pred_fallthru
        _
      %p180 = scmp.le.s32.totalorder 1, %s16
      %p181 = scmp.lt.s32.totalorder %s16, 5
      %p182 = pnand %p180, %p181
      %p183 = pneg %p182
      // Predicated region
      $region29: #{_predictor_core.1} parent=5 // pred_check
        _
      $region30: #{_predictor_core.1} parent=5 // pred_check_branch
        %185 = sbr.rel (%p182) target = $region32
      $region31: #{_predictor_core.1} parent=5 // pred_region
        %s186 = ssub.s32 %s16, 1
        %s187 = sand.u32 %s29, 1
        %s188 = scalar_lea.sflag [#allocation3], %s187
        %s189 = sand.u32 %s29, 1
        %s190 = smul.addr %s189, 294
        %s191 = scalar_lea.vmem [#allocation2], %s190
        // Predicated region
        $region33: #{_predictor_core.1} parent=31 // pred_check
          %p192 = pneg %p42
        $region34: #{_predictor_core.1} parent=31 // pred_check_branch
          %194 = sbr.rel (%p192) target = $region36
        $region35: #{_predictor_core.1} parent=31 // pred_region
          %195 = dma.done %s188, 4704
        $region36: #{_predictor_core.1} parent=31 // pred_fallthru
          _
        %s196 = sand.u32 %s21, 1
        %s197 = scalar_lea.sflag [#allocation6], %s196
        %s198 = sand.u32 %s55, 1
        %s199 = smul.addr %s198, 2352
        %s200 = scalar_lea.vmem [#allocation5], %s199
        // Predicated region
        $region37: #{_predictor_core.1} parent=31 // pred_check
          %p201 = pneg %p68
        $region38: #{_predictor_core.1} parent=31 // pred_check_branch
          %203 = sbr.rel (%p201) target = $region40
        $region39: #{_predictor_core.1} parent=31 // pred_region
          %204 = dma.done %s197, 37632
        $region40: #{_predictor_core.1} parent=31 // pred_fallthru
          _
        // Predicated region
        $region41: #{_predictor_core.1} parent=31 // pred_check
          %p205 = pneg %p89
        $region42: #{_predictor_core.1} parent=31 // pred_check_branch
          %207 = sbr.rel (%p205) target = $region44
        $region43: #{_predictor_core.1} parent=31 // pred_region
          %208 = dma.done [#allocation6], 16
        $region44: #{_predictor_core.1} parent=31 // pred_fallthru
          _
        %s209 = sand.u32 %s29, 1
        %s210 = scalar_lea.sflag [#allocation3], %s209
        %s211 = sand.u32 %s29, 1
        %s212 = smul.addr %s211, 294
        %s213 = scalar_lea.vmem [#allocation2], %s212
        %p214 = pneg %p42
        %p215 = pneg %p39
        %s216 = sand.u32 %s21, 1
        %s217 = scalar_lea.sflag [#allocation6], %s216
        %s218 = sand.u32 %s55, 1
        %s219 = smul.addr %s218, 2352
        %s220 = scalar_lea.vmem [#allocation5], %s219
        %p221 = pneg %p68
        %p222 = pneg %p65
        %p223 = pneg %p89
        %p224 = pneg %p86
        %p225 = pneg %p110
        %p226 = pneg %p107
        %s227 = smul.u32 294, %s21
        %s228 = smul.u32 294, %s21
        %p230 = scmp.eq.s32.totalorder %s21, 0
        // Predicated region
        $region45: #{_predictor_core.1} parent=31 // pred_check
          %p231 = pneg %p230
        $region46: #{_predictor_core.1} parent=31 // pred_check_branch
          %233 = sbr.rel (%p231) target = $region48
        $region47: #{_predictor_core.1} parent=31 // pred_region
          %vm234 = vcmask 123904
          %235 = vst.msk [vmem:[#allocation8] sm:$0x3] %vm234, 0.0
        $region48: #{_predictor_core.1} parent=31 // pred_fallthru
          _
        %v236 = vld [vmem:[#allocation8] sm:$0x3]
        %v237 = vld [vmem:[%s191] sm:$0xff]
        %v238 = vld [vmem:[%s191 + $0x8] sm:$0xff]
        %v239 = vld [vmem:[%s191 + $0x10] sm:$0xff]
        %v240 = vld [vmem:[%s191 + $0x18] sm:$0xff]
        %v241 = vld [vmem:[%s191 + $0x20] sm:$0xff]
        %v242 = vld [vmem:[%s191 + $0x28] sm:$0xff]
        %v243 = vld [vmem:[%s191 + $0x30] sm:$0xff]
        %v244 = vld [vmem:[%s191 + $0x38] sm:$0xff]
        %v245 = vld [vmem:[%s191 + $0x40] sm:$0xff]
        %v246 = vld [vmem:[%s191 + $0x48] sm:$0xff]
        %v247 = vld [vmem:[%s191 + $0x50] sm:$0xff]
        %v248 = vld [vmem:[%s191 + $0x58] sm:$0xff]
        %v249 = vld [vmem:[%s191 + $0x60] sm:$0xff]
        %v250 = vld [vmem:[%s191 + $0x68] sm:$0xff]
        %v251 = vld [vmem:[%s191 + $0x70] sm:$0xff]
        %v252 = vld [vmem:[%s191 + $0x78] sm:$0xff]
        %v253 = vld [vmem:[%s191 + $0x80] sm:$0xff]
        %v254 = vld [vmem:[%s191 + $0x88] sm:$0xff]
        %v255 = vld [vmem:[%s191 + $0x90] sm:$0xff]
        %v256 = vld [vmem:[%s191 + $0x98] sm:$0xff]
        %v257 = vld [vmem:[%s191 + $0xa0] sm:$0xff]
        %v258 = vld [vmem:[%s191 + $0xa8] sm:$0xff]
        %v259 = vld [vmem:[%s191 + $0xb0] sm:$0xff]
        %v260 = vld [vmem:[%s191 + $0xb8] sm:$0xff]
        %v261 = vld [vmem:[%s191 + $0xc0] sm:$0xff]
        %v262 = vld [vmem:[%s191 + $0xc8] sm:$0xff]
        %v263 = vld [vmem:[%s191 + $0xd0] sm:$0xff]
        %v264 = vld [vmem:[%s191 + $0xd8] sm:$0xff]
        %v265 = vld [vmem:[%s191 + $0xe0] sm:$0xff]
        %v266 = vld [vmem:[%s191 + $0xe8] sm:$0xff]
        %v267 = vld [vmem:[%s191 + $0xf0] sm:$0xff]
        %v268 = vld [vmem:[%s191 + $0xf8] sm:$0xff]
        %v269 = vld [vmem:[%s191 + $0x100] sm:$0xff]
        %v270 = vld [vmem:[%s191 + $0x108] sm:$0xff]
        %v271 = vld [vmem:[%s191 + $0x110] sm:$0xff]
        %v272 = vld [vmem:[%s191 + $0x118] sm:$0xff]
        %v273 = vld [vmem:[%s191 + $0x120] sm:$0x3f]
        %v274 = vld [vmem:[%s200] sm:$0xff]
        %v275 = vld [vmem:[%s200 + $0x8] sm:$0xff]
        %v276 = vld [vmem:[%s200 + $0x10] sm:$0xff]
        %v277 = vld [vmem:[%s200 + $0x18] sm:$0xff]
        %v278 = vld [vmem:[%s200 + $0x20] sm:$0xff]
        %v279 = vld [vmem:[%s200 + $0x28] sm:$0xff]
        %v280 = vld [vmem:[%s200 + $0x30] sm:$0xff]
        %v281 = vld [vmem:[%s200 + $0x38] sm:$0xff]
        %v282 = vld [vmem:[%s200 + $0x40] sm:$0xff]
        %v283 = vld [vmem:[%s200 + $0x48] sm:$0xff]
        %v284 = vld [vmem:[%s200 + $0x50] sm:$0xff]
        %v285 = vld [vmem:[%s200 + $0x58] sm:$0xff]
        %v286 = vld [vmem:[%s200 + $0x60] sm:$0xff]
        %v287 = vld [vmem:[%s200 + $0x68] sm:$0xff]
        %v288 = vld [vmem:[%s200 + $0x70] sm:$0xff]
        %v289 = vld [vmem:[%s200 + $0x78] sm:$0xff]
        %v290 = vld [vmem:[%s200 + $0x80] sm:$0xff]
        %v291 = vld [vmem:[%s200 + $0x88] sm:$0xff]
        %v292 = vld [vmem:[%s200 + $0x90] sm:$0xff]
        %v293 = vld [vmem:[%s200 + $0x98] sm:$0xff]
        %v294 = vld [vmem:[%s200 + $0xa0] sm:$0xff]
        %v295 = vld [vmem:[%s200 + $0xa8] sm:$0xff]
        %v296 = vld [vmem:[%s200 + $0xb0] sm:$0xff]
        %v297 = vld [vmem:[%s200 + $0xb8] sm:$0xff]
        %v298 = vld [vmem:[%s200 + $0xc0] sm:$0xff]
        %v299 = vld [vmem:[%s200 + $0xc8] sm:$0xff]
        %v300 = vld [vmem:[%s200 + $0xd0] sm:$0xff]
        %v301 = vld [vmem:[%s200 + $0xd8] sm:$0xff]
        %v302 = vld [vmem:[%s200 + $0xe0] sm:$0xff]
        %v303 = vld [vmem:[%s200 + $0xe8] sm:$0xff]
        %v304 = vld [vmem:[%s200 + $0xf0] sm:$0xff]
        %v305 = vld [vmem:[%s200 + $0xf8] sm:$0xff]
        %v306 = vld [vmem:[%s200 + $0x100] sm:$0xff]
        %v307 = vld [vmem:[%s200 + $0x108] sm:$0xff]
        %v308 = vld [vmem:[%s200 + $0x110] sm:$0xff]
        %v309 = vld [vmem:[%s200 + $0x118] sm:$0xff]
        %v310 = vld [vmem:[%s200 + $0x120] sm:$0xff]
        %v311 = vld [vmem:[%s200 + $0x128] sm:$0xff]
        %v312 = vld [vmem:[%s200 + $0x130] sm:$0xff]
        %v313 = vld [vmem:[%s200 + $0x138] sm:$0xff]
        %v314 = vld [vmem:[%s200 + $0x140] sm:$0xff]
        %v315 = vld [vmem:[%s200 + $0x148] sm:$0xff]
        %v316 = vld [vmem:[%s200 + $0x150] sm:$0xff]
        %v317 = vld [vmem:[%s200 + $0x158] sm:$0xff]
        %v318 = vld [vmem:[%s200 + $0x160] sm:$0xff]
        %v319 = vld [vmem:[%s200 + $0x168] sm:$0xff]
        %v320 = vld [vmem:[%s200 + $0x170] sm:$0xff]
        %v321 = vld [vmem:[%s200 + $0x178] sm:$0xff]
        %v322 = vld [vmem:[%s200 + $0x180] sm:$0xff]
        %v323 = vld [vmem:[%s200 + $0x188] sm:$0xff]
        %v324 = vld [vmem:[%s200 + $0x190] sm:$0xff]
        %v325 = vld [vmem:[%s200 + $0x198] sm:$0xff]
        %v326 = vld [vmem:[%s200 + $0x1a0] sm:$0xff]
        %v327 = vld [vmem:[%s200 + $0x1a8] sm:$0xff]
        %v328 = vld [vmem:[%s200 + $0x1b0] sm:$0xff]
        %v329 = vld [vmem:[%s200 + $0x1b8] sm:$0xff]
        %v330 = vld [vmem:[%s200 + $0x1c0] sm:$0xff]
        %v331 = vld [vmem:[%s200 + $0x1c8] sm:$0xff]
        %v332 = vld [vmem:[%s200 + $0x1d0] sm:$0xff]
        %v333 = vld [vmem:[%s200 + $0x1d8] sm:$0xff]
        %v334 = vld [vmem:[%s200 + $0x1e0] sm:$0xff]
        %v335 = vld [vmem:[%s200 + $0x1e8] sm:$0xff]
        %v336 = vld [vmem:[%s200 + $0x1f0] sm:$0xff]
        %v337 = vld [vmem:[%s200 + $0x1f8] sm:$0xff]
        %v338 = vld [vmem:[%s200 + $0x200] sm:$0xff]
        %v339 = vld [vmem:[%s200 + $0x208] sm:$0xff]
        %v340 = vld [vmem:[%s200 + $0x210] sm:$0xff]
        %v341 = vld [vmem:[%s200 + $0x218] sm:$0xff]
        %v342 = vld [vmem:[%s200 + $0x220] sm:$0xff]
        %v343 = vld [vmem:[%s200 + $0x228] sm:$0xff]
        %v344 = vld [vmem:[%s200 + $0x230] sm:$0xff]
        %v345 = vld [vmem:[%s200 + $0x238] sm:$0xff]
        %v346 = vld [vmem:[%s200 + $0x240] sm:$0xff]
        %v347 = vld [vmem:[%s200 + $0x248] sm:$0xff]
        %v348 = vld [vmem:[%s200 + $0x250] sm:$0xff]
        %v349 = vld [vmem:[%s200 + $0x258] sm:$0xff]
        %v350 = vld [vmem:[%s200 + $0x260] sm:$0xff]
        %v351 = vld [vmem:[%s200 + $0x268] sm:$0xff]
        %v352 = vld [vmem:[%s200 + $0x270] sm:$0xff]
        %v353 = vld [vmem:[%s200 + $0x278] sm:$0xff]
        %v354 = vld [vmem:[%s200 + $0x280] sm:$0xff]
        %v355 = vld [vmem:[%s200 + $0x288] sm:$0xff]
        %v356 = vld [vmem:[%s200 + $0x290] sm:$0xff]
        %v357 = vld [vmem:[%s200 + $0x298] sm:$0xff]
        %v358 = vld [vmem:[%s200 + $0x2a0] sm:$0xff]
        %v359 = vld [vmem:[%s200 + $0x2a8] sm:$0xff]
        %v360 = vld [vmem:[%s200 + $0x2b0] sm:$0xff]
        %v361 = vld [vmem:[%s200 + $0x2b8] sm:$0xff]
        %v362 = vld [vmem:[%s200 + $0x2c0] sm:$0xff]
        %v363 = vld [vmem:[%s200 + $0x2c8] sm:$0xff]
        %v364 = vld [vmem:[%s200 + $0x2d0] sm:$0xff]
        %v365 = vld [vmem:[%s200 + $0x2d8] sm:$0xff]
        %v366 = vld [vmem:[%s200 + $0x2e0] sm:$0xff]
        %v367 = vld [vmem:[%s200 + $0x2e8] sm:$0xff]
        %v368 = vld [vmem:[%s200 + $0x2f0] sm:$0xff]
        %v369 = vld [vmem:[%s200 + $0x2f8] sm:$0xff]
        %v370 = vld [vmem:[%s200 + $0x300] sm:$0xff]
        %v371 = vld [vmem:[%s200 + $0x308] sm:$0xff]
        %v372 = vld [vmem:[%s200 + $0x310] sm:$0xff]
        %v373 = vld [vmem:[%s200 + $0x318] sm:$0xff]
        %v374 = vld [vmem:[%s200 + $0x320] sm:$0xff]
        %v375 = vld [vmem:[%s200 + $0x328] sm:$0xff]
        %v376 = vld [vmem:[%s200 + $0x330] sm:$0xff]
        %v377 = vld [vmem:[%s200 + $0x338] sm:$0xff]
        %v378 = vld [vmem:[%s200 + $0x340] sm:$0xff]
        %v379 = vld [vmem:[%s200 + $0x348] sm:$0xff]
        %v380 = vld [vmem:[%s200 + $0x350] sm:$0xff]
        %v381 = vld [vmem:[%s200 + $0x358] sm:$0xff]
        %v382 = vld [vmem:[%s200 + $0x360] sm:$0xff]
        %v383 = vld [vmem:[%s200 + $0x368] sm:$0xff]
        %v384 = vld [vmem:[%s200 + $0x370] sm:$0xff]
        %v385 = vld [vmem:[%s200 + $0x378] sm:$0xff]
        %v386 = vld [vmem:[%s200 + $0x380] sm:$0xff]
        %v387 = vld [vmem:[%s200 + $0x388] sm:$0xff]
        %v388 = vld [vmem:[%s200 + $0x390] sm:$0xff]
        %v389 = vld [vmem:[%s200 + $0x398] sm:$0xff]
        %v390 = vld [vmem:[%s200 + $0x3a0] sm:$0xff]
        %v391 = vld [vmem:[%s200 + $0x3a8] sm:$0xff]
        %v392 = vld [vmem:[%s200 + $0x3b0] sm:$0xff]
        %v393 = vld [vmem:[%s200 + $0x3b8] sm:$0xff]
        %v394 = vld [vmem:[%s200 + $0x3c0] sm:$0xff]
        %v395 = vld [vmem:[%s200 + $0x3c8] sm:$0xff]
        %v396 = vld [vmem:[%s200 + $0x3d0] sm:$0xff]
        %v397 = vld [vmem:[%s200 + $0x3d8] sm:$0xff]
        %v398 = vld [vmem:[%s200 + $0x3e0] sm:$0xff]
        %v399 = vld [vmem:[%s200 + $0x3e8] sm:$0xff]
        %v400 = vld [vmem:[%s200 + $0x3f0] sm:$0xff]
        %v401 = vld [vmem:[%s200 + $0x3f8] sm:$0xff]
        %v402 = vld [vmem:[%s200 + $0x400] sm:$0xff]
        %v403 = vld [vmem:[%s200 + $0x408] sm:$0xff]
        %v404 = vld [vmem:[%s200 + $0x410] sm:$0xff]
        %v405 = vld [vmem:[%s200 + $0x418] sm:$0xff]
        %v406 = vld [vmem:[%s200 + $0x420] sm:$0xff]
        %v407 = vld [vmem:[%s200 + $0x428] sm:$0xff]
        %v408 = vld [vmem:[%s200 + $0x430] sm:$0xff]
        %v409 = vld [vmem:[%s200 + $0x438] sm:$0xff]
        %v410 = vld [vmem:[%s200 + $0x440] sm:$0xff]
        %v411 = vld [vmem:[%s200 + $0x448] sm:$0xff]
        %v412 = vld [vmem:[%s200 + $0x450] sm:$0xff]
        %v413 = vld [vmem:[%s200 + $0x458] sm:$0xff]
        %v414 = vld [vmem:[%s200 + $0x460] sm:$0xff]
        %v415 = vld [vmem:[%s200 + $0x468] sm:$0xff]
        %v416 = vld [vmem:[%s200 + $0x470] sm:$0xff]
        %v417 = vld [vmem:[%s200 + $0x478] sm:$0xff]
        %v418 = vld [vmem:[%s200 + $0x480] sm:$0xff]
        %v419 = vld [vmem:[%s200 + $0x488] sm:$0xff]
        %v420 = vld [vmem:[%s200 + $0x490] sm:$0xff]
        %v421 = vld [vmem:[%s200 + $0x498] sm:$0xff]
        %v422 = vld [vmem:[%s200 + $0x4a0] sm:$0xff]
        %v423 = vld [vmem:[%s200 + $0x4a8] sm:$0xff]
        %v424 = vld [vmem:[%s200 + $0x4b0] sm:$0xff]
        %v425 = vld [vmem:[%s200 + $0x4b8] sm:$0xff]
        %v426 = vld [vmem:[%s200 + $0x4c0] sm:$0xff]
        %v427 = vld [vmem:[%s200 + $0x4c8] sm:$0xff]
        %v428 = vld [vmem:[%s200 + $0x4d0] sm:$0xff]
        %v429 = vld [vmem:[%s200 + $0x4d8] sm:$0xff]
        %v430 = vld [vmem:[%s200 + $0x4e0] sm:$0xff]
        %v431 = vld [vmem:[%s200 + $0x4e8] sm:$0xff]
        %v432 = vld [vmem:[%s200 + $0x4f0] sm:$0xff]
        %v433 = vld [vmem:[%s200 + $0x4f8] sm:$0xff]
        %v434 = vld [vmem:[%s200 + $0x500] sm:$0xff]
        %v435 = vld [vmem:[%s200 + $0x508] sm:$0xff]
        %v436 = vld [vmem:[%s200 + $0x510] sm:$0xff]
        %v437 = vld [vmem:[%s200 + $0x518] sm:$0xff]
        %v438 = vld [vmem:[%s200 + $0x520] sm:$0xff]
        %v439 = vld [vmem:[%s200 + $0x528] sm:$0xff]
        %v440 = vld [vmem:[%s200 + $0x530] sm:$0xff]
        %v441 = vld [vmem:[%s200 + $0x538] sm:$0xff]
        %v442 = vld [vmem:[%s200 + $0x540] sm:$0xff]
        %v443 = vld [vmem:[%s200 + $0x548] sm:$0xff]
        %v444 = vld [vmem:[%s200 + $0x550] sm:$0xff]
        %v445 = vld [vmem:[%s200 + $0x558] sm:$0xff]
        %v446 = vld [vmem:[%s200 + $0x560] sm:$0xff]
        %v447 = vld [vmem:[%s200 + $0x568] sm:$0xff]
        %v448 = vld [vmem:[%s200 + $0x570] sm:$0xff]
        %v449 = vld [vmem:[%s200 + $0x578] sm:$0xff]
        %v450 = vld [vmem:[%s200 + $0x580] sm:$0xff]
        %v451 = vld [vmem:[%s200 + $0x588] sm:$0xff]
        %v452 = vld [vmem:[%s200 + $0x590] sm:$0xff]
        %v453 = vld [vmem:[%s200 + $0x598] sm:$0xff]
        %v454 = vld [vmem:[%s200 + $0x5a0] sm:$0xff]
        %v455 = vld [vmem:[%s200 + $0x5a8] sm:$0xff]
        %v456 = vld [vmem:[%s200 + $0x5b0] sm:$0xff]
        %v457 = vld [vmem:[%s200 + $0x5b8] sm:$0xff]
        %v458 = vld [vmem:[%s200 + $0x5c0] sm:$0xff]
        %v459 = vld [vmem:[%s200 + $0x5c8] sm:$0xff]
        %v460 = vld [vmem:[%s200 + $0x5d0] sm:$0xff]
        %v461 = vld [vmem:[%s200 + $0x5d8] sm:$0xff]
        %v462 = vld [vmem:[%s200 + $0x5e0] sm:$0xff]
        %v463 = vld [vmem:[%s200 + $0x5e8] sm:$0xff]
        %v464 = vld [vmem:[%s200 + $0x5f0] sm:$0xff]
        %v465 = vld [vmem:[%s200 + $0x5f8] sm:$0xff]
        %v466 = vld [vmem:[%s200 + $0x600] sm:$0xff]
        %v467 = vld [vmem:[%s200 + $0x608] sm:$0xff]
        %v468 = vld [vmem:[%s200 + $0x610] sm:$0xff]
        %v469 = vld [vmem:[%s200 + $0x618] sm:$0xff]
        %v470 = vld [vmem:[%s200 + $0x620] sm:$0xff]
        %v471 = vld [vmem:[%s200 + $0x628] sm:$0xff]
        %v472 = vld [vmem:[%s200 + $0x630] sm:$0xff]
        %v473 = vld [vmem:[%s200 + $0x638] sm:$0xff]
        %v474 = vld [vmem:[%s200 + $0x640] sm:$0xff]
        %v475 = vld [vmem:[%s200 + $0x648] sm:$0xff]
        %v476 = vld [vmem:[%s200 + $0x650] sm:$0xff]
        %v477 = vld [vmem:[%s200 + $0x658] sm:$0xff]
        %v478 = vld [vmem:[%s200 + $0x660] sm:$0xff]
        %v479 = vld [vmem:[%s200 + $0x668] sm:$0xff]
        %v480 = vld [vmem:[%s200 + $0x670] sm:$0xff]
        %v481 = vld [vmem:[%s200 + $0x678] sm:$0xff]
        %v482 = vld [vmem:[%s200 + $0x680] sm:$0xff]
        %v483 = vld [vmem:[%s200 + $0x688] sm:$0xff]
        %v484 = vld [vmem:[%s200 + $0x690] sm:$0xff]
        %v485 = vld [vmem:[%s200 + $0x698] sm:$0xff]
        %v486 = vld [vmem:[%s200 + $0x6a0] sm:$0xff]
        %v487 = vld [vmem:[%s200 + $0x6a8] sm:$0xff]
        %v488 = vld [vmem:[%s200 + $0x6b0] sm:$0xff]
        %v489 = vld [vmem:[%s200 + $0x6b8] sm:$0xff]
        %v490 = vld [vmem:[%s200 + $0x6c0] sm:$0xff]
        %v491 = vld [vmem:[%s200 + $0x6c8] sm:$0xff]
        %v492 = vld [vmem:[%s200 + $0x6d0] sm:$0xff]
        %v493 = vld [vmem:[%s200 + $0x6d8] sm:$0xff]
        %v494 = vld [vmem:[%s200 + $0x6e0] sm:$0xff]
        %v495 = vld [vmem:[%s200 + $0x6e8] sm:$0xff]
        %v496 = vld [vmem:[%s200 + $0x6f0] sm:$0xff]
        %v497 = vld [vmem:[%s200 + $0x6f8] sm:$0xff]
        %v498 = vld [vmem:[%s200 + $0x700] sm:$0xff]
        %v499 = vld [vmem:[%s200 + $0x708] sm:$0xff]
        %v500 = vld [vmem:[%s200 + $0x710] sm:$0xff]
        %v501 = vld [vmem:[%s200 + $0x718] sm:$0xff]
        %v502 = vld [vmem:[%s200 + $0x720] sm:$0xff]
        %v503 = vld [vmem:[%s200 + $0x728] sm:$0xff]
        %v504 = vld [vmem:[%s200 + $0x730] sm:$0xff]
        %v505 = vld [vmem:[%s200 + $0x738] sm:$0xff]
        %v506 = vld [vmem:[%s200 + $0x740] sm:$0xff]
        %v507 = vld [vmem:[%s200 + $0x748] sm:$0xff]
        %v508 = vld [vmem:[%s200 + $0x750] sm:$0xff]
        %v509 = vld [vmem:[%s200 + $0x758] sm:$0xff]
        %v510 = vld [vmem:[%s200 + $0x760] sm:$0xff]
        %v511 = vld [vmem:[%s200 + $0x768] sm:$0xff]
        %v512 = vld [vmem:[%s200 + $0x770] sm:$0xff]
        %v513 = vld [vmem:[%s200 + $0x778] sm:$0xff]
        %v514 = vld [vmem:[%s200 + $0x780] sm:$0xff]
        %v515 = vld [vmem:[%s200 + $0x788] sm:$0xff]
        %v516 = vld [vmem:[%s200 + $0x790] sm:$0xff]
        %v517 = vld [vmem:[%s200 + $0x798] sm:$0xff]
        %v518 = vld [vmem:[%s200 + $0x7a0] sm:$0xff]
        %v519 = vld [vmem:[%s200 + $0x7a8] sm:$0xff]
        %v520 = vld [vmem:[%s200 + $0x7b0] sm:$0xff]
        %v521 = vld [vmem:[%s200 + $0x7b8] sm:$0xff]
        %v522 = vld [vmem:[%s200 + $0x7c0] sm:$0xff]
        %v523 = vld [vmem:[%s200 + $0x7c8] sm:$0xff]
        %v524 = vld [vmem:[%s200 + $0x7d0] sm:$0xff]
        %v525 = vld [vmem:[%s200 + $0x7d8] sm:$0xff]
        %v526 = vld [vmem:[%s200 + $0x7e0] sm:$0xff]
        %v527 = vld [vmem:[%s200 + $0x7e8] sm:$0xff]
        %v528 = vld [vmem:[%s200 + $0x7f0] sm:$0xff]
        %v529 = vld [vmem:[%s200 + $0x7f8] sm:$0xff]
        %v530 = vld [vmem:[%s200 + $0x800] sm:$0xff]
        %v531 = vld [vmem:[%s200 + $0x808] sm:$0xff]
        %v532 = vld [vmem:[%s200 + $0x810] sm:$0xff]
        %v533 = vld [vmem:[%s200 + $0x818] sm:$0xff]
        %v534 = vld [vmem:[%s200 + $0x820] sm:$0xff]
        %v535 = vld [vmem:[%s200 + $0x828] sm:$0xff]
        %v536 = vld [vmem:[%s200 + $0x830] sm:$0xff]
        %v537 = vld [vmem:[%s200 + $0x838] sm:$0xff]
        %v538 = vld [vmem:[%s200 + $0x840] sm:$0xff]
        %v539 = vld [vmem:[%s200 + $0x848] sm:$0xff]
        %v540 = vld [vmem:[%s200 + $0x850] sm:$0xff]
        %v541 = vld [vmem:[%s200 + $0x858] sm:$0xff]
        %v542 = vld [vmem:[%s200 + $0x860] sm:$0xff]
        %v543 = vld [vmem:[%s200 + $0x868] sm:$0xff]
        %v544 = vld [vmem:[%s200 + $0x870] sm:$0xff]
        %v545 = vld [vmem:[%s200 + $0x878] sm:$0xff]
        %v546 = vld [vmem:[%s200 + $0x880] sm:$0xff]
        %v547 = vld [vmem:[%s200 + $0x888] sm:$0xff]
        %v548 = vld [vmem:[%s200 + $0x890] sm:$0xff]
        %v549 = vld [vmem:[%s200 + $0x898] sm:$0xff]
        %v550 = vld [vmem:[%s200 + $0x8a0] sm:$0xff]
        %v551 = vld [vmem:[%s200 + $0x8a8] sm:$0xff]
        %v552 = vld [vmem:[%s200 + $0x8b0] sm:$0xff]
        %v553 = vld [vmem:[%s200 + $0x8b8] sm:$0xff]
        %v554 = vld [vmem:[%s200 + $0x8c0] sm:$0xff]
        %v555 = vld [vmem:[%s200 + $0x8c8] sm:$0xff]
        %v556 = vld [vmem:[%s200 + $0x8d0] sm:$0xff]
        %v557 = vld [vmem:[%s200 + $0x8d8] sm:$0xff]
        %v558 = vld [vmem:[%s200 + $0x8e0] sm:$0xff]
        %v559 = vld [vmem:[%s200 + $0x8e8] sm:$0xff]
        %v560 = vld [vmem:[%s200 + $0x8f0] sm:$0xff]
        %v561 = vld [vmem:[%s200 + $0x8f8] sm:$0xff]
        %v562 = vld [vmem:[%s200 + $0x900] sm:$0xff]
        %v563 = vld [vmem:[%s200 + $0x908] sm:$0xff]
        %v564 = vld [vmem:[%s200 + $0x910] sm:$0xff]
        %v565 = vld [vmem:[%s200 + $0x918] sm:$0xff]
        %v566 = vld [vmem:[%s200 + $0x920] sm:$0xff]
        %v567 = vld [vmem:[%s200 + $0x928] sm:$0xff]
        %v605 = vcombine.high %v237, %v237
        %v607 = vunpack.c.l.s4 1966171168
        %v608 = vunpack.c.0.s8 %v607
        %v609 = vlaneseq
        %v610 = vshrl.u32 %v609, 7
        %v611 = vsub.s32 %v608, %v610
        %v612 = vrot.slane %v237, %v611
        %v614 = vunpack.c.l.s4 1966171168
        %v615 = vunpack.c.0.s8 %v614
        %v616 = vlaneseq
        %v617 = vshrl.u32 %v616, 7
        %v618 = vsub.s32 %v615, %v617
        %v619 = vrot.slane %v605, %v618
        %v620 = vcombine.high %v612, %v612
        %v621 = vcombine.high %v619, %v619
        %v623 = vunpack.c.l.s4 1966171168
        %v624 = vunpack.c.0.s8 %v623
        %v625 = vlaneseq
        %v626 = vshrl.u32 %v625, 7
        %v627 = vsub.s32 %v624, %v626
        %v628 = vrot.slane %v612, %v627
        %v630 = vunpack.c.l.s4 1966171168
        %v631 = vunpack.c.0.s8 %v630
        %v632 = vlaneseq
        %v633 = vshrl.u32 %v632, 7
        %v634 = vsub.s32 %v631, %v633
        %v635 = vrot.slane %v619, %v634
        %v637 = vunpack.c.l.s4 1966171168
        %v638 = vunpack.c.0.s8 %v637
        %v639 = vlaneseq
        %v640 = vshrl.u32 %v639, 7
        %v641 = vsub.s32 %v638, %v640
        %v642 = vrot.slane %v620, %v641
        %v644 = vunpack.c.l.s4 1966171168
        %v645 = vunpack.c.0.s8 %v644
        %v646 = vlaneseq
        %v647 = vshrl.u32 %v646, 7
        %v648 = vsub.s32 %v645, %v647
        %v649 = vrot.slane %v621, %v648
        %v650 = vcombine.high %v628, %v628
        %v651 = vcombine.high %v635, %v635
        %v652 = vcombine.high %v642, %v642
        %v653 = vcombine.high %v649, %v649
        %v654 = vcombine.high %v238, %v238
        %v656 = vunpack.c.l.s4 1966171168
        %v657 = vunpack.c.0.s8 %v656
        %v658 = vlaneseq
        %v659 = vshrl.u32 %v658, 7
        %v660 = vsub.s32 %v657, %v659
        %v661 = vrot.slane %v238, %v660
        %v663 = vunpack.c.l.s4 1966171168
        %v664 = vunpack.c.0.s8 %v663
        %v665 = vlaneseq
        %v666 = vshrl.u32 %v665, 7
        %v667 = vsub.s32 %v664, %v666
        %v668 = vrot.slane %v654, %v667
        %v669 = vcombine.high %v661, %v661
        %v670 = vcombine.high %v668, %v668
        %v672 = vunpack.c.l.s4 1966171168
        %v673 = vunpack.c.0.s8 %v672
        %v674 = vlaneseq
        %v675 = vshrl.u32 %v674, 7
        %v676 = vsub.s32 %v673, %v675
        %v677 = vrot.slane %v661, %v676
        %v679 = vunpack.c.l.s4 1966171168
        %v680 = vunpack.c.0.s8 %v679
        %v681 = vlaneseq
        %v682 = vshrl.u32 %v681, 7
        %v683 = vsub.s32 %v680, %v682
        %v684 = vrot.slane %v668, %v683
        %v686 = vunpack.c.l.s4 1966171168
        %v687 = vunpack.c.0.s8 %v686
        %v688 = vlaneseq
        %v689 = vshrl.u32 %v688, 7
        %v690 = vsub.s32 %v687, %v689
        %v691 = vrot.slane %v669, %v690
        %v693 = vunpack.c.l.s4 1966171168
        %v694 = vunpack.c.0.s8 %v693
        %v695 = vlaneseq
        %v696 = vshrl.u32 %v695, 7
        %v697 = vsub.s32 %v694, %v696
        %v698 = vrot.slane %v670, %v697
        %v699 = vcombine.high %v677, %v677
        %v700 = vcombine.high %v684, %v684
        %v701 = vcombine.high %v691, %v691
        %v702 = vcombine.high %v698, %v698
        %v703 = vcombine.high %v239, %v239
        %v705 = vunpack.c.l.s4 1966171168
        %v706 = vunpack.c.0.s8 %v705
        %v707 = vlaneseq
        %v708 = vshrl.u32 %v707, 7
        %v709 = vsub.s32 %v706, %v708
        %v710 = vrot.slane %v239, %v709
        %v712 = vunpack.c.l.s4 1966171168
        %v713 = vunpack.c.0.s8 %v712
        %v714 = vlaneseq
        %v715 = vshrl.u32 %v714, 7
        %v716 = vsub.s32 %v713, %v715
        %v717 = vrot.slane %v703, %v716
        %v718 = vcombine.high %v710, %v710
        %v719 = vcombine.high %v717, %v717
        %v721 = vunpack.c.l.s4 1966171168
        %v722 = vunpack.c.0.s8 %v721
        %v723 = vlaneseq
        %v724 = vshrl.u32 %v723, 7
        %v725 = vsub.s32 %v722, %v724
        %v726 = vrot.slane %v710, %v725
        %v728 = vunpack.c.l.s4 1966171168
        %v729 = vunpack.c.0.s8 %v728
        %v730 = vlaneseq
        %v731 = vshrl.u32 %v730, 7
        %v732 = vsub.s32 %v729, %v731
        %v733 = vrot.slane %v717, %v732
        %v735 = vunpack.c.l.s4 1966171168
        %v736 = vunpack.c.0.s8 %v735
        %v737 = vlaneseq
        %v738 = vshrl.u32 %v737, 7
        %v739 = vsub.s32 %v736, %v738
        %v740 = vrot.slane %v718, %v739
        %v742 = vunpack.c.l.s4 1966171168
        %v743 = vunpack.c.0.s8 %v742
        %v744 = vlaneseq
        %v745 = vshrl.u32 %v744, 7
        %v746 = vsub.s32 %v743, %v745
        %v747 = vrot.slane %v719, %v746
        %v748 = vcombine.high %v726, %v726
        %v749 = vcombine.high %v733, %v733
        %v750 = vcombine.high %v740, %v740
        %v751 = vcombine.high %v747, %v747
        %v752 = vcombine.high %v240, %v240
        %v754 = vunpack.c.l.s4 1966171168
        %v755 = vunpack.c.0.s8 %v754
        %v756 = vlaneseq
        %v757 = vshrl.u32 %v756, 7
        %v758 = vsub.s32 %v755, %v757
        %v759 = vrot.slane %v240, %v758
        %v761 = vunpack.c.l.s4 1966171168
        %v762 = vunpack.c.0.s8 %v761
        %v763 = vlaneseq
        %v764 = vshrl.u32 %v763, 7
        %v765 = vsub.s32 %v762, %v764
        %v766 = vrot.slane %v752, %v765
        %v767 = vcombine.high %v759, %v759
        %v768 = vcombine.high %v766, %v766
        %v770 = vunpack.c.l.s4 1966171168
        %v771 = vunpack.c.0.s8 %v770
        %v772 = vlaneseq
        %v773 = vshrl.u32 %v772, 7
        %v774 = vsub.s32 %v771, %v773
        %v775 = vrot.slane %v759, %v774
        %v777 = vunpack.c.l.s4 1966171168
        %v778 = vunpack.c.0.s8 %v777
        %v779 = vlaneseq
        %v780 = vshrl.u32 %v779, 7
        %v781 = vsub.s32 %v778, %v780
        %v782 = vrot.slane %v766, %v781
        %v784 = vunpack.c.l.s4 1966171168
        %v785 = vunpack.c.0.s8 %v784
        %v786 = vlaneseq
        %v787 = vshrl.u32 %v786, 7
        %v788 = vsub.s32 %v785, %v787
        %v789 = vrot.slane %v767, %v788
        %v791 = vunpack.c.l.s4 1966171168
        %v792 = vunpack.c.0.s8 %v791
        %v793 = vlaneseq
        %v794 = vshrl.u32 %v793, 7
        %v795 = vsub.s32 %v792, %v794
        %v796 = vrot.slane %v768, %v795
        %v797 = vcombine.high %v775, %v775
        %v798 = vcombine.high %v782, %v782
        %v799 = vcombine.high %v789, %v789
        %v800 = vcombine.high %v796, %v796
        %v801 = vcombine.high %v241, %v241
        %v803 = vunpack.c.l.s4 1966171168
        %v804 = vunpack.c.0.s8 %v803
        %v805 = vlaneseq
        %v806 = vshrl.u32 %v805, 7
        %v807 = vsub.s32 %v804, %v806
        %v808 = vrot.slane %v241, %v807
        %v810 = vunpack.c.l.s4 1966171168
        %v811 = vunpack.c.0.s8 %v810
        %v812 = vlaneseq
        %v813 = vshrl.u32 %v812, 7
        %v814 = vsub.s32 %v811, %v813
        %v815 = vrot.slane %v801, %v814
        %v816 = vcombine.high %v808, %v808
        %v817 = vcombine.high %v815, %v815
        %v819 = vunpack.c.l.s4 1966171168
        %v820 = vunpack.c.0.s8 %v819
        %v821 = vlaneseq
        %v822 = vshrl.u32 %v821, 7
        %v823 = vsub.s32 %v820, %v822
        %v824 = vrot.slane %v808, %v823
        %v826 = vunpack.c.l.s4 1966171168
        %v827 = vunpack.c.0.s8 %v826
        %v828 = vlaneseq
        %v829 = vshrl.u32 %v828, 7
        %v830 = vsub.s32 %v827, %v829
        %v831 = vrot.slane %v815, %v830
        %v833 = vunpack.c.l.s4 1966171168
        %v834 = vunpack.c.0.s8 %v833
        %v835 = vlaneseq
        %v836 = vshrl.u32 %v835, 7
        %v837 = vsub.s32 %v834, %v836
        %v838 = vrot.slane %v816, %v837
        %v840 = vunpack.c.l.s4 1966171168
        %v841 = vunpack.c.0.s8 %v840
        %v842 = vlaneseq
        %v843 = vshrl.u32 %v842, 7
        %v844 = vsub.s32 %v841, %v843
        %v845 = vrot.slane %v817, %v844
        %v846 = vcombine.high %v824, %v824
        %v847 = vcombine.high %v831, %v831
        %v848 = vcombine.high %v838, %v838
        %v849 = vcombine.high %v845, %v845
        %v850 = vcombine.high %v242, %v242
        %v852 = vunpack.c.l.s4 1966171168
        %v853 = vunpack.c.0.s8 %v852
        %v854 = vlaneseq
        %v855 = vshrl.u32 %v854, 7
        %v856 = vsub.s32 %v853, %v855
        %v857 = vrot.slane %v242, %v856
        %v859 = vunpack.c.l.s4 1966171168
        %v860 = vunpack.c.0.s8 %v859
        %v861 = vlaneseq
        %v862 = vshrl.u32 %v861, 7
        %v863 = vsub.s32 %v860, %v862
        %v864 = vrot.slane %v850, %v863
        %v865 = vcombine.high %v857, %v857
        %v866 = vcombine.high %v864, %v864
        %v868 = vunpack.c.l.s4 1966171168
        %v869 = vunpack.c.0.s8 %v868
        %v870 = vlaneseq
        %v871 = vshrl.u32 %v870, 7
        %v872 = vsub.s32 %v869, %v871
        %v873 = vrot.slane %v857, %v872
        %v875 = vunpack.c.l.s4 1966171168
        %v876 = vunpack.c.0.s8 %v875
        %v877 = vlaneseq
        %v878 = vshrl.u32 %v877, 7
        %v879 = vsub.s32 %v876, %v878
        %v880 = vrot.slane %v864, %v879
        %v882 = vunpack.c.l.s4 1966171168
        %v883 = vunpack.c.0.s8 %v882
        %v884 = vlaneseq
        %v885 = vshrl.u32 %v884, 7
        %v886 = vsub.s32 %v883, %v885
        %v887 = vrot.slane %v865, %v886
        %v889 = vunpack.c.l.s4 1966171168
        %v890 = vunpack.c.0.s8 %v889
        %v891 = vlaneseq
        %v892 = vshrl.u32 %v891, 7
        %v893 = vsub.s32 %v890, %v892
        %v894 = vrot.slane %v866, %v893
        %v895 = vcombine.high %v873, %v873
        %v896 = vcombine.high %v880, %v880
        %v897 = vcombine.high %v887, %v887
        %v898 = vcombine.high %v894, %v894
        %v899 = vcombine.high %v243, %v243
        %v901 = vunpack.c.l.s4 1966171168
        %v902 = vunpack.c.0.s8 %v901
        %v903 = vlaneseq
        %v904 = vshrl.u32 %v903, 7
        %v905 = vsub.s32 %v902, %v904
        %v906 = vrot.slane %v243, %v905
        %v908 = vunpack.c.l.s4 1966171168
        %v909 = vunpack.c.0.s8 %v908
        %v910 = vlaneseq
        %v911 = vshrl.u32 %v910, 7
        %v912 = vsub.s32 %v909, %v911
        %v913 = vrot.slane %v899, %v912
        %v914 = vcombine.high %v906, %v906
        %v915 = vcombine.high %v913, %v913
        %v917 = vunpack.c.l.s4 1966171168
        %v918 = vunpack.c.0.s8 %v917
        %v919 = vlaneseq
        %v920 = vshrl.u32 %v919, 7
        %v921 = vsub.s32 %v918, %v920
        %v922 = vrot.slane %v906, %v921
        %v924 = vunpack.c.l.s4 1966171168
        %v925 = vunpack.c.0.s8 %v924
        %v926 = vlaneseq
        %v927 = vshrl.u32 %v926, 7
        %v928 = vsub.s32 %v925, %v927
        %v929 = vrot.slane %v913, %v928
        %v931 = vunpack.c.l.s4 1966171168
        %v932 = vunpack.c.0.s8 %v931
        %v933 = vlaneseq
        %v934 = vshrl.u32 %v933, 7
        %v935 = vsub.s32 %v932, %v934
        %v936 = vrot.slane %v914, %v935
        %v938 = vunpack.c.l.s4 1966171168
        %v939 = vunpack.c.0.s8 %v938
        %v940 = vlaneseq
        %v941 = vshrl.u32 %v940, 7
        %v942 = vsub.s32 %v939, %v941
        %v943 = vrot.slane %v915, %v942
        %v944 = vcombine.high %v922, %v922
        %v945 = vcombine.high %v929, %v929
        %v946 = vcombine.high %v936, %v936
        %v947 = vcombine.high %v943, %v943
        %v948 = vcombine.high %v244, %v244
        %v950 = vunpack.c.l.s4 1966171168
        %v951 = vunpack.c.0.s8 %v950
        %v952 = vlaneseq
        %v953 = vshrl.u32 %v952, 7
        %v954 = vsub.s32 %v951, %v953
        %v955 = vrot.slane %v244, %v954
        %v957 = vunpack.c.l.s4 1966171168
        %v958 = vunpack.c.0.s8 %v957
        %v959 = vlaneseq
        %v960 = vshrl.u32 %v959, 7
        %v961 = vsub.s32 %v958, %v960
        %v962 = vrot.slane %v948, %v961
        %v963 = vcombine.high %v955, %v955
        %v964 = vcombine.high %v962, %v962
        %v966 = vunpack.c.l.s4 1966171168
        %v967 = vunpack.c.0.s8 %v966
        %v968 = vlaneseq
        %v969 = vshrl.u32 %v968, 7
        %v970 = vsub.s32 %v967, %v969
        %v971 = vrot.slane %v955, %v970
        %v973 = vunpack.c.l.s4 1966171168
        %v974 = vunpack.c.0.s8 %v973
        %v975 = vlaneseq
        %v976 = vshrl.u32 %v975, 7
        %v977 = vsub.s32 %v974, %v976
        %v978 = vrot.slane %v962, %v977
        %v980 = vunpack.c.l.s4 1966171168
        %v981 = vunpack.c.0.s8 %v980
        %v982 = vlaneseq
        %v983 = vshrl.u32 %v982, 7
        %v984 = vsub.s32 %v981, %v983
        %v985 = vrot.slane %v963, %v984
        %v987 = vunpack.c.l.s4 1966171168
        %v988 = vunpack.c.0.s8 %v987
        %v989 = vlaneseq
        %v990 = vshrl.u32 %v989, 7
        %v991 = vsub.s32 %v988, %v990
        %v992 = vrot.slane %v964, %v991
        %v993 = vcombine.high %v971, %v971
        %v994 = vcombine.high %v978, %v978
        %v995 = vcombine.high %v985, %v985
        %v996 = vcombine.high %v992, %v992
        %v997 = vcombine.high %v245, %v245
        %v999 = vunpack.c.l.s4 1966171168
        %v1000 = vunpack.c.0.s8 %v999
        %v1001 = vlaneseq
        %v1002 = vshrl.u32 %v1001, 7
        %v1003 = vsub.s32 %v1000, %v1002
        %v1004 = vrot.slane %v245, %v1003
        %v1006 = vunpack.c.l.s4 1966171168
        %v1007 = vunpack.c.0.s8 %v1006
        %v1008 = vlaneseq
        %v1009 = vshrl.u32 %v1008, 7
        %v1010 = vsub.s32 %v1007, %v1009
        %v1011 = vrot.slane %v997, %v1010
        %v1012 = vcombine.high %v1004, %v1004
        %v1013 = vcombine.high %v1011, %v1011
        %v1015 = vunpack.c.l.s4 1966171168
        %v1016 = vunpack.c.0.s8 %v1015
        %v1017 = vlaneseq
        %v1018 = vshrl.u32 %v1017, 7
        %v1019 = vsub.s32 %v1016, %v1018
        %v1020 = vrot.slane %v1004, %v1019
        %v1022 = vunpack.c.l.s4 1966171168
        %v1023 = vunpack.c.0.s8 %v1022
        %v1024 = vlaneseq
        %v1025 = vshrl.u32 %v1024, 7
        %v1026 = vsub.s32 %v1023, %v1025
        %v1027 = vrot.slane %v1011, %v1026
        %v1029 = vunpack.c.l.s4 1966171168
        %v1030 = vunpack.c.0.s8 %v1029
        %v1031 = vlaneseq
        %v1032 = vshrl.u32 %v1031, 7
        %v1033 = vsub.s32 %v1030, %v1032
        %v1034 = vrot.slane %v1012, %v1033
        %v1036 = vunpack.c.l.s4 1966171168
        %v1037 = vunpack.c.0.s8 %v1036
        %v1038 = vlaneseq
        %v1039 = vshrl.u32 %v1038, 7
        %v1040 = vsub.s32 %v1037, %v1039
        %v1041 = vrot.slane %v1013, %v1040
        %v1042 = vcombine.high %v1020, %v1020
        %v1043 = vcombine.high %v1027, %v1027
        %v1044 = vcombine.high %v1034, %v1034
        %v1045 = vcombine.high %v1041, %v1041
        %v1046 = vcombine.high %v246, %v246
        %v1048 = vunpack.c.l.s4 1966171168
        %v1049 = vunpack.c.0.s8 %v1048
        %v1050 = vlaneseq
        %v1051 = vshrl.u32 %v1050, 7
        %v1052 = vsub.s32 %v1049, %v1051
        %v1053 = vrot.slane %v246, %v1052
        %v1055 = vunpack.c.l.s4 1966171168
        %v1056 = vunpack.c.0.s8 %v1055
        %v1057 = vlaneseq
        %v1058 = vshrl.u32 %v1057, 7
        %v1059 = vsub.s32 %v1056, %v1058
        %v1060 = vrot.slane %v1046, %v1059
        %v1061 = vcombine.high %v1053, %v1053
        %v1062 = vcombine.high %v1060, %v1060
        %v1064 = vunpack.c.l.s4 1966171168
        %v1065 = vunpack.c.0.s8 %v1064
        %v1066 = vlaneseq
        %v1067 = vshrl.u32 %v1066, 7
        %v1068 = vsub.s32 %v1065, %v1067
        %v1069 = vrot.slane %v1053, %v1068
        %v1071 = vunpack.c.l.s4 1966171168
        %v1072 = vunpack.c.0.s8 %v1071
        %v1073 = vlaneseq
        %v1074 = vshrl.u32 %v1073, 7
        %v1075 = vsub.s32 %v1072, %v1074
        %v1076 = vrot.slane %v1060, %v1075
        %v1078 = vunpack.c.l.s4 1966171168
        %v1079 = vunpack.c.0.s8 %v1078
        %v1080 = vlaneseq
        %v1081 = vshrl.u32 %v1080, 7
        %v1082 = vsub.s32 %v1079, %v1081
        %v1083 = vrot.slane %v1061, %v1082
        %v1085 = vunpack.c.l.s4 1966171168
        %v1086 = vunpack.c.0.s8 %v1085
        %v1087 = vlaneseq
        %v1088 = vshrl.u32 %v1087, 7
        %v1089 = vsub.s32 %v1086, %v1088
        %v1090 = vrot.slane %v1062, %v1089
        %v1091 = vcombine.high %v1069, %v1069
        %v1092 = vcombine.high %v1076, %v1076
        %v1093 = vcombine.high %v1083, %v1083
        %v1094 = vcombine.high %v1090, %v1090
        %v1095 = vcombine.high %v247, %v247
        %v1097 = vunpack.c.l.s4 1966171168
        %v1098 = vunpack.c.0.s8 %v1097
        %v1099 = vlaneseq
        %v1100 = vshrl.u32 %v1099, 7
        %v1101 = vsub.s32 %v1098, %v1100
        %v1102 = vrot.slane %v247, %v1101
        %v1104 = vunpack.c.l.s4 1966171168
        %v1105 = vunpack.c.0.s8 %v1104
        %v1106 = vlaneseq
        %v1107 = vshrl.u32 %v1106, 7
        %v1108 = vsub.s32 %v1105, %v1107
        %v1109 = vrot.slane %v1095, %v1108
        %v1110 = vcombine.high %v1102, %v1102
        %v1111 = vcombine.high %v1109, %v1109
        %v1113 = vunpack.c.l.s4 1966171168
        %v1114 = vunpack.c.0.s8 %v1113
        %v1115 = vlaneseq
        %v1116 = vshrl.u32 %v1115, 7
        %v1117 = vsub.s32 %v1114, %v1116
        %v1118 = vrot.slane %v1102, %v1117
        %v1120 = vunpack.c.l.s4 1966171168
        %v1121 = vunpack.c.0.s8 %v1120
        %v1122 = vlaneseq
        %v1123 = vshrl.u32 %v1122, 7
        %v1124 = vsub.s32 %v1121, %v1123
        %v1125 = vrot.slane %v1109, %v1124
        %v1127 = vunpack.c.l.s4 1966171168
        %v1128 = vunpack.c.0.s8 %v1127
        %v1129 = vlaneseq
        %v1130 = vshrl.u32 %v1129, 7
        %v1131 = vsub.s32 %v1128, %v1130
        %v1132 = vrot.slane %v1110, %v1131
        %v1134 = vunpack.c.l.s4 1966171168
        %v1135 = vunpack.c.0.s8 %v1134
        %v1136 = vlaneseq
        %v1137 = vshrl.u32 %v1136, 7
        %v1138 = vsub.s32 %v1135, %v1137
        %v1139 = vrot.slane %v1111, %v1138
        %v1140 = vcombine.high %v1118, %v1118
        %v1141 = vcombine.high %v1125, %v1125
        %v1142 = vcombine.high %v1132, %v1132
        %v1143 = vcombine.high %v1139, %v1139
        %v1144 = vcombine.high %v248, %v248
        %v1146 = vunpack.c.l.s4 1966171168
        %v1147 = vunpack.c.0.s8 %v1146
        %v1148 = vlaneseq
        %v1149 = vshrl.u32 %v1148, 7
        %v1150 = vsub.s32 %v1147, %v1149
        %v1151 = vrot.slane %v248, %v1150
        %v1153 = vunpack.c.l.s4 1966171168
        %v1154 = vunpack.c.0.s8 %v1153
        %v1155 = vlaneseq
        %v1156 = vshrl.u32 %v1155, 7
        %v1157 = vsub.s32 %v1154, %v1156
        %v1158 = vrot.slane %v1144, %v1157
        %v1159 = vcombine.high %v1151, %v1151
        %v1160 = vcombine.high %v1158, %v1158
        %v1162 = vunpack.c.l.s4 1966171168
        %v1163 = vunpack.c.0.s8 %v1162
        %v1164 = vlaneseq
        %v1165 = vshrl.u32 %v1164, 7
        %v1166 = vsub.s32 %v1163, %v1165
        %v1167 = vrot.slane %v1151, %v1166
        %v1169 = vunpack.c.l.s4 1966171168
        %v1170 = vunpack.c.0.s8 %v1169
        %v1171 = vlaneseq
        %v1172 = vshrl.u32 %v1171, 7
        %v1173 = vsub.s32 %v1170, %v1172
        %v1174 = vrot.slane %v1158, %v1173
        %v1176 = vunpack.c.l.s4 1966171168
        %v1177 = vunpack.c.0.s8 %v1176
        %v1178 = vlaneseq
        %v1179 = vshrl.u32 %v1178, 7
        %v1180 = vsub.s32 %v1177, %v1179
        %v1181 = vrot.slane %v1159, %v1180
        %v1183 = vunpack.c.l.s4 1966171168
        %v1184 = vunpack.c.0.s8 %v1183
        %v1185 = vlaneseq
        %v1186 = vshrl.u32 %v1185, 7
        %v1187 = vsub.s32 %v1184, %v1186
        %v1188 = vrot.slane %v1160, %v1187
        %v1189 = vcombine.high %v1167, %v1167
        %v1190 = vcombine.high %v1174, %v1174
        %v1191 = vcombine.high %v1181, %v1181
        %v1192 = vcombine.high %v1188, %v1188
        %v1193 = vcombine.high %v249, %v249
        %v1195 = vunpack.c.l.s4 1966171168
        %v1196 = vunpack.c.0.s8 %v1195
        %v1197 = vlaneseq
        %v1198 = vshrl.u32 %v1197, 7
        %v1199 = vsub.s32 %v1196, %v1198
        %v1200 = vrot.slane %v249, %v1199
        %v1202 = vunpack.c.l.s4 1966171168
        %v1203 = vunpack.c.0.s8 %v1202
        %v1204 = vlaneseq
        %v1205 = vshrl.u32 %v1204, 7
        %v1206 = vsub.s32 %v1203, %v1205
        %v1207 = vrot.slane %v1193, %v1206
        %v1208 = vcombine.high %v1200, %v1200
        %v1209 = vcombine.high %v1207, %v1207
        %v1211 = vunpack.c.l.s4 1966171168
        %v1212 = vunpack.c.0.s8 %v1211
        %v1213 = vlaneseq
        %v1214 = vshrl.u32 %v1213, 7
        %v1215 = vsub.s32 %v1212, %v1214
        %v1216 = vrot.slane %v1200, %v1215
        %v1218 = vunpack.c.l.s4 1966171168
        %v1219 = vunpack.c.0.s8 %v1218
        %v1220 = vlaneseq
        %v1221 = vshrl.u32 %v1220, 7
        %v1222 = vsub.s32 %v1219, %v1221
        %v1223 = vrot.slane %v1207, %v1222
        %v1225 = vunpack.c.l.s4 1966171168
        %v1226 = vunpack.c.0.s8 %v1225
        %v1227 = vlaneseq
        %v1228 = vshrl.u32 %v1227, 7
        %v1229 = vsub.s32 %v1226, %v1228
        %v1230 = vrot.slane %v1208, %v1229
        %v1232 = vunpack.c.l.s4 1966171168
        %v1233 = vunpack.c.0.s8 %v1232
        %v1234 = vlaneseq
        %v1235 = vshrl.u32 %v1234, 7
        %v1236 = vsub.s32 %v1233, %v1235
        %v1237 = vrot.slane %v1209, %v1236
        %v1238 = vcombine.high %v1216, %v1216
        %v1239 = vcombine.high %v1223, %v1223
        %v1240 = vcombine.high %v1230, %v1230
        %v1241 = vcombine.high %v1237, %v1237
        %v1242 = vcombine.high %v250, %v250
        %v1244 = vunpack.c.l.s4 1966171168
        %v1245 = vunpack.c.0.s8 %v1244
        %v1246 = vlaneseq
        %v1247 = vshrl.u32 %v1246, 7
        %v1248 = vsub.s32 %v1245, %v1247
        %v1249 = vrot.slane %v250, %v1248
        %v1251 = vunpack.c.l.s4 1966171168
        %v1252 = vunpack.c.0.s8 %v1251
        %v1253 = vlaneseq
        %v1254 = vshrl.u32 %v1253, 7
        %v1255 = vsub.s32 %v1252, %v1254
        %v1256 = vrot.slane %v1242, %v1255
        %v1257 = vcombine.high %v1249, %v1249
        %v1258 = vcombine.high %v1256, %v1256
        %v1260 = vunpack.c.l.s4 1966171168
        %v1261 = vunpack.c.0.s8 %v1260
        %v1262 = vlaneseq
        %v1263 = vshrl.u32 %v1262, 7
        %v1264 = vsub.s32 %v1261, %v1263
        %v1265 = vrot.slane %v1249, %v1264
        %v1267 = vunpack.c.l.s4 1966171168
        %v1268 = vunpack.c.0.s8 %v1267
        %v1269 = vlaneseq
        %v1270 = vshrl.u32 %v1269, 7
        %v1271 = vsub.s32 %v1268, %v1270
        %v1272 = vrot.slane %v1256, %v1271
        %v1274 = vunpack.c.l.s4 1966171168
        %v1275 = vunpack.c.0.s8 %v1274
        %v1276 = vlaneseq
        %v1277 = vshrl.u32 %v1276, 7
        %v1278 = vsub.s32 %v1275, %v1277
        %v1279 = vrot.slane %v1257, %v1278
        %v1281 = vunpack.c.l.s4 1966171168
        %v1282 = vunpack.c.0.s8 %v1281
        %v1283 = vlaneseq
        %v1284 = vshrl.u32 %v1283, 7
        %v1285 = vsub.s32 %v1282, %v1284
        %v1286 = vrot.slane %v1258, %v1285
        %v1287 = vcombine.high %v1265, %v1265
        %v1288 = vcombine.high %v1272, %v1272
        %v1289 = vcombine.high %v1279, %v1279
        %v1290 = vcombine.high %v1286, %v1286
        %v1291 = vcombine.high %v251, %v251
        %v1293 = vunpack.c.l.s4 1966171168
        %v1294 = vunpack.c.0.s8 %v1293
        %v1295 = vlaneseq
        %v1296 = vshrl.u32 %v1295, 7
        %v1297 = vsub.s32 %v1294, %v1296
        %v1298 = vrot.slane %v251, %v1297
        %v1300 = vunpack.c.l.s4 1966171168
        %v1301 = vunpack.c.0.s8 %v1300
        %v1302 = vlaneseq
        %v1303 = vshrl.u32 %v1302, 7
        %v1304 = vsub.s32 %v1301, %v1303
        %v1305 = vrot.slane %v1291, %v1304
        %v1306 = vcombine.high %v1298, %v1298
        %v1307 = vcombine.high %v1305, %v1305
        %v1309 = vunpack.c.l.s4 1966171168
        %v1310 = vunpack.c.0.s8 %v1309
        %v1311 = vlaneseq
        %v1312 = vshrl.u32 %v1311, 7
        %v1313 = vsub.s32 %v1310, %v1312
        %v1314 = vrot.slane %v1298, %v1313
        %v1316 = vunpack.c.l.s4 1966171168
        %v1317 = vunpack.c.0.s8 %v1316
        %v1318 = vlaneseq
        %v1319 = vshrl.u32 %v1318, 7
        %v1320 = vsub.s32 %v1317, %v1319
        %v1321 = vrot.slane %v1305, %v1320
        %v1323 = vunpack.c.l.s4 1966171168
        %v1324 = vunpack.c.0.s8 %v1323
        %v1325 = vlaneseq
        %v1326 = vshrl.u32 %v1325, 7
        %v1327 = vsub.s32 %v1324, %v1326
        %v1328 = vrot.slane %v1306, %v1327
        %v1330 = vunpack.c.l.s4 1966171168
        %v1331 = vunpack.c.0.s8 %v1330
        %v1332 = vlaneseq
        %v1333 = vshrl.u32 %v1332, 7
        %v1334 = vsub.s32 %v1331, %v1333
        %v1335 = vrot.slane %v1307, %v1334
        %v1336 = vcombine.high %v1314, %v1314
        %v1337 = vcombine.high %v1321, %v1321
        %v1338 = vcombine.high %v1328, %v1328
        %v1339 = vcombine.high %v1335, %v1335
        %v1340 = vcombine.high %v252, %v252
        %v1342 = vunpack.c.l.s4 1966171168
        %v1343 = vunpack.c.0.s8 %v1342
        %v1344 = vlaneseq
        %v1345 = vshrl.u32 %v1344, 7
        %v1346 = vsub.s32 %v1343, %v1345
        %v1347 = vrot.slane %v252, %v1346
        %v1349 = vunpack.c.l.s4 1966171168
        %v1350 = vunpack.c.0.s8 %v1349
        %v1351 = vlaneseq
        %v1352 = vshrl.u32 %v1351, 7
        %v1353 = vsub.s32 %v1350, %v1352
        %v1354 = vrot.slane %v1340, %v1353
        %v1355 = vcombine.high %v1347, %v1347
        %v1356 = vcombine.high %v1354, %v1354
        %v1358 = vunpack.c.l.s4 1966171168
        %v1359 = vunpack.c.0.s8 %v1358
        %v1360 = vlaneseq
        %v1361 = vshrl.u32 %v1360, 7
        %v1362 = vsub.s32 %v1359, %v1361
        %v1363 = vrot.slane %v1347, %v1362
        %v1365 = vunpack.c.l.s4 1966171168
        %v1366 = vunpack.c.0.s8 %v1365
        %v1367 = vlaneseq
        %v1368 = vshrl.u32 %v1367, 7
        %v1369 = vsub.s32 %v1366, %v1368
        %v1370 = vrot.slane %v1354, %v1369
        %v1372 = vunpack.c.l.s4 1966171168
        %v1373 = vunpack.c.0.s8 %v1372
        %v1374 = vlaneseq
        %v1375 = vshrl.u32 %v1374, 7
        %v1376 = vsub.s32 %v1373, %v1375
        %v1377 = vrot.slane %v1355, %v1376
        %v1379 = vunpack.c.l.s4 1966171168
        %v1380 = vunpack.c.0.s8 %v1379
        %v1381 = vlaneseq
        %v1382 = vshrl.u32 %v1381, 7
        %v1383 = vsub.s32 %v1380, %v1382
        %v1384 = vrot.slane %v1356, %v1383
        %v1385 = vcombine.high %v1363, %v1363
        %v1386 = vcombine.high %v1370, %v1370
        %v1387 = vcombine.high %v1377, %v1377
        %v1388 = vcombine.high %v1384, %v1384
        %v1389 = vcombine.high %v253, %v253
        %v1391 = vunpack.c.l.s4 1966171168
        %v1392 = vunpack.c.0.s8 %v1391
        %v1393 = vlaneseq
        %v1394 = vshrl.u32 %v1393, 7
        %v1395 = vsub.s32 %v1392, %v1394
        %v1396 = vrot.slane %v253, %v1395
        %v1398 = vunpack.c.l.s4 1966171168
        %v1399 = vunpack.c.0.s8 %v1398
        %v1400 = vlaneseq
        %v1401 = vshrl.u32 %v1400, 7
        %v1402 = vsub.s32 %v1399, %v1401
        %v1403 = vrot.slane %v1389, %v1402
        %v1404 = vcombine.high %v1396, %v1396
        %v1405 = vcombine.high %v1403, %v1403
        %v1407 = vunpack.c.l.s4 1966171168
        %v1408 = vunpack.c.0.s8 %v1407
        %v1409 = vlaneseq
        %v1410 = vshrl.u32 %v1409, 7
        %v1411 = vsub.s32 %v1408, %v1410
        %v1412 = vrot.slane %v1396, %v1411
        %v1414 = vunpack.c.l.s4 1966171168
        %v1415 = vunpack.c.0.s8 %v1414
        %v1416 = vlaneseq
        %v1417 = vshrl.u32 %v1416, 7
        %v1418 = vsub.s32 %v1415, %v1417
        %v1419 = vrot.slane %v1403, %v1418
        %v1421 = vunpack.c.l.s4 1966171168
        %v1422 = vunpack.c.0.s8 %v1421
        %v1423 = vlaneseq
        %v1424 = vshrl.u32 %v1423, 7
        %v1425 = vsub.s32 %v1422, %v1424
        %v1426 = vrot.slane %v1404, %v1425
        %v1428 = vunpack.c.l.s4 1966171168
        %v1429 = vunpack.c.0.s8 %v1428
        %v1430 = vlaneseq
        %v1431 = vshrl.u32 %v1430, 7
        %v1432 = vsub.s32 %v1429, %v1431
        %v1433 = vrot.slane %v1405, %v1432
        %v1434 = vcombine.high %v1412, %v1412
        %v1435 = vcombine.high %v1419, %v1419
        %v1436 = vcombine.high %v1426, %v1426
        %v1437 = vcombine.high %v1433, %v1433
        %v1438 = vcombine.high %v254, %v254
        %v1440 = vunpack.c.l.s4 1966171168
        %v1441 = vunpack.c.0.s8 %v1440
        %v1442 = vlaneseq
        %v1443 = vshrl.u32 %v1442, 7
        %v1444 = vsub.s32 %v1441, %v1443
        %v1445 = vrot.slane %v254, %v1444
        %v1447 = vunpack.c.l.s4 1966171168
        %v1448 = vunpack.c.0.s8 %v1447
        %v1449 = vlaneseq
        %v1450 = vshrl.u32 %v1449, 7
        %v1451 = vsub.s32 %v1448, %v1450
        %v1452 = vrot.slane %v1438, %v1451
        %v1453 = vcombine.high %v1445, %v1445
        %v1454 = vcombine.high %v1452, %v1452
        %v1456 = vunpack.c.l.s4 1966171168
        %v1457 = vunpack.c.0.s8 %v1456
        %v1458 = vlaneseq
        %v1459 = vshrl.u32 %v1458, 7
        %v1460 = vsub.s32 %v1457, %v1459
        %v1461 = vrot.slane %v1445, %v1460
        %v1463 = vunpack.c.l.s4 1966171168
        %v1464 = vunpack.c.0.s8 %v1463
        %v1465 = vlaneseq
        %v1466 = vshrl.u32 %v1465, 7
        %v1467 = vsub.s32 %v1464, %v1466
        %v1468 = vrot.slane %v1452, %v1467
        %v1470 = vunpack.c.l.s4 1966171168
        %v1471 = vunpack.c.0.s8 %v1470
        %v1472 = vlaneseq
        %v1473 = vshrl.u32 %v1472, 7
        %v1474 = vsub.s32 %v1471, %v1473
        %v1475 = vrot.slane %v1453, %v1474
        %v1477 = vunpack.c.l.s4 1966171168
        %v1478 = vunpack.c.0.s8 %v1477
        %v1479 = vlaneseq
        %v1480 = vshrl.u32 %v1479, 7
        %v1481 = vsub.s32 %v1478, %v1480
        %v1482 = vrot.slane %v1454, %v1481
        %v1483 = vcombine.high %v1461, %v1461
        %v1484 = vcombine.high %v1468, %v1468
        %v1485 = vcombine.high %v1475, %v1475
        %v1486 = vcombine.high %v1482, %v1482
        %v1487 = vcombine.high %v255, %v255
        %v1489 = vunpack.c.l.s4 1966171168
        %v1490 = vunpack.c.0.s8 %v1489
        %v1491 = vlaneseq
        %v1492 = vshrl.u32 %v1491, 7
        %v1493 = vsub.s32 %v1490, %v1492
        %v1494 = vrot.slane %v255, %v1493
        %v1496 = vunpack.c.l.s4 1966171168
        %v1497 = vunpack.c.0.s8 %v1496
        %v1498 = vlaneseq
        %v1499 = vshrl.u32 %v1498, 7
        %v1500 = vsub.s32 %v1497, %v1499
        %v1501 = vrot.slane %v1487, %v1500
        %v1502 = vcombine.high %v1494, %v1494
        %v1503 = vcombine.high %v1501, %v1501
        %v1505 = vunpack.c.l.s4 1966171168
        %v1506 = vunpack.c.0.s8 %v1505
        %v1507 = vlaneseq
        %v1508 = vshrl.u32 %v1507, 7
        %v1509 = vsub.s32 %v1506, %v1508
        %v1510 = vrot.slane %v1494, %v1509
        %v1512 = vunpack.c.l.s4 1966171168
        %v1513 = vunpack.c.0.s8 %v1512
        %v1514 = vlaneseq
        %v1515 = vshrl.u32 %v1514, 7
        %v1516 = vsub.s32 %v1513, %v1515
        %v1517 = vrot.slane %v1501, %v1516
        %v1519 = vunpack.c.l.s4 1966171168
        %v1520 = vunpack.c.0.s8 %v1519
        %v1521 = vlaneseq
        %v1522 = vshrl.u32 %v1521, 7
        %v1523 = vsub.s32 %v1520, %v1522
        %v1524 = vrot.slane %v1502, %v1523
        %v1526 = vunpack.c.l.s4 1966171168
        %v1527 = vunpack.c.0.s8 %v1526
        %v1528 = vlaneseq
        %v1529 = vshrl.u32 %v1528, 7
        %v1530 = vsub.s32 %v1527, %v1529
        %v1531 = vrot.slane %v1503, %v1530
        %v1532 = vcombine.high %v1510, %v1510
        %v1533 = vcombine.high %v1517, %v1517
        %v1534 = vcombine.high %v1524, %v1524
        %v1535 = vcombine.high %v1531, %v1531
        %v1536 = vcombine.high %v256, %v256
        %v1538 = vunpack.c.l.s4 1966171168
        %v1539 = vunpack.c.0.s8 %v1538
        %v1540 = vlaneseq
        %v1541 = vshrl.u32 %v1540, 7
        %v1542 = vsub.s32 %v1539, %v1541
        %v1543 = vrot.slane %v256, %v1542
        %v1545 = vunpack.c.l.s4 1966171168
        %v1546 = vunpack.c.0.s8 %v1545
        %v1547 = vlaneseq
        %v1548 = vshrl.u32 %v1547, 7
        %v1549 = vsub.s32 %v1546, %v1548
        %v1550 = vrot.slane %v1536, %v1549
        %v1551 = vcombine.high %v1543, %v1543
        %v1552 = vcombine.high %v1550, %v1550
        %v1554 = vunpack.c.l.s4 1966171168
        %v1555 = vunpack.c.0.s8 %v1554
        %v1556 = vlaneseq
        %v1557 = vshrl.u32 %v1556, 7
        %v1558 = vsub.s32 %v1555, %v1557
        %v1559 = vrot.slane %v1543, %v1558
        %v1561 = vunpack.c.l.s4 1966171168
        %v1562 = vunpack.c.0.s8 %v1561
        %v1563 = vlaneseq
        %v1564 = vshrl.u32 %v1563, 7
        %v1565 = vsub.s32 %v1562, %v1564
        %v1566 = vrot.slane %v1550, %v1565
        %v1568 = vunpack.c.l.s4 1966171168
        %v1569 = vunpack.c.0.s8 %v1568
        %v1570 = vlaneseq
        %v1571 = vshrl.u32 %v1570, 7
        %v1572 = vsub.s32 %v1569, %v1571
        %v1573 = vrot.slane %v1551, %v1572
        %v1575 = vunpack.c.l.s4 1966171168
        %v1576 = vunpack.c.0.s8 %v1575
        %v1577 = vlaneseq
        %v1578 = vshrl.u32 %v1577, 7
        %v1579 = vsub.s32 %v1576, %v1578
        %v1580 = vrot.slane %v1552, %v1579
        %v1581 = vcombine.high %v1559, %v1559
        %v1582 = vcombine.high %v1566, %v1566
        %v1583 = vcombine.high %v1573, %v1573
        %v1584 = vcombine.high %v1580, %v1580
        %v1585 = vcombine.high %v257, %v257
        %v1587 = vunpack.c.l.s4 1966171168
        %v1588 = vunpack.c.0.s8 %v1587
        %v1589 = vlaneseq
        %v1590 = vshrl.u32 %v1589, 7
        %v1591 = vsub.s32 %v1588, %v1590
        %v1592 = vrot.slane %v257, %v1591
        %v1594 = vunpack.c.l.s4 1966171168
        %v1595 = vunpack.c.0.s8 %v1594
        %v1596 = vlaneseq
        %v1597 = vshrl.u32 %v1596, 7
        %v1598 = vsub.s32 %v1595, %v1597
        %v1599 = vrot.slane %v1585, %v1598
        %v1600 = vcombine.high %v1592, %v1592
        %v1601 = vcombine.high %v1599, %v1599
        %v1603 = vunpack.c.l.s4 1966171168
        %v1604 = vunpack.c.0.s8 %v1603
        %v1605 = vlaneseq
        %v1606 = vshrl.u32 %v1605, 7
        %v1607 = vsub.s32 %v1604, %v1606
        %v1608 = vrot.slane %v1592, %v1607
        %v1610 = vunpack.c.l.s4 1966171168
        %v1611 = vunpack.c.0.s8 %v1610
        %v1612 = vlaneseq
        %v1613 = vshrl.u32 %v1612, 7
        %v1614 = vsub.s32 %v1611, %v1613
        %v1615 = vrot.slane %v1599, %v1614
        %v1617 = vunpack.c.l.s4 1966171168
        %v1618 = vunpack.c.0.s8 %v1617
        %v1619 = vlaneseq
        %v1620 = vshrl.u32 %v1619, 7
        %v1621 = vsub.s32 %v1618, %v1620
        %v1622 = vrot.slane %v1600, %v1621
        %v1624 = vunpack.c.l.s4 1966171168
        %v1625 = vunpack.c.0.s8 %v1624
        %v1626 = vlaneseq
        %v1627 = vshrl.u32 %v1626, 7
        %v1628 = vsub.s32 %v1625, %v1627
        %v1629 = vrot.slane %v1601, %v1628
        %v1630 = vcombine.high %v1608, %v1608
        %v1631 = vcombine.high %v1615, %v1615
        %v1632 = vcombine.high %v1622, %v1622
        %v1633 = vcombine.high %v1629, %v1629
        %v1634 = vcombine.high %v258, %v258
        %v1636 = vunpack.c.l.s4 1966171168
        %v1637 = vunpack.c.0.s8 %v1636
        %v1638 = vlaneseq
        %v1639 = vshrl.u32 %v1638, 7
        %v1640 = vsub.s32 %v1637, %v1639
        %v1641 = vrot.slane %v258, %v1640
        %v1643 = vunpack.c.l.s4 1966171168
        %v1644 = vunpack.c.0.s8 %v1643
        %v1645 = vlaneseq
        %v1646 = vshrl.u32 %v1645, 7
        %v1647 = vsub.s32 %v1644, %v1646
        %v1648 = vrot.slane %v1634, %v1647
        %v1649 = vcombine.high %v1641, %v1641
        %v1650 = vcombine.high %v1648, %v1648
        %v1652 = vunpack.c.l.s4 1966171168
        %v1653 = vunpack.c.0.s8 %v1652
        %v1654 = vlaneseq
        %v1655 = vshrl.u32 %v1654, 7
        %v1656 = vsub.s32 %v1653, %v1655
        %v1657 = vrot.slane %v1641, %v1656
        %v1659 = vunpack.c.l.s4 1966171168
        %v1660 = vunpack.c.0.s8 %v1659
        %v1661 = vlaneseq
        %v1662 = vshrl.u32 %v1661, 7
        %v1663 = vsub.s32 %v1660, %v1662
        %v1664 = vrot.slane %v1648, %v1663
        %v1666 = vunpack.c.l.s4 1966171168
        %v1667 = vunpack.c.0.s8 %v1666
        %v1668 = vlaneseq
        %v1669 = vshrl.u32 %v1668, 7
        %v1670 = vsub.s32 %v1667, %v1669
        %v1671 = vrot.slane %v1649, %v1670
        %v1673 = vunpack.c.l.s4 1966171168
        %v1674 = vunpack.c.0.s8 %v1673
        %v1675 = vlaneseq
        %v1676 = vshrl.u32 %v1675, 7
        %v1677 = vsub.s32 %v1674, %v1676
        %v1678 = vrot.slane %v1650, %v1677
        %v1679 = vcombine.high %v1657, %v1657
        %v1680 = vcombine.high %v1664, %v1664
        %v1681 = vcombine.high %v1671, %v1671
        %v1682 = vcombine.high %v1678, %v1678
        %v1683 = vcombine.high %v259, %v259
        %v1685 = vunpack.c.l.s4 1966171168
        %v1686 = vunpack.c.0.s8 %v1685
        %v1687 = vlaneseq
        %v1688 = vshrl.u32 %v1687, 7
        %v1689 = vsub.s32 %v1686, %v1688
        %v1690 = vrot.slane %v259, %v1689
        %v1692 = vunpack.c.l.s4 1966171168
        %v1693 = vunpack.c.0.s8 %v1692
        %v1694 = vlaneseq
        %v1695 = vshrl.u32 %v1694, 7
        %v1696 = vsub.s32 %v1693, %v1695
        %v1697 = vrot.slane %v1683, %v1696
        %v1698 = vcombine.high %v1690, %v1690
        %v1699 = vcombine.high %v1697, %v1697
        %v1701 = vunpack.c.l.s4 1966171168
        %v1702 = vunpack.c.0.s8 %v1701
        %v1703 = vlaneseq
        %v1704 = vshrl.u32 %v1703, 7
        %v1705 = vsub.s32 %v1702, %v1704
        %v1706 = vrot.slane %v1690, %v1705
        %v1708 = vunpack.c.l.s4 1966171168
        %v1709 = vunpack.c.0.s8 %v1708
        %v1710 = vlaneseq
        %v1711 = vshrl.u32 %v1710, 7
        %v1712 = vsub.s32 %v1709, %v1711
        %v1713 = vrot.slane %v1697, %v1712
        %v1715 = vunpack.c.l.s4 1966171168
        %v1716 = vunpack.c.0.s8 %v1715
        %v1717 = vlaneseq
        %v1718 = vshrl.u32 %v1717, 7
        %v1719 = vsub.s32 %v1716, %v1718
        %v1720 = vrot.slane %v1698, %v1719
        %v1722 = vunpack.c.l.s4 1966171168
        %v1723 = vunpack.c.0.s8 %v1722
        %v1724 = vlaneseq
        %v1725 = vshrl.u32 %v1724, 7
        %v1726 = vsub.s32 %v1723, %v1725
        %v1727 = vrot.slane %v1699, %v1726
        %v1728 = vcombine.high %v1706, %v1706
        %v1729 = vcombine.high %v1713, %v1713
        %v1730 = vcombine.high %v1720, %v1720
        %v1731 = vcombine.high %v1727, %v1727
        %v1732 = vcombine.high %v260, %v260
        %v1734 = vunpack.c.l.s4 1966171168
        %v1735 = vunpack.c.0.s8 %v1734
        %v1736 = vlaneseq
        %v1737 = vshrl.u32 %v1736, 7
        %v1738 = vsub.s32 %v1735, %v1737
        %v1739 = vrot.slane %v260, %v1738
        %v1741 = vunpack.c.l.s4 1966171168
        %v1742 = vunpack.c.0.s8 %v1741
        %v1743 = vlaneseq
        %v1744 = vshrl.u32 %v1743, 7
        %v1745 = vsub.s32 %v1742, %v1744
        %v1746 = vrot.slane %v1732, %v1745
        %v1747 = vcombine.high %v1739, %v1739
        %v1748 = vcombine.high %v1746, %v1746
        %v1750 = vunpack.c.l.s4 1966171168
        %v1751 = vunpack.c.0.s8 %v1750
        %v1752 = vlaneseq
        %v1753 = vshrl.u32 %v1752, 7
        %v1754 = vsub.s32 %v1751, %v1753
        %v1755 = vrot.slane %v1739, %v1754
        %v1757 = vunpack.c.l.s4 1966171168
        %v1758 = vunpack.c.0.s8 %v1757
        %v1759 = vlaneseq
        %v1760 = vshrl.u32 %v1759, 7
        %v1761 = vsub.s32 %v1758, %v1760
        %v1762 = vrot.slane %v1746, %v1761
        %v1764 = vunpack.c.l.s4 1966171168
        %v1765 = vunpack.c.0.s8 %v1764
        %v1766 = vlaneseq
        %v1767 = vshrl.u32 %v1766, 7
        %v1768 = vsub.s32 %v1765, %v1767
        %v1769 = vrot.slane %v1747, %v1768
        %v1771 = vunpack.c.l.s4 1966171168
        %v1772 = vunpack.c.0.s8 %v1771
        %v1773 = vlaneseq
        %v1774 = vshrl.u32 %v1773, 7
        %v1775 = vsub.s32 %v1772, %v1774
        %v1776 = vrot.slane %v1748, %v1775
        %v1777 = vcombine.high %v1755, %v1755
        %v1778 = vcombine.high %v1762, %v1762
        %v1779 = vcombine.high %v1769, %v1769
        %v1780 = vcombine.high %v1776, %v1776
        %v1781 = vcombine.high %v261, %v261
        %v1783 = vunpack.c.l.s4 1966171168
        %v1784 = vunpack.c.0.s8 %v1783
        %v1785 = vlaneseq
        %v1786 = vshrl.u32 %v1785, 7
        %v1787 = vsub.s32 %v1784, %v1786
        %v1788 = vrot.slane %v261, %v1787
        %v1790 = vunpack.c.l.s4 1966171168
        %v1791 = vunpack.c.0.s8 %v1790
        %v1792 = vlaneseq
        %v1793 = vshrl.u32 %v1792, 7
        %v1794 = vsub.s32 %v1791, %v1793
        %v1795 = vrot.slane %v1781, %v1794
        %v1796 = vcombine.high %v1788, %v1788
        %v1797 = vcombine.high %v1795, %v1795
        %v1799 = vunpack.c.l.s4 1966171168
        %v1800 = vunpack.c.0.s8 %v1799
        %v1801 = vlaneseq
        %v1802 = vshrl.u32 %v1801, 7
        %v1803 = vsub.s32 %v1800, %v1802
        %v1804 = vrot.slane %v1788, %v1803
        %v1806 = vunpack.c.l.s4 1966171168
        %v1807 = vunpack.c.0.s8 %v1806
        %v1808 = vlaneseq
        %v1809 = vshrl.u32 %v1808, 7
        %v1810 = vsub.s32 %v1807, %v1809
        %v1811 = vrot.slane %v1795, %v1810
        %v1813 = vunpack.c.l.s4 1966171168
        %v1814 = vunpack.c.0.s8 %v1813
        %v1815 = vlaneseq
        %v1816 = vshrl.u32 %v1815, 7
        %v1817 = vsub.s32 %v1814, %v1816
        %v1818 = vrot.slane %v1796, %v1817
        %v1820 = vunpack.c.l.s4 1966171168
        %v1821 = vunpack.c.0.s8 %v1820
        %v1822 = vlaneseq
        %v1823 = vshrl.u32 %v1822, 7
        %v1824 = vsub.s32 %v1821, %v1823
        %v1825 = vrot.slane %v1797, %v1824
        %v1826 = vcombine.high %v1804, %v1804
        %v1827 = vcombine.high %v1811, %v1811
        %v1828 = vcombine.high %v1818, %v1818
        %v1829 = vcombine.high %v1825, %v1825
        %v1830 = vcombine.high %v262, %v262
        %v1832 = vunpack.c.l.s4 1966171168
        %v1833 = vunpack.c.0.s8 %v1832
        %v1834 = vlaneseq
        %v1835 = vshrl.u32 %v1834, 7
        %v1836 = vsub.s32 %v1833, %v1835
        %v1837 = vrot.slane %v262, %v1836
        %v1839 = vunpack.c.l.s4 1966171168
        %v1840 = vunpack.c.0.s8 %v1839
        %v1841 = vlaneseq
        %v1842 = vshrl.u32 %v1841, 7
        %v1843 = vsub.s32 %v1840, %v1842
        %v1844 = vrot.slane %v1830, %v1843
        %v1845 = vcombine.high %v1837, %v1837
        %v1846 = vcombine.high %v1844, %v1844
        %v1848 = vunpack.c.l.s4 1966171168
        %v1849 = vunpack.c.0.s8 %v1848
        %v1850 = vlaneseq
        %v1851 = vshrl.u32 %v1850, 7
        %v1852 = vsub.s32 %v1849, %v1851
        %v1853 = vrot.slane %v1837, %v1852
        %v1855 = vunpack.c.l.s4 1966171168
        %v1856 = vunpack.c.0.s8 %v1855
        %v1857 = vlaneseq
        %v1858 = vshrl.u32 %v1857, 7
        %v1859 = vsub.s32 %v1856, %v1858
        %v1860 = vrot.slane %v1844, %v1859
        %v1862 = vunpack.c.l.s4 1966171168
        %v1863 = vunpack.c.0.s8 %v1862
        %v1864 = vlaneseq
        %v1865 = vshrl.u32 %v1864, 7
        %v1866 = vsub.s32 %v1863, %v1865
        %v1867 = vrot.slane %v1845, %v1866
        %v1869 = vunpack.c.l.s4 1966171168
        %v1870 = vunpack.c.0.s8 %v1869
        %v1871 = vlaneseq
        %v1872 = vshrl.u32 %v1871, 7
        %v1873 = vsub.s32 %v1870, %v1872
        %v1874 = vrot.slane %v1846, %v1873
        %v1875 = vcombine.high %v1853, %v1853
        %v1876 = vcombine.high %v1860, %v1860
        %v1877 = vcombine.high %v1867, %v1867
        %v1878 = vcombine.high %v1874, %v1874
        %v1879 = vcombine.high %v263, %v263
        %v1881 = vunpack.c.l.s4 1966171168
        %v1882 = vunpack.c.0.s8 %v1881
        %v1883 = vlaneseq
        %v1884 = vshrl.u32 %v1883, 7
        %v1885 = vsub.s32 %v1882, %v1884
        %v1886 = vrot.slane %v263, %v1885
        %v1888 = vunpack.c.l.s4 1966171168
        %v1889 = vunpack.c.0.s8 %v1888
        %v1890 = vlaneseq
        %v1891 = vshrl.u32 %v1890, 7
        %v1892 = vsub.s32 %v1889, %v1891
        %v1893 = vrot.slane %v1879, %v1892
        %v1894 = vcombine.high %v1886, %v1886
        %v1895 = vcombine.high %v1893, %v1893
        %v1897 = vunpack.c.l.s4 1966171168
        %v1898 = vunpack.c.0.s8 %v1897
        %v1899 = vlaneseq
        %v1900 = vshrl.u32 %v1899, 7
        %v1901 = vsub.s32 %v1898, %v1900
        %v1902 = vrot.slane %v1886, %v1901
        %v1904 = vunpack.c.l.s4 1966171168
        %v1905 = vunpack.c.0.s8 %v1904
        %v1906 = vlaneseq
        %v1907 = vshrl.u32 %v1906, 7
        %v1908 = vsub.s32 %v1905, %v1907
        %v1909 = vrot.slane %v1893, %v1908
        %v1911 = vunpack.c.l.s4 1966171168
        %v1912 = vunpack.c.0.s8 %v1911
        %v1913 = vlaneseq
        %v1914 = vshrl.u32 %v1913, 7
        %v1915 = vsub.s32 %v1912, %v1914
        %v1916 = vrot.slane %v1894, %v1915
        %v1918 = vunpack.c.l.s4 1966171168
        %v1919 = vunpack.c.0.s8 %v1918
        %v1920 = vlaneseq
        %v1921 = vshrl.u32 %v1920, 7
        %v1922 = vsub.s32 %v1919, %v1921
        %v1923 = vrot.slane %v1895, %v1922
        %v1924 = vcombine.high %v1902, %v1902
        %v1925 = vcombine.high %v1909, %v1909
        %v1926 = vcombine.high %v1916, %v1916
        %v1927 = vcombine.high %v1923, %v1923
        %v1928 = vcombine.high %v264, %v264
        %v1930 = vunpack.c.l.s4 1966171168
        %v1931 = vunpack.c.0.s8 %v1930
        %v1932 = vlaneseq
        %v1933 = vshrl.u32 %v1932, 7
        %v1934 = vsub.s32 %v1931, %v1933
        %v1935 = vrot.slane %v264, %v1934
        %v1937 = vunpack.c.l.s4 1966171168
        %v1938 = vunpack.c.0.s8 %v1937
        %v1939 = vlaneseq
        %v1940 = vshrl.u32 %v1939, 7
        %v1941 = vsub.s32 %v1938, %v1940
        %v1942 = vrot.slane %v1928, %v1941
        %v1943 = vcombine.high %v1935, %v1935
        %v1944 = vcombine.high %v1942, %v1942
        %v1946 = vunpack.c.l.s4 1966171168
        %v1947 = vunpack.c.0.s8 %v1946
        %v1948 = vlaneseq
        %v1949 = vshrl.u32 %v1948, 7
        %v1950 = vsub.s32 %v1947, %v1949
        %v1951 = vrot.slane %v1935, %v1950
        %v1953 = vunpack.c.l.s4 1966171168
        %v1954 = vunpack.c.0.s8 %v1953
        %v1955 = vlaneseq
        %v1956 = vshrl.u32 %v1955, 7
        %v1957 = vsub.s32 %v1954, %v1956
        %v1958 = vrot.slane %v1942, %v1957
        %v1960 = vunpack.c.l.s4 1966171168
        %v1961 = vunpack.c.0.s8 %v1960
        %v1962 = vlaneseq
        %v1963 = vshrl.u32 %v1962, 7
        %v1964 = vsub.s32 %v1961, %v1963
        %v1965 = vrot.slane %v1943, %v1964
        %v1967 = vunpack.c.l.s4 1966171168
        %v1968 = vunpack.c.0.s8 %v1967
        %v1969 = vlaneseq
        %v1970 = vshrl.u32 %v1969, 7
        %v1971 = vsub.s32 %v1968, %v1970
        %v1972 = vrot.slane %v1944, %v1971
        %v1973 = vcombine.high %v1951, %v1951
        %v1974 = vcombine.high %v1958, %v1958
        %v1975 = vcombine.high %v1965, %v1965
        %v1976 = vcombine.high %v1972, %v1972
        %v1977 = vcombine.high %v265, %v265
        %v1979 = vunpack.c.l.s4 1966171168
        %v1980 = vunpack.c.0.s8 %v1979
        %v1981 = vlaneseq
        %v1982 = vshrl.u32 %v1981, 7
        %v1983 = vsub.s32 %v1980, %v1982
        %v1984 = vrot.slane %v265, %v1983
        %v1986 = vunpack.c.l.s4 1966171168
        %v1987 = vunpack.c.0.s8 %v1986
        %v1988 = vlaneseq
        %v1989 = vshrl.u32 %v1988, 7
        %v1990 = vsub.s32 %v1987, %v1989
        %v1991 = vrot.slane %v1977, %v1990
        %v1992 = vcombine.high %v1984, %v1984
        %v1993 = vcombine.high %v1991, %v1991
        %v1995 = vunpack.c.l.s4 1966171168
        %v1996 = vunpack.c.0.s8 %v1995
        %v1997 = vlaneseq
        %v1998 = vshrl.u32 %v1997, 7
        %v1999 = vsub.s32 %v1996, %v1998
        %v2000 = vrot.slane %v1984, %v1999
        %v2002 = vunpack.c.l.s4 1966171168
        %v2003 = vunpack.c.0.s8 %v2002
        %v2004 = vlaneseq
        %v2005 = vshrl.u32 %v2004, 7
        %v2006 = vsub.s32 %v2003, %v2005
        %v2007 = vrot.slane %v1991, %v2006
        %v2009 = vunpack.c.l.s4 1966171168
        %v2010 = vunpack.c.0.s8 %v2009
        %v2011 = vlaneseq
        %v2012 = vshrl.u32 %v2011, 7
        %v2013 = vsub.s32 %v2010, %v2012
        %v2014 = vrot.slane %v1992, %v2013
        %v2016 = vunpack.c.l.s4 1966171168
        %v2017 = vunpack.c.0.s8 %v2016
        %v2018 = vlaneseq
        %v2019 = vshrl.u32 %v2018, 7
        %v2020 = vsub.s32 %v2017, %v2019
        %v2021 = vrot.slane %v1993, %v2020
        %v2022 = vcombine.high %v2000, %v2000
        %v2023 = vcombine.high %v2007, %v2007
        %v2024 = vcombine.high %v2014, %v2014
        %v2025 = vcombine.high %v2021, %v2021
        %v2026 = vcombine.high %v266, %v266
        %v2028 = vunpack.c.l.s4 1966171168
        %v2029 = vunpack.c.0.s8 %v2028
        %v2030 = vlaneseq
        %v2031 = vshrl.u32 %v2030, 7
        %v2032 = vsub.s32 %v2029, %v2031
        %v2033 = vrot.slane %v266, %v2032
        %v2035 = vunpack.c.l.s4 1966171168
        %v2036 = vunpack.c.0.s8 %v2035
        %v2037 = vlaneseq
        %v2038 = vshrl.u32 %v2037, 7
        %v2039 = vsub.s32 %v2036, %v2038
        %v2040 = vrot.slane %v2026, %v2039
        %v2041 = vcombine.high %v2033, %v2033
        %v2042 = vcombine.high %v2040, %v2040
        %v2044 = vunpack.c.l.s4 1966171168
        %v2045 = vunpack.c.0.s8 %v2044
        %v2046 = vlaneseq
        %v2047 = vshrl.u32 %v2046, 7
        %v2048 = vsub.s32 %v2045, %v2047
        %v2049 = vrot.slane %v2033, %v2048
        %v2051 = vunpack.c.l.s4 1966171168
        %v2052 = vunpack.c.0.s8 %v2051
        %v2053 = vlaneseq
        %v2054 = vshrl.u32 %v2053, 7
        %v2055 = vsub.s32 %v2052, %v2054
        %v2056 = vrot.slane %v2040, %v2055
        %v2058 = vunpack.c.l.s4 1966171168
        %v2059 = vunpack.c.0.s8 %v2058
        %v2060 = vlaneseq
        %v2061 = vshrl.u32 %v2060, 7
        %v2062 = vsub.s32 %v2059, %v2061
        %v2063 = vrot.slane %v2041, %v2062
        %v2065 = vunpack.c.l.s4 1966171168
        %v2066 = vunpack.c.0.s8 %v2065
        %v2067 = vlaneseq
        %v2068 = vshrl.u32 %v2067, 7
        %v2069 = vsub.s32 %v2066, %v2068
        %v2070 = vrot.slane %v2042, %v2069
        %v2071 = vcombine.high %v2049, %v2049
        %v2072 = vcombine.high %v2056, %v2056
        %v2073 = vcombine.high %v2063, %v2063
        %v2074 = vcombine.high %v2070, %v2070
        %v2075 = vcombine.high %v267, %v267
        %v2077 = vunpack.c.l.s4 1966171168
        %v2078 = vunpack.c.0.s8 %v2077
        %v2079 = vlaneseq
        %v2080 = vshrl.u32 %v2079, 7
        %v2081 = vsub.s32 %v2078, %v2080
        %v2082 = vrot.slane %v267, %v2081
        %v2084 = vunpack.c.l.s4 1966171168
        %v2085 = vunpack.c.0.s8 %v2084
        %v2086 = vlaneseq
        %v2087 = vshrl.u32 %v2086, 7
        %v2088 = vsub.s32 %v2085, %v2087
        %v2089 = vrot.slane %v2075, %v2088
        %v2090 = vcombine.high %v2082, %v2082
        %v2091 = vcombine.high %v2089, %v2089
        %v2093 = vunpack.c.l.s4 1966171168
        %v2094 = vunpack.c.0.s8 %v2093
        %v2095 = vlaneseq
        %v2096 = vshrl.u32 %v2095, 7
        %v2097 = vsub.s32 %v2094, %v2096
        %v2098 = vrot.slane %v2082, %v2097
        %v2100 = vunpack.c.l.s4 1966171168
        %v2101 = vunpack.c.0.s8 %v2100
        %v2102 = vlaneseq
        %v2103 = vshrl.u32 %v2102, 7
        %v2104 = vsub.s32 %v2101, %v2103
        %v2105 = vrot.slane %v2089, %v2104
        %v2107 = vunpack.c.l.s4 1966171168
        %v2108 = vunpack.c.0.s8 %v2107
        %v2109 = vlaneseq
        %v2110 = vshrl.u32 %v2109, 7
        %v2111 = vsub.s32 %v2108, %v2110
        %v2112 = vrot.slane %v2090, %v2111
        %v2114 = vunpack.c.l.s4 1966171168
        %v2115 = vunpack.c.0.s8 %v2114
        %v2116 = vlaneseq
        %v2117 = vshrl.u32 %v2116, 7
        %v2118 = vsub.s32 %v2115, %v2117
        %v2119 = vrot.slane %v2091, %v2118
        %v2120 = vcombine.high %v2098, %v2098
        %v2121 = vcombine.high %v2105, %v2105
        %v2122 = vcombine.high %v2112, %v2112
        %v2123 = vcombine.high %v2119, %v2119
        %v2124 = vcombine.high %v268, %v268
        %v2126 = vunpack.c.l.s4 1966171168
        %v2127 = vunpack.c.0.s8 %v2126
        %v2128 = vlaneseq
        %v2129 = vshrl.u32 %v2128, 7
        %v2130 = vsub.s32 %v2127, %v2129
        %v2131 = vrot.slane %v268, %v2130
        %v2133 = vunpack.c.l.s4 1966171168
        %v2134 = vunpack.c.0.s8 %v2133
        %v2135 = vlaneseq
        %v2136 = vshrl.u32 %v2135, 7
        %v2137 = vsub.s32 %v2134, %v2136
        %v2138 = vrot.slane %v2124, %v2137
        %v2139 = vcombine.high %v2131, %v2131
        %v2140 = vcombine.high %v2138, %v2138
        %v2142 = vunpack.c.l.s4 1966171168
        %v2143 = vunpack.c.0.s8 %v2142
        %v2144 = vlaneseq
        %v2145 = vshrl.u32 %v2144, 7
        %v2146 = vsub.s32 %v2143, %v2145
        %v2147 = vrot.slane %v2131, %v2146
        %v2149 = vunpack.c.l.s4 1966171168
        %v2150 = vunpack.c.0.s8 %v2149
        %v2151 = vlaneseq
        %v2152 = vshrl.u32 %v2151, 7
        %v2153 = vsub.s32 %v2150, %v2152
        %v2154 = vrot.slane %v2138, %v2153
        %v2156 = vunpack.c.l.s4 1966171168
        %v2157 = vunpack.c.0.s8 %v2156
        %v2158 = vlaneseq
        %v2159 = vshrl.u32 %v2158, 7
        %v2160 = vsub.s32 %v2157, %v2159
        %v2161 = vrot.slane %v2139, %v2160
        %v2163 = vunpack.c.l.s4 1966171168
        %v2164 = vunpack.c.0.s8 %v2163
        %v2165 = vlaneseq
        %v2166 = vshrl.u32 %v2165, 7
        %v2167 = vsub.s32 %v2164, %v2166
        %v2168 = vrot.slane %v2140, %v2167
        %v2169 = vcombine.high %v2147, %v2147
        %v2170 = vcombine.high %v2154, %v2154
        %v2171 = vcombine.high %v2161, %v2161
        %v2172 = vcombine.high %v2168, %v2168
        %v2173 = vcombine.high %v269, %v269
        %v2175 = vunpack.c.l.s4 1966171168
        %v2176 = vunpack.c.0.s8 %v2175
        %v2177 = vlaneseq
        %v2178 = vshrl.u32 %v2177, 7
        %v2179 = vsub.s32 %v2176, %v2178
        %v2180 = vrot.slane %v269, %v2179
        %v2182 = vunpack.c.l.s4 1966171168
        %v2183 = vunpack.c.0.s8 %v2182
        %v2184 = vlaneseq
        %v2185 = vshrl.u32 %v2184, 7
        %v2186 = vsub.s32 %v2183, %v2185
        %v2187 = vrot.slane %v2173, %v2186
        %v2188 = vcombine.high %v2180, %v2180
        %v2189 = vcombine.high %v2187, %v2187
        %v2191 = vunpack.c.l.s4 1966171168
        %v2192 = vunpack.c.0.s8 %v2191
        %v2193 = vlaneseq
        %v2194 = vshrl.u32 %v2193, 7
        %v2195 = vsub.s32 %v2192, %v2194
        %v2196 = vrot.slane %v2180, %v2195
        %v2198 = vunpack.c.l.s4 1966171168
        %v2199 = vunpack.c.0.s8 %v2198
        %v2200 = vlaneseq
        %v2201 = vshrl.u32 %v2200, 7
        %v2202 = vsub.s32 %v2199, %v2201
        %v2203 = vrot.slane %v2187, %v2202
        %v2205 = vunpack.c.l.s4 1966171168
        %v2206 = vunpack.c.0.s8 %v2205
        %v2207 = vlaneseq
        %v2208 = vshrl.u32 %v2207, 7
        %v2209 = vsub.s32 %v2206, %v2208
        %v2210 = vrot.slane %v2188, %v2209
        %v2212 = vunpack.c.l.s4 1966171168
        %v2213 = vunpack.c.0.s8 %v2212
        %v2214 = vlaneseq
        %v2215 = vshrl.u32 %v2214, 7
        %v2216 = vsub.s32 %v2213, %v2215
        %v2217 = vrot.slane %v2189, %v2216
        %v2218 = vcombine.high %v2196, %v2196
        %v2219 = vcombine.high %v2203, %v2203
        %v2220 = vcombine.high %v2210, %v2210
        %v2221 = vcombine.high %v2217, %v2217
        %v2222 = vcombine.high %v270, %v270
        %v2224 = vunpack.c.l.s4 1966171168
        %v2225 = vunpack.c.0.s8 %v2224
        %v2226 = vlaneseq
        %v2227 = vshrl.u32 %v2226, 7
        %v2228 = vsub.s32 %v2225, %v2227
        %v2229 = vrot.slane %v270, %v2228
        %v2231 = vunpack.c.l.s4 1966171168
        %v2232 = vunpack.c.0.s8 %v2231
        %v2233 = vlaneseq
        %v2234 = vshrl.u32 %v2233, 7
        %v2235 = vsub.s32 %v2232, %v2234
        %v2236 = vrot.slane %v2222, %v2235
        %v2237 = vcombine.high %v2229, %v2229
        %v2238 = vcombine.high %v2236, %v2236
        %v2240 = vunpack.c.l.s4 1966171168
        %v2241 = vunpack.c.0.s8 %v2240
        %v2242 = vlaneseq
        %v2243 = vshrl.u32 %v2242, 7
        %v2244 = vsub.s32 %v2241, %v2243
        %v2245 = vrot.slane %v2229, %v2244
        %v2247 = vunpack.c.l.s4 1966171168
        %v2248 = vunpack.c.0.s8 %v2247
        %v2249 = vlaneseq
        %v2250 = vshrl.u32 %v2249, 7
        %v2251 = vsub.s32 %v2248, %v2250
        %v2252 = vrot.slane %v2236, %v2251
        %v2254 = vunpack.c.l.s4 1966171168
        %v2255 = vunpack.c.0.s8 %v2254
        %v2256 = vlaneseq
        %v2257 = vshrl.u32 %v2256, 7
        %v2258 = vsub.s32 %v2255, %v2257
        %v2259 = vrot.slane %v2237, %v2258
        %v2261 = vunpack.c.l.s4 1966171168
        %v2262 = vunpack.c.0.s8 %v2261
        %v2263 = vlaneseq
        %v2264 = vshrl.u32 %v2263, 7
        %v2265 = vsub.s32 %v2262, %v2264
        %v2266 = vrot.slane %v2238, %v2265
        %v2267 = vcombine.high %v2245, %v2245
        %v2268 = vcombine.high %v2252, %v2252
        %v2269 = vcombine.high %v2259, %v2259
        %v2270 = vcombine.high %v2266, %v2266
        %v2271 = vcombine.high %v271, %v271
        %v2273 = vunpack.c.l.s4 1966171168
        %v2274 = vunpack.c.0.s8 %v2273
        %v2275 = vlaneseq
        %v2276 = vshrl.u32 %v2275, 7
        %v2277 = vsub.s32 %v2274, %v2276
        %v2278 = vrot.slane %v271, %v2277
        %v2280 = vunpack.c.l.s4 1966171168
        %v2281 = vunpack.c.0.s8 %v2280
        %v2282 = vlaneseq
        %v2283 = vshrl.u32 %v2282, 7
        %v2284 = vsub.s32 %v2281, %v2283
        %v2285 = vrot.slane %v2271, %v2284
        %v2286 = vcombine.high %v2278, %v2278
        %v2287 = vcombine.high %v2285, %v2285
        %v2289 = vunpack.c.l.s4 1966171168
        %v2290 = vunpack.c.0.s8 %v2289
        %v2291 = vlaneseq
        %v2292 = vshrl.u32 %v2291, 7
        %v2293 = vsub.s32 %v2290, %v2292
        %v2294 = vrot.slane %v2278, %v2293
        %v2296 = vunpack.c.l.s4 1966171168
        %v2297 = vunpack.c.0.s8 %v2296
        %v2298 = vlaneseq
        %v2299 = vshrl.u32 %v2298, 7
        %v2300 = vsub.s32 %v2297, %v2299
        %v2301 = vrot.slane %v2285, %v2300
        %v2303 = vunpack.c.l.s4 1966171168
        %v2304 = vunpack.c.0.s8 %v2303
        %v2305 = vlaneseq
        %v2306 = vshrl.u32 %v2305, 7
        %v2307 = vsub.s32 %v2304, %v2306
        %v2308 = vrot.slane %v2286, %v2307
        %v2310 = vunpack.c.l.s4 1966171168
        %v2311 = vunpack.c.0.s8 %v2310
        %v2312 = vlaneseq
        %v2313 = vshrl.u32 %v2312, 7
        %v2314 = vsub.s32 %v2311, %v2313
        %v2315 = vrot.slane %v2287, %v2314
        %v2316 = vcombine.high %v2294, %v2294
        %v2317 = vcombine.high %v2301, %v2301
        %v2318 = vcombine.high %v2308, %v2308
        %v2319 = vcombine.high %v2315, %v2315
        %v2320 = vcombine.high %v272, %v272
        %v2322 = vunpack.c.l.s4 1966171168
        %v2323 = vunpack.c.0.s8 %v2322
        %v2324 = vlaneseq
        %v2325 = vshrl.u32 %v2324, 7
        %v2326 = vsub.s32 %v2323, %v2325
        %v2327 = vrot.slane %v272, %v2326
        %v2329 = vunpack.c.l.s4 1966171168
        %v2330 = vunpack.c.0.s8 %v2329
        %v2331 = vlaneseq
        %v2332 = vshrl.u32 %v2331, 7
        %v2333 = vsub.s32 %v2330, %v2332
        %v2334 = vrot.slane %v2320, %v2333
        %v2335 = vcombine.high %v2327, %v2327
        %v2336 = vcombine.high %v2334, %v2334
        %v2338 = vunpack.c.l.s4 1966171168
        %v2339 = vunpack.c.0.s8 %v2338
        %v2340 = vlaneseq
        %v2341 = vshrl.u32 %v2340, 7
        %v2342 = vsub.s32 %v2339, %v2341
        %v2343 = vrot.slane %v2327, %v2342
        %v2345 = vunpack.c.l.s4 1966171168
        %v2346 = vunpack.c.0.s8 %v2345
        %v2347 = vlaneseq
        %v2348 = vshrl.u32 %v2347, 7
        %v2349 = vsub.s32 %v2346, %v2348
        %v2350 = vrot.slane %v2334, %v2349
        %v2352 = vunpack.c.l.s4 1966171168
        %v2353 = vunpack.c.0.s8 %v2352
        %v2354 = vlaneseq
        %v2355 = vshrl.u32 %v2354, 7
        %v2356 = vsub.s32 %v2353, %v2355
        %v2357 = vrot.slane %v2335, %v2356
        %v2359 = vunpack.c.l.s4 1966171168
        %v2360 = vunpack.c.0.s8 %v2359
        %v2361 = vlaneseq
        %v2362 = vshrl.u32 %v2361, 7
        %v2363 = vsub.s32 %v2360, %v2362
        %v2364 = vrot.slane %v2336, %v2363
        %v2365 = vcombine.high %v2343, %v2343
        %v2366 = vcombine.high %v2350, %v2350
        %v2367 = vcombine.high %v2357, %v2357
        %v2368 = vcombine.high %v2364, %v2364
        %v2369 = vcombine.high %v273, %v273
        %v2371 = vunpack.c.l.s4 1966171168
        %v2372 = vunpack.c.0.s8 %v2371
        %v2373 = vlaneseq
        %v2374 = vshrl.u32 %v2373, 7
        %v2375 = vsub.s32 %v2372, %v2374
        %v2376 = vrot.slane %v273, %v2375
        %v2378 = vunpack.c.l.s4 1966171168
        %v2379 = vunpack.c.0.s8 %v2378
        %v2380 = vlaneseq
        %v2381 = vshrl.u32 %v2380, 7
        %v2382 = vsub.s32 %v2379, %v2381
        %v2383 = vrot.slane %v2369, %v2382
        %v2384 = vcombine.high %v2376, %v2376
        %v2385 = vcombine.high %v2383, %v2383
        %v2387 = vunpack.c.l.s4 1966171168
        %v2388 = vunpack.c.0.s8 %v2387
        %v2389 = vlaneseq
        %v2390 = vshrl.u32 %v2389, 7
        %v2391 = vsub.s32 %v2388, %v2390
        %v2392 = vrot.slane %v2376, %v2391
        %v2394 = vunpack.c.l.s4 1966171168
        %v2395 = vunpack.c.0.s8 %v2394
        %v2396 = vlaneseq
        %v2397 = vshrl.u32 %v2396, 7
        %v2398 = vsub.s32 %v2395, %v2397
        %v2399 = vrot.slane %v2383, %v2398
        %v2401 = vunpack.c.l.s4 1966171168
        %v2402 = vunpack.c.0.s8 %v2401
        %v2403 = vlaneseq
        %v2404 = vshrl.u32 %v2403, 7
        %v2405 = vsub.s32 %v2402, %v2404
        %v2406 = vrot.slane %v2384, %v2405
        %v2408 = vunpack.c.l.s4 1966171168
        %v2409 = vunpack.c.0.s8 %v2408
        %v2410 = vlaneseq
        %v2411 = vshrl.u32 %v2410, 7
        %v2412 = vsub.s32 %v2409, %v2411
        %v2413 = vrot.slane %v2385, %v2412
        %v2414 = vcombine.high %v2392, %v2392
        %v2415 = vcombine.high %v2406, %v2406
        %v3004 = vunpack.c.l.b16 %v274
        %v3005 = vunpack.c.h.b16 %v274
        %v3006 = vunpack.c.l.b16 %v275
        %v3007 = vunpack.c.h.b16 %v275
        %v3008 = vunpack.c.l.b16 %v276
        %v3009 = vunpack.c.h.b16 %v276
        %v3010 = vunpack.c.l.b16 %v277
        %v3011 = vunpack.c.h.b16 %v277
        %v3012 = vunpack.c.l.b16 %v278
        %v3013 = vunpack.c.h.b16 %v278
        %v3014 = vunpack.c.l.b16 %v279
        %v3015 = vunpack.c.h.b16 %v279
        %v3016 = vunpack.c.l.b16 %v280
        %v3017 = vunpack.c.h.b16 %v280
        %v3018 = vunpack.c.l.b16 %v281
        %v3019 = vunpack.c.h.b16 %v281
        %v3020 = vunpack.c.l.b16 %v282
        %v3021 = vunpack.c.h.b16 %v282
        %v3022 = vunpack.c.l.b16 %v283
        %v3023 = vunpack.c.h.b16 %v283
        %v3024 = vunpack.c.l.b16 %v284
        %v3025 = vunpack.c.h.b16 %v284
        %v3026 = vunpack.c.l.b16 %v285
        %v3027 = vunpack.c.h.b16 %v285
        %v3028 = vunpack.c.l.b16 %v286
        %v3029 = vunpack.c.h.b16 %v286
        %v3030 = vunpack.c.l.b16 %v287
        %v3031 = vunpack.c.h.b16 %v287
        %v3032 = vunpack.c.l.b16 %v288
        %v3033 = vunpack.c.h.b16 %v288
        %v3034 = vunpack.c.l.b16 %v289
        %v3035 = vunpack.c.h.b16 %v289
        %v3036 = vunpack.c.l.b16 %v290
        %v3037 = vunpack.c.h.b16 %v290
        %v3038 = vunpack.c.l.b16 %v291
        %v3039 = vunpack.c.h.b16 %v291
        %v3040 = vunpack.c.l.b16 %v292
        %v3041 = vunpack.c.h.b16 %v292
        %v3042 = vunpack.c.l.b16 %v293
        %v3043 = vunpack.c.h.b16 %v293
        %v3044 = vunpack.c.l.b16 %v294
        %v3045 = vunpack.c.h.b16 %v294
        %v3046 = vunpack.c.l.b16 %v295
        %v3047 = vunpack.c.h.b16 %v295
        %v3048 = vunpack.c.l.b16 %v296
        %v3049 = vunpack.c.h.b16 %v296
        %v3050 = vunpack.c.l.b16 %v297
        %v3051 = vunpack.c.h.b16 %v297
        %v3052 = vunpack.c.l.b16 %v298
        %v3053 = vunpack.c.h.b16 %v298
        %v3054 = vunpack.c.l.b16 %v299
        %v3055 = vunpack.c.h.b16 %v299
        %v3056 = vunpack.c.l.b16 %v300
        %v3057 = vunpack.c.h.b16 %v300
        %v3058 = vunpack.c.l.b16 %v301
        %v3059 = vunpack.c.h.b16 %v301
        %v3060 = vunpack.c.l.b16 %v302
        %v3061 = vunpack.c.h.b16 %v302
        %v3062 = vunpack.c.l.b16 %v303
        %v3063 = vunpack.c.h.b16 %v303
        %v3064 = vunpack.c.l.b16 %v304
        %v3065 = vunpack.c.h.b16 %v304
        %v3066 = vunpack.c.l.b16 %v305
        %v3067 = vunpack.c.h.b16 %v305
        %v3068 = vunpack.c.l.b16 %v306
        %v3069 = vunpack.c.h.b16 %v306
        %v3070 = vunpack.c.l.b16 %v307
        %v3071 = vunpack.c.h.b16 %v307
        %v3072 = vunpack.c.l.b16 %v308
        %v3073 = vunpack.c.h.b16 %v308
        %v3074 = vunpack.c.l.b16 %v309
        %v3075 = vunpack.c.h.b16 %v309
        %v3076 = vunpack.c.l.b16 %v310
        %v3077 = vunpack.c.h.b16 %v310
        %v3078 = vunpack.c.l.b16 %v311
        %v3079 = vunpack.c.h.b16 %v311
        %v3080 = vunpack.c.l.b16 %v312
        %v3081 = vunpack.c.h.b16 %v312
        %v3082 = vunpack.c.l.b16 %v313
        %v3083 = vunpack.c.h.b16 %v313
        %v3084 = vunpack.c.l.b16 %v314
        %v3085 = vunpack.c.h.b16 %v314
        %v3086 = vunpack.c.l.b16 %v315
        %v3087 = vunpack.c.h.b16 %v315
        %v3088 = vunpack.c.l.b16 %v316
        %v3089 = vunpack.c.h.b16 %v316
        %v3090 = vunpack.c.l.b16 %v317
        %v3091 = vunpack.c.h.b16 %v317
        %v3092 = vunpack.c.l.b16 %v318
        %v3093 = vunpack.c.h.b16 %v318
        %v3094 = vunpack.c.l.b16 %v319
        %v3095 = vunpack.c.h.b16 %v319
        %v3096 = vunpack.c.l.b16 %v320
        %v3097 = vunpack.c.h.b16 %v320
        %v3098 = vunpack.c.l.b16 %v321
        %v3099 = vunpack.c.h.b16 %v321
        %v3100 = vunpack.c.l.b16 %v322
        %v3101 = vunpack.c.h.b16 %v322
        %v3102 = vunpack.c.l.b16 %v323
        %v3103 = vunpack.c.h.b16 %v323
        %v3104 = vunpack.c.l.b16 %v324
        %v3105 = vunpack.c.h.b16 %v324
        %v3106 = vunpack.c.l.b16 %v325
        %v3107 = vunpack.c.h.b16 %v325
        %v3108 = vunpack.c.l.b16 %v326
        %v3109 = vunpack.c.h.b16 %v326
        %v3110 = vunpack.c.l.b16 %v327
        %v3111 = vunpack.c.h.b16 %v327
        %v3112 = vunpack.c.l.b16 %v328
        %v3113 = vunpack.c.h.b16 %v328
        %v3114 = vunpack.c.l.b16 %v329
        %v3115 = vunpack.c.h.b16 %v329
        %v3116 = vunpack.c.l.b16 %v330
        %v3117 = vunpack.c.h.b16 %v330
        %v3118 = vunpack.c.l.b16 %v331
        %v3119 = vunpack.c.h.b16 %v331
        %v3120 = vunpack.c.l.b16 %v332
        %v3121 = vunpack.c.h.b16 %v332
        %v3122 = vunpack.c.l.b16 %v333
        %v3123 = vunpack.c.h.b16 %v333
        %v3124 = vunpack.c.l.b16 %v334
        %v3125 = vunpack.c.h.b16 %v334
        %v3126 = vunpack.c.l.b16 %v335
        %v3127 = vunpack.c.h.b16 %v335
        %v3128 = vunpack.c.l.b16 %v336
        %v3129 = vunpack.c.h.b16 %v336
        %v3130 = vunpack.c.l.b16 %v337
        %v3131 = vunpack.c.h.b16 %v337
        %v3132 = vunpack.c.l.b16 %v338
        %v3133 = vunpack.c.h.b16 %v338
        %v3134 = vunpack.c.l.b16 %v339
        %v3135 = vunpack.c.h.b16 %v339
        %v3136 = vunpack.c.l.b16 %v340
        %v3137 = vunpack.c.h.b16 %v340
        %v3138 = vunpack.c.l.b16 %v341
        %v3139 = vunpack.c.h.b16 %v341
        %v3140 = vunpack.c.l.b16 %v342
        %v3141 = vunpack.c.h.b16 %v342
        %v3142 = vunpack.c.l.b16 %v343
        %v3143 = vunpack.c.h.b16 %v343
        %v3144 = vunpack.c.l.b16 %v344
        %v3145 = vunpack.c.h.b16 %v344
        %v3146 = vunpack.c.l.b16 %v345
        %v3147 = vunpack.c.h.b16 %v345
        %v3148 = vunpack.c.l.b16 %v346
        %v3149 = vunpack.c.h.b16 %v346
        %v3150 = vunpack.c.l.b16 %v347
        %v3151 = vunpack.c.h.b16 %v347
        %v3152 = vunpack.c.l.b16 %v348
        %v3153 = vunpack.c.h.b16 %v348
        %v3154 = vunpack.c.l.b16 %v349
        %v3155 = vunpack.c.h.b16 %v349
        %v3156 = vunpack.c.l.b16 %v350
        %v3157 = vunpack.c.h.b16 %v350
        %v3158 = vunpack.c.l.b16 %v351
        %v3159 = vunpack.c.h.b16 %v351
        %v3160 = vunpack.c.l.b16 %v352
        %v3161 = vunpack.c.h.b16 %v352
        %v3162 = vunpack.c.l.b16 %v353
        %v3163 = vunpack.c.h.b16 %v353
        %v3164 = vunpack.c.l.b16 %v354
        %v3165 = vunpack.c.h.b16 %v354
        %v3166 = vunpack.c.l.b16 %v355
        %v3167 = vunpack.c.h.b16 %v355
        %v3168 = vunpack.c.l.b16 %v356
        %v3169 = vunpack.c.h.b16 %v356
        %v3170 = vunpack.c.l.b16 %v357
        %v3171 = vunpack.c.h.b16 %v357
        %v3172 = vunpack.c.l.b16 %v358
        %v3173 = vunpack.c.h.b16 %v358
        %v3174 = vunpack.c.l.b16 %v359
        %v3175 = vunpack.c.h.b16 %v359
        %v3176 = vunpack.c.l.b16 %v360
        %v3177 = vunpack.c.h.b16 %v360
        %v3178 = vunpack.c.l.b16 %v361
        %v3179 = vunpack.c.h.b16 %v361
        %v3180 = vunpack.c.l.b16 %v362
        %v3181 = vunpack.c.h.b16 %v362
        %v3182 = vunpack.c.l.b16 %v363
        %v3183 = vunpack.c.h.b16 %v363
        %v3184 = vunpack.c.l.b16 %v364
        %v3185 = vunpack.c.h.b16 %v364
        %v3186 = vunpack.c.l.b16 %v365
        %v3187 = vunpack.c.h.b16 %v365
        %v3188 = vunpack.c.l.b16 %v366
        %v3189 = vunpack.c.h.b16 %v366
        %v3190 = vunpack.c.l.b16 %v367
        %v3191 = vunpack.c.h.b16 %v367
        %v3192 = vunpack.c.l.b16 %v368
        %v3193 = vunpack.c.h.b16 %v368
        %v3194 = vunpack.c.l.b16 %v369
        %v3195 = vunpack.c.h.b16 %v369
        %v3196 = vunpack.c.l.b16 %v370
        %v3197 = vunpack.c.h.b16 %v370
        %v3198 = vunpack.c.l.b16 %v371
        %v3199 = vunpack.c.h.b16 %v371
        %v3200 = vunpack.c.l.b16 %v372
        %v3201 = vunpack.c.h.b16 %v372
        %v3202 = vunpack.c.l.b16 %v373
        %v3203 = vunpack.c.h.b16 %v373
        %v3204 = vunpack.c.l.b16 %v374
        %v3205 = vunpack.c.h.b16 %v374
        %v3206 = vunpack.c.l.b16 %v375
        %v3207 = vunpack.c.h.b16 %v375
        %v3208 = vunpack.c.l.b16 %v376
        %v3209 = vunpack.c.h.b16 %v376
        %v3210 = vunpack.c.l.b16 %v377
        %v3211 = vunpack.c.h.b16 %v377
        %v3212 = vunpack.c.l.b16 %v378
        %v3213 = vunpack.c.h.b16 %v378
        %v3214 = vunpack.c.l.b16 %v379
        %v3215 = vunpack.c.h.b16 %v379
        %v3216 = vunpack.c.l.b16 %v380
        %v3217 = vunpack.c.h.b16 %v380
        %v3218 = vunpack.c.l.b16 %v381
        %v3219 = vunpack.c.h.b16 %v381
        %v3220 = vunpack.c.l.b16 %v382
        %v3221 = vunpack.c.h.b16 %v382
        %v3222 = vunpack.c.l.b16 %v383
        %v3223 = vunpack.c.h.b16 %v383
        %v3224 = vunpack.c.l.b16 %v384
        %v3225 = vunpack.c.h.b16 %v384
        %v3226 = vunpack.c.l.b16 %v385
        %v3227 = vunpack.c.h.b16 %v385
        %v3228 = vunpack.c.l.b16 %v386
        %v3229 = vunpack.c.h.b16 %v386
        %v3230 = vunpack.c.l.b16 %v387
        %v3231 = vunpack.c.h.b16 %v387
        %v3232 = vunpack.c.l.b16 %v388
        %v3233 = vunpack.c.h.b16 %v388
        %v3234 = vunpack.c.l.b16 %v389
        %v3235 = vunpack.c.h.b16 %v389
        %v3236 = vunpack.c.l.b16 %v390
        %v3237 = vunpack.c.h.b16 %v390
        %v3238 = vunpack.c.l.b16 %v391
        %v3239 = vunpack.c.h.b16 %v391
        %v3240 = vunpack.c.l.b16 %v392
        %v3241 = vunpack.c.h.b16 %v392
        %v3242 = vunpack.c.l.b16 %v393
        %v3243 = vunpack.c.h.b16 %v393
        %v3244 = vunpack.c.l.b16 %v394
        %v3245 = vunpack.c.h.b16 %v394
        %v3246 = vunpack.c.l.b16 %v395
        %v3247 = vunpack.c.h.b16 %v395
        %v3248 = vunpack.c.l.b16 %v396
        %v3249 = vunpack.c.h.b16 %v396
        %v3250 = vunpack.c.l.b16 %v397
        %v3251 = vunpack.c.h.b16 %v397
        %v3252 = vunpack.c.l.b16 %v398
        %v3253 = vunpack.c.h.b16 %v398
        %v3254 = vunpack.c.l.b16 %v399
        %v3255 = vunpack.c.h.b16 %v399
        %v3256 = vunpack.c.l.b16 %v400
        %v3257 = vunpack.c.h.b16 %v400
        %v3258 = vunpack.c.l.b16 %v401
        %v3259 = vunpack.c.h.b16 %v401
        %v3260 = vunpack.c.l.b16 %v402
        %v3261 = vunpack.c.h.b16 %v402
        %v3262 = vunpack.c.l.b16 %v403
        %v3263 = vunpack.c.h.b16 %v403
        %v3264 = vunpack.c.l.b16 %v404
        %v3265 = vunpack.c.h.b16 %v404
        %v3266 = vunpack.c.l.b16 %v405
        %v3267 = vunpack.c.h.b16 %v405
        %v3268 = vunpack.c.l.b16 %v406
        %v3269 = vunpack.c.h.b16 %v406
        %v3270 = vunpack.c.l.b16 %v407
        %v3271 = vunpack.c.h.b16 %v407
        %v3272 = vunpack.c.l.b16 %v408
        %v3273 = vunpack.c.h.b16 %v408
        %v3274 = vunpack.c.l.b16 %v409
        %v3275 = vunpack.c.h.b16 %v409
        %v3276 = vunpack.c.l.b16 %v410
        %v3277 = vunpack.c.h.b16 %v410
        %v3278 = vunpack.c.l.b16 %v411
        %v3279 = vunpack.c.h.b16 %v411
        %v3280 = vunpack.c.l.b16 %v412
        %v3281 = vunpack.c.h.b16 %v412
        %v3282 = vunpack.c.l.b16 %v413
        %v3283 = vunpack.c.h.b16 %v413
        %v3284 = vunpack.c.l.b16 %v414
        %v3285 = vunpack.c.h.b16 %v414
        %v3286 = vunpack.c.l.b16 %v415
        %v3287 = vunpack.c.h.b16 %v415
        %v3288 = vunpack.c.l.b16 %v416
        %v3289 = vunpack.c.h.b16 %v416
        %v3290 = vunpack.c.l.b16 %v417
        %v3291 = vunpack.c.h.b16 %v417
        %v3292 = vunpack.c.l.b16 %v418
        %v3293 = vunpack.c.h.b16 %v418
        %v3294 = vunpack.c.l.b16 %v419
        %v3295 = vunpack.c.h.b16 %v419
        %v3296 = vunpack.c.l.b16 %v420
        %v3297 = vunpack.c.h.b16 %v420
        %v3298 = vunpack.c.l.b16 %v421
        %v3299 = vunpack.c.h.b16 %v421
        %v3300 = vunpack.c.l.b16 %v422
        %v3301 = vunpack.c.h.b16 %v422
        %v3302 = vunpack.c.l.b16 %v423
        %v3303 = vunpack.c.h.b16 %v423
        %v3304 = vunpack.c.l.b16 %v424
        %v3305 = vunpack.c.h.b16 %v424
        %v3306 = vunpack.c.l.b16 %v425
        %v3307 = vunpack.c.h.b16 %v425
        %v3308 = vunpack.c.l.b16 %v426
        %v3309 = vunpack.c.h.b16 %v426
        %v3310 = vunpack.c.l.b16 %v427
        %v3311 = vunpack.c.h.b16 %v427
        %v3312 = vunpack.c.l.b16 %v428
        %v3313 = vunpack.c.h.b16 %v428
        %v3314 = vunpack.c.l.b16 %v429
        %v3315 = vunpack.c.h.b16 %v429
        %v3316 = vunpack.c.l.b16 %v430
        %v3317 = vunpack.c.h.b16 %v430
        %v3318 = vunpack.c.l.b16 %v431
        %v3319 = vunpack.c.h.b16 %v431
        %v3320 = vunpack.c.l.b16 %v432
        %v3321 = vunpack.c.h.b16 %v432
        %v3322 = vunpack.c.l.b16 %v433
        %v3323 = vunpack.c.h.b16 %v433
        %v3324 = vunpack.c.l.b16 %v434
        %v3325 = vunpack.c.h.b16 %v434
        %v3326 = vunpack.c.l.b16 %v435
        %v3327 = vunpack.c.h.b16 %v435
        %v3328 = vunpack.c.l.b16 %v436
        %v3329 = vunpack.c.h.b16 %v436
        %v3330 = vunpack.c.l.b16 %v437
        %v3331 = vunpack.c.h.b16 %v437
        %v3332 = vunpack.c.l.b16 %v438
        %v3333 = vunpack.c.h.b16 %v438
        %v3334 = vunpack.c.l.b16 %v439
        %v3335 = vunpack.c.h.b16 %v439
        %v3336 = vunpack.c.l.b16 %v440
        %v3337 = vunpack.c.h.b16 %v440
        %v3338 = vunpack.c.l.b16 %v441
        %v3339 = vunpack.c.h.b16 %v441
        %v3340 = vunpack.c.l.b16 %v442
        %v3341 = vunpack.c.h.b16 %v442
        %v3342 = vunpack.c.l.b16 %v443
        %v3343 = vunpack.c.h.b16 %v443
        %v3344 = vunpack.c.l.b16 %v444
        %v3345 = vunpack.c.h.b16 %v444
        %v3346 = vunpack.c.l.b16 %v445
        %v3347 = vunpack.c.h.b16 %v445
        %v3348 = vunpack.c.l.b16 %v446
        %v3349 = vunpack.c.h.b16 %v446
        %v3350 = vunpack.c.l.b16 %v447
        %v3351 = vunpack.c.h.b16 %v447
        %v3352 = vunpack.c.l.b16 %v448
        %v3353 = vunpack.c.h.b16 %v448
        %v3354 = vunpack.c.l.b16 %v449
        %v3355 = vunpack.c.h.b16 %v449
        %v3356 = vunpack.c.l.b16 %v450
        %v3357 = vunpack.c.h.b16 %v450
        %v3358 = vunpack.c.l.b16 %v451
        %v3359 = vunpack.c.h.b16 %v451
        %v3360 = vunpack.c.l.b16 %v452
        %v3361 = vunpack.c.h.b16 %v452
        %v3362 = vunpack.c.l.b16 %v453
        %v3363 = vunpack.c.h.b16 %v453
        %v3364 = vunpack.c.l.b16 %v454
        %v3365 = vunpack.c.h.b16 %v454
        %v3366 = vunpack.c.l.b16 %v455
        %v3367 = vunpack.c.h.b16 %v455
        %v3368 = vunpack.c.l.b16 %v456
        %v3369 = vunpack.c.h.b16 %v456
        %v3370 = vunpack.c.l.b16 %v457
        %v3371 = vunpack.c.h.b16 %v457
        %v3372 = vunpack.c.l.b16 %v458
        %v3373 = vunpack.c.h.b16 %v458
        %v3374 = vunpack.c.l.b16 %v459
        %v3375 = vunpack.c.h.b16 %v459
        %v3376 = vunpack.c.l.b16 %v460
        %v3377 = vunpack.c.h.b16 %v460
        %v3378 = vunpack.c.l.b16 %v461
        %v3379 = vunpack.c.h.b16 %v461
        %v3380 = vunpack.c.l.b16 %v462
        %v3381 = vunpack.c.h.b16 %v462
        %v3382 = vunpack.c.l.b16 %v463
        %v3383 = vunpack.c.h.b16 %v463
        %v3384 = vunpack.c.l.b16 %v464
        %v3385 = vunpack.c.h.b16 %v464
        %v3386 = vunpack.c.l.b16 %v465
        %v3387 = vunpack.c.h.b16 %v465
        %v3388 = vunpack.c.l.b16 %v466
        %v3389 = vunpack.c.h.b16 %v466
        %v3390 = vunpack.c.l.b16 %v467
        %v3391 = vunpack.c.h.b16 %v467
        %v3392 = vunpack.c.l.b16 %v468
        %v3393 = vunpack.c.h.b16 %v468
        %v3394 = vunpack.c.l.b16 %v469
        %v3395 = vunpack.c.h.b16 %v469
        %v3396 = vunpack.c.l.b16 %v470
        %v3397 = vunpack.c.h.b16 %v470
        %v3398 = vunpack.c.l.b16 %v471
        %v3399 = vunpack.c.h.b16 %v471
        %v3400 = vunpack.c.l.b16 %v472
        %v3401 = vunpack.c.h.b16 %v472
        %v3402 = vunpack.c.l.b16 %v473
        %v3403 = vunpack.c.h.b16 %v473
        %v3404 = vunpack.c.l.b16 %v474
        %v3405 = vunpack.c.h.b16 %v474
        %v3406 = vunpack.c.l.b16 %v475
        %v3407 = vunpack.c.h.b16 %v475
        %v3408 = vunpack.c.l.b16 %v476
        %v3409 = vunpack.c.h.b16 %v476
        %v3410 = vunpack.c.l.b16 %v477
        %v3411 = vunpack.c.h.b16 %v477
        %v3412 = vunpack.c.l.b16 %v478
        %v3413 = vunpack.c.h.b16 %v478
        %v3414 = vunpack.c.l.b16 %v479
        %v3415 = vunpack.c.h.b16 %v479
        %v3416 = vunpack.c.l.b16 %v480
        %v3417 = vunpack.c.h.b16 %v480
        %v3418 = vunpack.c.l.b16 %v481
        %v3419 = vunpack.c.h.b16 %v481
        %v3420 = vunpack.c.l.b16 %v482
        %v3421 = vunpack.c.h.b16 %v482
        %v3422 = vunpack.c.l.b16 %v483
        %v3423 = vunpack.c.h.b16 %v483
        %v3424 = vunpack.c.l.b16 %v484
        %v3425 = vunpack.c.h.b16 %v484
        %v3426 = vunpack.c.l.b16 %v485
        %v3427 = vunpack.c.h.b16 %v485
        %v3428 = vunpack.c.l.b16 %v486
        %v3429 = vunpack.c.h.b16 %v486
        %v3430 = vunpack.c.l.b16 %v487
        %v3431 = vunpack.c.h.b16 %v487
        %v3432 = vunpack.c.l.b16 %v488
        %v3433 = vunpack.c.h.b16 %v488
        %v3434 = vunpack.c.l.b16 %v489
        %v3435 = vunpack.c.h.b16 %v489
        %v3436 = vunpack.c.l.b16 %v490
        %v3437 = vunpack.c.h.b16 %v490
        %v3438 = vunpack.c.l.b16 %v491
        %v3439 = vunpack.c.h.b16 %v491
        %v3440 = vunpack.c.l.b16 %v492
        %v3441 = vunpack.c.h.b16 %v492
        %v3442 = vunpack.c.l.b16 %v493
        %v3443 = vunpack.c.h.b16 %v493
        %v3444 = vunpack.c.l.b16 %v494
        %v3445 = vunpack.c.h.b16 %v494
        %v3446 = vunpack.c.l.b16 %v495
        %v3447 = vunpack.c.h.b16 %v495
        %v3448 = vunpack.c.l.b16 %v496
        %v3449 = vunpack.c.h.b16 %v496
        %v3450 = vunpack.c.l.b16 %v497
        %v3451 = vunpack.c.h.b16 %v497
        %v3452 = vunpack.c.l.b16 %v498
        %v3453 = vunpack.c.h.b16 %v498
        %v3454 = vunpack.c.l.b16 %v499
        %v3455 = vunpack.c.h.b16 %v499
        %v3456 = vunpack.c.l.b16 %v500
        %v3457 = vunpack.c.h.b16 %v500
        %v3458 = vunpack.c.l.b16 %v501
        %v3459 = vunpack.c.h.b16 %v501
        %v3460 = vunpack.c.l.b16 %v502
        %v3461 = vunpack.c.h.b16 %v502
        %v3462 = vunpack.c.l.b16 %v503
        %v3463 = vunpack.c.h.b16 %v503
        %v3464 = vunpack.c.l.b16 %v504
        %v3465 = vunpack.c.h.b16 %v504
        %v3466 = vunpack.c.l.b16 %v505
        %v3467 = vunpack.c.h.b16 %v505
        %v3468 = vunpack.c.l.b16 %v506
        %v3469 = vunpack.c.h.b16 %v506
        %v3470 = vunpack.c.l.b16 %v507
        %v3471 = vunpack.c.h.b16 %v507
        %v3472 = vunpack.c.l.b16 %v508
        %v3473 = vunpack.c.h.b16 %v508
        %v3474 = vunpack.c.l.b16 %v509
        %v3475 = vunpack.c.h.b16 %v509
        %v3476 = vunpack.c.l.b16 %v510
        %v3477 = vunpack.c.h.b16 %v510
        %v3478 = vunpack.c.l.b16 %v511
        %v3479 = vunpack.c.h.b16 %v511
        %v3480 = vunpack.c.l.b16 %v512
        %v3481 = vunpack.c.h.b16 %v512
        %v3482 = vunpack.c.l.b16 %v513
        %v3483 = vunpack.c.h.b16 %v513
        %v3484 = vunpack.c.l.b16 %v514
        %v3485 = vunpack.c.h.b16 %v514
        %v3486 = vunpack.c.l.b16 %v515
        %v3487 = vunpack.c.h.b16 %v515
        %v3488 = vunpack.c.l.b16 %v516
        %v3489 = vunpack.c.h.b16 %v516
        %v3490 = vunpack.c.l.b16 %v517
        %v3491 = vunpack.c.h.b16 %v517
        %v3492 = vunpack.c.l.b16 %v518
        %v3493 = vunpack.c.h.b16 %v518
        %v3494 = vunpack.c.l.b16 %v519
        %v3495 = vunpack.c.h.b16 %v519
        %v3496 = vunpack.c.l.b16 %v520
        %v3497 = vunpack.c.h.b16 %v520
        %v3498 = vunpack.c.l.b16 %v521
        %v3499 = vunpack.c.h.b16 %v521
        %v3500 = vunpack.c.l.b16 %v522
        %v3501 = vunpack.c.h.b16 %v522
        %v3502 = vunpack.c.l.b16 %v523
        %v3503 = vunpack.c.h.b16 %v523
        %v3504 = vunpack.c.l.b16 %v524
        %v3505 = vunpack.c.h.b16 %v524
        %v3506 = vunpack.c.l.b16 %v525
        %v3507 = vunpack.c.h.b16 %v525
        %v3508 = vunpack.c.l.b16 %v526
        %v3509 = vunpack.c.h.b16 %v526
        %v3510 = vunpack.c.l.b16 %v527
        %v3511 = vunpack.c.h.b16 %v527
        %v3512 = vunpack.c.l.b16 %v528
        %v3513 = vunpack.c.h.b16 %v528
        %v3514 = vunpack.c.l.b16 %v529
        %v3515 = vunpack.c.h.b16 %v529
        %v3516 = vunpack.c.l.b16 %v530
        %v3517 = vunpack.c.h.b16 %v530
        %v3518 = vunpack.c.l.b16 %v531
        %v3519 = vunpack.c.h.b16 %v531
        %v3520 = vunpack.c.l.b16 %v532
        %v3521 = vunpack.c.h.b16 %v532
        %v3522 = vunpack.c.l.b16 %v533
        %v3523 = vunpack.c.h.b16 %v533
        %v3524 = vunpack.c.l.b16 %v534
        %v3525 = vunpack.c.h.b16 %v534
        %v3526 = vunpack.c.l.b16 %v535
        %v3527 = vunpack.c.h.b16 %v535
        %v3528 = vunpack.c.l.b16 %v536
        %v3529 = vunpack.c.h.b16 %v536
        %v3530 = vunpack.c.l.b16 %v537
        %v3531 = vunpack.c.h.b16 %v537
        %v3532 = vunpack.c.l.b16 %v538
        %v3533 = vunpack.c.h.b16 %v538
        %v3534 = vunpack.c.l.b16 %v539
        %v3535 = vunpack.c.h.b16 %v539
        %v3536 = vunpack.c.l.b16 %v540
        %v3537 = vunpack.c.h.b16 %v540
        %v3538 = vunpack.c.l.b16 %v541
        %v3539 = vunpack.c.h.b16 %v541
        %v3540 = vunpack.c.l.b16 %v542
        %v3541 = vunpack.c.h.b16 %v542
        %v3542 = vunpack.c.l.b16 %v543
        %v3543 = vunpack.c.h.b16 %v543
        %v3544 = vunpack.c.l.b16 %v544
        %v3545 = vunpack.c.h.b16 %v544
        %v3546 = vunpack.c.l.b16 %v545
        %v3547 = vunpack.c.h.b16 %v545
        %v3548 = vunpack.c.l.b16 %v546
        %v3549 = vunpack.c.h.b16 %v546
        %v3550 = vunpack.c.l.b16 %v547
        %v3551 = vunpack.c.h.b16 %v547
        %v3552 = vunpack.c.l.b16 %v548
        %v3553 = vunpack.c.h.b16 %v548
        %v3554 = vunpack.c.l.b16 %v549
        %v3555 = vunpack.c.h.b16 %v549
        %v3556 = vunpack.c.l.b16 %v550
        %v3557 = vunpack.c.h.b16 %v550
        %v3558 = vunpack.c.l.b16 %v551
        %v3559 = vunpack.c.h.b16 %v551
        %v3560 = vunpack.c.l.b16 %v552
        %v3561 = vunpack.c.h.b16 %v552
        %v3562 = vunpack.c.l.b16 %v553
        %v3563 = vunpack.c.h.b16 %v553
        %v3564 = vunpack.c.l.b16 %v554
        %v3565 = vunpack.c.h.b16 %v554
        %v3566 = vunpack.c.l.b16 %v555
        %v3567 = vunpack.c.h.b16 %v555
        %v3568 = vunpack.c.l.b16 %v556
        %v3569 = vunpack.c.h.b16 %v556
        %v3570 = vunpack.c.l.b16 %v557
        %v3571 = vunpack.c.h.b16 %v557
        %v3572 = vunpack.c.l.b16 %v558
        %v3573 = vunpack.c.h.b16 %v558
        %v3574 = vunpack.c.l.b16 %v559
        %v3575 = vunpack.c.h.b16 %v559
        %v3576 = vunpack.c.l.b16 %v560
        %v3577 = vunpack.c.h.b16 %v560
        %v3578 = vunpack.c.l.b16 %v561
        %v3579 = vunpack.c.h.b16 %v561
        %v3580 = vunpack.c.l.b16 %v562
        %v3581 = vunpack.c.h.b16 %v562
        %v3582 = vunpack.c.l.b16 %v563
        %v3583 = vunpack.c.h.b16 %v563
        %v3584 = vunpack.c.l.b16 %v564
        %v3585 = vunpack.c.h.b16 %v564
        %v3586 = vunpack.c.l.b16 %v565
        %v3587 = vunpack.c.h.b16 %v565
        %v3588 = vunpack.c.l.b16 %v566
        %v3589 = vunpack.c.h.b16 %v566
        %v3590 = vunpack.c.l.b16 %v567
        %v3591 = vunpack.c.h.b16 %v567
        %v3592 = vpack.c.b16 %v3298, %v3004
        %v3593 = vpack.c.b16 %v3299, %v3005
        %v3594 = vpack.c.b16 %v3300, %v3006
        %v3595 = vpack.c.b16 %v3301, %v3007
        %v3596 = vpack.c.b16 %v3302, %v3008
        %v3597 = vpack.c.b16 %v3303, %v3009
        %v3598 = vpack.c.b16 %v3304, %v3010
        %v3599 = vpack.c.b16 %v3305, %v3011
        %v3600 = vpack.c.b16 %v3306, %v3012
        %v3601 = vpack.c.b16 %v3307, %v3013
        %v3602 = vpack.c.b16 %v3308, %v3014
        %v3603 = vpack.c.b16 %v3309, %v3015
        %v3604 = vpack.c.b16 %v3310, %v3016
        %v3605 = vpack.c.b16 %v3311, %v3017
        %v3606 = vpack.c.b16 %v3312, %v3018
        %v3607 = vpack.c.b16 %v3313, %v3019
        %v3608 = vpack.c.b16 %v3314, %v3020
        %v3609 = vpack.c.b16 %v3315, %v3021
        %v3610 = vpack.c.b16 %v3316, %v3022
        %v3611 = vpack.c.b16 %v3317, %v3023
        %v3612 = vpack.c.b16 %v3318, %v3024
        %v3613 = vpack.c.b16 %v3319, %v3025
        %v3614 = vpack.c.b16 %v3320, %v3026
        %v3615 = vpack.c.b16 %v3321, %v3027
        %v3616 = vpack.c.b16 %v3322, %v3028
        %v3617 = vpack.c.b16 %v3323, %v3029
        %v3618 = vpack.c.b16 %v3324, %v3030
        %v3619 = vpack.c.b16 %v3325, %v3031
        %v3620 = vpack.c.b16 %v3326, %v3032
        %v3621 = vpack.c.b16 %v3327, %v3033
        %v3622 = vpack.c.b16 %v3328, %v3034
        %v3623 = vpack.c.b16 %v3329, %v3035
        %v3624 = vpack.c.b16 %v3330, %v3036
        %v3625 = vpack.c.b16 %v3331, %v3037
        %v3626 = vpack.c.b16 %v3332, %v3038
        %v3627 = vpack.c.b16 %v3333, %v3039
        %v3628 = vpack.c.b16 %v3334, %v3040
        %v3629 = vpack.c.b16 %v3335, %v3041
        %v3630 = vpack.c.b16 %v3336, %v3042
        %v3631 = vpack.c.b16 %v3337, %v3043
        %v3632 = vpack.c.b16 %v3338, %v3044
        %v3633 = vpack.c.b16 %v3339, %v3045
        %v3634 = vpack.c.b16 %v3340, %v3046
        %v3635 = vpack.c.b16 %v3341, %v3047
        %v3636 = vpack.c.b16 %v3342, %v3048
        %v3637 = vpack.c.b16 %v3343, %v3049
        %v3638 = vpack.c.b16 %v3344, %v3050
        %v3639 = vpack.c.b16 %v3345, %v3051
        %v3640 = vpack.c.b16 %v3346, %v3052
        %v3641 = vpack.c.b16 %v3347, %v3053
        %v3642 = vpack.c.b16 %v3348, %v3054
        %v3643 = vpack.c.b16 %v3349, %v3055
        %v3644 = vpack.c.b16 %v3350, %v3056
        %v3645 = vpack.c.b16 %v3351, %v3057
        %v3646 = vpack.c.b16 %v3352, %v3058
        %v3647 = vpack.c.b16 %v3353, %v3059
        %v3648 = vpack.c.b16 %v3354, %v3060
        %v3649 = vpack.c.b16 %v3355, %v3061
        %v3650 = vpack.c.b16 %v3356, %v3062
        %v3651 = vpack.c.b16 %v3357, %v3063
        %v3652 = vpack.c.b16 %v3358, %v3064
        %v3653 = vpack.c.b16 %v3359, %v3065
        %v3654 = vpack.c.b16 %v3360, %v3066
        %v3655 = vpack.c.b16 %v3361, %v3067
        %v3656 = vpack.c.b16 %v3362, %v3068
        %v3657 = vpack.c.b16 %v3363, %v3069
        %v3658 = vpack.c.b16 %v3364, %v3070
        %v3659 = vpack.c.b16 %v3365, %v3071
        %v3660 = vpack.c.b16 %v3366, %v3072
        %v3661 = vpack.c.b16 %v3367, %v3073
        %v3662 = vpack.c.b16 %v3368, %v3074
        %v3663 = vpack.c.b16 %v3369, %v3075
        %v3664 = vpack.c.b16 %v3370, %v3076
        %v3665 = vpack.c.b16 %v3371, %v3077
        %v3666 = vpack.c.b16 %v3372, %v3078
        %v3667 = vpack.c.b16 %v3373, %v3079
        %v3668 = vpack.c.b16 %v3374, %v3080
        %v3669 = vpack.c.b16 %v3375, %v3081
        %v3670 = vpack.c.b16 %v3376, %v3082
        %v3671 = vpack.c.b16 %v3377, %v3083
        %v3672 = vpack.c.b16 %v3378, %v3084
        %v3673 = vpack.c.b16 %v3379, %v3085
        %v3674 = vpack.c.b16 %v3380, %v3086
        %v3675 = vpack.c.b16 %v3381, %v3087
        %v3676 = vpack.c.b16 %v3382, %v3088
        %v3677 = vpack.c.b16 %v3383, %v3089
        %v3678 = vpack.c.b16 %v3384, %v3090
        %v3679 = vpack.c.b16 %v3385, %v3091
        %v3680 = vpack.c.b16 %v3386, %v3092
        %v3681 = vpack.c.b16 %v3387, %v3093
        %v3682 = vpack.c.b16 %v3388, %v3094
        %v3683 = vpack.c.b16 %v3389, %v3095
        %v3684 = vpack.c.b16 %v3390, %v3096
        %v3685 = vpack.c.b16 %v3391, %v3097
        %v3686 = vpack.c.b16 %v3392, %v3098
        %v3687 = vpack.c.b16 %v3393, %v3099
        %v3688 = vpack.c.b16 %v3394, %v3100
        %v3689 = vpack.c.b16 %v3395, %v3101
        %v3690 = vpack.c.b16 %v3396, %v3102
        %v3691 = vpack.c.b16 %v3397, %v3103
        %v3692 = vpack.c.b16 %v3398, %v3104
        %v3693 = vpack.c.b16 %v3399, %v3105
        %v3694 = vpack.c.b16 %v3400, %v3106
        %v3695 = vpack.c.b16 %v3401, %v3107
        %v3696 = vpack.c.b16 %v3402, %v3108
        %v3697 = vpack.c.b16 %v3403, %v3109
        %v3698 = vpack.c.b16 %v3404, %v3110
        %v3699 = vpack.c.b16 %v3405, %v3111
        %v3700 = vpack.c.b16 %v3406, %v3112
        %v3701 = vpack.c.b16 %v3407, %v3113
        %v3702 = vpack.c.b16 %v3408, %v3114
        %v3703 = vpack.c.b16 %v3409, %v3115
        %v3704 = vpack.c.b16 %v3410, %v3116
        %v3705 = vpack.c.b16 %v3411, %v3117
        %v3706 = vpack.c.b16 %v3412, %v3118
        %v3707 = vpack.c.b16 %v3413, %v3119
        %v3708 = vpack.c.b16 %v3414, %v3120
        %v3709 = vpack.c.b16 %v3415, %v3121
        %v3710 = vpack.c.b16 %v3416, %v3122
        %v3711 = vpack.c.b16 %v3417, %v3123
        %v3712 = vpack.c.b16 %v3418, %v3124
        %v3713 = vpack.c.b16 %v3419, %v3125
        %v3714 = vpack.c.b16 %v3420, %v3126
        %v3715 = vpack.c.b16 %v3421, %v3127
        %v3716 = vpack.c.b16 %v3422, %v3128
        %v3717 = vpack.c.b16 %v3423, %v3129
        %v3718 = vpack.c.b16 %v3424, %v3130
        %v3719 = vpack.c.b16 %v3425, %v3131
        %v3720 = vpack.c.b16 %v3426, %v3132
        %v3721 = vpack.c.b16 %v3427, %v3133
        %v3722 = vpack.c.b16 %v3428, %v3134
        %v3723 = vpack.c.b16 %v3429, %v3135
        %v3724 = vpack.c.b16 %v3430, %v3136
        %v3725 = vpack.c.b16 %v3431, %v3137
        %v3726 = vpack.c.b16 %v3432, %v3138
        %v3727 = vpack.c.b16 %v3433, %v3139
        %v3728 = vpack.c.b16 %v3434, %v3140
        %v3729 = vpack.c.b16 %v3435, %v3141
        %v3730 = vpack.c.b16 %v3436, %v3142
        %v3731 = vpack.c.b16 %v3437, %v3143
        %v3732 = vpack.c.b16 %v3438, %v3144
        %v3733 = vpack.c.b16 %v3439, %v3145
        %v3734 = vpack.c.b16 %v3440, %v3146
        %v3735 = vpack.c.b16 %v3441, %v3147
        %v3736 = vpack.c.b16 %v3442, %v3148
        %v3737 = vpack.c.b16 %v3443, %v3149
        %v3738 = vpack.c.b16 %v3444, %v3150
        %v3739 = vpack.c.b16 %v3445, %v3151
        %v3740 = vpack.c.b16 %v3446, %v3152
        %v3741 = vpack.c.b16 %v3447, %v3153
        %v3742 = vpack.c.b16 %v3448, %v3154
        %v3743 = vpack.c.b16 %v3449, %v3155
        %v3744 = vpack.c.b16 %v3450, %v3156
        %v3745 = vpack.c.b16 %v3451, %v3157
        %v3746 = vpack.c.b16 %v3452, %v3158
        %v3747 = vpack.c.b16 %v3453, %v3159
        %v3748 = vpack.c.b16 %v3454, %v3160
        %v3749 = vpack.c.b16 %v3455, %v3161
        %v3750 = vpack.c.b16 %v3456, %v3162
        %v3751 = vpack.c.b16 %v3457, %v3163
        %v3752 = vpack.c.b16 %v3458, %v3164
        %v3753 = vpack.c.b16 %v3459, %v3165
        %v3754 = vpack.c.b16 %v3460, %v3166
        %v3755 = vpack.c.b16 %v3461, %v3167
        %v3756 = vpack.c.b16 %v3462, %v3168
        %v3757 = vpack.c.b16 %v3463, %v3169
        %v3758 = vpack.c.b16 %v3464, %v3170
        %v3759 = vpack.c.b16 %v3465, %v3171
        %v3760 = vpack.c.b16 %v3466, %v3172
        %v3761 = vpack.c.b16 %v3467, %v3173
        %v3762 = vpack.c.b16 %v3468, %v3174
        %v3763 = vpack.c.b16 %v3469, %v3175
        %v3764 = vpack.c.b16 %v3470, %v3176
        %v3765 = vpack.c.b16 %v3471, %v3177
        %v3766 = vpack.c.b16 %v3472, %v3178
        %v3767 = vpack.c.b16 %v3473, %v3179
        %v3768 = vpack.c.b16 %v3474, %v3180
        %v3769 = vpack.c.b16 %v3475, %v3181
        %v3770 = vpack.c.b16 %v3476, %v3182
        %v3771 = vpack.c.b16 %v3477, %v3183
        %v3772 = vpack.c.b16 %v3478, %v3184
        %v3773 = vpack.c.b16 %v3479, %v3185
        %v3774 = vpack.c.b16 %v3480, %v3186
        %v3775 = vpack.c.b16 %v3481, %v3187
        %v3776 = vpack.c.b16 %v3482, %v3188
        %v3777 = vpack.c.b16 %v3483, %v3189
        %v3778 = vpack.c.b16 %v3484, %v3190
        %v3779 = vpack.c.b16 %v3485, %v3191
        %v3780 = vpack.c.b16 %v3486, %v3192
        %v3781 = vpack.c.b16 %v3487, %v3193
        %v3782 = vpack.c.b16 %v3488, %v3194
        %v3783 = vpack.c.b16 %v3489, %v3195
        %v3784 = vpack.c.b16 %v3490, %v3196
        %v3785 = vpack.c.b16 %v3491, %v3197
        %v3786 = vpack.c.b16 %v3492, %v3198
        %v3787 = vpack.c.b16 %v3493, %v3199
        %v3788 = vpack.c.b16 %v3494, %v3200
        %v3789 = vpack.c.b16 %v3495, %v3201
        %v3790 = vpack.c.b16 %v3496, %v3202
        %v3791 = vpack.c.b16 %v3497, %v3203
        %v3792 = vpack.c.b16 %v3498, %v3204
        %v3793 = vpack.c.b16 %v3499, %v3205
        %v3794 = vpack.c.b16 %v3500, %v3206
        %v3795 = vpack.c.b16 %v3501, %v3207
        %v3796 = vpack.c.b16 %v3502, %v3208
        %v3797 = vpack.c.b16 %v3503, %v3209
        %v3798 = vpack.c.b16 %v3504, %v3210
        %v3799 = vpack.c.b16 %v3505, %v3211
        %v3800 = vpack.c.b16 %v3506, %v3212
        %v3801 = vpack.c.b16 %v3507, %v3213
        %v3802 = vpack.c.b16 %v3508, %v3214
        %v3803 = vpack.c.b16 %v3509, %v3215
        %v3804 = vpack.c.b16 %v3510, %v3216
        %v3805 = vpack.c.b16 %v3511, %v3217
        %v3806 = vpack.c.b16 %v3512, %v3218
        %v3807 = vpack.c.b16 %v3513, %v3219
        %v3808 = vpack.c.b16 %v3514, %v3220
        %v3809 = vpack.c.b16 %v3515, %v3221
        %v3810 = vpack.c.b16 %v3516, %v3222
        %v3811 = vpack.c.b16 %v3517, %v3223
        %v3812 = vpack.c.b16 %v3518, %v3224
        %v3813 = vpack.c.b16 %v3519, %v3225
        %v3814 = vpack.c.b16 %v3520, %v3226
        %v3815 = vpack.c.b16 %v3521, %v3227
        %v3816 = vpack.c.b16 %v3522, %v3228
        %v3817 = vpack.c.b16 %v3523, %v3229
        %v3818 = vpack.c.b16 %v3524, %v3230
        %v3819 = vpack.c.b16 %v3525, %v3231
        %v3820 = vpack.c.b16 %v3526, %v3232
        %v3821 = vpack.c.b16 %v3527, %v3233
        %v3822 = vpack.c.b16 %v3528, %v3234
        %v3823 = vpack.c.b16 %v3529, %v3235
        %v3824 = vpack.c.b16 %v3530, %v3236
        %v3825 = vpack.c.b16 %v3531, %v3237
        %v3826 = vpack.c.b16 %v3532, %v3238
        %v3827 = vpack.c.b16 %v3533, %v3239
        %v3828 = vpack.c.b16 %v3534, %v3240
        %v3829 = vpack.c.b16 %v3535, %v3241
        %v3830 = vpack.c.b16 %v3536, %v3242
        %v3831 = vpack.c.b16 %v3537, %v3243
        %v3832 = vpack.c.b16 %v3538, %v3244
        %v3833 = vpack.c.b16 %v3539, %v3245
        %v3834 = vpack.c.b16 %v3540, %v3246
        %v3835 = vpack.c.b16 %v3541, %v3247
        %v3836 = vpack.c.b16 %v3542, %v3248
        %v3837 = vpack.c.b16 %v3543, %v3249
        %v3838 = vpack.c.b16 %v3544, %v3250
        %v3839 = vpack.c.b16 %v3545, %v3251
        %v3840 = vpack.c.b16 %v3546, %v3252
        %v3841 = vpack.c.b16 %v3547, %v3253
        %v3842 = vpack.c.b16 %v3548, %v3254
        %v3843 = vpack.c.b16 %v3549, %v3255
        %v3844 = vpack.c.b16 %v3550, %v3256
        %v3845 = vpack.c.b16 %v3551, %v3257
        %v3846 = vpack.c.b16 %v3552, %v3258
        %v3847 = vpack.c.b16 %v3553, %v3259
        %v3848 = vpack.c.b16 %v3554, %v3260
        %v3849 = vpack.c.b16 %v3555, %v3261
        %v3850 = vpack.c.b16 %v3556, %v3262
        %v3851 = vpack.c.b16 %v3557, %v3263
        %v3852 = vpack.c.b16 %v3558, %v3264
        %v3853 = vpack.c.b16 %v3559, %v3265
        %v3854 = vpack.c.b16 %v3560, %v3266
        %v3855 = vpack.c.b16 %v3561, %v3267
        %v3856 = vpack.c.b16 %v3562, %v3268
        %v3857 = vpack.c.b16 %v3563, %v3269
        %v3858 = vpack.c.b16 %v3564, %v3270
        %v3859 = vpack.c.b16 %v3565, %v3271
        %v3860 = vpack.c.b16 %v3566, %v3272
        %v3861 = vpack.c.b16 %v3567, %v3273
        %v3862 = vpack.c.b16 %v3568, %v3274
        %v3863 = vpack.c.b16 %v3569, %v3275
        %v3864 = vpack.c.b16 %v3570, %v3276
        %v3865 = vpack.c.b16 %v3571, %v3277
        %v3866 = vpack.c.b16 %v3572, %v3278
        %v3867 = vpack.c.b16 %v3573, %v3279
        %v3868 = vpack.c.b16 %v3574, %v3280
        %v3869 = vpack.c.b16 %v3575, %v3281
        %v3870 = vpack.c.b16 %v3576, %v3282
        %v3871 = vpack.c.b16 %v3577, %v3283
        %v3872 = vpack.c.b16 %v3578, %v3284
        %v3873 = vpack.c.b16 %v3579, %v3285
        %v3874 = vpack.c.b16 %v3580, %v3286
        %v3875 = vpack.c.b16 %v3581, %v3287
        %v3876 = vpack.c.b16 %v3582, %v3288
        %v3877 = vpack.c.b16 %v3583, %v3289
        %v3878 = vpack.c.b16 %v3584, %v3290
        %v3879 = vpack.c.b16 %v3585, %v3291
        %v3880 = vpack.c.b16 %v3586, %v3292
        %v3881 = vpack.c.b16 %v3587, %v3293
        %v3882 = vpack.c.b16 %v3588, %v3294
        %v3883 = vpack.c.b16 %v3589, %v3295
        %v3884 = vpack.c.b16 %v3590, %v3296
        %v3885 = vpack.c.b16 %v3591, %v3297
        %4180 = vmatprep.subr.bf16.mxu0 0
        %4181 = vmatpush1.bf16.xpose.msra.mxu0 0
        %4182 = vmatprep.subr.bf16.mxu0 0
        %4183 = vmatpush1.bf16.xpose.msra.mxu0 0
        %4184 = vmatprep.subr.bf16.mxu0 0
        %4185 = vmatpush1.bf16.xpose.msra.mxu0 0
        %4186 = vmatprep.subr.bf16.mxu0 0
        %4187 = vmatpush1.bf16.xpose.msra.mxu0 0
        %4188 = vmatprep.subr.bf16.mxu0 0
        %4189 = vmatpush1.bf16.xpose.msra.mxu0 0
        %4190 = vmatprep.subr.bf16.mxu0 0
        %4191 = vmatpush1.bf16.xpose.msra.mxu0 0
        %4192 = vmatprep.subr.bf16.mxu0 0
        %4193 = vmatpush1.bf16.xpose.msra.mxu0 0
        %4194 = vmatprep.subr.bf16.mxu0 %v3593
        %4195 = vmatpush1.bf16.xpose.msra.mxu0 %v3592
        %4196 = vmatprep.subr.bf16.mxu0 0
        %4197 = vmatpush2.bf16.xpose.msra.mxu0 0
        %4198 = vmatprep.subr.bf16.mxu0 0
        %4199 = vmatpush2.bf16.xpose.msra.mxu0 0
        %4200 = vmatprep.subr.bf16.mxu0 0
        %4201 = vmatpush2.bf16.xpose.msra.mxu0 0
        %4202 = vmatprep.subr.bf16.mxu0 0
        %4203 = vmatpush2.bf16.xpose.msra.mxu0 0
        %4204 = vmatprep.subr.bf16.mxu0 0
        %4205 = vmatpush2.bf16.xpose.msra.mxu0 0
        %4206 = vmatprep.subr.bf16.mxu0 0
        %4207 = vmatpush2.bf16.xpose.msra.mxu0 0
        %4208 = vmatprep.subr.bf16.mxu0 0
        %4209 = vmatpush2.bf16.xpose.msra.mxu0 0
        %4210 = vmatprep.subr.bf16.mxu0 0
        %4211 = vmatpush2.bf16.xpose.msra.mxu0 0
        %4212 = vmatprep.mubr.bf16.mxu0 %v642
        %4213 = vmatmul.mubr.bf16.gmra.mxu0 %v628
        %v4214 = vpop.f32.mrf.mxu0
        %v4215 = vadd.f32 0.0, %v4214
        %v4216 = vpop.f32.mrf.mxu0
        %v4217 = vpop.f32.mrf.mxu0
        %v4218 = vpop.f32.mrf.mxu0
        %4219 = vdwg.mxu0
        %4220 = vmatprep.subr.bf16.mxu0 0
        %4221 = vmatpush1.bf16.xpose.msra.mxu0 0
        %4222 = vmatprep.subr.bf16.mxu0 0
        %4223 = vmatpush1.bf16.xpose.msra.mxu0 0
        %4224 = vmatprep.subr.bf16.mxu0 0
        %4225 = vmatpush1.bf16.xpose.msra.mxu0 0
        %4226 = vmatprep.subr.bf16.mxu0 0
        %4227 = vmatpush1.bf16.xpose.msra.mxu0 0
        %4228 = vmatprep.subr.bf16.mxu0 0
        %4229 = vmatpush1.bf16.xpose.msra.mxu0 0
        %4230 = vmatprep.subr.bf16.mxu0 0
        %4231 = vmatpush1.bf16.xpose.msra.mxu0 0
        %4232 = vmatprep.subr.bf16.mxu0 0
        %4233 = vmatpush1.bf16.xpose.msra.mxu0 0
        %4234 = vmatprep.subr.bf16.mxu0 %v3595
        %4235 = vmatpush1.bf16.xpose.msra.mxu0 %v3594
        %4236 = vmatprep.subr.bf16.mxu0 0
        %4237 = vmatpush2.bf16.xpose.msra.mxu0 0
        %4238 = vmatprep.subr.bf16.mxu0 0
        %4239 = vmatpush2.bf16.xpose.msra.mxu0 0
        %4240 = vmatprep.subr.bf16.mxu0 0
        %4241 = vmatpush2.bf16.xpose.msra.mxu0 0
        %4242 = vmatprep.subr.bf16.mxu0 0
        %4243 = vmatpush2.bf16.xpose.msra.mxu0 0
        %4244 = vmatprep.subr.bf16.mxu0 0
        %4245 = vmatpush2.bf16.xpose.msra.mxu0 0
        %4246 = vmatprep.subr.bf16.mxu0 0
        %4247 = vmatpush2.bf16.xpose.msra.mxu0 0
        %4248 = vmatprep.subr.bf16.mxu0 0
        %4249 = vmatpush2.bf16.xpose.msra.mxu0 0
        %4250 = vmatprep.subr.bf16.mxu0 0
        %4251 = vmatpush2.bf16.xpose.msra.mxu0 0
        %4252 = vmatprep.mubr.bf16.mxu0 %v652
        %4253 = vmatmul.mubr.bf16.gmra.mxu0 %v650
        %v4254 = vpop.f32.mrf.mxu0
        %v4255 = vadd.f32 %v4215, %v4254
        %v4256 = vpop.f32.mrf.mxu0
        %v4257 = vpop.f32.mrf.mxu0
        %v4258 = vpop.f32.mrf.mxu0
        %4259 = vdwg.mxu0
        %4260 = vmatprep.subr.bf16.mxu0 0
        %4261 = vmatpush1.bf16.xpose.msra.mxu0 0
        %4262 = vmatprep.subr.bf16.mxu0 0
        %4263 = vmatpush1.bf16.xpose.msra.mxu0 0
        %4264 = vmatprep.subr.bf16.mxu0 0
        %4265 = vmatpush1.bf16.xpose.msra.mxu0 0
        %4266 = vmatprep.subr.bf16.mxu0 0
        %4267 = vmatpush1.bf16.xpose.msra.mxu0 0
        %4268 = vmatprep.subr.bf16.mxu0 0
        %4269 = vmatpush1.bf16.xpose.msra.mxu0 0
        %4270 = vmatprep.subr.bf16.mxu0 0
        %4271 = vmatpush1.bf16.xpose.msra.mxu0 0
        %4272 = vmatprep.subr.bf16.mxu0 0
        %4273 = vmatpush1.bf16.xpose.msra.mxu0 0
        %4274 = vmatprep.subr.bf16.mxu0 %v3597
        %4275 = vmatpush1.bf16.xpose.msra.mxu0 %v3596
        %4276 = vmatprep.subr.bf16.mxu0 0
        %4277 = vmatpush2.bf16.xpose.msra.mxu0 0
        %4278 = vmatprep.subr.bf16.mxu0 0
        %4279 = vmatpush2.bf16.xpose.msra.mxu0 0
        %4280 = vmatprep.subr.bf16.mxu0 0
        %4281 = vmatpush2.bf16.xpose.msra.mxu0 0
        %4282 = vmatprep.subr.bf16.mxu0 0
        %4283 = vmatpush2.bf16.xpose.msra.mxu0 0
        %4284 = vmatprep.subr.bf16.mxu0 0
        %4285 = vmatpush2.bf16.xpose.msra.mxu0 0
        %4286 = vmatprep.subr.bf16.mxu0 0
        %4287 = vmatpush2.bf16.xpose.msra.mxu0 0
        %4288 = vmatprep.subr.bf16.mxu0 0
        %4289 = vmatpush2.bf16.xpose.msra.mxu0 0
        %4290 = vmatprep.subr.bf16.mxu0 0
        %4291 = vmatpush2.bf16.xpose.msra.mxu0 0
        %4292 = vmatprep.mubr.bf16.mxu0 %v649
        %4293 = vmatmul.mubr.bf16.gmra.mxu0 %v635
        %v4294 = vpop.f32.mrf.mxu0
        %v4295 = vadd.f32 %v4255, %v4294
        %v4296 = vpop.f32.mrf.mxu0
        %v4297 = vpop.f32.mrf.mxu0
        %v4298 = vpop.f32.mrf.mxu0
        %4299 = vdwg.mxu0
        %4300 = vmatprep.subr.bf16.mxu0 0
        %4301 = vmatpush1.bf16.xpose.msra.mxu0 0
        %4302 = vmatprep.subr.bf16.mxu0 0
        %4303 = vmatpush1.bf16.xpose.msra.mxu0 0
        %4304 = vmatprep.subr.bf16.mxu0 0
        %4305 = vmatpush1.bf16.xpose.msra.mxu0 0
        %4306 = vmatprep.subr.bf16.mxu0 0
        %4307 = vmatpush1.bf16.xpose.msra.mxu0 0
        %4308 = vmatprep.subr.bf16.mxu0 0
        %4309 = vmatpush1.bf16.xpose.msra.mxu0 0
        %4310 = vmatprep.subr.bf16.mxu0 0
        %4311 = vmatpush1.bf16.xpose.msra.mxu0 0
        %4312 = vmatprep.subr.bf16.mxu0 0
        %4313 = vmatpush1.bf16.xpose.msra.mxu0 0
        %4314 = vmatprep.subr.bf16.mxu0 %v3599
        %4315 = vmatpush1.bf16.xpose.msra.mxu0 %v3598
        %4316 = vmatprep.subr.bf16.mxu0 0
        %4317 = vmatpush2.bf16.xpose.msra.mxu0 0
        %4318 = vmatprep.subr.bf16.mxu0 0
        %4319 = vmatpush2.bf16.xpose.msra.mxu0 0
        %4320 = vmatprep.subr.bf16.mxu0 0
        %4321 = vmatpush2.bf16.xpose.msra.mxu0 0
        %4322 = vmatprep.subr.bf16.mxu0 0
        %4323 = vmatpush2.bf16.xpose.msra.mxu0 0
        %4324 = vmatprep.subr.bf16.mxu0 0
        %4325 = vmatpush2.bf16.xpose.msra.mxu0 0
        %4326 = vmatprep.subr.bf16.mxu0 0
        %4327 = vmatpush2.bf16.xpose.msra.mxu0 0
        %4328 = vmatprep.subr.bf16.mxu0 0
        %4329 = vmatpush2.bf16.xpose.msra.mxu0 0
        %4330 = vmatprep.subr.bf16.mxu0 0
        %4331 = vmatpush2.bf16.xpose.msra.mxu0 0
        %4332 = vmatprep.mubr.bf16.mxu0 %v653
        %4333 = vmatmul.mubr.bf16.gmra.mxu0 %v651
        %v4334 = vpop.f32.mrf.mxu0
        %v4335 = vadd.f32 %v4295, %v4334
        %v4336 = vpop.f32.mrf.mxu0
        %v4337 = vpop.f32.mrf.mxu0
        %v4338 = vpop.f32.mrf.mxu0
        %4339 = vdwg.mxu0
        %4340 = vmatprep.subr.bf16.mxu0 0
        %4341 = vmatpush1.bf16.xpose.msra.mxu0 0
        %4342 = vmatprep.subr.bf16.mxu0 0
        %4343 = vmatpush1.bf16.xpose.msra.mxu0 0
        %4344 = vmatprep.subr.bf16.mxu0 0
        %4345 = vmatpush1.bf16.xpose.msra.mxu0 0
        %4346 = vmatprep.subr.bf16.mxu0 0
        %4347 = vmatpush1.bf16.xpose.msra.mxu0 0
        %4348 = vmatprep.subr.bf16.mxu0 0
        %4349 = vmatpush1.bf16.xpose.msra.mxu0 0
        %4350 = vmatprep.subr.bf16.mxu0 0
        %4351 = vmatpush1.bf16.xpose.msra.mxu0 0
        %4352 = vmatprep.subr.bf16.mxu0 0
        %4353 = vmatpush1.bf16.xpose.msra.mxu0 0
        %4354 = vmatprep.subr.bf16.mxu0 %v3601
        %4355 = vmatpush1.bf16.xpose.msra.mxu0 %v3600
        %4356 = vmatprep.subr.bf16.mxu0 0
        %4357 = vmatpush2.bf16.xpose.msra.mxu0 0
        %4358 = vmatprep.subr.bf16.mxu0 0
        %4359 = vmatpush2.bf16.xpose.msra.mxu0 0
        %4360 = vmatprep.subr.bf16.mxu0 0
        %4361 = vmatpush2.bf16.xpose.msra.mxu0 0
        %4362 = vmatprep.subr.bf16.mxu0 0
        %4363 = vmatpush2.bf16.xpose.msra.mxu0 0
        %4364 = vmatprep.subr.bf16.mxu0 0
        %4365 = vmatpush2.bf16.xpose.msra.mxu0 0
        %4366 = vmatprep.subr.bf16.mxu0 0
        %4367 = vmatpush2.bf16.xpose.msra.mxu0 0
        %4368 = vmatprep.subr.bf16.mxu0 0
        %4369 = vmatpush2.bf16.xpose.msra.mxu0 0
        %4370 = vmatprep.subr.bf16.mxu0 0
        %4371 = vmatpush2.bf16.xpose.msra.mxu0 0
        %4372 = vmatprep.mubr.bf16.mxu0 %v691
        %4373 = vmatmul.mubr.bf16.gmra.mxu0 %v677
        %v4374 = vpop.f32.mrf.mxu0
        %v4375 = vadd.f32 %v4335, %v4374
        %v4376 = vpop.f32.mrf.mxu0
        %v4377 = vpop.f32.mrf.mxu0
        %v4378 = vpop.f32.mrf.mxu0
        %4379 = vdwg.mxu0
        %4380 = vmatprep.subr.bf16.mxu0 0
        %4381 = vmatpush1.bf16.xpose.msra.mxu0 0
        %4382 = vmatprep.subr.bf16.mxu0 0
        %4383 = vmatpush1.bf16.xpose.msra.mxu0 0
        %4384 = vmatprep.subr.bf16.mxu0 0
        %4385 = vmatpush1.bf16.xpose.msra.mxu0 0
        %4386 = vmatprep.subr.bf16.mxu0 0
        %4387 = vmatpush1.bf16.xpose.msra.mxu0 0
        %4388 = vmatprep.subr.bf16.mxu0 0
        %4389 = vmatpush1.bf16.xpose.msra.mxu0 0
        %4390 = vmatprep.subr.bf16.mxu0 0
        %4391 = vmatpush1.bf16.xpose.msra.mxu0 0
        %4392 = vmatprep.subr.bf16.mxu0 0
        %4393 = vmatpush1.bf16.xpose.msra.mxu0 0
        %4394 = vmatprep.subr.bf16.mxu0 %v3603
        %4395 = vmatpush1.bf16.xpose.msra.mxu0 %v3602
        %4396 = vmatprep.subr.bf16.mxu0 0
        %4397 = vmatpush2.bf16.xpose.msra.mxu0 0
        %4398 = vmatprep.subr.bf16.mxu0 0
        %4399 = vmatpush2.bf16.xpose.msra.mxu0 0
        %4400 = vmatprep.subr.bf16.mxu0 0
        %4401 = vmatpush2.bf16.xpose.msra.mxu0 0
        %4402 = vmatprep.subr.bf16.mxu0 0
        %4403 = vmatpush2.bf16.xpose.msra.mxu0 0
        %4404 = vmatprep.subr.bf16.mxu0 0
        %4405 = vmatpush2.bf16.xpose.msra.mxu0 0
        %4406 = vmatprep.subr.bf16.mxu0 0
        %4407 = vmatpush2.bf16.xpose.msra.mxu0 0
        %4408 = vmatprep.subr.bf16.mxu0 0
        %4409 = vmatpush2.bf16.xpose.msra.mxu0 0
        %4410 = vmatprep.subr.bf16.mxu0 0
        %4411 = vmatpush2.bf16.xpose.msra.mxu0 0
        %4412 = vmatprep.mubr.bf16.mxu0 %v701
        %4413 = vmatmul.mubr.bf16.gmra.mxu0 %v699
        %v4414 = vpop.f32.mrf.mxu0
        %v4415 = vadd.f32 %v4375, %v4414
        %v4416 = vpop.f32.mrf.mxu0
        %v4417 = vpop.f32.mrf.mxu0
        %v4418 = vpop.f32.mrf.mxu0
        %4419 = vdwg.mxu0
        %4420 = vmatprep.subr.bf16.mxu0 0
        %4421 = vmatpush1.bf16.xpose.msra.mxu0 0
        %4422 = vmatprep.subr.bf16.mxu0 0
        %4423 = vmatpush1.bf16.xpose.msra.mxu0 0
        %4424 = vmatprep.subr.bf16.mxu0 0
        %4425 = vmatpush1.bf16.xpose.msra.mxu0 0
        %4426 = vmatprep.subr.bf16.mxu0 0
        %4427 = vmatpush1.bf16.xpose.msra.mxu0 0
        %4428 = vmatprep.subr.bf16.mxu0 0
        %4429 = vmatpush1.bf16.xpose.msra.mxu0 0
        %4430 = vmatprep.subr.bf16.mxu0 0
        %4431 = vmatpush1.bf16.xpose.msra.mxu0 0
        %4432 = vmatprep.subr.bf16.mxu0 0
        %4433 = vmatpush1.bf16.xpose.msra.mxu0 0
        %4434 = vmatprep.subr.bf16.mxu0 %v3605
        %4435 = vmatpush1.bf16.xpose.msra.mxu0 %v3604
        %4436 = vmatprep.subr.bf16.mxu0 0
        %4437 = vmatpush2.bf16.xpose.msra.mxu0 0
        %4438 = vmatprep.subr.bf16.mxu0 0
        %4439 = vmatpush2.bf16.xpose.msra.mxu0 0
        %4440 = vmatprep.subr.bf16.mxu0 0
        %4441 = vmatpush2.bf16.xpose.msra.mxu0 0
        %4442 = vmatprep.subr.bf16.mxu0 0
        %4443 = vmatpush2.bf16.xpose.msra.mxu0 0
        %4444 = vmatprep.subr.bf16.mxu0 0
        %4445 = vmatpush2.bf16.xpose.msra.mxu0 0
        %4446 = vmatprep.subr.bf16.mxu0 0
        %4447 = vmatpush2.bf16.xpose.msra.mxu0 0
        %4448 = vmatprep.subr.bf16.mxu0 0
        %4449 = vmatpush2.bf16.xpose.msra.mxu0 0
        %4450 = vmatprep.subr.bf16.mxu0 0
        %4451 = vmatpush2.bf16.xpose.msra.mxu0 0
        %4452 = vmatprep.mubr.bf16.mxu0 %v698
        %4453 = vmatmul.mubr.bf16.gmra.mxu0 %v684
        %v4454 = vpop.f32.mrf.mxu0
        %v4455 = vadd.f32 %v4415, %v4454
        %v4456 = vpop.f32.mrf.mxu0
        %v4457 = vpop.f32.mrf.mxu0
        %v4458 = vpop.f32.mrf.mxu0
        %4459 = vdwg.mxu0
        %4460 = vmatprep.subr.bf16.mxu0 0
        %4461 = vmatpush1.bf16.xpose.msra.mxu0 0
        %4462 = vmatprep.subr.bf16.mxu0 0
        %4463 = vmatpush1.bf16.xpose.msra.mxu0 0
        %4464 = vmatprep.subr.bf16.mxu0 0
        %4465 = vmatpush1.bf16.xpose.msra.mxu0 0
        %4466 = vmatprep.subr.bf16.mxu0 0
        %4467 = vmatpush1.bf16.xpose.msra.mxu0 0
        %4468 = vmatprep.subr.bf16.mxu0 0
        %4469 = vmatpush1.bf16.xpose.msra.mxu0 0
        %4470 = vmatprep.subr.bf16.mxu0 0
        %4471 = vmatpush1.bf16.xpose.msra.mxu0 0
        %4472 = vmatprep.subr.bf16.mxu0 0
        %4473 = vmatpush1.bf16.xpose.msra.mxu0 0
        %4474 = vmatprep.subr.bf16.mxu0 %v3607
        %4475 = vmatpush1.bf16.xpose.msra.mxu0 %v3606
        %4476 = vmatprep.subr.bf16.mxu0 0
        %4477 = vmatpush2.bf16.xpose.msra.mxu0 0
        %4478 = vmatprep.subr.bf16.mxu0 0
        %4479 = vmatpush2.bf16.xpose.msra.mxu0 0
        %4480 = vmatprep.subr.bf16.mxu0 0
        %4481 = vmatpush2.bf16.xpose.msra.mxu0 0
        %4482 = vmatprep.subr.bf16.mxu0 0
        %4483 = vmatpush2.bf16.xpose.msra.mxu0 0
        %4484 = vmatprep.subr.bf16.mxu0 0
        %4485 = vmatpush2.bf16.xpose.msra.mxu0 0
        %4486 = vmatprep.subr.bf16.mxu0 0
        %4487 = vmatpush2.bf16.xpose.msra.mxu0 0
        %4488 = vmatprep.subr.bf16.mxu0 0
        %4489 = vmatpush2.bf16.xpose.msra.mxu0 0
        %4490 = vmatprep.subr.bf16.mxu0 0
        %4491 = vmatpush2.bf16.xpose.msra.mxu0 0
        %4492 = vmatprep.mubr.bf16.mxu0 %v702
        %4493 = vmatmul.mubr.bf16.gmra.mxu0 %v700
        %v4494 = vpop.f32.mrf.mxu0
        %v4495 = vadd.f32 %v4455, %v4494
        %v4496 = vpop.f32.mrf.mxu0
        %v4497 = vpop.f32.mrf.mxu0
        %v4498 = vpop.f32.mrf.mxu0
        %4499 = vdwg.mxu0
        %4500 = vmatprep.subr.bf16.mxu0 0
        %4501 = vmatpush1.bf16.xpose.msra.mxu0 0
        %4502 = vmatprep.subr.bf16.mxu0 0
        %4503 = vmatpush1.bf16.xpose.msra.mxu0 0
        %4504 = vmatprep.subr.bf16.mxu0 0
        %4505 = vmatpush1.bf16.xpose.msra.mxu0 0
        %4506 = vmatprep.subr.bf16.mxu0 0
        %4507 = vmatpush1.bf16.xpose.msra.mxu0 0
        %4508 = vmatprep.subr.bf16.mxu0 0
        %4509 = vmatpush1.bf16.xpose.msra.mxu0 0
        %4510 = vmatprep.subr.bf16.mxu0 0
        %4511 = vmatpush1.bf16.xpose.msra.mxu0 0
        %4512 = vmatprep.subr.bf16.mxu0 0
        %4513 = vmatpush1.bf16.xpose.msra.mxu0 0
        %4514 = vmatprep.subr.bf16.mxu0 %v3609
        %4515 = vmatpush1.bf16.xpose.msra.mxu0 %v3608
        %4516 = vmatprep.subr.bf16.mxu0 0
        %4517 = vmatpush2.bf16.xpose.msra.mxu0 0
        %4518 = vmatprep.subr.bf16.mxu0 0
        %4519 = vmatpush2.bf16.xpose.msra.mxu0 0
        %4520 = vmatprep.subr.bf16.mxu0 0
        %4521 = vmatpush2.bf16.xpose.msra.mxu0 0
        %4522 = vmatprep.subr.bf16.mxu0 0
        %4523 = vmatpush2.bf16.xpose.msra.mxu0 0
        %4524 = vmatprep.subr.bf16.mxu0 0
        %4525 = vmatpush2.bf16.xpose.msra.mxu0 0
        %4526 = vmatprep.subr.bf16.mxu0 0
        %4527 = vmatpush2.bf16.xpose.msra.mxu0 0
        %4528 = vmatprep.subr.bf16.mxu0 0
        %4529 = vmatpush2.bf16.xpose.msra.mxu0 0
        %4530 = vmatprep.subr.bf16.mxu0 0
        %4531 = vmatpush2.bf16.xpose.msra.mxu0 0
        %4532 = vmatprep.mubr.bf16.mxu0 %v740
        %4533 = vmatmul.mubr.bf16.gmra.mxu0 %v726
        %v4534 = vpop.f32.mrf.mxu0
        %v4535 = vadd.f32 %v4495, %v4534
        %v4536 = vpop.f32.mrf.mxu0
        %v4537 = vpop.f32.mrf.mxu0
        %v4538 = vpop.f32.mrf.mxu0
        %4539 = vdwg.mxu0
        %4540 = vmatprep.subr.bf16.mxu0 0
        %4541 = vmatpush1.bf16.xpose.msra.mxu0 0
        %4542 = vmatprep.subr.bf16.mxu0 0
        %4543 = vmatpush1.bf16.xpose.msra.mxu0 0
        %4544 = vmatprep.subr.bf16.mxu0 0
        %4545 = vmatpush1.bf16.xpose.msra.mxu0 0
        %4546 = vmatprep.subr.bf16.mxu0 0
        %4547 = vmatpush1.bf16.xpose.msra.mxu0 0
        %4548 = vmatprep.subr.bf16.mxu0 0
        %4549 = vmatpush1.bf16.xpose.msra.mxu0 0
        %4550 = vmatprep.subr.bf16.mxu0 0
        %4551 = vmatpush1.bf16.xpose.msra.mxu0 0
        %4552 = vmatprep.subr.bf16.mxu0 0
        %4553 = vmatpush1.bf16.xpose.msra.mxu0 0
        %4554 = vmatprep.subr.bf16.mxu0 %v3611
        %4555 = vmatpush1.bf16.xpose.msra.mxu0 %v3610
        %4556 = vmatprep.subr.bf16.mxu0 0
        %4557 = vmatpush2.bf16.xpose.msra.mxu0 0
        %4558 = vmatprep.subr.bf16.mxu0 0
        %4559 = vmatpush2.bf16.xpose.msra.mxu0 0
        %4560 = vmatprep.subr.bf16.mxu0 0
        %4561 = vmatpush2.bf16.xpose.msra.mxu0 0
        %4562 = vmatprep.subr.bf16.mxu0 0
        %4563 = vmatpush2.bf16.xpose.msra.mxu0 0
        %4564 = vmatprep.subr.bf16.mxu0 0
        %4565 = vmatpush2.bf16.xpose.msra.mxu0 0
        %4566 = vmatprep.subr.bf16.mxu0 0
        %4567 = vmatpush2.bf16.xpose.msra.mxu0 0
        %4568 = vmatprep.subr.bf16.mxu0 0
        %4569 = vmatpush2.bf16.xpose.msra.mxu0 0
        %4570 = vmatprep.subr.bf16.mxu0 0
        %4571 = vmatpush2.bf16.xpose.msra.mxu0 0
        %4572 = vmatprep.mubr.bf16.mxu0 %v750
        %4573 = vmatmul.mubr.bf16.gmra.mxu0 %v748
        %v4574 = vpop.f32.mrf.mxu0
        %v4575 = vadd.f32 %v4535, %v4574
        %v4576 = vpop.f32.mrf.mxu0
        %v4577 = vpop.f32.mrf.mxu0
        %v4578 = vpop.f32.mrf.mxu0
        %4579 = vdwg.mxu0
        %4580 = vmatprep.subr.bf16.mxu0 0
        %4581 = vmatpush1.bf16.xpose.msra.mxu0 0
        %4582 = vmatprep.subr.bf16.mxu0 0
        %4583 = vmatpush1.bf16.xpose.msra.mxu0 0
        %4584 = vmatprep.subr.bf16.mxu0 0
        %4585 = vmatpush1.bf16.xpose.msra.mxu0 0
        %4586 = vmatprep.subr.bf16.mxu0 0
        %4587 = vmatpush1.bf16.xpose.msra.mxu0 0
        %4588 = vmatprep.subr.bf16.mxu0 0
        %4589 = vmatpush1.bf16.xpose.msra.mxu0 0
        %4590 = vmatprep.subr.bf16.mxu0 0
        %4591 = vmatpush1.bf16.xpose.msra.mxu0 0
        %4592 = vmatprep.subr.bf16.mxu0 0
        %4593 = vmatpush1.bf16.xpose.msra.mxu0 0
        %4594 = vmatprep.subr.bf16.mxu0 %v3613
        %4595 = vmatpush1.bf16.xpose.msra.mxu0 %v3612
        %4596 = vmatprep.subr.bf16.mxu0 0
        %4597 = vmatpush2.bf16.xpose.msra.mxu0 0
        %4598 = vmatprep.subr.bf16.mxu0 0
        %4599 = vmatpush2.bf16.xpose.msra.mxu0 0
        %4600 = vmatprep.subr.bf16.mxu0 0
        %4601 = vmatpush2.bf16.xpose.msra.mxu0 0
        %4602 = vmatprep.subr.bf16.mxu0 0
        %4603 = vmatpush2.bf16.xpose.msra.mxu0 0
        %4604 = vmatprep.subr.bf16.mxu0 0
        %4605 = vmatpush2.bf16.xpose.msra.mxu0 0
        %4606 = vmatprep.subr.bf16.mxu0 0
        %4607 = vmatpush2.bf16.xpose.msra.mxu0 0
        %4608 = vmatprep.subr.bf16.mxu0 0
        %4609 = vmatpush2.bf16.xpose.msra.mxu0 0
        %4610 = vmatprep.subr.bf16.mxu0 0
        %4611 = vmatpush2.bf16.xpose.msra.mxu0 0
        %4612 = vmatprep.mubr.bf16.mxu0 %v747
        %4613 = vmatmul.mubr.bf16.gmra.mxu0 %v733
        %v4614 = vpop.f32.mrf.mxu0
        %v4615 = vadd.f32 %v4575, %v4614
        %v4616 = vpop.f32.mrf.mxu0
        %v4617 = vpop.f32.mrf.mxu0
        %v4618 = vpop.f32.mrf.mxu0
        %4619 = vdwg.mxu0
        %4620 = vmatprep.subr.bf16.mxu0 0
        %4621 = vmatpush1.bf16.xpose.msra.mxu0 0
        %4622 = vmatprep.subr.bf16.mxu0 0
        %4623 = vmatpush1.bf16.xpose.msra.mxu0 0
        %4624 = vmatprep.subr.bf16.mxu0 0
        %4625 = vmatpush1.bf16.xpose.msra.mxu0 0
        %4626 = vmatprep.subr.bf16.mxu0 0
        %4627 = vmatpush1.bf16.xpose.msra.mxu0 0
        %4628 = vmatprep.subr.bf16.mxu0 0
        %4629 = vmatpush1.bf16.xpose.msra.mxu0 0
        %4630 = vmatprep.subr.bf16.mxu0 0
        %4631 = vmatpush1.bf16.xpose.msra.mxu0 0
        %4632 = vmatprep.subr.bf16.mxu0 0
        %4633 = vmatpush1.bf16.xpose.msra.mxu0 0
        %4634 = vmatprep.subr.bf16.mxu0 %v3615
        %4635 = vmatpush1.bf16.xpose.msra.mxu0 %v3614
        %4636 = vmatprep.subr.bf16.mxu0 0
        %4637 = vmatpush2.bf16.xpose.msra.mxu0 0
        %4638 = vmatprep.subr.bf16.mxu0 0
        %4639 = vmatpush2.bf16.xpose.msra.mxu0 0
        %4640 = vmatprep.subr.bf16.mxu0 0
        %4641 = vmatpush2.bf16.xpose.msra.mxu0 0
        %4642 = vmatprep.subr.bf16.mxu0 0
        %4643 = vmatpush2.bf16.xpose.msra.mxu0 0
        %4644 = vmatprep.subr.bf16.mxu0 0
        %4645 = vmatpush2.bf16.xpose.msra.mxu0 0
        %4646 = vmatprep.subr.bf16.mxu0 0
        %4647 = vmatpush2.bf16.xpose.msra.mxu0 0
        %4648 = vmatprep.subr.bf16.mxu0 0
        %4649 = vmatpush2.bf16.xpose.msra.mxu0 0
        %4650 = vmatprep.subr.bf16.mxu0 0
        %4651 = vmatpush2.bf16.xpose.msra.mxu0 0
        %4652 = vmatprep.mubr.bf16.mxu0 %v751
        %4653 = vmatmul.mubr.bf16.gmra.mxu0 %v749
        %v4654 = vpop.f32.mrf.mxu0
        %v4655 = vadd.f32 %v4615, %v4654
        %v4656 = vpop.f32.mrf.mxu0
        %v4657 = vpop.f32.mrf.mxu0
        %v4658 = vpop.f32.mrf.mxu0
        %4659 = vdwg.mxu0
        %4660 = vmatprep.subr.bf16.mxu0 0
        %4661 = vmatpush1.bf16.xpose.msra.mxu0 0
        %4662 = vmatprep.subr.bf16.mxu0 0
        %4663 = vmatpush1.bf16.xpose.msra.mxu0 0
        %4664 = vmatprep.subr.bf16.mxu0 0
        %4665 = vmatpush1.bf16.xpose.msra.mxu0 0
        %4666 = vmatprep.subr.bf16.mxu0 0
        %4667 = vmatpush1.bf16.xpose.msra.mxu0 0
        %4668 = vmatprep.subr.bf16.mxu0 0
        %4669 = vmatpush1.bf16.xpose.msra.mxu0 0
        %4670 = vmatprep.subr.bf16.mxu0 0
        %4671 = vmatpush1.bf16.xpose.msra.mxu0 0
        %4672 = vmatprep.subr.bf16.mxu0 0
        %4673 = vmatpush1.bf16.xpose.msra.mxu0 0
        %4674 = vmatprep.subr.bf16.mxu0 %v3617
        %4675 = vmatpush1.bf16.xpose.msra.mxu0 %v3616
        %4676 = vmatprep.subr.bf16.mxu0 0
        %4677 = vmatpush2.bf16.xpose.msra.mxu0 0
        %4678 = vmatprep.subr.bf16.mxu0 0
        %4679 = vmatpush2.bf16.xpose.msra.mxu0 0
        %4680 = vmatprep.subr.bf16.mxu0 0
        %4681 = vmatpush2.bf16.xpose.msra.mxu0 0
        %4682 = vmatprep.subr.bf16.mxu0 0
        %4683 = vmatpush2.bf16.xpose.msra.mxu0 0
        %4684 = vmatprep.subr.bf16.mxu0 0
        %4685 = vmatpush2.bf16.xpose.msra.mxu0 0
        %4686 = vmatprep.subr.bf16.mxu0 0
        %4687 = vmatpush2.bf16.xpose.msra.mxu0 0
        %4688 = vmatprep.subr.bf16.mxu0 0
        %4689 = vmatpush2.bf16.xpose.msra.mxu0 0
        %4690 = vmatprep.subr.bf16.mxu0 0
        %4691 = vmatpush2.bf16.xpose.msra.mxu0 0
        %4692 = vmatprep.mubr.bf16.mxu0 %v789
        %4693 = vmatmul.mubr.bf16.gmra.mxu0 %v775
        %v4694 = vpop.f32.mrf.mxu0
        %v4695 = vadd.f32 %v4655, %v4694
        %v4696 = vpop.f32.mrf.mxu0
        %v4697 = vpop.f32.mrf.mxu0
        %v4698 = vpop.f32.mrf.mxu0
        %4699 = vdwg.mxu0
        %4700 = vmatprep.subr.bf16.mxu0 0
        %4701 = vmatpush1.bf16.xpose.msra.mxu0 0
        %4702 = vmatprep.subr.bf16.mxu0 0
        %4703 = vmatpush1.bf16.xpose.msra.mxu0 0
        %4704 = vmatprep.subr.bf16.mxu0 0
        %4705 = vmatpush1.bf16.xpose.msra.mxu0 0
        %4706 = vmatprep.subr.bf16.mxu0 0
        %4707 = vmatpush1.bf16.xpose.msra.mxu0 0
        %4708 = vmatprep.subr.bf16.mxu0 0
        %4709 = vmatpush1.bf16.xpose.msra.mxu0 0
        %4710 = vmatprep.subr.bf16.mxu0 0
        %4711 = vmatpush1.bf16.xpose.msra.mxu0 0
        %4712 = vmatprep.subr.bf16.mxu0 0
        %4713 = vmatpush1.bf16.xpose.msra.mxu0 0
        %4714 = vmatprep.subr.bf16.mxu0 %v3619
        %4715 = vmatpush1.bf16.xpose.msra.mxu0 %v3618
        %4716 = vmatprep.subr.bf16.mxu0 0
        %4717 = vmatpush2.bf16.xpose.msra.mxu0 0
        %4718 = vmatprep.subr.bf16.mxu0 0
        %4719 = vmatpush2.bf16.xpose.msra.mxu0 0
        %4720 = vmatprep.subr.bf16.mxu0 0
        %4721 = vmatpush2.bf16.xpose.msra.mxu0 0
        %4722 = vmatprep.subr.bf16.mxu0 0
        %4723 = vmatpush2.bf16.xpose.msra.mxu0 0
        %4724 = vmatprep.subr.bf16.mxu0 0
        %4725 = vmatpush2.bf16.xpose.msra.mxu0 0
        %4726 = vmatprep.subr.bf16.mxu0 0
        %4727 = vmatpush2.bf16.xpose.msra.mxu0 0
        %4728 = vmatprep.subr.bf16.mxu0 0
        %4729 = vmatpush2.bf16.xpose.msra.mxu0 0
        %4730 = vmatprep.subr.bf16.mxu0 0
        %4731 = vmatpush2.bf16.xpose.msra.mxu0 0
        %4732 = vmatprep.mubr.bf16.mxu0 %v799
        %4733 = vmatmul.mubr.bf16.gmra.mxu0 %v797
        %v4734 = vpop.f32.mrf.mxu0
        %v4735 = vadd.f32 %v4695, %v4734
        %v4736 = vpop.f32.mrf.mxu0
        %v4737 = vpop.f32.mrf.mxu0
        %v4738 = vpop.f32.mrf.mxu0
        %4739 = vdwg.mxu0
        %4740 = vmatprep.subr.bf16.mxu0 0
        %4741 = vmatpush1.bf16.xpose.msra.mxu0 0
        %4742 = vmatprep.subr.bf16.mxu0 0
        %4743 = vmatpush1.bf16.xpose.msra.mxu0 0
        %4744 = vmatprep.subr.bf16.mxu0 0
        %4745 = vmatpush1.bf16.xpose.msra.mxu0 0
        %4746 = vmatprep.subr.bf16.mxu0 0
        %4747 = vmatpush1.bf16.xpose.msra.mxu0 0
        %4748 = vmatprep.subr.bf16.mxu0 0
        %4749 = vmatpush1.bf16.xpose.msra.mxu0 0
        %4750 = vmatprep.subr.bf16.mxu0 0
        %4751 = vmatpush1.bf16.xpose.msra.mxu0 0
        %4752 = vmatprep.subr.bf16.mxu0 0
        %4753 = vmatpush1.bf16.xpose.msra.mxu0 0
        %4754 = vmatprep.subr.bf16.mxu0 %v3621
        %4755 = vmatpush1.bf16.xpose.msra.mxu0 %v3620
        %4756 = vmatprep.subr.bf16.mxu0 0
        %4757 = vmatpush2.bf16.xpose.msra.mxu0 0
        %4758 = vmatprep.subr.bf16.mxu0 0
        %4759 = vmatpush2.bf16.xpose.msra.mxu0 0
        %4760 = vmatprep.subr.bf16.mxu0 0
        %4761 = vmatpush2.bf16.xpose.msra.mxu0 0
        %4762 = vmatprep.subr.bf16.mxu0 0
        %4763 = vmatpush2.bf16.xpose.msra.mxu0 0
        %4764 = vmatprep.subr.bf16.mxu0 0
        %4765 = vmatpush2.bf16.xpose.msra.mxu0 0
        %4766 = vmatprep.subr.bf16.mxu0 0
        %4767 = vmatpush2.bf16.xpose.msra.mxu0 0
        %4768 = vmatprep.subr.bf16.mxu0 0
        %4769 = vmatpush2.bf16.xpose.msra.mxu0 0
        %4770 = vmatprep.subr.bf16.mxu0 0
        %4771 = vmatpush2.bf16.xpose.msra.mxu0 0
        %4772 = vmatprep.mubr.bf16.mxu0 %v796
        %4773 = vmatmul.mubr.bf16.gmra.mxu0 %v782
        %v4774 = vpop.f32.mrf.mxu0
        %v4775 = vadd.f32 %v4735, %v4774
        %v4776 = vpop.f32.mrf.mxu0
        %v4777 = vpop.f32.mrf.mxu0
        %v4778 = vpop.f32.mrf.mxu0
        %4779 = vdwg.mxu0
        %4780 = vmatprep.subr.bf16.mxu0 0
        %4781 = vmatpush1.bf16.xpose.msra.mxu0 0
        %4782 = vmatprep.subr.bf16.mxu0 0
        %4783 = vmatpush1.bf16.xpose.msra.mxu0 0
        %4784 = vmatprep.subr.bf16.mxu0 0
        %4785 = vmatpush1.bf16.xpose.msra.mxu0 0
        %4786 = vmatprep.subr.bf16.mxu0 0
        %4787 = vmatpush1.bf16.xpose.msra.mxu0 0
        %4788 = vmatprep.subr.bf16.mxu0 0
        %4789 = vmatpush1.bf16.xpose.msra.mxu0 0
        %4790 = vmatprep.subr.bf16.mxu0 0
        %4791 = vmatpush1.bf16.xpose.msra.mxu0 0
        %4792 = vmatprep.subr.bf16.mxu0 0
        %4793 = vmatpush1.bf16.xpose.msra.mxu0 0
        %4794 = vmatprep.subr.bf16.mxu0 %v3623
        %4795 = vmatpush1.bf16.xpose.msra.mxu0 %v3622
        %4796 = vmatprep.subr.bf16.mxu0 0
        %4797 = vmatpush2.bf16.xpose.msra.mxu0 0
        %4798 = vmatprep.subr.bf16.mxu0 0
        %4799 = vmatpush2.bf16.xpose.msra.mxu0 0
        %4800 = vmatprep.subr.bf16.mxu0 0
        %4801 = vmatpush2.bf16.xpose.msra.mxu0 0
        %4802 = vmatprep.subr.bf16.mxu0 0
        %4803 = vmatpush2.bf16.xpose.msra.mxu0 0
        %4804 = vmatprep.subr.bf16.mxu0 0
        %4805 = vmatpush2.bf16.xpose.msra.mxu0 0
        %4806 = vmatprep.subr.bf16.mxu0 0
        %4807 = vmatpush2.bf16.xpose.msra.mxu0 0
        %4808 = vmatprep.subr.bf16.mxu0 0
        %4809 = vmatpush2.bf16.xpose.msra.mxu0 0
        %4810 = vmatprep.subr.bf16.mxu0 0
        %4811 = vmatpush2.bf16.xpose.msra.mxu0 0
        %4812 = vmatprep.mubr.bf16.mxu0 %v800
        %4813 = vmatmul.mubr.bf16.gmra.mxu0 %v798
        %v4814 = vpop.f32.mrf.mxu0
        %v4815 = vadd.f32 %v4775, %v4814
        %v4816 = vpop.f32.mrf.mxu0
        %v4817 = vpop.f32.mrf.mxu0
        %v4818 = vpop.f32.mrf.mxu0
        %4819 = vdwg.mxu0
        %4820 = vmatprep.subr.bf16.mxu0 0
        %4821 = vmatpush1.bf16.xpose.msra.mxu0 0
        %4822 = vmatprep.subr.bf16.mxu0 0
        %4823 = vmatpush1.bf16.xpose.msra.mxu0 0
        %4824 = vmatprep.subr.bf16.mxu0 0
        %4825 = vmatpush1.bf16.xpose.msra.mxu0 0
        %4826 = vmatprep.subr.bf16.mxu0 0
        %4827 = vmatpush1.bf16.xpose.msra.mxu0 0
        %4828 = vmatprep.subr.bf16.mxu0 0
        %4829 = vmatpush1.bf16.xpose.msra.mxu0 0
        %4830 = vmatprep.subr.bf16.mxu0 0
        %4831 = vmatpush1.bf16.xpose.msra.mxu0 0
        %4832 = vmatprep.subr.bf16.mxu0 0
        %4833 = vmatpush1.bf16.xpose.msra.mxu0 0
        %4834 = vmatprep.subr.bf16.mxu0 %v3625
        %4835 = vmatpush1.bf16.xpose.msra.mxu0 %v3624
        %4836 = vmatprep.subr.bf16.mxu0 0
        %4837 = vmatpush2.bf16.xpose.msra.mxu0 0
        %4838 = vmatprep.subr.bf16.mxu0 0
        %4839 = vmatpush2.bf16.xpose.msra.mxu0 0
        %4840 = vmatprep.subr.bf16.mxu0 0
        %4841 = vmatpush2.bf16.xpose.msra.mxu0 0
        %4842 = vmatprep.subr.bf16.mxu0 0
        %4843 = vmatpush2.bf16.xpose.msra.mxu0 0
        %4844 = vmatprep.subr.bf16.mxu0 0
        %4845 = vmatpush2.bf16.xpose.msra.mxu0 0
        %4846 = vmatprep.subr.bf16.mxu0 0
        %4847 = vmatpush2.bf16.xpose.msra.mxu0 0
        %4848 = vmatprep.subr.bf16.mxu0 0
        %4849 = vmatpush2.bf16.xpose.msra.mxu0 0
        %4850 = vmatprep.subr.bf16.mxu0 0
        %4851 = vmatpush2.bf16.xpose.msra.mxu0 0
        %4852 = vmatprep.mubr.bf16.mxu0 %v838
        %4853 = vmatmul.mubr.bf16.gmra.mxu0 %v824
        %v4854 = vpop.f32.mrf.mxu0
        %v4855 = vadd.f32 %v4815, %v4854
        %v4856 = vpop.f32.mrf.mxu0
        %v4857 = vpop.f32.mrf.mxu0
        %v4858 = vpop.f32.mrf.mxu0
        %4859 = vdwg.mxu0
        %4860 = vmatprep.subr.bf16.mxu0 0
        %4861 = vmatpush1.bf16.xpose.msra.mxu0 0
        %4862 = vmatprep.subr.bf16.mxu0 0
        %4863 = vmatpush1.bf16.xpose.msra.mxu0 0
        %4864 = vmatprep.subr.bf16.mxu0 0
        %4865 = vmatpush1.bf16.xpose.msra.mxu0 0
        %4866 = vmatprep.subr.bf16.mxu0 0
        %4867 = vmatpush1.bf16.xpose.msra.mxu0 0
        %4868 = vmatprep.subr.bf16.mxu0 0
        %4869 = vmatpush1.bf16.xpose.msra.mxu0 0
        %4870 = vmatprep.subr.bf16.mxu0 0
        %4871 = vmatpush1.bf16.xpose.msra.mxu0 0
        %4872 = vmatprep.subr.bf16.mxu0 0
        %4873 = vmatpush1.bf16.xpose.msra.mxu0 0
        %4874 = vmatprep.subr.bf16.mxu0 %v3627
        %4875 = vmatpush1.bf16.xpose.msra.mxu0 %v3626
        %4876 = vmatprep.subr.bf16.mxu0 0
        %4877 = vmatpush2.bf16.xpose.msra.mxu0 0
        %4878 = vmatprep.subr.bf16.mxu0 0
        %4879 = vmatpush2.bf16.xpose.msra.mxu0 0
        %4880 = vmatprep.subr.bf16.mxu0 0
        %4881 = vmatpush2.bf16.xpose.msra.mxu0 0
        %4882 = vmatprep.subr.bf16.mxu0 0
        %4883 = vmatpush2.bf16.xpose.msra.mxu0 0
        %4884 = vmatprep.subr.bf16.mxu0 0
        %4885 = vmatpush2.bf16.xpose.msra.mxu0 0
        %4886 = vmatprep.subr.bf16.mxu0 0
        %4887 = vmatpush2.bf16.xpose.msra.mxu0 0
        %4888 = vmatprep.subr.bf16.mxu0 0
        %4889 = vmatpush2.bf16.xpose.msra.mxu0 0
        %4890 = vmatprep.subr.bf16.mxu0 0
        %4891 = vmatpush2.bf16.xpose.msra.mxu0 0
        %4892 = vmatprep.mubr.bf16.mxu0 %v848
        %4893 = vmatmul.mubr.bf16.gmra.mxu0 %v846
        %v4894 = vpop.f32.mrf.mxu0
        %v4895 = vadd.f32 %v4855, %v4894
        %v4896 = vpop.f32.mrf.mxu0
        %v4897 = vpop.f32.mrf.mxu0
        %v4898 = vpop.f32.mrf.mxu0
        %4899 = vdwg.mxu0
        %4900 = vmatprep.subr.bf16.mxu0 0
        %4901 = vmatpush1.bf16.xpose.msra.mxu0 0
        %4902 = vmatprep.subr.bf16.mxu0 0
        %4903 = vmatpush1.bf16.xpose.msra.mxu0 0
        %4904 = vmatprep.subr.bf16.mxu0 0
        %4905 = vmatpush1.bf16.xpose.msra.mxu0 0
        %4906 = vmatprep.subr.bf16.mxu0 0
        %4907 = vmatpush1.bf16.xpose.msra.mxu0 0
        %4908 = vmatprep.subr.bf16.mxu0 0
        %4909 = vmatpush1.bf16.xpose.msra.mxu0 0
        %4910 = vmatprep.subr.bf16.mxu0 0
        %4911 = vmatpush1.bf16.xpose.msra.mxu0 0
        %4912 = vmatprep.subr.bf16.mxu0 0
        %4913 = vmatpush1.bf16.xpose.msra.mxu0 0
        %4914 = vmatprep.subr.bf16.mxu0 %v3629
        %4915 = vmatpush1.bf16.xpose.msra.mxu0 %v3628
        %4916 = vmatprep.subr.bf16.mxu0 0
        %4917 = vmatpush2.bf16.xpose.msra.mxu0 0
        %4918 = vmatprep.subr.bf16.mxu0 0
        %4919 = vmatpush2.bf16.xpose.msra.mxu0 0
        %4920 = vmatprep.subr.bf16.mxu0 0
        %4921 = vmatpush2.bf16.xpose.msra.mxu0 0
        %4922 = vmatprep.subr.bf16.mxu0 0
        %4923 = vmatpush2.bf16.xpose.msra.mxu0 0
        %4924 = vmatprep.subr.bf16.mxu0 0
        %4925 = vmatpush2.bf16.xpose.msra.mxu0 0
        %4926 = vmatprep.subr.bf16.mxu0 0
        %4927 = vmatpush2.bf16.xpose.msra.mxu0 0
        %4928 = vmatprep.subr.bf16.mxu0 0
        %4929 = vmatpush2.bf16.xpose.msra.mxu0 0
        %4930 = vmatprep.subr.bf16.mxu0 0
        %4931 = vmatpush2.bf16.xpose.msra.mxu0 0
        %4932 = vmatprep.mubr.bf16.mxu0 %v845
        %4933 = vmatmul.mubr.bf16.gmra.mxu0 %v831
        %v4934 = vpop.f32.mrf.mxu0
        %v4935 = vadd.f32 %v4895, %v4934
        %v4936 = vpop.f32.mrf.mxu0
        %v4937 = vpop.f32.mrf.mxu0
        %v4938 = vpop.f32.mrf.mxu0
        %4939 = vdwg.mxu0
        %4940 = vmatprep.subr.bf16.mxu0 0
        %4941 = vmatpush1.bf16.xpose.msra.mxu0 0
        %4942 = vmatprep.subr.bf16.mxu0 0
        %4943 = vmatpush1.bf16.xpose.msra.mxu0 0
        %4944 = vmatprep.subr.bf16.mxu0 0
        %4945 = vmatpush1.bf16.xpose.msra.mxu0 0
        %4946 = vmatprep.subr.bf16.mxu0 0
        %4947 = vmatpush1.bf16.xpose.msra.mxu0 0
        %4948 = vmatprep.subr.bf16.mxu0 0
        %4949 = vmatpush1.bf16.xpose.msra.mxu0 0
        %4950 = vmatprep.subr.bf16.mxu0 0
        %4951 = vmatpush1.bf16.xpose.msra.mxu0 0
        %4952 = vmatprep.subr.bf16.mxu0 0
        %4953 = vmatpush1.bf16.xpose.msra.mxu0 0
        %4954 = vmatprep.subr.bf16.mxu0 %v3631
        %4955 = vmatpush1.bf16.xpose.msra.mxu0 %v3630
        %4956 = vmatprep.subr.bf16.mxu0 0
        %4957 = vmatpush2.bf16.xpose.msra.mxu0 0
        %4958 = vmatprep.subr.bf16.mxu0 0
        %4959 = vmatpush2.bf16.xpose.msra.mxu0 0
        %4960 = vmatprep.subr.bf16.mxu0 0
        %4961 = vmatpush2.bf16.xpose.msra.mxu0 0
        %4962 = vmatprep.subr.bf16.mxu0 0
        %4963 = vmatpush2.bf16.xpose.msra.mxu0 0
        %4964 = vmatprep.subr.bf16.mxu0 0
        %4965 = vmatpush2.bf16.xpose.msra.mxu0 0
        %4966 = vmatprep.subr.bf16.mxu0 0
        %4967 = vmatpush2.bf16.xpose.msra.mxu0 0
        %4968 = vmatprep.subr.bf16.mxu0 0
        %4969 = vmatpush2.bf16.xpose.msra.mxu0 0
        %4970 = vmatprep.subr.bf16.mxu0 0
        %4971 = vmatpush2.bf16.xpose.msra.mxu0 0
        %4972 = vmatprep.mubr.bf16.mxu0 %v849
        %4973 = vmatmul.mubr.bf16.gmra.mxu0 %v847
        %v4974 = vpop.f32.mrf.mxu0
        %v4975 = vadd.f32 %v4935, %v4974
        %v4976 = vpop.f32.mrf.mxu0
        %v4977 = vpop.f32.mrf.mxu0
        %v4978 = vpop.f32.mrf.mxu0
        %4979 = vdwg.mxu0
        %4980 = vmatprep.subr.bf16.mxu0 0
        %4981 = vmatpush1.bf16.xpose.msra.mxu0 0
        %4982 = vmatprep.subr.bf16.mxu0 0
        %4983 = vmatpush1.bf16.xpose.msra.mxu0 0
        %4984 = vmatprep.subr.bf16.mxu0 0
        %4985 = vmatpush1.bf16.xpose.msra.mxu0 0
        %4986 = vmatprep.subr.bf16.mxu0 0
        %4987 = vmatpush1.bf16.xpose.msra.mxu0 0
        %4988 = vmatprep.subr.bf16.mxu0 0
        %4989 = vmatpush1.bf16.xpose.msra.mxu0 0
        %4990 = vmatprep.subr.bf16.mxu0 0
        %4991 = vmatpush1.bf16.xpose.msra.mxu0 0
        %4992 = vmatprep.subr.bf16.mxu0 0
        %4993 = vmatpush1.bf16.xpose.msra.mxu0 0
        %4994 = vmatprep.subr.bf16.mxu0 %v3633
        %4995 = vmatpush1.bf16.xpose.msra.mxu0 %v3632
        %4996 = vmatprep.subr.bf16.mxu0 0
        %4997 = vmatpush2.bf16.xpose.msra.mxu0 0
        %4998 = vmatprep.subr.bf16.mxu0 0
        %4999 = vmatpush2.bf16.xpose.msra.mxu0 0
        %5000 = vmatprep.subr.bf16.mxu0 0
        %5001 = vmatpush2.bf16.xpose.msra.mxu0 0
        %5002 = vmatprep.subr.bf16.mxu0 0
        %5003 = vmatpush2.bf16.xpose.msra.mxu0 0
        %5004 = vmatprep.subr.bf16.mxu0 0
        %5005 = vmatpush2.bf16.xpose.msra.mxu0 0
        %5006 = vmatprep.subr.bf16.mxu0 0
        %5007 = vmatpush2.bf16.xpose.msra.mxu0 0
        %5008 = vmatprep.subr.bf16.mxu0 0
        %5009 = vmatpush2.bf16.xpose.msra.mxu0 0
        %5010 = vmatprep.subr.bf16.mxu0 0
        %5011 = vmatpush2.bf16.xpose.msra.mxu0 0
        %5012 = vmatprep.mubr.bf16.mxu0 %v887
        %5013 = vmatmul.mubr.bf16.gmra.mxu0 %v873
        %v5014 = vpop.f32.mrf.mxu0
        %v5015 = vadd.f32 %v4975, %v5014
        %v5016 = vpop.f32.mrf.mxu0
        %v5017 = vpop.f32.mrf.mxu0
        %v5018 = vpop.f32.mrf.mxu0
        %5019 = vdwg.mxu0
        %5020 = vmatprep.subr.bf16.mxu0 0
        %5021 = vmatpush1.bf16.xpose.msra.mxu0 0
        %5022 = vmatprep.subr.bf16.mxu0 0
        %5023 = vmatpush1.bf16.xpose.msra.mxu0 0
        %5024 = vmatprep.subr.bf16.mxu0 0
        %5025 = vmatpush1.bf16.xpose.msra.mxu0 0
        %5026 = vmatprep.subr.bf16.mxu0 0
        %5027 = vmatpush1.bf16.xpose.msra.mxu0 0
        %5028 = vmatprep.subr.bf16.mxu0 0
        %5029 = vmatpush1.bf16.xpose.msra.mxu0 0
        %5030 = vmatprep.subr.bf16.mxu0 0
        %5031 = vmatpush1.bf16.xpose.msra.mxu0 0
        %5032 = vmatprep.subr.bf16.mxu0 0
        %5033 = vmatpush1.bf16.xpose.msra.mxu0 0
        %5034 = vmatprep.subr.bf16.mxu0 %v3635
        %5035 = vmatpush1.bf16.xpose.msra.mxu0 %v3634
        %5036 = vmatprep.subr.bf16.mxu0 0
        %5037 = vmatpush2.bf16.xpose.msra.mxu0 0
        %5038 = vmatprep.subr.bf16.mxu0 0
        %5039 = vmatpush2.bf16.xpose.msra.mxu0 0
        %5040 = vmatprep.subr.bf16.mxu0 0
        %5041 = vmatpush2.bf16.xpose.msra.mxu0 0
        %5042 = vmatprep.subr.bf16.mxu0 0
        %5043 = vmatpush2.bf16.xpose.msra.mxu0 0
        %5044 = vmatprep.subr.bf16.mxu0 0
        %5045 = vmatpush2.bf16.xpose.msra.mxu0 0
        %5046 = vmatprep.subr.bf16.mxu0 0
        %5047 = vmatpush2.bf16.xpose.msra.mxu0 0
        %5048 = vmatprep.subr.bf16.mxu0 0
        %5049 = vmatpush2.bf16.xpose.msra.mxu0 0
        %5050 = vmatprep.subr.bf16.mxu0 0
        %5051 = vmatpush2.bf16.xpose.msra.mxu0 0
        %5052 = vmatprep.mubr.bf16.mxu0 %v897
        %5053 = vmatmul.mubr.bf16.gmra.mxu0 %v895
        %v5054 = vpop.f32.mrf.mxu0
        %v5055 = vadd.f32 %v5015, %v5054
        %v5056 = vpop.f32.mrf.mxu0
        %v5057 = vpop.f32.mrf.mxu0
        %v5058 = vpop.f32.mrf.mxu0
        %5059 = vdwg.mxu0
        %5060 = vmatprep.subr.bf16.mxu0 0
        %5061 = vmatpush1.bf16.xpose.msra.mxu0 0
        %5062 = vmatprep.subr.bf16.mxu0 0
        %5063 = vmatpush1.bf16.xpose.msra.mxu0 0
        %5064 = vmatprep.subr.bf16.mxu0 0
        %5065 = vmatpush1.bf16.xpose.msra.mxu0 0
        %5066 = vmatprep.subr.bf16.mxu0 0
        %5067 = vmatpush1.bf16.xpose.msra.mxu0 0
        %5068 = vmatprep.subr.bf16.mxu0 0
        %5069 = vmatpush1.bf16.xpose.msra.mxu0 0
        %5070 = vmatprep.subr.bf16.mxu0 0
        %5071 = vmatpush1.bf16.xpose.msra.mxu0 0
        %5072 = vmatprep.subr.bf16.mxu0 0
        %5073 = vmatpush1.bf16.xpose.msra.mxu0 0
        %5074 = vmatprep.subr.bf16.mxu0 %v3637
        %5075 = vmatpush1.bf16.xpose.msra.mxu0 %v3636
        %5076 = vmatprep.subr.bf16.mxu0 0
        %5077 = vmatpush2.bf16.xpose.msra.mxu0 0
        %5078 = vmatprep.subr.bf16.mxu0 0
        %5079 = vmatpush2.bf16.xpose.msra.mxu0 0
        %5080 = vmatprep.subr.bf16.mxu0 0
        %5081 = vmatpush2.bf16.xpose.msra.mxu0 0
        %5082 = vmatprep.subr.bf16.mxu0 0
        %5083 = vmatpush2.bf16.xpose.msra.mxu0 0
        %5084 = vmatprep.subr.bf16.mxu0 0
        %5085 = vmatpush2.bf16.xpose.msra.mxu0 0
        %5086 = vmatprep.subr.bf16.mxu0 0
        %5087 = vmatpush2.bf16.xpose.msra.mxu0 0
        %5088 = vmatprep.subr.bf16.mxu0 0
        %5089 = vmatpush2.bf16.xpose.msra.mxu0 0
        %5090 = vmatprep.subr.bf16.mxu0 0
        %5091 = vmatpush2.bf16.xpose.msra.mxu0 0
        %5092 = vmatprep.mubr.bf16.mxu0 %v894
        %5093 = vmatmul.mubr.bf16.gmra.mxu0 %v880
        %v5094 = vpop.f32.mrf.mxu0
        %v5095 = vadd.f32 %v5055, %v5094
        %v5096 = vpop.f32.mrf.mxu0
        %v5097 = vpop.f32.mrf.mxu0
        %v5098 = vpop.f32.mrf.mxu0
        %5099 = vdwg.mxu0
        %5100 = vmatprep.subr.bf16.mxu0 0
        %5101 = vmatpush1.bf16.xpose.msra.mxu0 0
        %5102 = vmatprep.subr.bf16.mxu0 0
        %5103 = vmatpush1.bf16.xpose.msra.mxu0 0
        %5104 = vmatprep.subr.bf16.mxu0 0
        %5105 = vmatpush1.bf16.xpose.msra.mxu0 0
        %5106 = vmatprep.subr.bf16.mxu0 0
        %5107 = vmatpush1.bf16.xpose.msra.mxu0 0
        %5108 = vmatprep.subr.bf16.mxu0 0
        %5109 = vmatpush1.bf16.xpose.msra.mxu0 0
        %5110 = vmatprep.subr.bf16.mxu0 0
        %5111 = vmatpush1.bf16.xpose.msra.mxu0 0
        %5112 = vmatprep.subr.bf16.mxu0 0
        %5113 = vmatpush1.bf16.xpose.msra.mxu0 0
        %5114 = vmatprep.subr.bf16.mxu0 %v3639
        %5115 = vmatpush1.bf16.xpose.msra.mxu0 %v3638
        %5116 = vmatprep.subr.bf16.mxu0 0
        %5117 = vmatpush2.bf16.xpose.msra.mxu0 0
        %5118 = vmatprep.subr.bf16.mxu0 0
        %5119 = vmatpush2.bf16.xpose.msra.mxu0 0
        %5120 = vmatprep.subr.bf16.mxu0 0
        %5121 = vmatpush2.bf16.xpose.msra.mxu0 0
        %5122 = vmatprep.subr.bf16.mxu0 0
        %5123 = vmatpush2.bf16.xpose.msra.mxu0 0
        %5124 = vmatprep.subr.bf16.mxu0 0
        %5125 = vmatpush2.bf16.xpose.msra.mxu0 0
        %5126 = vmatprep.subr.bf16.mxu0 0
        %5127 = vmatpush2.bf16.xpose.msra.mxu0 0
        %5128 = vmatprep.subr.bf16.mxu0 0
        %5129 = vmatpush2.bf16.xpose.msra.mxu0 0
        %5130 = vmatprep.subr.bf16.mxu0 0
        %5131 = vmatpush2.bf16.xpose.msra.mxu0 0
        %5132 = vmatprep.mubr.bf16.mxu0 %v898
        %5133 = vmatmul.mubr.bf16.gmra.mxu0 %v896
        %v5134 = vpop.f32.mrf.mxu0
        %v5135 = vadd.f32 %v5095, %v5134
        %v5136 = vpop.f32.mrf.mxu0
        %v5137 = vpop.f32.mrf.mxu0
        %v5138 = vpop.f32.mrf.mxu0
        %5139 = vdwg.mxu0
        %5140 = vmatprep.subr.bf16.mxu0 0
        %5141 = vmatpush1.bf16.xpose.msra.mxu0 0
        %5142 = vmatprep.subr.bf16.mxu0 0
        %5143 = vmatpush1.bf16.xpose.msra.mxu0 0
        %5144 = vmatprep.subr.bf16.mxu0 0
        %5145 = vmatpush1.bf16.xpose.msra.mxu0 0
        %5146 = vmatprep.subr.bf16.mxu0 0
        %5147 = vmatpush1.bf16.xpose.msra.mxu0 0
        %5148 = vmatprep.subr.bf16.mxu0 0
        %5149 = vmatpush1.bf16.xpose.msra.mxu0 0
        %5150 = vmatprep.subr.bf16.mxu0 0
        %5151 = vmatpush1.bf16.xpose.msra.mxu0 0
        %5152 = vmatprep.subr.bf16.mxu0 0
        %5153 = vmatpush1.bf16.xpose.msra.mxu0 0
        %5154 = vmatprep.subr.bf16.mxu0 %v3641
        %5155 = vmatpush1.bf16.xpose.msra.mxu0 %v3640
        %5156 = vmatprep.subr.bf16.mxu0 0
        %5157 = vmatpush2.bf16.xpose.msra.mxu0 0
        %5158 = vmatprep.subr.bf16.mxu0 0
        %5159 = vmatpush2.bf16.xpose.msra.mxu0 0
        %5160 = vmatprep.subr.bf16.mxu0 0
        %5161 = vmatpush2.bf16.xpose.msra.mxu0 0
        %5162 = vmatprep.subr.bf16.mxu0 0
        %5163 = vmatpush2.bf16.xpose.msra.mxu0 0
        %5164 = vmatprep.subr.bf16.mxu0 0
        %5165 = vmatpush2.bf16.xpose.msra.mxu0 0
        %5166 = vmatprep.subr.bf16.mxu0 0
        %5167 = vmatpush2.bf16.xpose.msra.mxu0 0
        %5168 = vmatprep.subr.bf16.mxu0 0
        %5169 = vmatpush2.bf16.xpose.msra.mxu0 0
        %5170 = vmatprep.subr.bf16.mxu0 0
        %5171 = vmatpush2.bf16.xpose.msra.mxu0 0
        %5172 = vmatprep.mubr.bf16.mxu0 %v936
        %5173 = vmatmul.mubr.bf16.gmra.mxu0 %v922
        %v5174 = vpop.f32.mrf.mxu0
        %v5175 = vadd.f32 %v5135, %v5174
        %v5176 = vpop.f32.mrf.mxu0
        %v5177 = vpop.f32.mrf.mxu0
        %v5178 = vpop.f32.mrf.mxu0
        %5179 = vdwg.mxu0
        %5180 = vmatprep.subr.bf16.mxu0 0
        %5181 = vmatpush1.bf16.xpose.msra.mxu0 0
        %5182 = vmatprep.subr.bf16.mxu0 0
        %5183 = vmatpush1.bf16.xpose.msra.mxu0 0
        %5184 = vmatprep.subr.bf16.mxu0 0
        %5185 = vmatpush1.bf16.xpose.msra.mxu0 0
        %5186 = vmatprep.subr.bf16.mxu0 0
        %5187 = vmatpush1.bf16.xpose.msra.mxu0 0
        %5188 = vmatprep.subr.bf16.mxu0 0
        %5189 = vmatpush1.bf16.xpose.msra.mxu0 0
        %5190 = vmatprep.subr.bf16.mxu0 0
        %5191 = vmatpush1.bf16.xpose.msra.mxu0 0
        %5192 = vmatprep.subr.bf16.mxu0 0
        %5193 = vmatpush1.bf16.xpose.msra.mxu0 0
        %5194 = vmatprep.subr.bf16.mxu0 %v3643
        %5195 = vmatpush1.bf16.xpose.msra.mxu0 %v3642
        %5196 = vmatprep.subr.bf16.mxu0 0
        %5197 = vmatpush2.bf16.xpose.msra.mxu0 0
        %5198 = vmatprep.subr.bf16.mxu0 0
        %5199 = vmatpush2.bf16.xpose.msra.mxu0 0
        %5200 = vmatprep.subr.bf16.mxu0 0
        %5201 = vmatpush2.bf16.xpose.msra.mxu0 0
        %5202 = vmatprep.subr.bf16.mxu0 0
        %5203 = vmatpush2.bf16.xpose.msra.mxu0 0
        %5204 = vmatprep.subr.bf16.mxu0 0
        %5205 = vmatpush2.bf16.xpose.msra.mxu0 0
        %5206 = vmatprep.subr.bf16.mxu0 0
        %5207 = vmatpush2.bf16.xpose.msra.mxu0 0
        %5208 = vmatprep.subr.bf16.mxu0 0
        %5209 = vmatpush2.bf16.xpose.msra.mxu0 0
        %5210 = vmatprep.subr.bf16.mxu0 0
        %5211 = vmatpush2.bf16.xpose.msra.mxu0 0
        %5212 = vmatprep.mubr.bf16.mxu0 %v946
        %5213 = vmatmul.mubr.bf16.gmra.mxu0 %v944
        %v5214 = vpop.f32.mrf.mxu0
        %v5215 = vadd.f32 %v5175, %v5214
        %v5216 = vpop.f32.mrf.mxu0
        %v5217 = vpop.f32.mrf.mxu0
        %v5218 = vpop.f32.mrf.mxu0
        %5219 = vdwg.mxu0
        %5220 = vmatprep.subr.bf16.mxu0 0
        %5221 = vmatpush1.bf16.xpose.msra.mxu0 0
        %5222 = vmatprep.subr.bf16.mxu0 0
        %5223 = vmatpush1.bf16.xpose.msra.mxu0 0
        %5224 = vmatprep.subr.bf16.mxu0 0
        %5225 = vmatpush1.bf16.xpose.msra.mxu0 0
        %5226 = vmatprep.subr.bf16.mxu0 0
        %5227 = vmatpush1.bf16.xpose.msra.mxu0 0
        %5228 = vmatprep.subr.bf16.mxu0 0
        %5229 = vmatpush1.bf16.xpose.msra.mxu0 0
        %5230 = vmatprep.subr.bf16.mxu0 0
        %5231 = vmatpush1.bf16.xpose.msra.mxu0 0
        %5232 = vmatprep.subr.bf16.mxu0 0
        %5233 = vmatpush1.bf16.xpose.msra.mxu0 0
        %5234 = vmatprep.subr.bf16.mxu0 %v3645
        %5235 = vmatpush1.bf16.xpose.msra.mxu0 %v3644
        %5236 = vmatprep.subr.bf16.mxu0 0
        %5237 = vmatpush2.bf16.xpose.msra.mxu0 0
        %5238 = vmatprep.subr.bf16.mxu0 0
        %5239 = vmatpush2.bf16.xpose.msra.mxu0 0
        %5240 = vmatprep.subr.bf16.mxu0 0
        %5241 = vmatpush2.bf16.xpose.msra.mxu0 0
        %5242 = vmatprep.subr.bf16.mxu0 0
        %5243 = vmatpush2.bf16.xpose.msra.mxu0 0
        %5244 = vmatprep.subr.bf16.mxu0 0
        %5245 = vmatpush2.bf16.xpose.msra.mxu0 0
        %5246 = vmatprep.subr.bf16.mxu0 0
        %5247 = vmatpush2.bf16.xpose.msra.mxu0 0
        %5248 = vmatprep.subr.bf16.mxu0 0
        %5249 = vmatpush2.bf16.xpose.msra.mxu0 0
        %5250 = vmatprep.subr.bf16.mxu0 0
        %5251 = vmatpush2.bf16.xpose.msra.mxu0 0
        %5252 = vmatprep.mubr.bf16.mxu0 %v943
        %5253 = vmatmul.mubr.bf16.gmra.mxu0 %v929
        %v5254 = vpop.f32.mrf.mxu0
        %v5255 = vadd.f32 %v5215, %v5254
        %v5256 = vpop.f32.mrf.mxu0
        %v5257 = vpop.f32.mrf.mxu0
        %v5258 = vpop.f32.mrf.mxu0
        %5259 = vdwg.mxu0
        %5260 = vmatprep.subr.bf16.mxu0 0
        %5261 = vmatpush1.bf16.xpose.msra.mxu0 0
        %5262 = vmatprep.subr.bf16.mxu0 0
        %5263 = vmatpush1.bf16.xpose.msra.mxu0 0
        %5264 = vmatprep.subr.bf16.mxu0 0
        %5265 = vmatpush1.bf16.xpose.msra.mxu0 0
        %5266 = vmatprep.subr.bf16.mxu0 0
        %5267 = vmatpush1.bf16.xpose.msra.mxu0 0
        %5268 = vmatprep.subr.bf16.mxu0 0
        %5269 = vmatpush1.bf16.xpose.msra.mxu0 0
        %5270 = vmatprep.subr.bf16.mxu0 0
        %5271 = vmatpush1.bf16.xpose.msra.mxu0 0
        %5272 = vmatprep.subr.bf16.mxu0 0
        %5273 = vmatpush1.bf16.xpose.msra.mxu0 0
        %5274 = vmatprep.subr.bf16.mxu0 %v3647
        %5275 = vmatpush1.bf16.xpose.msra.mxu0 %v3646
        %5276 = vmatprep.subr.bf16.mxu0 0
        %5277 = vmatpush2.bf16.xpose.msra.mxu0 0
        %5278 = vmatprep.subr.bf16.mxu0 0
        %5279 = vmatpush2.bf16.xpose.msra.mxu0 0
        %5280 = vmatprep.subr.bf16.mxu0 0
        %5281 = vmatpush2.bf16.xpose.msra.mxu0 0
        %5282 = vmatprep.subr.bf16.mxu0 0
        %5283 = vmatpush2.bf16.xpose.msra.mxu0 0
        %5284 = vmatprep.subr.bf16.mxu0 0
        %5285 = vmatpush2.bf16.xpose.msra.mxu0 0
        %5286 = vmatprep.subr.bf16.mxu0 0
        %5287 = vmatpush2.bf16.xpose.msra.mxu0 0
        %5288 = vmatprep.subr.bf16.mxu0 0
        %5289 = vmatpush2.bf16.xpose.msra.mxu0 0
        %5290 = vmatprep.subr.bf16.mxu0 0
        %5291 = vmatpush2.bf16.xpose.msra.mxu0 0
        %5292 = vmatprep.mubr.bf16.mxu0 %v947
        %5293 = vmatmul.mubr.bf16.gmra.mxu0 %v945
        %v5294 = vpop.f32.mrf.mxu0
        %v5295 = vadd.f32 %v5255, %v5294
        %v5296 = vpop.f32.mrf.mxu0
        %v5297 = vpop.f32.mrf.mxu0
        %v5298 = vpop.f32.mrf.mxu0
        %5299 = vdwg.mxu0
        %5300 = vmatprep.subr.bf16.mxu0 0
        %5301 = vmatpush1.bf16.xpose.msra.mxu0 0
        %5302 = vmatprep.subr.bf16.mxu0 0
        %5303 = vmatpush1.bf16.xpose.msra.mxu0 0
        %5304 = vmatprep.subr.bf16.mxu0 0
        %5305 = vmatpush1.bf16.xpose.msra.mxu0 0
        %5306 = vmatprep.subr.bf16.mxu0 0
        %5307 = vmatpush1.bf16.xpose.msra.mxu0 0
        %5308 = vmatprep.subr.bf16.mxu0 0
        %5309 = vmatpush1.bf16.xpose.msra.mxu0 0
        %5310 = vmatprep.subr.bf16.mxu0 0
        %5311 = vmatpush1.bf16.xpose.msra.mxu0 0
        %5312 = vmatprep.subr.bf16.mxu0 0
        %5313 = vmatpush1.bf16.xpose.msra.mxu0 0
        %5314 = vmatprep.subr.bf16.mxu0 %v3649
        %5315 = vmatpush1.bf16.xpose.msra.mxu0 %v3648
        %5316 = vmatprep.subr.bf16.mxu0 0
        %5317 = vmatpush2.bf16.xpose.msra.mxu0 0
        %5318 = vmatprep.subr.bf16.mxu0 0
        %5319 = vmatpush2.bf16.xpose.msra.mxu0 0
        %5320 = vmatprep.subr.bf16.mxu0 0
        %5321 = vmatpush2.bf16.xpose.msra.mxu0 0
        %5322 = vmatprep.subr.bf16.mxu0 0
        %5323 = vmatpush2.bf16.xpose.msra.mxu0 0
        %5324 = vmatprep.subr.bf16.mxu0 0
        %5325 = vmatpush2.bf16.xpose.msra.mxu0 0
        %5326 = vmatprep.subr.bf16.mxu0 0
        %5327 = vmatpush2.bf16.xpose.msra.mxu0 0
        %5328 = vmatprep.subr.bf16.mxu0 0
        %5329 = vmatpush2.bf16.xpose.msra.mxu0 0
        %5330 = vmatprep.subr.bf16.mxu0 0
        %5331 = vmatpush2.bf16.xpose.msra.mxu0 0
        %5332 = vmatprep.mubr.bf16.mxu0 %v985
        %5333 = vmatmul.mubr.bf16.gmra.mxu0 %v971
        %v5334 = vpop.f32.mrf.mxu0
        %v5335 = vadd.f32 %v5295, %v5334
        %v5336 = vpop.f32.mrf.mxu0
        %v5337 = vpop.f32.mrf.mxu0
        %v5338 = vpop.f32.mrf.mxu0
        %5339 = vdwg.mxu0
        %5340 = vmatprep.subr.bf16.mxu0 0
        %5341 = vmatpush1.bf16.xpose.msra.mxu0 0
        %5342 = vmatprep.subr.bf16.mxu0 0
        %5343 = vmatpush1.bf16.xpose.msra.mxu0 0
        %5344 = vmatprep.subr.bf16.mxu0 0
        %5345 = vmatpush1.bf16.xpose.msra.mxu0 0
        %5346 = vmatprep.subr.bf16.mxu0 0
        %5347 = vmatpush1.bf16.xpose.msra.mxu0 0
        %5348 = vmatprep.subr.bf16.mxu0 0
        %5349 = vmatpush1.bf16.xpose.msra.mxu0 0
        %5350 = vmatprep.subr.bf16.mxu0 0
        %5351 = vmatpush1.bf16.xpose.msra.mxu0 0
        %5352 = vmatprep.subr.bf16.mxu0 0
        %5353 = vmatpush1.bf16.xpose.msra.mxu0 0
        %5354 = vmatprep.subr.bf16.mxu0 %v3651
        %5355 = vmatpush1.bf16.xpose.msra.mxu0 %v3650
        %5356 = vmatprep.subr.bf16.mxu0 0
        %5357 = vmatpush2.bf16.xpose.msra.mxu0 0
        %5358 = vmatprep.subr.bf16.mxu0 0
        %5359 = vmatpush2.bf16.xpose.msra.mxu0 0
        %5360 = vmatprep.subr.bf16.mxu0 0
        %5361 = vmatpush2.bf16.xpose.msra.mxu0 0
        %5362 = vmatprep.subr.bf16.mxu0 0
        %5363 = vmatpush2.bf16.xpose.msra.mxu0 0
        %5364 = vmatprep.subr.bf16.mxu0 0
        %5365 = vmatpush2.bf16.xpose.msra.mxu0 0
        %5366 = vmatprep.subr.bf16.mxu0 0
        %5367 = vmatpush2.bf16.xpose.msra.mxu0 0
        %5368 = vmatprep.subr.bf16.mxu0 0
        %5369 = vmatpush2.bf16.xpose.msra.mxu0 0
        %5370 = vmatprep.subr.bf16.mxu0 0
        %5371 = vmatpush2.bf16.xpose.msra.mxu0 0
        %5372 = vmatprep.mubr.bf16.mxu0 %v995
        %5373 = vmatmul.mubr.bf16.gmra.mxu0 %v993
        %v5374 = vpop.f32.mrf.mxu0
        %v5375 = vadd.f32 %v5335, %v5374
        %v5376 = vpop.f32.mrf.mxu0
        %v5377 = vpop.f32.mrf.mxu0
        %v5378 = vpop.f32.mrf.mxu0
        %5379 = vdwg.mxu0
        %5380 = vmatprep.subr.bf16.mxu0 0
        %5381 = vmatpush1.bf16.xpose.msra.mxu0 0
        %5382 = vmatprep.subr.bf16.mxu0 0
        %5383 = vmatpush1.bf16.xpose.msra.mxu0 0
        %5384 = vmatprep.subr.bf16.mxu0 0
        %5385 = vmatpush1.bf16.xpose.msra.mxu0 0
        %5386 = vmatprep.subr.bf16.mxu0 0
        %5387 = vmatpush1.bf16.xpose.msra.mxu0 0
        %5388 = vmatprep.subr.bf16.mxu0 0
        %5389 = vmatpush1.bf16.xpose.msra.mxu0 0
        %5390 = vmatprep.subr.bf16.mxu0 0
        %5391 = vmatpush1.bf16.xpose.msra.mxu0 0
        %5392 = vmatprep.subr.bf16.mxu0 0
        %5393 = vmatpush1.bf16.xpose.msra.mxu0 0
        %5394 = vmatprep.subr.bf16.mxu0 %v3653
        %5395 = vmatpush1.bf16.xpose.msra.mxu0 %v3652
        %5396 = vmatprep.subr.bf16.mxu0 0
        %5397 = vmatpush2.bf16.xpose.msra.mxu0 0
        %5398 = vmatprep.subr.bf16.mxu0 0
        %5399 = vmatpush2.bf16.xpose.msra.mxu0 0
        %5400 = vmatprep.subr.bf16.mxu0 0
        %5401 = vmatpush2.bf16.xpose.msra.mxu0 0
        %5402 = vmatprep.subr.bf16.mxu0 0
        %5403 = vmatpush2.bf16.xpose.msra.mxu0 0
        %5404 = vmatprep.subr.bf16.mxu0 0
        %5405 = vmatpush2.bf16.xpose.msra.mxu0 0
        %5406 = vmatprep.subr.bf16.mxu0 0
        %5407 = vmatpush2.bf16.xpose.msra.mxu0 0
        %5408 = vmatprep.subr.bf16.mxu0 0
        %5409 = vmatpush2.bf16.xpose.msra.mxu0 0
        %5410 = vmatprep.subr.bf16.mxu0 0
        %5411 = vmatpush2.bf16.xpose.msra.mxu0 0
        %5412 = vmatprep.mubr.bf16.mxu0 %v992
        %5413 = vmatmul.mubr.bf16.gmra.mxu0 %v978
        %v5414 = vpop.f32.mrf.mxu0
        %v5415 = vadd.f32 %v5375, %v5414
        %v5416 = vpop.f32.mrf.mxu0
        %v5417 = vpop.f32.mrf.mxu0
        %v5418 = vpop.f32.mrf.mxu0
        %5419 = vdwg.mxu0
        %5420 = vmatprep.subr.bf16.mxu0 0
        %5421 = vmatpush1.bf16.xpose.msra.mxu0 0
        %5422 = vmatprep.subr.bf16.mxu0 0
        %5423 = vmatpush1.bf16.xpose.msra.mxu0 0
        %5424 = vmatprep.subr.bf16.mxu0 0
        %5425 = vmatpush1.bf16.xpose.msra.mxu0 0
        %5426 = vmatprep.subr.bf16.mxu0 0
        %5427 = vmatpush1.bf16.xpose.msra.mxu0 0
        %5428 = vmatprep.subr.bf16.mxu0 0
        %5429 = vmatpush1.bf16.xpose.msra.mxu0 0
        %5430 = vmatprep.subr.bf16.mxu0 0
        %5431 = vmatpush1.bf16.xpose.msra.mxu0 0
        %5432 = vmatprep.subr.bf16.mxu0 0
        %5433 = vmatpush1.bf16.xpose.msra.mxu0 0
        %5434 = vmatprep.subr.bf16.mxu0 %v3655
        %5435 = vmatpush1.bf16.xpose.msra.mxu0 %v3654
        %5436 = vmatprep.subr.bf16.mxu0 0
        %5437 = vmatpush2.bf16.xpose.msra.mxu0 0
        %5438 = vmatprep.subr.bf16.mxu0 0
        %5439 = vmatpush2.bf16.xpose.msra.mxu0 0
        %5440 = vmatprep.subr.bf16.mxu0 0
        %5441 = vmatpush2.bf16.xpose.msra.mxu0 0
        %5442 = vmatprep.subr.bf16.mxu0 0
        %5443 = vmatpush2.bf16.xpose.msra.mxu0 0
        %5444 = vmatprep.subr.bf16.mxu0 0
        %5445 = vmatpush2.bf16.xpose.msra.mxu0 0
        %5446 = vmatprep.subr.bf16.mxu0 0
        %5447 = vmatpush2.bf16.xpose.msra.mxu0 0
        %5448 = vmatprep.subr.bf16.mxu0 0
        %5449 = vmatpush2.bf16.xpose.msra.mxu0 0
        %5450 = vmatprep.subr.bf16.mxu0 0
        %5451 = vmatpush2.bf16.xpose.msra.mxu0 0
        %5452 = vmatprep.mubr.bf16.mxu0 %v996
        %5453 = vmatmul.mubr.bf16.gmra.mxu0 %v994
        %v5454 = vpop.f32.mrf.mxu0
        %v5455 = vadd.f32 %v5415, %v5454
        %v5456 = vpop.f32.mrf.mxu0
        %v5457 = vpop.f32.mrf.mxu0
        %v5458 = vpop.f32.mrf.mxu0
        %5459 = vdwg.mxu0
        %5460 = vmatprep.subr.bf16.mxu0 0
        %5461 = vmatpush1.bf16.xpose.msra.mxu0 0
        %5462 = vmatprep.subr.bf16.mxu0 0
        %5463 = vmatpush1.bf16.xpose.msra.mxu0 0
        %5464 = vmatprep.subr.bf16.mxu0 0
        %5465 = vmatpush1.bf16.xpose.msra.mxu0 0
        %5466 = vmatprep.subr.bf16.mxu0 0
        %5467 = vmatpush1.bf16.xpose.msra.mxu0 0
        %5468 = vmatprep.subr.bf16.mxu0 0
        %5469 = vmatpush1.bf16.xpose.msra.mxu0 0
        %5470 = vmatprep.subr.bf16.mxu0 0
        %5471 = vmatpush1.bf16.xpose.msra.mxu0 0
        %5472 = vmatprep.subr.bf16.mxu0 0
        %5473 = vmatpush1.bf16.xpose.msra.mxu0 0
        %5474 = vmatprep.subr.bf16.mxu0 %v3657
        %5475 = vmatpush1.bf16.xpose.msra.mxu0 %v3656
        %5476 = vmatprep.subr.bf16.mxu0 0
        %5477 = vmatpush2.bf16.xpose.msra.mxu0 0
        %5478 = vmatprep.subr.bf16.mxu0 0
        %5479 = vmatpush2.bf16.xpose.msra.mxu0 0
        %5480 = vmatprep.subr.bf16.mxu0 0
        %5481 = vmatpush2.bf16.xpose.msra.mxu0 0
        %5482 = vmatprep.subr.bf16.mxu0 0
        %5483 = vmatpush2.bf16.xpose.msra.mxu0 0
        %5484 = vmatprep.subr.bf16.mxu0 0
        %5485 = vmatpush2.bf16.xpose.msra.mxu0 0
        %5486 = vmatprep.subr.bf16.mxu0 0
        %5487 = vmatpush2.bf16.xpose.msra.mxu0 0
        %5488 = vmatprep.subr.bf16.mxu0 0
        %5489 = vmatpush2.bf16.xpose.msra.mxu0 0
        %5490 = vmatprep.subr.bf16.mxu0 0
        %5491 = vmatpush2.bf16.xpose.msra.mxu0 0
        %5492 = vmatprep.mubr.bf16.mxu0 %v1034
        %5493 = vmatmul.mubr.bf16.gmra.mxu0 %v1020
        %v5494 = vpop.f32.mrf.mxu0
        %v5495 = vadd.f32 %v5455, %v5494
        %v5496 = vpop.f32.mrf.mxu0
        %v5497 = vpop.f32.mrf.mxu0
        %v5498 = vpop.f32.mrf.mxu0
        %5499 = vdwg.mxu0
        %5500 = vmatprep.subr.bf16.mxu0 0
        %5501 = vmatpush1.bf16.xpose.msra.mxu0 0
        %5502 = vmatprep.subr.bf16.mxu0 0
        %5503 = vmatpush1.bf16.xpose.msra.mxu0 0
        %5504 = vmatprep.subr.bf16.mxu0 0
        %5505 = vmatpush1.bf16.xpose.msra.mxu0 0
        %5506 = vmatprep.subr.bf16.mxu0 0
        %5507 = vmatpush1.bf16.xpose.msra.mxu0 0
        %5508 = vmatprep.subr.bf16.mxu0 0
        %5509 = vmatpush1.bf16.xpose.msra.mxu0 0
        %5510 = vmatprep.subr.bf16.mxu0 0
        %5511 = vmatpush1.bf16.xpose.msra.mxu0 0
        %5512 = vmatprep.subr.bf16.mxu0 0
        %5513 = vmatpush1.bf16.xpose.msra.mxu0 0
        %5514 = vmatprep.subr.bf16.mxu0 %v3659
        %5515 = vmatpush1.bf16.xpose.msra.mxu0 %v3658
        %5516 = vmatprep.subr.bf16.mxu0 0
        %5517 = vmatpush2.bf16.xpose.msra.mxu0 0
        %5518 = vmatprep.subr.bf16.mxu0 0
        %5519 = vmatpush2.bf16.xpose.msra.mxu0 0
        %5520 = vmatprep.subr.bf16.mxu0 0
        %5521 = vmatpush2.bf16.xpose.msra.mxu0 0
        %5522 = vmatprep.subr.bf16.mxu0 0
        %5523 = vmatpush2.bf16.xpose.msra.mxu0 0
        %5524 = vmatprep.subr.bf16.mxu0 0
        %5525 = vmatpush2.bf16.xpose.msra.mxu0 0
        %5526 = vmatprep.subr.bf16.mxu0 0
        %5527 = vmatpush2.bf16.xpose.msra.mxu0 0
        %5528 = vmatprep.subr.bf16.mxu0 0
        %5529 = vmatpush2.bf16.xpose.msra.mxu0 0
        %5530 = vmatprep.subr.bf16.mxu0 0
        %5531 = vmatpush2.bf16.xpose.msra.mxu0 0
        %5532 = vmatprep.mubr.bf16.mxu0 %v1044
        %5533 = vmatmul.mubr.bf16.gmra.mxu0 %v1042
        %v5534 = vpop.f32.mrf.mxu0
        %v5535 = vadd.f32 %v5495, %v5534
        %v5536 = vpop.f32.mrf.mxu0
        %v5537 = vpop.f32.mrf.mxu0
        %v5538 = vpop.f32.mrf.mxu0
        %5539 = vdwg.mxu0
        %5540 = vmatprep.subr.bf16.mxu0 0
        %5541 = vmatpush1.bf16.xpose.msra.mxu0 0
        %5542 = vmatprep.subr.bf16.mxu0 0
        %5543 = vmatpush1.bf16.xpose.msra.mxu0 0
        %5544 = vmatprep.subr.bf16.mxu0 0
        %5545 = vmatpush1.bf16.xpose.msra.mxu0 0
        %5546 = vmatprep.subr.bf16.mxu0 0
        %5547 = vmatpush1.bf16.xpose.msra.mxu0 0
        %5548 = vmatprep.subr.bf16.mxu0 0
        %5549 = vmatpush1.bf16.xpose.msra.mxu0 0
        %5550 = vmatprep.subr.bf16.mxu0 0
        %5551 = vmatpush1.bf16.xpose.msra.mxu0 0
        %5552 = vmatprep.subr.bf16.mxu0 0
        %5553 = vmatpush1.bf16.xpose.msra.mxu0 0
        %5554 = vmatprep.subr.bf16.mxu0 %v3661
        %5555 = vmatpush1.bf16.xpose.msra.mxu0 %v3660
        %5556 = vmatprep.subr.bf16.mxu0 0
        %5557 = vmatpush2.bf16.xpose.msra.mxu0 0
        %5558 = vmatprep.subr.bf16.mxu0 0
        %5559 = vmatpush2.bf16.xpose.msra.mxu0 0
        %5560 = vmatprep.subr.bf16.mxu0 0
        %5561 = vmatpush2.bf16.xpose.msra.mxu0 0
        %5562 = vmatprep.subr.bf16.mxu0 0
        %5563 = vmatpush2.bf16.xpose.msra.mxu0 0
        %5564 = vmatprep.subr.bf16.mxu0 0
        %5565 = vmatpush2.bf16.xpose.msra.mxu0 0
        %5566 = vmatprep.subr.bf16.mxu0 0
        %5567 = vmatpush2.bf16.xpose.msra.mxu0 0
        %5568 = vmatprep.subr.bf16.mxu0 0
        %5569 = vmatpush2.bf16.xpose.msra.mxu0 0
        %5570 = vmatprep.subr.bf16.mxu0 0
        %5571 = vmatpush2.bf16.xpose.msra.mxu0 0
        %5572 = vmatprep.mubr.bf16.mxu0 %v1041
        %5573 = vmatmul.mubr.bf16.gmra.mxu0 %v1027
        %v5574 = vpop.f32.mrf.mxu0
        %v5575 = vadd.f32 %v5535, %v5574
        %v5576 = vpop.f32.mrf.mxu0
        %v5577 = vpop.f32.mrf.mxu0
        %v5578 = vpop.f32.mrf.mxu0
        %5579 = vdwg.mxu0
        %5580 = vmatprep.subr.bf16.mxu0 0
        %5581 = vmatpush1.bf16.xpose.msra.mxu0 0
        %5582 = vmatprep.subr.bf16.mxu0 0
        %5583 = vmatpush1.bf16.xpose.msra.mxu0 0
        %5584 = vmatprep.subr.bf16.mxu0 0
        %5585 = vmatpush1.bf16.xpose.msra.mxu0 0
        %5586 = vmatprep.subr.bf16.mxu0 0
        %5587 = vmatpush1.bf16.xpose.msra.mxu0 0
        %5588 = vmatprep.subr.bf16.mxu0 0
        %5589 = vmatpush1.bf16.xpose.msra.mxu0 0
        %5590 = vmatprep.subr.bf16.mxu0 0
        %5591 = vmatpush1.bf16.xpose.msra.mxu0 0
        %5592 = vmatprep.subr.bf16.mxu0 0
        %5593 = vmatpush1.bf16.xpose.msra.mxu0 0
        %5594 = vmatprep.subr.bf16.mxu0 %v3663
        %5595 = vmatpush1.bf16.xpose.msra.mxu0 %v3662
        %5596 = vmatprep.subr.bf16.mxu0 0
        %5597 = vmatpush2.bf16.xpose.msra.mxu0 0
        %5598 = vmatprep.subr.bf16.mxu0 0
        %5599 = vmatpush2.bf16.xpose.msra.mxu0 0
        %5600 = vmatprep.subr.bf16.mxu0 0
        %5601 = vmatpush2.bf16.xpose.msra.mxu0 0
        %5602 = vmatprep.subr.bf16.mxu0 0
        %5603 = vmatpush2.bf16.xpose.msra.mxu0 0
        %5604 = vmatprep.subr.bf16.mxu0 0
        %5605 = vmatpush2.bf16.xpose.msra.mxu0 0
        %5606 = vmatprep.subr.bf16.mxu0 0
        %5607 = vmatpush2.bf16.xpose.msra.mxu0 0
        %5608 = vmatprep.subr.bf16.mxu0 0
        %5609 = vmatpush2.bf16.xpose.msra.mxu0 0
        %5610 = vmatprep.subr.bf16.mxu0 0
        %5611 = vmatpush2.bf16.xpose.msra.mxu0 0
        %5612 = vmatprep.mubr.bf16.mxu0 %v1045
        %5613 = vmatmul.mubr.bf16.gmra.mxu0 %v1043
        %v5614 = vpop.f32.mrf.mxu0
        %v5615 = vadd.f32 %v5575, %v5614
        %v5616 = vpop.f32.mrf.mxu0
        %v5617 = vpop.f32.mrf.mxu0
        %v5618 = vpop.f32.mrf.mxu0
        %5619 = vdwg.mxu0
        %5620 = vmatprep.subr.bf16.mxu0 0
        %5621 = vmatpush1.bf16.xpose.msra.mxu0 0
        %5622 = vmatprep.subr.bf16.mxu0 0
        %5623 = vmatpush1.bf16.xpose.msra.mxu0 0
        %5624 = vmatprep.subr.bf16.mxu0 0
        %5625 = vmatpush1.bf16.xpose.msra.mxu0 0
        %5626 = vmatprep.subr.bf16.mxu0 0
        %5627 = vmatpush1.bf16.xpose.msra.mxu0 0
        %5628 = vmatprep.subr.bf16.mxu0 0
        %5629 = vmatpush1.bf16.xpose.msra.mxu0 0
        %5630 = vmatprep.subr.bf16.mxu0 0
        %5631 = vmatpush1.bf16.xpose.msra.mxu0 0
        %5632 = vmatprep.subr.bf16.mxu0 0
        %5633 = vmatpush1.bf16.xpose.msra.mxu0 0
        %5634 = vmatprep.subr.bf16.mxu0 %v3665
        %5635 = vmatpush1.bf16.xpose.msra.mxu0 %v3664
        %5636 = vmatprep.subr.bf16.mxu0 0
        %5637 = vmatpush2.bf16.xpose.msra.mxu0 0
        %5638 = vmatprep.subr.bf16.mxu0 0
        %5639 = vmatpush2.bf16.xpose.msra.mxu0 0
        %5640 = vmatprep.subr.bf16.mxu0 0
        %5641 = vmatpush2.bf16.xpose.msra.mxu0 0
        %5642 = vmatprep.subr.bf16.mxu0 0
        %5643 = vmatpush2.bf16.xpose.msra.mxu0 0
        %5644 = vmatprep.subr.bf16.mxu0 0
        %5645 = vmatpush2.bf16.xpose.msra.mxu0 0
        %5646 = vmatprep.subr.bf16.mxu0 0
        %5647 = vmatpush2.bf16.xpose.msra.mxu0 0
        %5648 = vmatprep.subr.bf16.mxu0 0
        %5649 = vmatpush2.bf16.xpose.msra.mxu0 0
        %5650 = vmatprep.subr.bf16.mxu0 0
        %5651 = vmatpush2.bf16.xpose.msra.mxu0 0
        %5652 = vmatprep.mubr.bf16.mxu0 %v1083
        %5653 = vmatmul.mubr.bf16.gmra.mxu0 %v1069
        %v5654 = vpop.f32.mrf.mxu0
        %v5655 = vadd.f32 %v5615, %v5654
        %v5656 = vpop.f32.mrf.mxu0
        %v5657 = vpop.f32.mrf.mxu0
        %v5658 = vpop.f32.mrf.mxu0
        %5659 = vdwg.mxu0
        %5660 = vmatprep.subr.bf16.mxu0 0
        %5661 = vmatpush1.bf16.xpose.msra.mxu0 0
        %5662 = vmatprep.subr.bf16.mxu0 0
        %5663 = vmatpush1.bf16.xpose.msra.mxu0 0
        %5664 = vmatprep.subr.bf16.mxu0 0
        %5665 = vmatpush1.bf16.xpose.msra.mxu0 0
        %5666 = vmatprep.subr.bf16.mxu0 0
        %5667 = vmatpush1.bf16.xpose.msra.mxu0 0
        %5668 = vmatprep.subr.bf16.mxu0 0
        %5669 = vmatpush1.bf16.xpose.msra.mxu0 0
        %5670 = vmatprep.subr.bf16.mxu0 0
        %5671 = vmatpush1.bf16.xpose.msra.mxu0 0
        %5672 = vmatprep.subr.bf16.mxu0 0
        %5673 = vmatpush1.bf16.xpose.msra.mxu0 0
        %5674 = vmatprep.subr.bf16.mxu0 %v3667
        %5675 = vmatpush1.bf16.xpose.msra.mxu0 %v3666
        %5676 = vmatprep.subr.bf16.mxu0 0
        %5677 = vmatpush2.bf16.xpose.msra.mxu0 0
        %5678 = vmatprep.subr.bf16.mxu0 0
        %5679 = vmatpush2.bf16.xpose.msra.mxu0 0
        %5680 = vmatprep.subr.bf16.mxu0 0
        %5681 = vmatpush2.bf16.xpose.msra.mxu0 0
        %5682 = vmatprep.subr.bf16.mxu0 0
        %5683 = vmatpush2.bf16.xpose.msra.mxu0 0
        %5684 = vmatprep.subr.bf16.mxu0 0
        %5685 = vmatpush2.bf16.xpose.msra.mxu0 0
        %5686 = vmatprep.subr.bf16.mxu0 0
        %5687 = vmatpush2.bf16.xpose.msra.mxu0 0
        %5688 = vmatprep.subr.bf16.mxu0 0
        %5689 = vmatpush2.bf16.xpose.msra.mxu0 0
        %5690 = vmatprep.subr.bf16.mxu0 0
        %5691 = vmatpush2.bf16.xpose.msra.mxu0 0
        %5692 = vmatprep.mubr.bf16.mxu0 %v1093
        %5693 = vmatmul.mubr.bf16.gmra.mxu0 %v1091
        %v5694 = vpop.f32.mrf.mxu0
        %v5695 = vadd.f32 %v5655, %v5694
        %v5696 = vpop.f32.mrf.mxu0
        %v5697 = vpop.f32.mrf.mxu0
        %v5698 = vpop.f32.mrf.mxu0
        %5699 = vdwg.mxu0
        %5700 = vmatprep.subr.bf16.mxu0 0
        %5701 = vmatpush1.bf16.xpose.msra.mxu0 0
        %5702 = vmatprep.subr.bf16.mxu0 0
        %5703 = vmatpush1.bf16.xpose.msra.mxu0 0
        %5704 = vmatprep.subr.bf16.mxu0 0
        %5705 = vmatpush1.bf16.xpose.msra.mxu0 0
        %5706 = vmatprep.subr.bf16.mxu0 0
        %5707 = vmatpush1.bf16.xpose.msra.mxu0 0
        %5708 = vmatprep.subr.bf16.mxu0 0
        %5709 = vmatpush1.bf16.xpose.msra.mxu0 0
        %5710 = vmatprep.subr.bf16.mxu0 0
        %5711 = vmatpush1.bf16.xpose.msra.mxu0 0
        %5712 = vmatprep.subr.bf16.mxu0 0
        %5713 = vmatpush1.bf16.xpose.msra.mxu0 0
        %5714 = vmatprep.subr.bf16.mxu0 %v3669
        %5715 = vmatpush1.bf16.xpose.msra.mxu0 %v3668
        %5716 = vmatprep.subr.bf16.mxu0 0
        %5717 = vmatpush2.bf16.xpose.msra.mxu0 0
        %5718 = vmatprep.subr.bf16.mxu0 0
        %5719 = vmatpush2.bf16.xpose.msra.mxu0 0
        %5720 = vmatprep.subr.bf16.mxu0 0
        %5721 = vmatpush2.bf16.xpose.msra.mxu0 0
        %5722 = vmatprep.subr.bf16.mxu0 0
        %5723 = vmatpush2.bf16.xpose.msra.mxu0 0
        %5724 = vmatprep.subr.bf16.mxu0 0
        %5725 = vmatpush2.bf16.xpose.msra.mxu0 0
        %5726 = vmatprep.subr.bf16.mxu0 0
        %5727 = vmatpush2.bf16.xpose.msra.mxu0 0
        %5728 = vmatprep.subr.bf16.mxu0 0
        %5729 = vmatpush2.bf16.xpose.msra.mxu0 0
        %5730 = vmatprep.subr.bf16.mxu0 0
        %5731 = vmatpush2.bf16.xpose.msra.mxu0 0
        %5732 = vmatprep.mubr.bf16.mxu0 %v1090
        %5733 = vmatmul.mubr.bf16.gmra.mxu0 %v1076
        %v5734 = vpop.f32.mrf.mxu0
        %v5735 = vadd.f32 %v5695, %v5734
        %v5736 = vpop.f32.mrf.mxu0
        %v5737 = vpop.f32.mrf.mxu0
        %v5738 = vpop.f32.mrf.mxu0
        %5739 = vdwg.mxu0
        %5740 = vmatprep.subr.bf16.mxu0 0
        %5741 = vmatpush1.bf16.xpose.msra.mxu0 0
        %5742 = vmatprep.subr.bf16.mxu0 0
        %5743 = vmatpush1.bf16.xpose.msra.mxu0 0
        %5744 = vmatprep.subr.bf16.mxu0 0
        %5745 = vmatpush1.bf16.xpose.msra.mxu0 0
        %5746 = vmatprep.subr.bf16.mxu0 0
        %5747 = vmatpush1.bf16.xpose.msra.mxu0 0
        %5748 = vmatprep.subr.bf16.mxu0 0
        %5749 = vmatpush1.bf16.xpose.msra.mxu0 0
        %5750 = vmatprep.subr.bf16.mxu0 0
        %5751 = vmatpush1.bf16.xpose.msra.mxu0 0
        %5752 = vmatprep.subr.bf16.mxu0 0
        %5753 = vmatpush1.bf16.xpose.msra.mxu0 0
        %5754 = vmatprep.subr.bf16.mxu0 %v3671
        %5755 = vmatpush1.bf16.xpose.msra.mxu0 %v3670
        %5756 = vmatprep.subr.bf16.mxu0 0
        %5757 = vmatpush2.bf16.xpose.msra.mxu0 0
        %5758 = vmatprep.subr.bf16.mxu0 0
        %5759 = vmatpush2.bf16.xpose.msra.mxu0 0
        %5760 = vmatprep.subr.bf16.mxu0 0
        %5761 = vmatpush2.bf16.xpose.msra.mxu0 0
        %5762 = vmatprep.subr.bf16.mxu0 0
        %5763 = vmatpush2.bf16.xpose.msra.mxu0 0
        %5764 = vmatprep.subr.bf16.mxu0 0
        %5765 = vmatpush2.bf16.xpose.msra.mxu0 0
        %5766 = vmatprep.subr.bf16.mxu0 0
        %5767 = vmatpush2.bf16.xpose.msra.mxu0 0
        %5768 = vmatprep.subr.bf16.mxu0 0
        %5769 = vmatpush2.bf16.xpose.msra.mxu0 0
        %5770 = vmatprep.subr.bf16.mxu0 0
        %5771 = vmatpush2.bf16.xpose.msra.mxu0 0
        %5772 = vmatprep.mubr.bf16.mxu0 %v1094
        %5773 = vmatmul.mubr.bf16.gmra.mxu0 %v1092
        %v5774 = vpop.f32.mrf.mxu0
        %v5775 = vadd.f32 %v5735, %v5774
        %v5776 = vpop.f32.mrf.mxu0
        %v5777 = vpop.f32.mrf.mxu0
        %v5778 = vpop.f32.mrf.mxu0
        %5779 = vdwg.mxu0
        %5780 = vmatprep.subr.bf16.mxu0 0
        %5781 = vmatpush1.bf16.xpose.msra.mxu0 0
        %5782 = vmatprep.subr.bf16.mxu0 0
        %5783 = vmatpush1.bf16.xpose.msra.mxu0 0
        %5784 = vmatprep.subr.bf16.mxu0 0
        %5785 = vmatpush1.bf16.xpose.msra.mxu0 0
        %5786 = vmatprep.subr.bf16.mxu0 0
        %5787 = vmatpush1.bf16.xpose.msra.mxu0 0
        %5788 = vmatprep.subr.bf16.mxu0 0
        %5789 = vmatpush1.bf16.xpose.msra.mxu0 0
        %5790 = vmatprep.subr.bf16.mxu0 0
        %5791 = vmatpush1.bf16.xpose.msra.mxu0 0
        %5792 = vmatprep.subr.bf16.mxu0 0
        %5793 = vmatpush1.bf16.xpose.msra.mxu0 0
        %5794 = vmatprep.subr.bf16.mxu0 %v3673
        %5795 = vmatpush1.bf16.xpose.msra.mxu0 %v3672
        %5796 = vmatprep.subr.bf16.mxu0 0
        %5797 = vmatpush2.bf16.xpose.msra.mxu0 0
        %5798 = vmatprep.subr.bf16.mxu0 0
        %5799 = vmatpush2.bf16.xpose.msra.mxu0 0
        %5800 = vmatprep.subr.bf16.mxu0 0
        %5801 = vmatpush2.bf16.xpose.msra.mxu0 0
        %5802 = vmatprep.subr.bf16.mxu0 0
        %5803 = vmatpush2.bf16.xpose.msra.mxu0 0
        %5804 = vmatprep.subr.bf16.mxu0 0
        %5805 = vmatpush2.bf16.xpose.msra.mxu0 0
        %5806 = vmatprep.subr.bf16.mxu0 0
        %5807 = vmatpush2.bf16.xpose.msra.mxu0 0
        %5808 = vmatprep.subr.bf16.mxu0 0
        %5809 = vmatpush2.bf16.xpose.msra.mxu0 0
        %5810 = vmatprep.subr.bf16.mxu0 0
        %5811 = vmatpush2.bf16.xpose.msra.mxu0 0
        %5812 = vmatprep.mubr.bf16.mxu0 %v1132
        %5813 = vmatmul.mubr.bf16.gmra.mxu0 %v1118
        %v5814 = vpop.f32.mrf.mxu0
        %v5815 = vadd.f32 %v5775, %v5814
        %v5816 = vpop.f32.mrf.mxu0
        %v5817 = vpop.f32.mrf.mxu0
        %v5818 = vpop.f32.mrf.mxu0
        %5819 = vdwg.mxu0
        %5820 = vmatprep.subr.bf16.mxu0 0
        %5821 = vmatpush1.bf16.xpose.msra.mxu0 0
        %5822 = vmatprep.subr.bf16.mxu0 0
        %5823 = vmatpush1.bf16.xpose.msra.mxu0 0
        %5824 = vmatprep.subr.bf16.mxu0 0
        %5825 = vmatpush1.bf16.xpose.msra.mxu0 0
        %5826 = vmatprep.subr.bf16.mxu0 0
        %5827 = vmatpush1.bf16.xpose.msra.mxu0 0
        %5828 = vmatprep.subr.bf16.mxu0 0
        %5829 = vmatpush1.bf16.xpose.msra.mxu0 0
        %5830 = vmatprep.subr.bf16.mxu0 0
        %5831 = vmatpush1.bf16.xpose.msra.mxu0 0
        %5832 = vmatprep.subr.bf16.mxu0 0
        %5833 = vmatpush1.bf16.xpose.msra.mxu0 0
        %5834 = vmatprep.subr.bf16.mxu0 %v3675
        %5835 = vmatpush1.bf16.xpose.msra.mxu0 %v3674
        %5836 = vmatprep.subr.bf16.mxu0 0
        %5837 = vmatpush2.bf16.xpose.msra.mxu0 0
        %5838 = vmatprep.subr.bf16.mxu0 0
        %5839 = vmatpush2.bf16.xpose.msra.mxu0 0
        %5840 = vmatprep.subr.bf16.mxu0 0
        %5841 = vmatpush2.bf16.xpose.msra.mxu0 0
        %5842 = vmatprep.subr.bf16.mxu0 0
        %5843 = vmatpush2.bf16.xpose.msra.mxu0 0
        %5844 = vmatprep.subr.bf16.mxu0 0
        %5845 = vmatpush2.bf16.xpose.msra.mxu0 0
        %5846 = vmatprep.subr.bf16.mxu0 0
        %5847 = vmatpush2.bf16.xpose.msra.mxu0 0
        %5848 = vmatprep.subr.bf16.mxu0 0
        %5849 = vmatpush2.bf16.xpose.msra.mxu0 0
        %5850 = vmatprep.subr.bf16.mxu0 0
        %5851 = vmatpush2.bf16.xpose.msra.mxu0 0
        %5852 = vmatprep.mubr.bf16.mxu0 %v1142
        %5853 = vmatmul.mubr.bf16.gmra.mxu0 %v1140
        %v5854 = vpop.f32.mrf.mxu0
        %v5855 = vadd.f32 %v5815, %v5854
        %v5856 = vpop.f32.mrf.mxu0
        %v5857 = vpop.f32.mrf.mxu0
        %v5858 = vpop.f32.mrf.mxu0
        %5859 = vdwg.mxu0
        %5860 = vmatprep.subr.bf16.mxu0 0
        %5861 = vmatpush1.bf16.xpose.msra.mxu0 0
        %5862 = vmatprep.subr.bf16.mxu0 0
        %5863 = vmatpush1.bf16.xpose.msra.mxu0 0
        %5864 = vmatprep.subr.bf16.mxu0 0
        %5865 = vmatpush1.bf16.xpose.msra.mxu0 0
        %5866 = vmatprep.subr.bf16.mxu0 0
        %5867 = vmatpush1.bf16.xpose.msra.mxu0 0
        %5868 = vmatprep.subr.bf16.mxu0 0
        %5869 = vmatpush1.bf16.xpose.msra.mxu0 0
        %5870 = vmatprep.subr.bf16.mxu0 0
        %5871 = vmatpush1.bf16.xpose.msra.mxu0 0
        %5872 = vmatprep.subr.bf16.mxu0 0
        %5873 = vmatpush1.bf16.xpose.msra.mxu0 0
        %5874 = vmatprep.subr.bf16.mxu0 %v3677
        %5875 = vmatpush1.bf16.xpose.msra.mxu0 %v3676
        %5876 = vmatprep.subr.bf16.mxu0 0
        %5877 = vmatpush2.bf16.xpose.msra.mxu0 0
        %5878 = vmatprep.subr.bf16.mxu0 0
        %5879 = vmatpush2.bf16.xpose.msra.mxu0 0
        %5880 = vmatprep.subr.bf16.mxu0 0
        %5881 = vmatpush2.bf16.xpose.msra.mxu0 0
        %5882 = vmatprep.subr.bf16.mxu0 0
        %5883 = vmatpush2.bf16.xpose.msra.mxu0 0
        %5884 = vmatprep.subr.bf16.mxu0 0
        %5885 = vmatpush2.bf16.xpose.msra.mxu0 0
        %5886 = vmatprep.subr.bf16.mxu0 0
        %5887 = vmatpush2.bf16.xpose.msra.mxu0 0
        %5888 = vmatprep.subr.bf16.mxu0 0
        %5889 = vmatpush2.bf16.xpose.msra.mxu0 0
        %5890 = vmatprep.subr.bf16.mxu0 0
        %5891 = vmatpush2.bf16.xpose.msra.mxu0 0
        %5892 = vmatprep.mubr.bf16.mxu0 %v1139
        %5893 = vmatmul.mubr.bf16.gmra.mxu0 %v1125
        %v5894 = vpop.f32.mrf.mxu0
        %v5895 = vadd.f32 %v5855, %v5894
        %v5896 = vpop.f32.mrf.mxu0
        %v5897 = vpop.f32.mrf.mxu0
        %v5898 = vpop.f32.mrf.mxu0
        %5899 = vdwg.mxu0
        %5900 = vmatprep.subr.bf16.mxu0 0
        %5901 = vmatpush1.bf16.xpose.msra.mxu0 0
        %5902 = vmatprep.subr.bf16.mxu0 0
        %5903 = vmatpush1.bf16.xpose.msra.mxu0 0
        %5904 = vmatprep.subr.bf16.mxu0 0
        %5905 = vmatpush1.bf16.xpose.msra.mxu0 0
        %5906 = vmatprep.subr.bf16.mxu0 0
        %5907 = vmatpush1.bf16.xpose.msra.mxu0 0
        %5908 = vmatprep.subr.bf16.mxu0 0
        %5909 = vmatpush1.bf16.xpose.msra.mxu0 0
        %5910 = vmatprep.subr.bf16.mxu0 0
        %5911 = vmatpush1.bf16.xpose.msra.mxu0 0
        %5912 = vmatprep.subr.bf16.mxu0 0
        %5913 = vmatpush1.bf16.xpose.msra.mxu0 0
        %5914 = vmatprep.subr.bf16.mxu0 %v3679
        %5915 = vmatpush1.bf16.xpose.msra.mxu0 %v3678
        %5916 = vmatprep.subr.bf16.mxu0 0
        %5917 = vmatpush2.bf16.xpose.msra.mxu0 0
        %5918 = vmatprep.subr.bf16.mxu0 0
        %5919 = vmatpush2.bf16.xpose.msra.mxu0 0
        %5920 = vmatprep.subr.bf16.mxu0 0
        %5921 = vmatpush2.bf16.xpose.msra.mxu0 0
        %5922 = vmatprep.subr.bf16.mxu0 0
        %5923 = vmatpush2.bf16.xpose.msra.mxu0 0
        %5924 = vmatprep.subr.bf16.mxu0 0
        %5925 = vmatpush2.bf16.xpose.msra.mxu0 0
        %5926 = vmatprep.subr.bf16.mxu0 0
        %5927 = vmatpush2.bf16.xpose.msra.mxu0 0
        %5928 = vmatprep.subr.bf16.mxu0 0
        %5929 = vmatpush2.bf16.xpose.msra.mxu0 0
        %5930 = vmatprep.subr.bf16.mxu0 0
        %5931 = vmatpush2.bf16.xpose.msra.mxu0 0
        %5932 = vmatprep.mubr.bf16.mxu0 %v1143
        %5933 = vmatmul.mubr.bf16.gmra.mxu0 %v1141
        %v5934 = vpop.f32.mrf.mxu0
        %v5935 = vadd.f32 %v5895, %v5934
        %v5936 = vpop.f32.mrf.mxu0
        %v5937 = vpop.f32.mrf.mxu0
        %v5938 = vpop.f32.mrf.mxu0
        %5939 = vdwg.mxu0
        %5940 = vmatprep.subr.bf16.mxu0 0
        %5941 = vmatpush1.bf16.xpose.msra.mxu0 0
        %5942 = vmatprep.subr.bf16.mxu0 0
        %5943 = vmatpush1.bf16.xpose.msra.mxu0 0
        %5944 = vmatprep.subr.bf16.mxu0 0
        %5945 = vmatpush1.bf16.xpose.msra.mxu0 0
        %5946 = vmatprep.subr.bf16.mxu0 0
        %5947 = vmatpush1.bf16.xpose.msra.mxu0 0
        %5948 = vmatprep.subr.bf16.mxu0 0
        %5949 = vmatpush1.bf16.xpose.msra.mxu0 0
        %5950 = vmatprep.subr.bf16.mxu0 0
        %5951 = vmatpush1.bf16.xpose.msra.mxu0 0
        %5952 = vmatprep.subr.bf16.mxu0 0
        %5953 = vmatpush1.bf16.xpose.msra.mxu0 0
        %5954 = vmatprep.subr.bf16.mxu0 %v3681
        %5955 = vmatpush1.bf16.xpose.msra.mxu0 %v3680
        %5956 = vmatprep.subr.bf16.mxu0 0
        %5957 = vmatpush2.bf16.xpose.msra.mxu0 0
        %5958 = vmatprep.subr.bf16.mxu0 0
        %5959 = vmatpush2.bf16.xpose.msra.mxu0 0
        %5960 = vmatprep.subr.bf16.mxu0 0
        %5961 = vmatpush2.bf16.xpose.msra.mxu0 0
        %5962 = vmatprep.subr.bf16.mxu0 0
        %5963 = vmatpush2.bf16.xpose.msra.mxu0 0
        %5964 = vmatprep.subr.bf16.mxu0 0
        %5965 = vmatpush2.bf16.xpose.msra.mxu0 0
        %5966 = vmatprep.subr.bf16.mxu0 0
        %5967 = vmatpush2.bf16.xpose.msra.mxu0 0
        %5968 = vmatprep.subr.bf16.mxu0 0
        %5969 = vmatpush2.bf16.xpose.msra.mxu0 0
        %5970 = vmatprep.subr.bf16.mxu0 0
        %5971 = vmatpush2.bf16.xpose.msra.mxu0 0
        %5972 = vmatprep.mubr.bf16.mxu0 %v1181
        %5973 = vmatmul.mubr.bf16.gmra.mxu0 %v1167
        %v5974 = vpop.f32.mrf.mxu0
        %v5975 = vadd.f32 %v5935, %v5974
        %v5976 = vpop.f32.mrf.mxu0
        %v5977 = vpop.f32.mrf.mxu0
        %v5978 = vpop.f32.mrf.mxu0
        %5979 = vdwg.mxu0
        %5980 = vmatprep.subr.bf16.mxu0 0
        %5981 = vmatpush1.bf16.xpose.msra.mxu0 0
        %5982 = vmatprep.subr.bf16.mxu0 0
        %5983 = vmatpush1.bf16.xpose.msra.mxu0 0
        %5984 = vmatprep.subr.bf16.mxu0 0
        %5985 = vmatpush1.bf16.xpose.msra.mxu0 0
        %5986 = vmatprep.subr.bf16.mxu0 0
        %5987 = vmatpush1.bf16.xpose.msra.mxu0 0
        %5988 = vmatprep.subr.bf16.mxu0 0
        %5989 = vmatpush1.bf16.xpose.msra.mxu0 0
        %5990 = vmatprep.subr.bf16.mxu0 0
        %5991 = vmatpush1.bf16.xpose.msra.mxu0 0
        %5992 = vmatprep.subr.bf16.mxu0 0
        %5993 = vmatpush1.bf16.xpose.msra.mxu0 0
        %5994 = vmatprep.subr.bf16.mxu0 %v3683
        %5995 = vmatpush1.bf16.xpose.msra.mxu0 %v3682
        %5996 = vmatprep.subr.bf16.mxu0 0
        %5997 = vmatpush2.bf16.xpose.msra.mxu0 0
        %5998 = vmatprep.subr.bf16.mxu0 0
        %5999 = vmatpush2.bf16.xpose.msra.mxu0 0
        %6000 = vmatprep.subr.bf16.mxu0 0
        %6001 = vmatpush2.bf16.xpose.msra.mxu0 0
        %6002 = vmatprep.subr.bf16.mxu0 0
        %6003 = vmatpush2.bf16.xpose.msra.mxu0 0
        %6004 = vmatprep.subr.bf16.mxu0 0
        %6005 = vmatpush2.bf16.xpose.msra.mxu0 0
        %6006 = vmatprep.subr.bf16.mxu0 0
        %6007 = vmatpush2.bf16.xpose.msra.mxu0 0
        %6008 = vmatprep.subr.bf16.mxu0 0
        %6009 = vmatpush2.bf16.xpose.msra.mxu0 0
        %6010 = vmatprep.subr.bf16.mxu0 0
        %6011 = vmatpush2.bf16.xpose.msra.mxu0 0
        %6012 = vmatprep.mubr.bf16.mxu0 %v1191
        %6013 = vmatmul.mubr.bf16.gmra.mxu0 %v1189
        %v6014 = vpop.f32.mrf.mxu0
        %v6015 = vadd.f32 %v5975, %v6014
        %v6016 = vpop.f32.mrf.mxu0
        %v6017 = vpop.f32.mrf.mxu0
        %v6018 = vpop.f32.mrf.mxu0
        %6019 = vdwg.mxu0
        %6020 = vmatprep.subr.bf16.mxu0 0
        %6021 = vmatpush1.bf16.xpose.msra.mxu0 0
        %6022 = vmatprep.subr.bf16.mxu0 0
        %6023 = vmatpush1.bf16.xpose.msra.mxu0 0
        %6024 = vmatprep.subr.bf16.mxu0 0
        %6025 = vmatpush1.bf16.xpose.msra.mxu0 0
        %6026 = vmatprep.subr.bf16.mxu0 0
        %6027 = vmatpush1.bf16.xpose.msra.mxu0 0
        %6028 = vmatprep.subr.bf16.mxu0 0
        %6029 = vmatpush1.bf16.xpose.msra.mxu0 0
        %6030 = vmatprep.subr.bf16.mxu0 0
        %6031 = vmatpush1.bf16.xpose.msra.mxu0 0
        %6032 = vmatprep.subr.bf16.mxu0 0
        %6033 = vmatpush1.bf16.xpose.msra.mxu0 0
        %6034 = vmatprep.subr.bf16.mxu0 %v3685
        %6035 = vmatpush1.bf16.xpose.msra.mxu0 %v3684
        %6036 = vmatprep.subr.bf16.mxu0 0
        %6037 = vmatpush2.bf16.xpose.msra.mxu0 0
        %6038 = vmatprep.subr.bf16.mxu0 0
        %6039 = vmatpush2.bf16.xpose.msra.mxu0 0
        %6040 = vmatprep.subr.bf16.mxu0 0
        %6041 = vmatpush2.bf16.xpose.msra.mxu0 0
        %6042 = vmatprep.subr.bf16.mxu0 0
        %6043 = vmatpush2.bf16.xpose.msra.mxu0 0
        %6044 = vmatprep.subr.bf16.mxu0 0
        %6045 = vmatpush2.bf16.xpose.msra.mxu0 0
        %6046 = vmatprep.subr.bf16.mxu0 0
        %6047 = vmatpush2.bf16.xpose.msra.mxu0 0
        %6048 = vmatprep.subr.bf16.mxu0 0
        %6049 = vmatpush2.bf16.xpose.msra.mxu0 0
        %6050 = vmatprep.subr.bf16.mxu0 0
        %6051 = vmatpush2.bf16.xpose.msra.mxu0 0
        %6052 = vmatprep.mubr.bf16.mxu0 %v1188
        %6053 = vmatmul.mubr.bf16.gmra.mxu0 %v1174
        %v6054 = vpop.f32.mrf.mxu0
        %v6055 = vadd.f32 %v6015, %v6054
        %v6056 = vpop.f32.mrf.mxu0
        %v6057 = vpop.f32.mrf.mxu0
        %v6058 = vpop.f32.mrf.mxu0
        %6059 = vdwg.mxu0
        %6060 = vmatprep.subr.bf16.mxu0 0
        %6061 = vmatpush1.bf16.xpose.msra.mxu0 0
        %6062 = vmatprep.subr.bf16.mxu0 0
        %6063 = vmatpush1.bf16.xpose.msra.mxu0 0
        %6064 = vmatprep.subr.bf16.mxu0 0
        %6065 = vmatpush1.bf16.xpose.msra.mxu0 0
        %6066 = vmatprep.subr.bf16.mxu0 0
        %6067 = vmatpush1.bf16.xpose.msra.mxu0 0
        %6068 = vmatprep.subr.bf16.mxu0 0
        %6069 = vmatpush1.bf16.xpose.msra.mxu0 0
        %6070 = vmatprep.subr.bf16.mxu0 0
        %6071 = vmatpush1.bf16.xpose.msra.mxu0 0
        %6072 = vmatprep.subr.bf16.mxu0 0
        %6073 = vmatpush1.bf16.xpose.msra.mxu0 0
        %6074 = vmatprep.subr.bf16.mxu0 %v3687
        %6075 = vmatpush1.bf16.xpose.msra.mxu0 %v3686
        %6076 = vmatprep.subr.bf16.mxu0 0
        %6077 = vmatpush2.bf16.xpose.msra.mxu0 0
        %6078 = vmatprep.subr.bf16.mxu0 0
        %6079 = vmatpush2.bf16.xpose.msra.mxu0 0
        %6080 = vmatprep.subr.bf16.mxu0 0
        %6081 = vmatpush2.bf16.xpose.msra.mxu0 0
        %6082 = vmatprep.subr.bf16.mxu0 0
        %6083 = vmatpush2.bf16.xpose.msra.mxu0 0
        %6084 = vmatprep.subr.bf16.mxu0 0
        %6085 = vmatpush2.bf16.xpose.msra.mxu0 0
        %6086 = vmatprep.subr.bf16.mxu0 0
        %6087 = vmatpush2.bf16.xpose.msra.mxu0 0
        %6088 = vmatprep.subr.bf16.mxu0 0
        %6089 = vmatpush2.bf16.xpose.msra.mxu0 0
        %6090 = vmatprep.subr.bf16.mxu0 0
        %6091 = vmatpush2.bf16.xpose.msra.mxu0 0
        %6092 = vmatprep.mubr.bf16.mxu0 %v1192
        %6093 = vmatmul.mubr.bf16.gmra.mxu0 %v1190
        %v6094 = vpop.f32.mrf.mxu0
        %v6095 = vadd.f32 %v6055, %v6094
        %v6096 = vpop.f32.mrf.mxu0
        %v6097 = vpop.f32.mrf.mxu0
        %v6098 = vpop.f32.mrf.mxu0
        %6099 = vdwg.mxu0
        %6100 = vmatprep.subr.bf16.mxu0 0
        %6101 = vmatpush1.bf16.xpose.msra.mxu0 0
        %6102 = vmatprep.subr.bf16.mxu0 0
        %6103 = vmatpush1.bf16.xpose.msra.mxu0 0
        %6104 = vmatprep.subr.bf16.mxu0 0
        %6105 = vmatpush1.bf16.xpose.msra.mxu0 0
        %6106 = vmatprep.subr.bf16.mxu0 0
        %6107 = vmatpush1.bf16.xpose.msra.mxu0 0
        %6108 = vmatprep.subr.bf16.mxu0 0
        %6109 = vmatpush1.bf16.xpose.msra.mxu0 0
        %6110 = vmatprep.subr.bf16.mxu0 0
        %6111 = vmatpush1.bf16.xpose.msra.mxu0 0
        %6112 = vmatprep.subr.bf16.mxu0 0
        %6113 = vmatpush1.bf16.xpose.msra.mxu0 0
        %6114 = vmatprep.subr.bf16.mxu0 %v3689
        %6115 = vmatpush1.bf16.xpose.msra.mxu0 %v3688
        %6116 = vmatprep.subr.bf16.mxu0 0
        %6117 = vmatpush2.bf16.xpose.msra.mxu0 0
        %6118 = vmatprep.subr.bf16.mxu0 0
        %6119 = vmatpush2.bf16.xpose.msra.mxu0 0
        %6120 = vmatprep.subr.bf16.mxu0 0
        %6121 = vmatpush2.bf16.xpose.msra.mxu0 0
        %6122 = vmatprep.subr.bf16.mxu0 0
        %6123 = vmatpush2.bf16.xpose.msra.mxu0 0
        %6124 = vmatprep.subr.bf16.mxu0 0
        %6125 = vmatpush2.bf16.xpose.msra.mxu0 0
        %6126 = vmatprep.subr.bf16.mxu0 0
        %6127 = vmatpush2.bf16.xpose.msra.mxu0 0
        %6128 = vmatprep.subr.bf16.mxu0 0
        %6129 = vmatpush2.bf16.xpose.msra.mxu0 0
        %6130 = vmatprep.subr.bf16.mxu0 0
        %6131 = vmatpush2.bf16.xpose.msra.mxu0 0
        %6132 = vmatprep.mubr.bf16.mxu0 %v1230
        %6133 = vmatmul.mubr.bf16.gmra.mxu0 %v1216
        %v6134 = vpop.f32.mrf.mxu0
        %v6135 = vadd.f32 %v6095, %v6134
        %v6136 = vpop.f32.mrf.mxu0
        %v6137 = vpop.f32.mrf.mxu0
        %v6138 = vpop.f32.mrf.mxu0
        %6139 = vdwg.mxu0
        %6140 = vmatprep.subr.bf16.mxu0 0
        %6141 = vmatpush1.bf16.xpose.msra.mxu0 0
        %6142 = vmatprep.subr.bf16.mxu0 0
        %6143 = vmatpush1.bf16.xpose.msra.mxu0 0
        %6144 = vmatprep.subr.bf16.mxu0 0
        %6145 = vmatpush1.bf16.xpose.msra.mxu0 0
        %6146 = vmatprep.subr.bf16.mxu0 0
        %6147 = vmatpush1.bf16.xpose.msra.mxu0 0
        %6148 = vmatprep.subr.bf16.mxu0 0
        %6149 = vmatpush1.bf16.xpose.msra.mxu0 0
        %6150 = vmatprep.subr.bf16.mxu0 0
        %6151 = vmatpush1.bf16.xpose.msra.mxu0 0
        %6152 = vmatprep.subr.bf16.mxu0 0
        %6153 = vmatpush1.bf16.xpose.msra.mxu0 0
        %6154 = vmatprep.subr.bf16.mxu0 %v3691
        %6155 = vmatpush1.bf16.xpose.msra.mxu0 %v3690
        %6156 = vmatprep.subr.bf16.mxu0 0
        %6157 = vmatpush2.bf16.xpose.msra.mxu0 0
        %6158 = vmatprep.subr.bf16.mxu0 0
        %6159 = vmatpush2.bf16.xpose.msra.mxu0 0
        %6160 = vmatprep.subr.bf16.mxu0 0
        %6161 = vmatpush2.bf16.xpose.msra.mxu0 0
        %6162 = vmatprep.subr.bf16.mxu0 0
        %6163 = vmatpush2.bf16.xpose.msra.mxu0 0
        %6164 = vmatprep.subr.bf16.mxu0 0
        %6165 = vmatpush2.bf16.xpose.msra.mxu0 0
        %6166 = vmatprep.subr.bf16.mxu0 0
        %6167 = vmatpush2.bf16.xpose.msra.mxu0 0
        %6168 = vmatprep.subr.bf16.mxu0 0
        %6169 = vmatpush2.bf16.xpose.msra.mxu0 0
        %6170 = vmatprep.subr.bf16.mxu0 0
        %6171 = vmatpush2.bf16.xpose.msra.mxu0 0
        %6172 = vmatprep.mubr.bf16.mxu0 %v1240
        %6173 = vmatmul.mubr.bf16.gmra.mxu0 %v1238
        %v6174 = vpop.f32.mrf.mxu0
        %v6175 = vadd.f32 %v6135, %v6174
        %v6176 = vpop.f32.mrf.mxu0
        %v6177 = vpop.f32.mrf.mxu0
        %v6178 = vpop.f32.mrf.mxu0
        %6179 = vdwg.mxu0
        %6180 = vmatprep.subr.bf16.mxu0 0
        %6181 = vmatpush1.bf16.xpose.msra.mxu0 0
        %6182 = vmatprep.subr.bf16.mxu0 0
        %6183 = vmatpush1.bf16.xpose.msra.mxu0 0
        %6184 = vmatprep.subr.bf16.mxu0 0
        %6185 = vmatpush1.bf16.xpose.msra.mxu0 0
        %6186 = vmatprep.subr.bf16.mxu0 0
        %6187 = vmatpush1.bf16.xpose.msra.mxu0 0
        %6188 = vmatprep.subr.bf16.mxu0 0
        %6189 = vmatpush1.bf16.xpose.msra.mxu0 0
        %6190 = vmatprep.subr.bf16.mxu0 0
        %6191 = vmatpush1.bf16.xpose.msra.mxu0 0
        %6192 = vmatprep.subr.bf16.mxu0 0
        %6193 = vmatpush1.bf16.xpose.msra.mxu0 0
        %6194 = vmatprep.subr.bf16.mxu0 %v3693
        %6195 = vmatpush1.bf16.xpose.msra.mxu0 %v3692
        %6196 = vmatprep.subr.bf16.mxu0 0
        %6197 = vmatpush2.bf16.xpose.msra.mxu0 0
        %6198 = vmatprep.subr.bf16.mxu0 0
        %6199 = vmatpush2.bf16.xpose.msra.mxu0 0
        %6200 = vmatprep.subr.bf16.mxu0 0
        %6201 = vmatpush2.bf16.xpose.msra.mxu0 0
        %6202 = vmatprep.subr.bf16.mxu0 0
        %6203 = vmatpush2.bf16.xpose.msra.mxu0 0
        %6204 = vmatprep.subr.bf16.mxu0 0
        %6205 = vmatpush2.bf16.xpose.msra.mxu0 0
        %6206 = vmatprep.subr.bf16.mxu0 0
        %6207 = vmatpush2.bf16.xpose.msra.mxu0 0
        %6208 = vmatprep.subr.bf16.mxu0 0
        %6209 = vmatpush2.bf16.xpose.msra.mxu0 0
        %6210 = vmatprep.subr.bf16.mxu0 0
        %6211 = vmatpush2.bf16.xpose.msra.mxu0 0
        %6212 = vmatprep.mubr.bf16.mxu0 %v1237
        %6213 = vmatmul.mubr.bf16.gmra.mxu0 %v1223
        %v6214 = vpop.f32.mrf.mxu0
        %v6215 = vadd.f32 %v6175, %v6214
        %v6216 = vpop.f32.mrf.mxu0
        %v6217 = vpop.f32.mrf.mxu0
        %v6218 = vpop.f32.mrf.mxu0
        %6219 = vdwg.mxu0
        %6220 = vmatprep.subr.bf16.mxu0 0
        %6221 = vmatpush1.bf16.xpose.msra.mxu0 0
        %6222 = vmatprep.subr.bf16.mxu0 0
        %6223 = vmatpush1.bf16.xpose.msra.mxu0 0
        %6224 = vmatprep.subr.bf16.mxu0 0
        %6225 = vmatpush1.bf16.xpose.msra.mxu0 0
        %6226 = vmatprep.subr.bf16.mxu0 0
        %6227 = vmatpush1.bf16.xpose.msra.mxu0 0
        %6228 = vmatprep.subr.bf16.mxu0 0
        %6229 = vmatpush1.bf16.xpose.msra.mxu0 0
        %6230 = vmatprep.subr.bf16.mxu0 0
        %6231 = vmatpush1.bf16.xpose.msra.mxu0 0
        %6232 = vmatprep.subr.bf16.mxu0 0
        %6233 = vmatpush1.bf16.xpose.msra.mxu0 0
        %6234 = vmatprep.subr.bf16.mxu0 %v3695
        %6235 = vmatpush1.bf16.xpose.msra.mxu0 %v3694
        %6236 = vmatprep.subr.bf16.mxu0 0
        %6237 = vmatpush2.bf16.xpose.msra.mxu0 0
        %6238 = vmatprep.subr.bf16.mxu0 0
        %6239 = vmatpush2.bf16.xpose.msra.mxu0 0
        %6240 = vmatprep.subr.bf16.mxu0 0
        %6241 = vmatpush2.bf16.xpose.msra.mxu0 0
        %6242 = vmatprep.subr.bf16.mxu0 0
        %6243 = vmatpush2.bf16.xpose.msra.mxu0 0
        %6244 = vmatprep.subr.bf16.mxu0 0
        %6245 = vmatpush2.bf16.xpose.msra.mxu0 0
        %6246 = vmatprep.subr.bf16.mxu0 0
        %6247 = vmatpush2.bf16.xpose.msra.mxu0 0
        %6248 = vmatprep.subr.bf16.mxu0 0
        %6249 = vmatpush2.bf16.xpose.msra.mxu0 0
        %6250 = vmatprep.subr.bf16.mxu0 0
        %6251 = vmatpush2.bf16.xpose.msra.mxu0 0
        %6252 = vmatprep.mubr.bf16.mxu0 %v1241
        %6253 = vmatmul.mubr.bf16.gmra.mxu0 %v1239
        %v6254 = vpop.f32.mrf.mxu0
        %v6255 = vadd.f32 %v6215, %v6254
        %v6256 = vpop.f32.mrf.mxu0
        %v6257 = vpop.f32.mrf.mxu0
        %v6258 = vpop.f32.mrf.mxu0
        %6259 = vdwg.mxu0
        %6260 = vmatprep.subr.bf16.mxu0 0
        %6261 = vmatpush1.bf16.xpose.msra.mxu0 0
        %6262 = vmatprep.subr.bf16.mxu0 0
        %6263 = vmatpush1.bf16.xpose.msra.mxu0 0
        %6264 = vmatprep.subr.bf16.mxu0 0
        %6265 = vmatpush1.bf16.xpose.msra.mxu0 0
        %6266 = vmatprep.subr.bf16.mxu0 0
        %6267 = vmatpush1.bf16.xpose.msra.mxu0 0
        %6268 = vmatprep.subr.bf16.mxu0 0
        %6269 = vmatpush1.bf16.xpose.msra.mxu0 0
        %6270 = vmatprep.subr.bf16.mxu0 0
        %6271 = vmatpush1.bf16.xpose.msra.mxu0 0
        %6272 = vmatprep.subr.bf16.mxu0 0
        %6273 = vmatpush1.bf16.xpose.msra.mxu0 0
        %6274 = vmatprep.subr.bf16.mxu0 %v3697
        %6275 = vmatpush1.bf16.xpose.msra.mxu0 %v3696
        %6276 = vmatprep.subr.bf16.mxu0 0
        %6277 = vmatpush2.bf16.xpose.msra.mxu0 0
        %6278 = vmatprep.subr.bf16.mxu0 0
        %6279 = vmatpush2.bf16.xpose.msra.mxu0 0
        %6280 = vmatprep.subr.bf16.mxu0 0
        %6281 = vmatpush2.bf16.xpose.msra.mxu0 0
        %6282 = vmatprep.subr.bf16.mxu0 0
        %6283 = vmatpush2.bf16.xpose.msra.mxu0 0
        %6284 = vmatprep.subr.bf16.mxu0 0
        %6285 = vmatpush2.bf16.xpose.msra.mxu0 0
        %6286 = vmatprep.subr.bf16.mxu0 0
        %6287 = vmatpush2.bf16.xpose.msra.mxu0 0
        %6288 = vmatprep.subr.bf16.mxu0 0
        %6289 = vmatpush2.bf16.xpose.msra.mxu0 0
        %6290 = vmatprep.subr.bf16.mxu0 0
        %6291 = vmatpush2.bf16.xpose.msra.mxu0 0
        %6292 = vmatprep.mubr.bf16.mxu0 %v1279
        %6293 = vmatmul.mubr.bf16.gmra.mxu0 %v1265
        %v6294 = vpop.f32.mrf.mxu0
        %v6295 = vadd.f32 %v6255, %v6294
        %v6296 = vpop.f32.mrf.mxu0
        %v6297 = vpop.f32.mrf.mxu0
        %v6298 = vpop.f32.mrf.mxu0
        %6299 = vdwg.mxu0
        %6300 = vmatprep.subr.bf16.mxu0 0
        %6301 = vmatpush1.bf16.xpose.msra.mxu0 0
        %6302 = vmatprep.subr.bf16.mxu0 0
        %6303 = vmatpush1.bf16.xpose.msra.mxu0 0
        %6304 = vmatprep.subr.bf16.mxu0 0
        %6305 = vmatpush1.bf16.xpose.msra.mxu0 0
        %6306 = vmatprep.subr.bf16.mxu0 0
        %6307 = vmatpush1.bf16.xpose.msra.mxu0 0
        %6308 = vmatprep.subr.bf16.mxu0 0
        %6309 = vmatpush1.bf16.xpose.msra.mxu0 0
        %6310 = vmatprep.subr.bf16.mxu0 0
        %6311 = vmatpush1.bf16.xpose.msra.mxu0 0
        %6312 = vmatprep.subr.bf16.mxu0 0
        %6313 = vmatpush1.bf16.xpose.msra.mxu0 0
        %6314 = vmatprep.subr.bf16.mxu0 %v3699
        %6315 = vmatpush1.bf16.xpose.msra.mxu0 %v3698
        %6316 = vmatprep.subr.bf16.mxu0 0
        %6317 = vmatpush2.bf16.xpose.msra.mxu0 0
        %6318 = vmatprep.subr.bf16.mxu0 0
        %6319 = vmatpush2.bf16.xpose.msra.mxu0 0
        %6320 = vmatprep.subr.bf16.mxu0 0
        %6321 = vmatpush2.bf16.xpose.msra.mxu0 0
        %6322 = vmatprep.subr.bf16.mxu0 0
        %6323 = vmatpush2.bf16.xpose.msra.mxu0 0
        %6324 = vmatprep.subr.bf16.mxu0 0
        %6325 = vmatpush2.bf16.xpose.msra.mxu0 0
        %6326 = vmatprep.subr.bf16.mxu0 0
        %6327 = vmatpush2.bf16.xpose.msra.mxu0 0
        %6328 = vmatprep.subr.bf16.mxu0 0
        %6329 = vmatpush2.bf16.xpose.msra.mxu0 0
        %6330 = vmatprep.subr.bf16.mxu0 0
        %6331 = vmatpush2.bf16.xpose.msra.mxu0 0
        %6332 = vmatprep.mubr.bf16.mxu0 %v1289
        %6333 = vmatmul.mubr.bf16.gmra.mxu0 %v1287
        %v6334 = vpop.f32.mrf.mxu0
        %v6335 = vadd.f32 %v6295, %v6334
        %v6336 = vpop.f32.mrf.mxu0
        %v6337 = vpop.f32.mrf.mxu0
        %v6338 = vpop.f32.mrf.mxu0
        %6339 = vdwg.mxu0
        %6340 = vmatprep.subr.bf16.mxu0 0
        %6341 = vmatpush1.bf16.xpose.msra.mxu0 0
        %6342 = vmatprep.subr.bf16.mxu0 0
        %6343 = vmatpush1.bf16.xpose.msra.mxu0 0
        %6344 = vmatprep.subr.bf16.mxu0 0
        %6345 = vmatpush1.bf16.xpose.msra.mxu0 0
        %6346 = vmatprep.subr.bf16.mxu0 0
        %6347 = vmatpush1.bf16.xpose.msra.mxu0 0
        %6348 = vmatprep.subr.bf16.mxu0 0
        %6349 = vmatpush1.bf16.xpose.msra.mxu0 0
        %6350 = vmatprep.subr.bf16.mxu0 0
        %6351 = vmatpush1.bf16.xpose.msra.mxu0 0
        %6352 = vmatprep.subr.bf16.mxu0 0
        %6353 = vmatpush1.bf16.xpose.msra.mxu0 0
        %6354 = vmatprep.subr.bf16.mxu0 %v3701
        %6355 = vmatpush1.bf16.xpose.msra.mxu0 %v3700
        %6356 = vmatprep.subr.bf16.mxu0 0
        %6357 = vmatpush2.bf16.xpose.msra.mxu0 0
        %6358 = vmatprep.subr.bf16.mxu0 0
        %6359 = vmatpush2.bf16.xpose.msra.mxu0 0
        %6360 = vmatprep.subr.bf16.mxu0 0
        %6361 = vmatpush2.bf16.xpose.msra.mxu0 0
        %6362 = vmatprep.subr.bf16.mxu0 0
        %6363 = vmatpush2.bf16.xpose.msra.mxu0 0
        %6364 = vmatprep.subr.bf16.mxu0 0
        %6365 = vmatpush2.bf16.xpose.msra.mxu0 0
        %6366 = vmatprep.subr.bf16.mxu0 0
        %6367 = vmatpush2.bf16.xpose.msra.mxu0 0
        %6368 = vmatprep.subr.bf16.mxu0 0
        %6369 = vmatpush2.bf16.xpose.msra.mxu0 0
        %6370 = vmatprep.subr.bf16.mxu0 0
        %6371 = vmatpush2.bf16.xpose.msra.mxu0 0
        %6372 = vmatprep.mubr.bf16.mxu0 %v1286
        %6373 = vmatmul.mubr.bf16.gmra.mxu0 %v1272
        %v6374 = vpop.f32.mrf.mxu0
        %v6375 = vadd.f32 %v6335, %v6374
        %v6376 = vpop.f32.mrf.mxu0
        %v6377 = vpop.f32.mrf.mxu0
        %v6378 = vpop.f32.mrf.mxu0
        %6379 = vdwg.mxu0
        %6380 = vmatprep.subr.bf16.mxu0 0
        %6381 = vmatpush1.bf16.xpose.msra.mxu0 0
        %6382 = vmatprep.subr.bf16.mxu0 0
        %6383 = vmatpush1.bf16.xpose.msra.mxu0 0
        %6384 = vmatprep.subr.bf16.mxu0 0
        %6385 = vmatpush1.bf16.xpose.msra.mxu0 0
        %6386 = vmatprep.subr.bf16.mxu0 0
        %6387 = vmatpush1.bf16.xpose.msra.mxu0 0
        %6388 = vmatprep.subr.bf16.mxu0 0
        %6389 = vmatpush1.bf16.xpose.msra.mxu0 0
        %6390 = vmatprep.subr.bf16.mxu0 0
        %6391 = vmatpush1.bf16.xpose.msra.mxu0 0
        %6392 = vmatprep.subr.bf16.mxu0 0
        %6393 = vmatpush1.bf16.xpose.msra.mxu0 0
        %6394 = vmatprep.subr.bf16.mxu0 %v3703
        %6395 = vmatpush1.bf16.xpose.msra.mxu0 %v3702
        %6396 = vmatprep.subr.bf16.mxu0 0
        %6397 = vmatpush2.bf16.xpose.msra.mxu0 0
        %6398 = vmatprep.subr.bf16.mxu0 0
        %6399 = vmatpush2.bf16.xpose.msra.mxu0 0
        %6400 = vmatprep.subr.bf16.mxu0 0
        %6401 = vmatpush2.bf16.xpose.msra.mxu0 0
        %6402 = vmatprep.subr.bf16.mxu0 0
        %6403 = vmatpush2.bf16.xpose.msra.mxu0 0
        %6404 = vmatprep.subr.bf16.mxu0 0
        %6405 = vmatpush2.bf16.xpose.msra.mxu0 0
        %6406 = vmatprep.subr.bf16.mxu0 0
        %6407 = vmatpush2.bf16.xpose.msra.mxu0 0
        %6408 = vmatprep.subr.bf16.mxu0 0
        %6409 = vmatpush2.bf16.xpose.msra.mxu0 0
        %6410 = vmatprep.subr.bf16.mxu0 0
        %6411 = vmatpush2.bf16.xpose.msra.mxu0 0
        %6412 = vmatprep.mubr.bf16.mxu0 %v1290
        %6413 = vmatmul.mubr.bf16.gmra.mxu0 %v1288
        %v6414 = vpop.f32.mrf.mxu0
        %v6415 = vadd.f32 %v6375, %v6414
        %v6416 = vpop.f32.mrf.mxu0
        %v6417 = vpop.f32.mrf.mxu0
        %v6418 = vpop.f32.mrf.mxu0
        %6419 = vdwg.mxu0
        %6420 = vmatprep.subr.bf16.mxu0 0
        %6421 = vmatpush1.bf16.xpose.msra.mxu0 0
        %6422 = vmatprep.subr.bf16.mxu0 0
        %6423 = vmatpush1.bf16.xpose.msra.mxu0 0
        %6424 = vmatprep.subr.bf16.mxu0 0
        %6425 = vmatpush1.bf16.xpose.msra.mxu0 0
        %6426 = vmatprep.subr.bf16.mxu0 0
        %6427 = vmatpush1.bf16.xpose.msra.mxu0 0
        %6428 = vmatprep.subr.bf16.mxu0 0
        %6429 = vmatpush1.bf16.xpose.msra.mxu0 0
        %6430 = vmatprep.subr.bf16.mxu0 0
        %6431 = vmatpush1.bf16.xpose.msra.mxu0 0
        %6432 = vmatprep.subr.bf16.mxu0 0
        %6433 = vmatpush1.bf16.xpose.msra.mxu0 0
        %6434 = vmatprep.subr.bf16.mxu0 %v3705
        %6435 = vmatpush1.bf16.xpose.msra.mxu0 %v3704
        %6436 = vmatprep.subr.bf16.mxu0 0
        %6437 = vmatpush2.bf16.xpose.msra.mxu0 0
        %6438 = vmatprep.subr.bf16.mxu0 0
        %6439 = vmatpush2.bf16.xpose.msra.mxu0 0
        %6440 = vmatprep.subr.bf16.mxu0 0
        %6441 = vmatpush2.bf16.xpose.msra.mxu0 0
        %6442 = vmatprep.subr.bf16.mxu0 0
        %6443 = vmatpush2.bf16.xpose.msra.mxu0 0
        %6444 = vmatprep.subr.bf16.mxu0 0
        %6445 = vmatpush2.bf16.xpose.msra.mxu0 0
        %6446 = vmatprep.subr.bf16.mxu0 0
        %6447 = vmatpush2.bf16.xpose.msra.mxu0 0
        %6448 = vmatprep.subr.bf16.mxu0 0
        %6449 = vmatpush2.bf16.xpose.msra.mxu0 0
        %6450 = vmatprep.subr.bf16.mxu0 0
        %6451 = vmatpush2.bf16.xpose.msra.mxu0 0
        %6452 = vmatprep.mubr.bf16.mxu0 %v1328
        %6453 = vmatmul.mubr.bf16.gmra.mxu0 %v1314
        %v6454 = vpop.f32.mrf.mxu0
        %v6455 = vadd.f32 %v6415, %v6454
        %v6456 = vpop.f32.mrf.mxu0
        %v6457 = vpop.f32.mrf.mxu0
        %v6458 = vpop.f32.mrf.mxu0
        %6459 = vdwg.mxu0
        %6460 = vmatprep.subr.bf16.mxu0 0
        %6461 = vmatpush1.bf16.xpose.msra.mxu0 0
        %6462 = vmatprep.subr.bf16.mxu0 0
        %6463 = vmatpush1.bf16.xpose.msra.mxu0 0
        %6464 = vmatprep.subr.bf16.mxu0 0
        %6465 = vmatpush1.bf16.xpose.msra.mxu0 0
        %6466 = vmatprep.subr.bf16.mxu0 0
        %6467 = vmatpush1.bf16.xpose.msra.mxu0 0
        %6468 = vmatprep.subr.bf16.mxu0 0
        %6469 = vmatpush1.bf16.xpose.msra.mxu0 0
        %6470 = vmatprep.subr.bf16.mxu0 0
        %6471 = vmatpush1.bf16.xpose.msra.mxu0 0
        %6472 = vmatprep.subr.bf16.mxu0 0
        %6473 = vmatpush1.bf16.xpose.msra.mxu0 0
        %6474 = vmatprep.subr.bf16.mxu0 %v3707
        %6475 = vmatpush1.bf16.xpose.msra.mxu0 %v3706
        %6476 = vmatprep.subr.bf16.mxu0 0
        %6477 = vmatpush2.bf16.xpose.msra.mxu0 0
        %6478 = vmatprep.subr.bf16.mxu0 0
        %6479 = vmatpush2.bf16.xpose.msra.mxu0 0
        %6480 = vmatprep.subr.bf16.mxu0 0
        %6481 = vmatpush2.bf16.xpose.msra.mxu0 0
        %6482 = vmatprep.subr.bf16.mxu0 0
        %6483 = vmatpush2.bf16.xpose.msra.mxu0 0
        %6484 = vmatprep.subr.bf16.mxu0 0
        %6485 = vmatpush2.bf16.xpose.msra.mxu0 0
        %6486 = vmatprep.subr.bf16.mxu0 0
        %6487 = vmatpush2.bf16.xpose.msra.mxu0 0
        %6488 = vmatprep.subr.bf16.mxu0 0
        %6489 = vmatpush2.bf16.xpose.msra.mxu0 0
        %6490 = vmatprep.subr.bf16.mxu0 0
        %6491 = vmatpush2.bf16.xpose.msra.mxu0 0
        %6492 = vmatprep.mubr.bf16.mxu0 %v1338
        %6493 = vmatmul.mubr.bf16.gmra.mxu0 %v1336
        %v6494 = vpop.f32.mrf.mxu0
        %v6495 = vadd.f32 %v6455, %v6494
        %v6496 = vpop.f32.mrf.mxu0
        %v6497 = vpop.f32.mrf.mxu0
        %v6498 = vpop.f32.mrf.mxu0
        %6499 = vdwg.mxu0
        %6500 = vmatprep.subr.bf16.mxu0 0
        %6501 = vmatpush1.bf16.xpose.msra.mxu0 0
        %6502 = vmatprep.subr.bf16.mxu0 0
        %6503 = vmatpush1.bf16.xpose.msra.mxu0 0
        %6504 = vmatprep.subr.bf16.mxu0 0
        %6505 = vmatpush1.bf16.xpose.msra.mxu0 0
        %6506 = vmatprep.subr.bf16.mxu0 0
        %6507 = vmatpush1.bf16.xpose.msra.mxu0 0
        %6508 = vmatprep.subr.bf16.mxu0 0
        %6509 = vmatpush1.bf16.xpose.msra.mxu0 0
        %6510 = vmatprep.subr.bf16.mxu0 0
        %6511 = vmatpush1.bf16.xpose.msra.mxu0 0
        %6512 = vmatprep.subr.bf16.mxu0 0
        %6513 = vmatpush1.bf16.xpose.msra.mxu0 0
        %6514 = vmatprep.subr.bf16.mxu0 %v3709
        %6515 = vmatpush1.bf16.xpose.msra.mxu0 %v3708
        %6516 = vmatprep.subr.bf16.mxu0 0
        %6517 = vmatpush2.bf16.xpose.msra.mxu0 0
        %6518 = vmatprep.subr.bf16.mxu0 0
        %6519 = vmatpush2.bf16.xpose.msra.mxu0 0
        %6520 = vmatprep.subr.bf16.mxu0 0
        %6521 = vmatpush2.bf16.xpose.msra.mxu0 0
        %6522 = vmatprep.subr.bf16.mxu0 0
        %6523 = vmatpush2.bf16.xpose.msra.mxu0 0
        %6524 = vmatprep.subr.bf16.mxu0 0
        %6525 = vmatpush2.bf16.xpose.msra.mxu0 0
        %6526 = vmatprep.subr.bf16.mxu0 0
        %6527 = vmatpush2.bf16.xpose.msra.mxu0 0
        %6528 = vmatprep.subr.bf16.mxu0 0
        %6529 = vmatpush2.bf16.xpose.msra.mxu0 0
        %6530 = vmatprep.subr.bf16.mxu0 0
        %6531 = vmatpush2.bf16.xpose.msra.mxu0 0
        %6532 = vmatprep.mubr.bf16.mxu0 %v1335
        %6533 = vmatmul.mubr.bf16.gmra.mxu0 %v1321
        %v6534 = vpop.f32.mrf.mxu0
        %v6535 = vadd.f32 %v6495, %v6534
        %v6536 = vpop.f32.mrf.mxu0
        %v6537 = vpop.f32.mrf.mxu0
        %v6538 = vpop.f32.mrf.mxu0
        %6539 = vdwg.mxu0
        %6540 = vmatprep.subr.bf16.mxu0 0
        %6541 = vmatpush1.bf16.xpose.msra.mxu0 0
        %6542 = vmatprep.subr.bf16.mxu0 0
        %6543 = vmatpush1.bf16.xpose.msra.mxu0 0
        %6544 = vmatprep.subr.bf16.mxu0 0
        %6545 = vmatpush1.bf16.xpose.msra.mxu0 0
        %6546 = vmatprep.subr.bf16.mxu0 0
        %6547 = vmatpush1.bf16.xpose.msra.mxu0 0
        %6548 = vmatprep.subr.bf16.mxu0 0
        %6549 = vmatpush1.bf16.xpose.msra.mxu0 0
        %6550 = vmatprep.subr.bf16.mxu0 0
        %6551 = vmatpush1.bf16.xpose.msra.mxu0 0
        %6552 = vmatprep.subr.bf16.mxu0 0
        %6553 = vmatpush1.bf16.xpose.msra.mxu0 0
        %6554 = vmatprep.subr.bf16.mxu0 %v3711
        %6555 = vmatpush1.bf16.xpose.msra.mxu0 %v3710
        %6556 = vmatprep.subr.bf16.mxu0 0
        %6557 = vmatpush2.bf16.xpose.msra.mxu0 0
        %6558 = vmatprep.subr.bf16.mxu0 0
        %6559 = vmatpush2.bf16.xpose.msra.mxu0 0
        %6560 = vmatprep.subr.bf16.mxu0 0
        %6561 = vmatpush2.bf16.xpose.msra.mxu0 0
        %6562 = vmatprep.subr.bf16.mxu0 0
        %6563 = vmatpush2.bf16.xpose.msra.mxu0 0
        %6564 = vmatprep.subr.bf16.mxu0 0
        %6565 = vmatpush2.bf16.xpose.msra.mxu0 0
        %6566 = vmatprep.subr.bf16.mxu0 0
        %6567 = vmatpush2.bf16.xpose.msra.mxu0 0
        %6568 = vmatprep.subr.bf16.mxu0 0
        %6569 = vmatpush2.bf16.xpose.msra.mxu0 0
        %6570 = vmatprep.subr.bf16.mxu0 0
        %6571 = vmatpush2.bf16.xpose.msra.mxu0 0
        %6572 = vmatprep.mubr.bf16.mxu0 %v1339
        %6573 = vmatmul.mubr.bf16.gmra.mxu0 %v1337
        %v6574 = vpop.f32.mrf.mxu0
        %v6575 = vadd.f32 %v6535, %v6574
        %v6576 = vpop.f32.mrf.mxu0
        %v6577 = vpop.f32.mrf.mxu0
        %v6578 = vpop.f32.mrf.mxu0
        %6579 = vdwg.mxu0
        %6580 = vmatprep.subr.bf16.mxu0 0
        %6581 = vmatpush1.bf16.xpose.msra.mxu0 0
        %6582 = vmatprep.subr.bf16.mxu0 0
        %6583 = vmatpush1.bf16.xpose.msra.mxu0 0
        %6584 = vmatprep.subr.bf16.mxu0 0
        %6585 = vmatpush1.bf16.xpose.msra.mxu0 0
        %6586 = vmatprep.subr.bf16.mxu0 0
        %6587 = vmatpush1.bf16.xpose.msra.mxu0 0
        %6588 = vmatprep.subr.bf16.mxu0 0
        %6589 = vmatpush1.bf16.xpose.msra.mxu0 0
        %6590 = vmatprep.subr.bf16.mxu0 0
        %6591 = vmatpush1.bf16.xpose.msra.mxu0 0
        %6592 = vmatprep.subr.bf16.mxu0 0
        %6593 = vmatpush1.bf16.xpose.msra.mxu0 0
        %6594 = vmatprep.subr.bf16.mxu0 %v3713
        %6595 = vmatpush1.bf16.xpose.msra.mxu0 %v3712
        %6596 = vmatprep.subr.bf16.mxu0 0
        %6597 = vmatpush2.bf16.xpose.msra.mxu0 0
        %6598 = vmatprep.subr.bf16.mxu0 0
        %6599 = vmatpush2.bf16.xpose.msra.mxu0 0
        %6600 = vmatprep.subr.bf16.mxu0 0
        %6601 = vmatpush2.bf16.xpose.msra.mxu0 0
        %6602 = vmatprep.subr.bf16.mxu0 0
        %6603 = vmatpush2.bf16.xpose.msra.mxu0 0
        %6604 = vmatprep.subr.bf16.mxu0 0
        %6605 = vmatpush2.bf16.xpose.msra.mxu0 0
        %6606 = vmatprep.subr.bf16.mxu0 0
        %6607 = vmatpush2.bf16.xpose.msra.mxu0 0
        %6608 = vmatprep.subr.bf16.mxu0 0
        %6609 = vmatpush2.bf16.xpose.msra.mxu0 0
        %6610 = vmatprep.subr.bf16.mxu0 0
        %6611 = vmatpush2.bf16.xpose.msra.mxu0 0
        %6612 = vmatprep.mubr.bf16.mxu0 %v1377
        %6613 = vmatmul.mubr.bf16.gmra.mxu0 %v1363
        %v6614 = vpop.f32.mrf.mxu0
        %v6615 = vadd.f32 %v6575, %v6614
        %v6616 = vpop.f32.mrf.mxu0
        %v6617 = vpop.f32.mrf.mxu0
        %v6618 = vpop.f32.mrf.mxu0
        %6619 = vdwg.mxu0
        %6620 = vmatprep.subr.bf16.mxu0 0
        %6621 = vmatpush1.bf16.xpose.msra.mxu0 0
        %6622 = vmatprep.subr.bf16.mxu0 0
        %6623 = vmatpush1.bf16.xpose.msra.mxu0 0
        %6624 = vmatprep.subr.bf16.mxu0 0
        %6625 = vmatpush1.bf16.xpose.msra.mxu0 0
        %6626 = vmatprep.subr.bf16.mxu0 0
        %6627 = vmatpush1.bf16.xpose.msra.mxu0 0
        %6628 = vmatprep.subr.bf16.mxu0 0
        %6629 = vmatpush1.bf16.xpose.msra.mxu0 0
        %6630 = vmatprep.subr.bf16.mxu0 0
        %6631 = vmatpush1.bf16.xpose.msra.mxu0 0
        %6632 = vmatprep.subr.bf16.mxu0 0
        %6633 = vmatpush1.bf16.xpose.msra.mxu0 0
        %6634 = vmatprep.subr.bf16.mxu0 %v3715
        %6635 = vmatpush1.bf16.xpose.msra.mxu0 %v3714
        %6636 = vmatprep.subr.bf16.mxu0 0
        %6637 = vmatpush2.bf16.xpose.msra.mxu0 0
        %6638 = vmatprep.subr.bf16.mxu0 0
        %6639 = vmatpush2.bf16.xpose.msra.mxu0 0
        %6640 = vmatprep.subr.bf16.mxu0 0
        %6641 = vmatpush2.bf16.xpose.msra.mxu0 0
        %6642 = vmatprep.subr.bf16.mxu0 0
        %6643 = vmatpush2.bf16.xpose.msra.mxu0 0
        %6644 = vmatprep.subr.bf16.mxu0 0
        %6645 = vmatpush2.bf16.xpose.msra.mxu0 0
        %6646 = vmatprep.subr.bf16.mxu0 0
        %6647 = vmatpush2.bf16.xpose.msra.mxu0 0
        %6648 = vmatprep.subr.bf16.mxu0 0
        %6649 = vmatpush2.bf16.xpose.msra.mxu0 0
        %6650 = vmatprep.subr.bf16.mxu0 0
        %6651 = vmatpush2.bf16.xpose.msra.mxu0 0
        %6652 = vmatprep.mubr.bf16.mxu0 %v1387
        %6653 = vmatmul.mubr.bf16.gmra.mxu0 %v1385
        %v6654 = vpop.f32.mrf.mxu0
        %v6655 = vadd.f32 %v6615, %v6654
        %v6656 = vpop.f32.mrf.mxu0
        %v6657 = vpop.f32.mrf.mxu0
        %v6658 = vpop.f32.mrf.mxu0
        %6659 = vdwg.mxu0
        %6660 = vmatprep.subr.bf16.mxu0 0
        %6661 = vmatpush1.bf16.xpose.msra.mxu0 0
        %6662 = vmatprep.subr.bf16.mxu0 0
        %6663 = vmatpush1.bf16.xpose.msra.mxu0 0
        %6664 = vmatprep.subr.bf16.mxu0 0
        %6665 = vmatpush1.bf16.xpose.msra.mxu0 0
        %6666 = vmatprep.subr.bf16.mxu0 0
        %6667 = vmatpush1.bf16.xpose.msra.mxu0 0
        %6668 = vmatprep.subr.bf16.mxu0 0
        %6669 = vmatpush1.bf16.xpose.msra.mxu0 0
        %6670 = vmatprep.subr.bf16.mxu0 0
        %6671 = vmatpush1.bf16.xpose.msra.mxu0 0
        %6672 = vmatprep.subr.bf16.mxu0 0
        %6673 = vmatpush1.bf16.xpose.msra.mxu0 0
        %6674 = vmatprep.subr.bf16.mxu0 %v3717
        %6675 = vmatpush1.bf16.xpose.msra.mxu0 %v3716
        %6676 = vmatprep.subr.bf16.mxu0 0
        %6677 = vmatpush2.bf16.xpose.msra.mxu0 0
        %6678 = vmatprep.subr.bf16.mxu0 0
        %6679 = vmatpush2.bf16.xpose.msra.mxu0 0
        %6680 = vmatprep.subr.bf16.mxu0 0
        %6681 = vmatpush2.bf16.xpose.msra.mxu0 0
        %6682 = vmatprep.subr.bf16.mxu0 0
        %6683 = vmatpush2.bf16.xpose.msra.mxu0 0
        %6684 = vmatprep.subr.bf16.mxu0 0
        %6685 = vmatpush2.bf16.xpose.msra.mxu0 0
        %6686 = vmatprep.subr.bf16.mxu0 0
        %6687 = vmatpush2.bf16.xpose.msra.mxu0 0
        %6688 = vmatprep.subr.bf16.mxu0 0
        %6689 = vmatpush2.bf16.xpose.msra.mxu0 0
        %6690 = vmatprep.subr.bf16.mxu0 0
        %6691 = vmatpush2.bf16.xpose.msra.mxu0 0
        %6692 = vmatprep.mubr.bf16.mxu0 %v1384
        %6693 = vmatmul.mubr.bf16.gmra.mxu0 %v1370
        %v6694 = vpop.f32.mrf.mxu0
        %v6695 = vadd.f32 %v6655, %v6694
        %v6696 = vpop.f32.mrf.mxu0
        %v6697 = vpop.f32.mrf.mxu0
        %v6698 = vpop.f32.mrf.mxu0
        %6699 = vdwg.mxu0
        %6700 = vmatprep.subr.bf16.mxu0 0
        %6701 = vmatpush1.bf16.xpose.msra.mxu0 0
        %6702 = vmatprep.subr.bf16.mxu0 0
        %6703 = vmatpush1.bf16.xpose.msra.mxu0 0
        %6704 = vmatprep.subr.bf16.mxu0 0
        %6705 = vmatpush1.bf16.xpose.msra.mxu0 0
        %6706 = vmatprep.subr.bf16.mxu0 0
        %6707 = vmatpush1.bf16.xpose.msra.mxu0 0
        %6708 = vmatprep.subr.bf16.mxu0 0
        %6709 = vmatpush1.bf16.xpose.msra.mxu0 0
        %6710 = vmatprep.subr.bf16.mxu0 0
        %6711 = vmatpush1.bf16.xpose.msra.mxu0 0
        %6712 = vmatprep.subr.bf16.mxu0 0
        %6713 = vmatpush1.bf16.xpose.msra.mxu0 0
        %6714 = vmatprep.subr.bf16.mxu0 %v3719
        %6715 = vmatpush1.bf16.xpose.msra.mxu0 %v3718
        %6716 = vmatprep.subr.bf16.mxu0 0
        %6717 = vmatpush2.bf16.xpose.msra.mxu0 0
        %6718 = vmatprep.subr.bf16.mxu0 0
        %6719 = vmatpush2.bf16.xpose.msra.mxu0 0
        %6720 = vmatprep.subr.bf16.mxu0 0
        %6721 = vmatpush2.bf16.xpose.msra.mxu0 0
        %6722 = vmatprep.subr.bf16.mxu0 0
        %6723 = vmatpush2.bf16.xpose.msra.mxu0 0
        %6724 = vmatprep.subr.bf16.mxu0 0
        %6725 = vmatpush2.bf16.xpose.msra.mxu0 0
        %6726 = vmatprep.subr.bf16.mxu0 0
        %6727 = vmatpush2.bf16.xpose.msra.mxu0 0
        %6728 = vmatprep.subr.bf16.mxu0 0
        %6729 = vmatpush2.bf16.xpose.msra.mxu0 0
        %6730 = vmatprep.subr.bf16.mxu0 0
        %6731 = vmatpush2.bf16.xpose.msra.mxu0 0
        %6732 = vmatprep.mubr.bf16.mxu0 %v1388
        %6733 = vmatmul.mubr.bf16.gmra.mxu0 %v1386
        %v6734 = vpop.f32.mrf.mxu0
        %v6735 = vadd.f32 %v6695, %v6734
        %v6736 = vpop.f32.mrf.mxu0
        %v6737 = vpop.f32.mrf.mxu0
        %v6738 = vpop.f32.mrf.mxu0
        %6739 = vdwg.mxu0
        %6740 = vmatprep.subr.bf16.mxu0 0
        %6741 = vmatpush1.bf16.xpose.msra.mxu0 0
        %6742 = vmatprep.subr.bf16.mxu0 0
        %6743 = vmatpush1.bf16.xpose.msra.mxu0 0
        %6744 = vmatprep.subr.bf16.mxu0 0
        %6745 = vmatpush1.bf16.xpose.msra.mxu0 0
        %6746 = vmatprep.subr.bf16.mxu0 0
        %6747 = vmatpush1.bf16.xpose.msra.mxu0 0
        %6748 = vmatprep.subr.bf16.mxu0 0
        %6749 = vmatpush1.bf16.xpose.msra.mxu0 0
        %6750 = vmatprep.subr.bf16.mxu0 0
        %6751 = vmatpush1.bf16.xpose.msra.mxu0 0
        %6752 = vmatprep.subr.bf16.mxu0 0
        %6753 = vmatpush1.bf16.xpose.msra.mxu0 0
        %6754 = vmatprep.subr.bf16.mxu0 %v3721
        %6755 = vmatpush1.bf16.xpose.msra.mxu0 %v3720
        %6756 = vmatprep.subr.bf16.mxu0 0
        %6757 = vmatpush2.bf16.xpose.msra.mxu0 0
        %6758 = vmatprep.subr.bf16.mxu0 0
        %6759 = vmatpush2.bf16.xpose.msra.mxu0 0
        %6760 = vmatprep.subr.bf16.mxu0 0
        %6761 = vmatpush2.bf16.xpose.msra.mxu0 0
        %6762 = vmatprep.subr.bf16.mxu0 0
        %6763 = vmatpush2.bf16.xpose.msra.mxu0 0
        %6764 = vmatprep.subr.bf16.mxu0 0
        %6765 = vmatpush2.bf16.xpose.msra.mxu0 0
        %6766 = vmatprep.subr.bf16.mxu0 0
        %6767 = vmatpush2.bf16.xpose.msra.mxu0 0
        %6768 = vmatprep.subr.bf16.mxu0 0
        %6769 = vmatpush2.bf16.xpose.msra.mxu0 0
        %6770 = vmatprep.subr.bf16.mxu0 0
        %6771 = vmatpush2.bf16.xpose.msra.mxu0 0
        %6772 = vmatprep.mubr.bf16.mxu0 %v1426
        %6773 = vmatmul.mubr.bf16.gmra.mxu0 %v1412
        %v6774 = vpop.f32.mrf.mxu0
        %v6775 = vadd.f32 %v6735, %v6774
        %v6776 = vpop.f32.mrf.mxu0
        %v6777 = vpop.f32.mrf.mxu0
        %v6778 = vpop.f32.mrf.mxu0
        %6779 = vdwg.mxu0
        %6780 = vmatprep.subr.bf16.mxu0 0
        %6781 = vmatpush1.bf16.xpose.msra.mxu0 0
        %6782 = vmatprep.subr.bf16.mxu0 0
        %6783 = vmatpush1.bf16.xpose.msra.mxu0 0
        %6784 = vmatprep.subr.bf16.mxu0 0
        %6785 = vmatpush1.bf16.xpose.msra.mxu0 0
        %6786 = vmatprep.subr.bf16.mxu0 0
        %6787 = vmatpush1.bf16.xpose.msra.mxu0 0
        %6788 = vmatprep.subr.bf16.mxu0 0
        %6789 = vmatpush1.bf16.xpose.msra.mxu0 0
        %6790 = vmatprep.subr.bf16.mxu0 0
        %6791 = vmatpush1.bf16.xpose.msra.mxu0 0
        %6792 = vmatprep.subr.bf16.mxu0 0
        %6793 = vmatpush1.bf16.xpose.msra.mxu0 0
        %6794 = vmatprep.subr.bf16.mxu0 %v3723
        %6795 = vmatpush1.bf16.xpose.msra.mxu0 %v3722
        %6796 = vmatprep.subr.bf16.mxu0 0
        %6797 = vmatpush2.bf16.xpose.msra.mxu0 0
        %6798 = vmatprep.subr.bf16.mxu0 0
        %6799 = vmatpush2.bf16.xpose.msra.mxu0 0
        %6800 = vmatprep.subr.bf16.mxu0 0
        %6801 = vmatpush2.bf16.xpose.msra.mxu0 0
        %6802 = vmatprep.subr.bf16.mxu0 0
        %6803 = vmatpush2.bf16.xpose.msra.mxu0 0
        %6804 = vmatprep.subr.bf16.mxu0 0
        %6805 = vmatpush2.bf16.xpose.msra.mxu0 0
        %6806 = vmatprep.subr.bf16.mxu0 0
        %6807 = vmatpush2.bf16.xpose.msra.mxu0 0
        %6808 = vmatprep.subr.bf16.mxu0 0
        %6809 = vmatpush2.bf16.xpose.msra.mxu0 0
        %6810 = vmatprep.subr.bf16.mxu0 0
        %6811 = vmatpush2.bf16.xpose.msra.mxu0 0
        %6812 = vmatprep.mubr.bf16.mxu0 %v1436
        %6813 = vmatmul.mubr.bf16.gmra.mxu0 %v1434
        %v6814 = vpop.f32.mrf.mxu0
        %v6815 = vadd.f32 %v6775, %v6814
        %v6816 = vpop.f32.mrf.mxu0
        %v6817 = vpop.f32.mrf.mxu0
        %v6818 = vpop.f32.mrf.mxu0
        %6819 = vdwg.mxu0
        %6820 = vmatprep.subr.bf16.mxu0 0
        %6821 = vmatpush1.bf16.xpose.msra.mxu0 0
        %6822 = vmatprep.subr.bf16.mxu0 0
        %6823 = vmatpush1.bf16.xpose.msra.mxu0 0
        %6824 = vmatprep.subr.bf16.mxu0 0
        %6825 = vmatpush1.bf16.xpose.msra.mxu0 0
        %6826 = vmatprep.subr.bf16.mxu0 0
        %6827 = vmatpush1.bf16.xpose.msra.mxu0 0
        %6828 = vmatprep.subr.bf16.mxu0 0
        %6829 = vmatpush1.bf16.xpose.msra.mxu0 0
        %6830 = vmatprep.subr.bf16.mxu0 0
        %6831 = vmatpush1.bf16.xpose.msra.mxu0 0
        %6832 = vmatprep.subr.bf16.mxu0 0
        %6833 = vmatpush1.bf16.xpose.msra.mxu0 0
        %6834 = vmatprep.subr.bf16.mxu0 %v3725
        %6835 = vmatpush1.bf16.xpose.msra.mxu0 %v3724
        %6836 = vmatprep.subr.bf16.mxu0 0
        %6837 = vmatpush2.bf16.xpose.msra.mxu0 0
        %6838 = vmatprep.subr.bf16.mxu0 0
        %6839 = vmatpush2.bf16.xpose.msra.mxu0 0
        %6840 = vmatprep.subr.bf16.mxu0 0
        %6841 = vmatpush2.bf16.xpose.msra.mxu0 0
        %6842 = vmatprep.subr.bf16.mxu0 0
        %6843 = vmatpush2.bf16.xpose.msra.mxu0 0
        %6844 = vmatprep.subr.bf16.mxu0 0
        %6845 = vmatpush2.bf16.xpose.msra.mxu0 0
        %6846 = vmatprep.subr.bf16.mxu0 0
        %6847 = vmatpush2.bf16.xpose.msra.mxu0 0
        %6848 = vmatprep.subr.bf16.mxu0 0
        %6849 = vmatpush2.bf16.xpose.msra.mxu0 0
        %6850 = vmatprep.subr.bf16.mxu0 0
        %6851 = vmatpush2.bf16.xpose.msra.mxu0 0
        %6852 = vmatprep.mubr.bf16.mxu0 %v1433
        %6853 = vmatmul.mubr.bf16.gmra.mxu0 %v1419
        %v6854 = vpop.f32.mrf.mxu0
        %v6855 = vadd.f32 %v6815, %v6854
        %v6856 = vpop.f32.mrf.mxu0
        %v6857 = vpop.f32.mrf.mxu0
        %v6858 = vpop.f32.mrf.mxu0
        %6859 = vdwg.mxu0
        %6860 = vmatprep.subr.bf16.mxu0 0
        %6861 = vmatpush1.bf16.xpose.msra.mxu0 0
        %6862 = vmatprep.subr.bf16.mxu0 0
        %6863 = vmatpush1.bf16.xpose.msra.mxu0 0
        %6864 = vmatprep.subr.bf16.mxu0 0
        %6865 = vmatpush1.bf16.xpose.msra.mxu0 0
        %6866 = vmatprep.subr.bf16.mxu0 0
        %6867 = vmatpush1.bf16.xpose.msra.mxu0 0
        %6868 = vmatprep.subr.bf16.mxu0 0
        %6869 = vmatpush1.bf16.xpose.msra.mxu0 0
        %6870 = vmatprep.subr.bf16.mxu0 0
        %6871 = vmatpush1.bf16.xpose.msra.mxu0 0
        %6872 = vmatprep.subr.bf16.mxu0 0
        %6873 = vmatpush1.bf16.xpose.msra.mxu0 0
        %6874 = vmatprep.subr.bf16.mxu0 %v3727
        %6875 = vmatpush1.bf16.xpose.msra.mxu0 %v3726
        %6876 = vmatprep.subr.bf16.mxu0 0
        %6877 = vmatpush2.bf16.xpose.msra.mxu0 0
        %6878 = vmatprep.subr.bf16.mxu0 0
        %6879 = vmatpush2.bf16.xpose.msra.mxu0 0
        %6880 = vmatprep.subr.bf16.mxu0 0
        %6881 = vmatpush2.bf16.xpose.msra.mxu0 0
        %6882 = vmatprep.subr.bf16.mxu0 0
        %6883 = vmatpush2.bf16.xpose.msra.mxu0 0
        %6884 = vmatprep.subr.bf16.mxu0 0
        %6885 = vmatpush2.bf16.xpose.msra.mxu0 0
        %6886 = vmatprep.subr.bf16.mxu0 0
        %6887 = vmatpush2.bf16.xpose.msra.mxu0 0
        %6888 = vmatprep.subr.bf16.mxu0 0
        %6889 = vmatpush2.bf16.xpose.msra.mxu0 0
        %6890 = vmatprep.subr.bf16.mxu0 0
        %6891 = vmatpush2.bf16.xpose.msra.mxu0 0
        %6892 = vmatprep.mubr.bf16.mxu0 %v1437
        %6893 = vmatmul.mubr.bf16.gmra.mxu0 %v1435
        %v6894 = vpop.f32.mrf.mxu0
        %v6895 = vadd.f32 %v6855, %v6894
        %v6896 = vpop.f32.mrf.mxu0
        %v6897 = vpop.f32.mrf.mxu0
        %v6898 = vpop.f32.mrf.mxu0
        %6899 = vdwg.mxu0
        %6900 = vmatprep.subr.bf16.mxu0 0
        %6901 = vmatpush1.bf16.xpose.msra.mxu0 0
        %6902 = vmatprep.subr.bf16.mxu0 0
        %6903 = vmatpush1.bf16.xpose.msra.mxu0 0
        %6904 = vmatprep.subr.bf16.mxu0 0
        %6905 = vmatpush1.bf16.xpose.msra.mxu0 0
        %6906 = vmatprep.subr.bf16.mxu0 0
        %6907 = vmatpush1.bf16.xpose.msra.mxu0 0
        %6908 = vmatprep.subr.bf16.mxu0 0
        %6909 = vmatpush1.bf16.xpose.msra.mxu0 0
        %6910 = vmatprep.subr.bf16.mxu0 0
        %6911 = vmatpush1.bf16.xpose.msra.mxu0 0
        %6912 = vmatprep.subr.bf16.mxu0 0
        %6913 = vmatpush1.bf16.xpose.msra.mxu0 0
        %6914 = vmatprep.subr.bf16.mxu0 %v3729
        %6915 = vmatpush1.bf16.xpose.msra.mxu0 %v3728
        %6916 = vmatprep.subr.bf16.mxu0 0
        %6917 = vmatpush2.bf16.xpose.msra.mxu0 0
        %6918 = vmatprep.subr.bf16.mxu0 0
        %6919 = vmatpush2.bf16.xpose.msra.mxu0 0
        %6920 = vmatprep.subr.bf16.mxu0 0
        %6921 = vmatpush2.bf16.xpose.msra.mxu0 0
        %6922 = vmatprep.subr.bf16.mxu0 0
        %6923 = vmatpush2.bf16.xpose.msra.mxu0 0
        %6924 = vmatprep.subr.bf16.mxu0 0
        %6925 = vmatpush2.bf16.xpose.msra.mxu0 0
        %6926 = vmatprep.subr.bf16.mxu0 0
        %6927 = vmatpush2.bf16.xpose.msra.mxu0 0
        %6928 = vmatprep.subr.bf16.mxu0 0
        %6929 = vmatpush2.bf16.xpose.msra.mxu0 0
        %6930 = vmatprep.subr.bf16.mxu0 0
        %6931 = vmatpush2.bf16.xpose.msra.mxu0 0
        %6932 = vmatprep.mubr.bf16.mxu0 %v1475
        %6933 = vmatmul.mubr.bf16.gmra.mxu0 %v1461
        %v6934 = vpop.f32.mrf.mxu0
        %v6935 = vadd.f32 %v6895, %v6934
        %v6936 = vpop.f32.mrf.mxu0
        %v6937 = vpop.f32.mrf.mxu0
        %v6938 = vpop.f32.mrf.mxu0
        %6939 = vdwg.mxu0
        %6940 = vmatprep.subr.bf16.mxu0 0
        %6941 = vmatpush1.bf16.xpose.msra.mxu0 0
        %6942 = vmatprep.subr.bf16.mxu0 0
        %6943 = vmatpush1.bf16.xpose.msra.mxu0 0
        %6944 = vmatprep.subr.bf16.mxu0 0
        %6945 = vmatpush1.bf16.xpose.msra.mxu0 0
        %6946 = vmatprep.subr.bf16.mxu0 0
        %6947 = vmatpush1.bf16.xpose.msra.mxu0 0
        %6948 = vmatprep.subr.bf16.mxu0 0
        %6949 = vmatpush1.bf16.xpose.msra.mxu0 0
        %6950 = vmatprep.subr.bf16.mxu0 0
        %6951 = vmatpush1.bf16.xpose.msra.mxu0 0
        %6952 = vmatprep.subr.bf16.mxu0 0
        %6953 = vmatpush1.bf16.xpose.msra.mxu0 0
        %6954 = vmatprep.subr.bf16.mxu0 %v3731
        %6955 = vmatpush1.bf16.xpose.msra.mxu0 %v3730
        %6956 = vmatprep.subr.bf16.mxu0 0
        %6957 = vmatpush2.bf16.xpose.msra.mxu0 0
        %6958 = vmatprep.subr.bf16.mxu0 0
        %6959 = vmatpush2.bf16.xpose.msra.mxu0 0
        %6960 = vmatprep.subr.bf16.mxu0 0
        %6961 = vmatpush2.bf16.xpose.msra.mxu0 0
        %6962 = vmatprep.subr.bf16.mxu0 0
        %6963 = vmatpush2.bf16.xpose.msra.mxu0 0
        %6964 = vmatprep.subr.bf16.mxu0 0
        %6965 = vmatpush2.bf16.xpose.msra.mxu0 0
        %6966 = vmatprep.subr.bf16.mxu0 0
        %6967 = vmatpush2.bf16.xpose.msra.mxu0 0
        %6968 = vmatprep.subr.bf16.mxu0 0
        %6969 = vmatpush2.bf16.xpose.msra.mxu0 0
        %6970 = vmatprep.subr.bf16.mxu0 0
        %6971 = vmatpush2.bf16.xpose.msra.mxu0 0
        %6972 = vmatprep.mubr.bf16.mxu0 %v1485
        %6973 = vmatmul.mubr.bf16.gmra.mxu0 %v1483
        %v6974 = vpop.f32.mrf.mxu0
        %v6975 = vadd.f32 %v6935, %v6974
        %v6976 = vpop.f32.mrf.mxu0
        %v6977 = vpop.f32.mrf.mxu0
        %v6978 = vpop.f32.mrf.mxu0
        %6979 = vdwg.mxu0
        %6980 = vmatprep.subr.bf16.mxu0 0
        %6981 = vmatpush1.bf16.xpose.msra.mxu0 0
        %6982 = vmatprep.subr.bf16.mxu0 0
        %6983 = vmatpush1.bf16.xpose.msra.mxu0 0
        %6984 = vmatprep.subr.bf16.mxu0 0
        %6985 = vmatpush1.bf16.xpose.msra.mxu0 0
        %6986 = vmatprep.subr.bf16.mxu0 0
        %6987 = vmatpush1.bf16.xpose.msra.mxu0 0
        %6988 = vmatprep.subr.bf16.mxu0 0
        %6989 = vmatpush1.bf16.xpose.msra.mxu0 0
        %6990 = vmatprep.subr.bf16.mxu0 0
        %6991 = vmatpush1.bf16.xpose.msra.mxu0 0
        %6992 = vmatprep.subr.bf16.mxu0 0
        %6993 = vmatpush1.bf16.xpose.msra.mxu0 0
        %6994 = vmatprep.subr.bf16.mxu0 %v3733
        %6995 = vmatpush1.bf16.xpose.msra.mxu0 %v3732
        %6996 = vmatprep.subr.bf16.mxu0 0
        %6997 = vmatpush2.bf16.xpose.msra.mxu0 0
        %6998 = vmatprep.subr.bf16.mxu0 0
        %6999 = vmatpush2.bf16.xpose.msra.mxu0 0
        %7000 = vmatprep.subr.bf16.mxu0 0
        %7001 = vmatpush2.bf16.xpose.msra.mxu0 0
        %7002 = vmatprep.subr.bf16.mxu0 0
        %7003 = vmatpush2.bf16.xpose.msra.mxu0 0
        %7004 = vmatprep.subr.bf16.mxu0 0
        %7005 = vmatpush2.bf16.xpose.msra.mxu0 0
        %7006 = vmatprep.subr.bf16.mxu0 0
        %7007 = vmatpush2.bf16.xpose.msra.mxu0 0
        %7008 = vmatprep.subr.bf16.mxu0 0
        %7009 = vmatpush2.bf16.xpose.msra.mxu0 0
        %7010 = vmatprep.subr.bf16.mxu0 0
        %7011 = vmatpush2.bf16.xpose.msra.mxu0 0
        %7012 = vmatprep.mubr.bf16.mxu0 %v1482
        %7013 = vmatmul.mubr.bf16.gmra.mxu0 %v1468
        %v7014 = vpop.f32.mrf.mxu0
        %v7015 = vadd.f32 %v6975, %v7014
        %v7016 = vpop.f32.mrf.mxu0
        %v7017 = vpop.f32.mrf.mxu0
        %v7018 = vpop.f32.mrf.mxu0
        %7019 = vdwg.mxu0
        %7020 = vmatprep.subr.bf16.mxu0 0
        %7021 = vmatpush1.bf16.xpose.msra.mxu0 0
        %7022 = vmatprep.subr.bf16.mxu0 0
        %7023 = vmatpush1.bf16.xpose.msra.mxu0 0
        %7024 = vmatprep.subr.bf16.mxu0 0
        %7025 = vmatpush1.bf16.xpose.msra.mxu0 0
        %7026 = vmatprep.subr.bf16.mxu0 0
        %7027 = vmatpush1.bf16.xpose.msra.mxu0 0
        %7028 = vmatprep.subr.bf16.mxu0 0
        %7029 = vmatpush1.bf16.xpose.msra.mxu0 0
        %7030 = vmatprep.subr.bf16.mxu0 0
        %7031 = vmatpush1.bf16.xpose.msra.mxu0 0
        %7032 = vmatprep.subr.bf16.mxu0 0
        %7033 = vmatpush1.bf16.xpose.msra.mxu0 0
        %7034 = vmatprep.subr.bf16.mxu0 %v3735
        %7035 = vmatpush1.bf16.xpose.msra.mxu0 %v3734
        %7036 = vmatprep.subr.bf16.mxu0 0
        %7037 = vmatpush2.bf16.xpose.msra.mxu0 0
        %7038 = vmatprep.subr.bf16.mxu0 0
        %7039 = vmatpush2.bf16.xpose.msra.mxu0 0
        %7040 = vmatprep.subr.bf16.mxu0 0
        %7041 = vmatpush2.bf16.xpose.msra.mxu0 0
        %7042 = vmatprep.subr.bf16.mxu0 0
        %7043 = vmatpush2.bf16.xpose.msra.mxu0 0
        %7044 = vmatprep.subr.bf16.mxu0 0
        %7045 = vmatpush2.bf16.xpose.msra.mxu0 0
        %7046 = vmatprep.subr.bf16.mxu0 0
        %7047 = vmatpush2.bf16.xpose.msra.mxu0 0
        %7048 = vmatprep.subr.bf16.mxu0 0
        %7049 = vmatpush2.bf16.xpose.msra.mxu0 0
        %7050 = vmatprep.subr.bf16.mxu0 0
        %7051 = vmatpush2.bf16.xpose.msra.mxu0 0
        %7052 = vmatprep.mubr.bf16.mxu0 %v1486
        %7053 = vmatmul.mubr.bf16.gmra.mxu0 %v1484
        %v7054 = vpop.f32.mrf.mxu0
        %v7055 = vadd.f32 %v7015, %v7054
        %v7056 = vpop.f32.mrf.mxu0
        %v7057 = vpop.f32.mrf.mxu0
        %v7058 = vpop.f32.mrf.mxu0
        %7059 = vdwg.mxu0
        %7060 = vmatprep.subr.bf16.mxu0 0
        %7061 = vmatpush1.bf16.xpose.msra.mxu0 0
        %7062 = vmatprep.subr.bf16.mxu0 0
        %7063 = vmatpush1.bf16.xpose.msra.mxu0 0
        %7064 = vmatprep.subr.bf16.mxu0 0
        %7065 = vmatpush1.bf16.xpose.msra.mxu0 0
        %7066 = vmatprep.subr.bf16.mxu0 0
        %7067 = vmatpush1.bf16.xpose.msra.mxu0 0
        %7068 = vmatprep.subr.bf16.mxu0 0
        %7069 = vmatpush1.bf16.xpose.msra.mxu0 0
        %7070 = vmatprep.subr.bf16.mxu0 0
        %7071 = vmatpush1.bf16.xpose.msra.mxu0 0
        %7072 = vmatprep.subr.bf16.mxu0 0
        %7073 = vmatpush1.bf16.xpose.msra.mxu0 0
        %7074 = vmatprep.subr.bf16.mxu0 %v3737
        %7075 = vmatpush1.bf16.xpose.msra.mxu0 %v3736
        %7076 = vmatprep.subr.bf16.mxu0 0
        %7077 = vmatpush2.bf16.xpose.msra.mxu0 0
        %7078 = vmatprep.subr.bf16.mxu0 0
        %7079 = vmatpush2.bf16.xpose.msra.mxu0 0
        %7080 = vmatprep.subr.bf16.mxu0 0
        %7081 = vmatpush2.bf16.xpose.msra.mxu0 0
        %7082 = vmatprep.subr.bf16.mxu0 0
        %7083 = vmatpush2.bf16.xpose.msra.mxu0 0
        %7084 = vmatprep.subr.bf16.mxu0 0
        %7085 = vmatpush2.bf16.xpose.msra.mxu0 0
        %7086 = vmatprep.subr.bf16.mxu0 0
        %7087 = vmatpush2.bf16.xpose.msra.mxu0 0
        %7088 = vmatprep.subr.bf16.mxu0 0
        %7089 = vmatpush2.bf16.xpose.msra.mxu0 0
        %7090 = vmatprep.subr.bf16.mxu0 0
        %7091 = vmatpush2.bf16.xpose.msra.mxu0 0
        %7092 = vmatprep.mubr.bf16.mxu0 %v1524
        %7093 = vmatmul.mubr.bf16.gmra.mxu0 %v1510
        %v7094 = vpop.f32.mrf.mxu0
        %v7095 = vadd.f32 %v7055, %v7094
        %v7096 = vpop.f32.mrf.mxu0
        %v7097 = vpop.f32.mrf.mxu0
        %v7098 = vpop.f32.mrf.mxu0
        %7099 = vdwg.mxu0
        %7100 = vmatprep.subr.bf16.mxu0 0
        %7101 = vmatpush1.bf16.xpose.msra.mxu0 0
        %7102 = vmatprep.subr.bf16.mxu0 0
        %7103 = vmatpush1.bf16.xpose.msra.mxu0 0
        %7104 = vmatprep.subr.bf16.mxu0 0
        %7105 = vmatpush1.bf16.xpose.msra.mxu0 0
        %7106 = vmatprep.subr.bf16.mxu0 0
        %7107 = vmatpush1.bf16.xpose.msra.mxu0 0
        %7108 = vmatprep.subr.bf16.mxu0 0
        %7109 = vmatpush1.bf16.xpose.msra.mxu0 0
        %7110 = vmatprep.subr.bf16.mxu0 0
        %7111 = vmatpush1.bf16.xpose.msra.mxu0 0
        %7112 = vmatprep.subr.bf16.mxu0 0
        %7113 = vmatpush1.bf16.xpose.msra.mxu0 0
        %7114 = vmatprep.subr.bf16.mxu0 %v3739
        %7115 = vmatpush1.bf16.xpose.msra.mxu0 %v3738
        %7116 = vmatprep.subr.bf16.mxu0 0
        %7117 = vmatpush2.bf16.xpose.msra.mxu0 0
        %7118 = vmatprep.subr.bf16.mxu0 0
        %7119 = vmatpush2.bf16.xpose.msra.mxu0 0
        %7120 = vmatprep.subr.bf16.mxu0 0
        %7121 = vmatpush2.bf16.xpose.msra.mxu0 0
        %7122 = vmatprep.subr.bf16.mxu0 0
        %7123 = vmatpush2.bf16.xpose.msra.mxu0 0
        %7124 = vmatprep.subr.bf16.mxu0 0
        %7125 = vmatpush2.bf16.xpose.msra.mxu0 0
        %7126 = vmatprep.subr.bf16.mxu0 0
        %7127 = vmatpush2.bf16.xpose.msra.mxu0 0
        %7128 = vmatprep.subr.bf16.mxu0 0
        %7129 = vmatpush2.bf16.xpose.msra.mxu0 0
        %7130 = vmatprep.subr.bf16.mxu0 0
        %7131 = vmatpush2.bf16.xpose.msra.mxu0 0
        %7132 = vmatprep.mubr.bf16.mxu0 %v1534
        %7133 = vmatmul.mubr.bf16.gmra.mxu0 %v1532
        %v7134 = vpop.f32.mrf.mxu0
        %v7135 = vadd.f32 %v7095, %v7134
        %v7136 = vpop.f32.mrf.mxu0
        %v7137 = vpop.f32.mrf.mxu0
        %v7138 = vpop.f32.mrf.mxu0
        %7139 = vdwg.mxu0
        %7140 = vmatprep.subr.bf16.mxu0 0
        %7141 = vmatpush1.bf16.xpose.msra.mxu0 0
        %7142 = vmatprep.subr.bf16.mxu0 0
        %7143 = vmatpush1.bf16.xpose.msra.mxu0 0
        %7144 = vmatprep.subr.bf16.mxu0 0
        %7145 = vmatpush1.bf16.xpose.msra.mxu0 0
        %7146 = vmatprep.subr.bf16.mxu0 0
        %7147 = vmatpush1.bf16.xpose.msra.mxu0 0
        %7148 = vmatprep.subr.bf16.mxu0 0
        %7149 = vmatpush1.bf16.xpose.msra.mxu0 0
        %7150 = vmatprep.subr.bf16.mxu0 0
        %7151 = vmatpush1.bf16.xpose.msra.mxu0 0
        %7152 = vmatprep.subr.bf16.mxu0 0
        %7153 = vmatpush1.bf16.xpose.msra.mxu0 0
        %7154 = vmatprep.subr.bf16.mxu0 %v3741
        %7155 = vmatpush1.bf16.xpose.msra.mxu0 %v3740
        %7156 = vmatprep.subr.bf16.mxu0 0
        %7157 = vmatpush2.bf16.xpose.msra.mxu0 0
        %7158 = vmatprep.subr.bf16.mxu0 0
        %7159 = vmatpush2.bf16.xpose.msra.mxu0 0
        %7160 = vmatprep.subr.bf16.mxu0 0
        %7161 = vmatpush2.bf16.xpose.msra.mxu0 0
        %7162 = vmatprep.subr.bf16.mxu0 0
        %7163 = vmatpush2.bf16.xpose.msra.mxu0 0
        %7164 = vmatprep.subr.bf16.mxu0 0
        %7165 = vmatpush2.bf16.xpose.msra.mxu0 0
        %7166 = vmatprep.subr.bf16.mxu0 0
        %7167 = vmatpush2.bf16.xpose.msra.mxu0 0
        %7168 = vmatprep.subr.bf16.mxu0 0
        %7169 = vmatpush2.bf16.xpose.msra.mxu0 0
        %7170 = vmatprep.subr.bf16.mxu0 0
        %7171 = vmatpush2.bf16.xpose.msra.mxu0 0
        %7172 = vmatprep.mubr.bf16.mxu0 %v1531
        %7173 = vmatmul.mubr.bf16.gmra.mxu0 %v1517
        %v7174 = vpop.f32.mrf.mxu0
        %v7175 = vadd.f32 %v7135, %v7174
        %v7176 = vpop.f32.mrf.mxu0
        %v7177 = vpop.f32.mrf.mxu0
        %v7178 = vpop.f32.mrf.mxu0
        %7179 = vdwg.mxu0
        %7180 = vmatprep.subr.bf16.mxu0 0
        %7181 = vmatpush1.bf16.xpose.msra.mxu0 0
        %7182 = vmatprep.subr.bf16.mxu0 0
        %7183 = vmatpush1.bf16.xpose.msra.mxu0 0
        %7184 = vmatprep.subr.bf16.mxu0 0
        %7185 = vmatpush1.bf16.xpose.msra.mxu0 0
        %7186 = vmatprep.subr.bf16.mxu0 0
        %7187 = vmatpush1.bf16.xpose.msra.mxu0 0
        %7188 = vmatprep.subr.bf16.mxu0 0
        %7189 = vmatpush1.bf16.xpose.msra.mxu0 0
        %7190 = vmatprep.subr.bf16.mxu0 0
        %7191 = vmatpush1.bf16.xpose.msra.mxu0 0
        %7192 = vmatprep.subr.bf16.mxu0 0
        %7193 = vmatpush1.bf16.xpose.msra.mxu0 0
        %7194 = vmatprep.subr.bf16.mxu0 %v3743
        %7195 = vmatpush1.bf16.xpose.msra.mxu0 %v3742
        %7196 = vmatprep.subr.bf16.mxu0 0
        %7197 = vmatpush2.bf16.xpose.msra.mxu0 0
        %7198 = vmatprep.subr.bf16.mxu0 0
        %7199 = vmatpush2.bf16.xpose.msra.mxu0 0
        %7200 = vmatprep.subr.bf16.mxu0 0
        %7201 = vmatpush2.bf16.xpose.msra.mxu0 0
        %7202 = vmatprep.subr.bf16.mxu0 0
        %7203 = vmatpush2.bf16.xpose.msra.mxu0 0
        %7204 = vmatprep.subr.bf16.mxu0 0
        %7205 = vmatpush2.bf16.xpose.msra.mxu0 0
        %7206 = vmatprep.subr.bf16.mxu0 0
        %7207 = vmatpush2.bf16.xpose.msra.mxu0 0
        %7208 = vmatprep.subr.bf16.mxu0 0
        %7209 = vmatpush2.bf16.xpose.msra.mxu0 0
        %7210 = vmatprep.subr.bf16.mxu0 0
        %7211 = vmatpush2.bf16.xpose.msra.mxu0 0
        %7212 = vmatprep.mubr.bf16.mxu0 %v1535
        %7213 = vmatmul.mubr.bf16.gmra.mxu0 %v1533
        %v7214 = vpop.f32.mrf.mxu0
        %v7215 = vadd.f32 %v7175, %v7214
        %v7216 = vpop.f32.mrf.mxu0
        %v7217 = vpop.f32.mrf.mxu0
        %v7218 = vpop.f32.mrf.mxu0
        %7219 = vdwg.mxu0
        %7220 = vmatprep.subr.bf16.mxu0 0
        %7221 = vmatpush1.bf16.xpose.msra.mxu0 0
        %7222 = vmatprep.subr.bf16.mxu0 0
        %7223 = vmatpush1.bf16.xpose.msra.mxu0 0
        %7224 = vmatprep.subr.bf16.mxu0 0
        %7225 = vmatpush1.bf16.xpose.msra.mxu0 0
        %7226 = vmatprep.subr.bf16.mxu0 0
        %7227 = vmatpush1.bf16.xpose.msra.mxu0 0
        %7228 = vmatprep.subr.bf16.mxu0 0
        %7229 = vmatpush1.bf16.xpose.msra.mxu0 0
        %7230 = vmatprep.subr.bf16.mxu0 0
        %7231 = vmatpush1.bf16.xpose.msra.mxu0 0
        %7232 = vmatprep.subr.bf16.mxu0 0
        %7233 = vmatpush1.bf16.xpose.msra.mxu0 0
        %7234 = vmatprep.subr.bf16.mxu0 %v3745
        %7235 = vmatpush1.bf16.xpose.msra.mxu0 %v3744
        %7236 = vmatprep.subr.bf16.mxu0 0
        %7237 = vmatpush2.bf16.xpose.msra.mxu0 0
        %7238 = vmatprep.subr.bf16.mxu0 0
        %7239 = vmatpush2.bf16.xpose.msra.mxu0 0
        %7240 = vmatprep.subr.bf16.mxu0 0
        %7241 = vmatpush2.bf16.xpose.msra.mxu0 0
        %7242 = vmatprep.subr.bf16.mxu0 0
        %7243 = vmatpush2.bf16.xpose.msra.mxu0 0
        %7244 = vmatprep.subr.bf16.mxu0 0
        %7245 = vmatpush2.bf16.xpose.msra.mxu0 0
        %7246 = vmatprep.subr.bf16.mxu0 0
        %7247 = vmatpush2.bf16.xpose.msra.mxu0 0
        %7248 = vmatprep.subr.bf16.mxu0 0
        %7249 = vmatpush2.bf16.xpose.msra.mxu0 0
        %7250 = vmatprep.subr.bf16.mxu0 0
        %7251 = vmatpush2.bf16.xpose.msra.mxu0 0
        %7252 = vmatprep.mubr.bf16.mxu0 %v1573
        %7253 = vmatmul.mubr.bf16.gmra.mxu0 %v1559
        %v7254 = vpop.f32.mrf.mxu0
        %v7255 = vadd.f32 %v7215, %v7254
        %v7256 = vpop.f32.mrf.mxu0
        %v7257 = vpop.f32.mrf.mxu0
        %v7258 = vpop.f32.mrf.mxu0
        %7259 = vdwg.mxu0
        %7260 = vmatprep.subr.bf16.mxu0 0
        %7261 = vmatpush1.bf16.xpose.msra.mxu0 0
        %7262 = vmatprep.subr.bf16.mxu0 0
        %7263 = vmatpush1.bf16.xpose.msra.mxu0 0
        %7264 = vmatprep.subr.bf16.mxu0 0
        %7265 = vmatpush1.bf16.xpose.msra.mxu0 0
        %7266 = vmatprep.subr.bf16.mxu0 0
        %7267 = vmatpush1.bf16.xpose.msra.mxu0 0
        %7268 = vmatprep.subr.bf16.mxu0 0
        %7269 = vmatpush1.bf16.xpose.msra.mxu0 0
        %7270 = vmatprep.subr.bf16.mxu0 0
        %7271 = vmatpush1.bf16.xpose.msra.mxu0 0
        %7272 = vmatprep.subr.bf16.mxu0 0
        %7273 = vmatpush1.bf16.xpose.msra.mxu0 0
        %7274 = vmatprep.subr.bf16.mxu0 %v3747
        %7275 = vmatpush1.bf16.xpose.msra.mxu0 %v3746
        %7276 = vmatprep.subr.bf16.mxu0 0
        %7277 = vmatpush2.bf16.xpose.msra.mxu0 0
        %7278 = vmatprep.subr.bf16.mxu0 0
        %7279 = vmatpush2.bf16.xpose.msra.mxu0 0
        %7280 = vmatprep.subr.bf16.mxu0 0
        %7281 = vmatpush2.bf16.xpose.msra.mxu0 0
        %7282 = vmatprep.subr.bf16.mxu0 0
        %7283 = vmatpush2.bf16.xpose.msra.mxu0 0
        %7284 = vmatprep.subr.bf16.mxu0 0
        %7285 = vmatpush2.bf16.xpose.msra.mxu0 0
        %7286 = vmatprep.subr.bf16.mxu0 0
        %7287 = vmatpush2.bf16.xpose.msra.mxu0 0
        %7288 = vmatprep.subr.bf16.mxu0 0
        %7289 = vmatpush2.bf16.xpose.msra.mxu0 0
        %7290 = vmatprep.subr.bf16.mxu0 0
        %7291 = vmatpush2.bf16.xpose.msra.mxu0 0
        %7292 = vmatprep.mubr.bf16.mxu0 %v1583
        %7293 = vmatmul.mubr.bf16.gmra.mxu0 %v1581
        %v7294 = vpop.f32.mrf.mxu0
        %v7295 = vadd.f32 %v7255, %v7294
        %v7296 = vpop.f32.mrf.mxu0
        %v7297 = vpop.f32.mrf.mxu0
        %v7298 = vpop.f32.mrf.mxu0
        %7299 = vdwg.mxu0
        %7300 = vmatprep.subr.bf16.mxu0 0
        %7301 = vmatpush1.bf16.xpose.msra.mxu0 0
        %7302 = vmatprep.subr.bf16.mxu0 0
        %7303 = vmatpush1.bf16.xpose.msra.mxu0 0
        %7304 = vmatprep.subr.bf16.mxu0 0
        %7305 = vmatpush1.bf16.xpose.msra.mxu0 0
        %7306 = vmatprep.subr.bf16.mxu0 0
        %7307 = vmatpush1.bf16.xpose.msra.mxu0 0
        %7308 = vmatprep.subr.bf16.mxu0 0
        %7309 = vmatpush1.bf16.xpose.msra.mxu0 0
        %7310 = vmatprep.subr.bf16.mxu0 0
        %7311 = vmatpush1.bf16.xpose.msra.mxu0 0
        %7312 = vmatprep.subr.bf16.mxu0 0
        %7313 = vmatpush1.bf16.xpose.msra.mxu0 0
        %7314 = vmatprep.subr.bf16.mxu0 %v3749
        %7315 = vmatpush1.bf16.xpose.msra.mxu0 %v3748
        %7316 = vmatprep.subr.bf16.mxu0 0
        %7317 = vmatpush2.bf16.xpose.msra.mxu0 0
        %7318 = vmatprep.subr.bf16.mxu0 0
        %7319 = vmatpush2.bf16.xpose.msra.mxu0 0
        %7320 = vmatprep.subr.bf16.mxu0 0
        %7321 = vmatpush2.bf16.xpose.msra.mxu0 0
        %7322 = vmatprep.subr.bf16.mxu0 0
        %7323 = vmatpush2.bf16.xpose.msra.mxu0 0
        %7324 = vmatprep.subr.bf16.mxu0 0
        %7325 = vmatpush2.bf16.xpose.msra.mxu0 0
        %7326 = vmatprep.subr.bf16.mxu0 0
        %7327 = vmatpush2.bf16.xpose.msra.mxu0 0
        %7328 = vmatprep.subr.bf16.mxu0 0
        %7329 = vmatpush2.bf16.xpose.msra.mxu0 0
        %7330 = vmatprep.subr.bf16.mxu0 0
        %7331 = vmatpush2.bf16.xpose.msra.mxu0 0
        %7332 = vmatprep.mubr.bf16.mxu0 %v1580
        %7333 = vmatmul.mubr.bf16.gmra.mxu0 %v1566
        %v7334 = vpop.f32.mrf.mxu0
        %v7335 = vadd.f32 %v7295, %v7334
        %v7336 = vpop.f32.mrf.mxu0
        %v7337 = vpop.f32.mrf.mxu0
        %v7338 = vpop.f32.mrf.mxu0
        %7339 = vdwg.mxu0
        %7340 = vmatprep.subr.bf16.mxu0 0
        %7341 = vmatpush1.bf16.xpose.msra.mxu0 0
        %7342 = vmatprep.subr.bf16.mxu0 0
        %7343 = vmatpush1.bf16.xpose.msra.mxu0 0
        %7344 = vmatprep.subr.bf16.mxu0 0
        %7345 = vmatpush1.bf16.xpose.msra.mxu0 0
        %7346 = vmatprep.subr.bf16.mxu0 0
        %7347 = vmatpush1.bf16.xpose.msra.mxu0 0
        %7348 = vmatprep.subr.bf16.mxu0 0
        %7349 = vmatpush1.bf16.xpose.msra.mxu0 0
        %7350 = vmatprep.subr.bf16.mxu0 0
        %7351 = vmatpush1.bf16.xpose.msra.mxu0 0
        %7352 = vmatprep.subr.bf16.mxu0 0
        %7353 = vmatpush1.bf16.xpose.msra.mxu0 0
        %7354 = vmatprep.subr.bf16.mxu0 %v3751
        %7355 = vmatpush1.bf16.xpose.msra.mxu0 %v3750
        %7356 = vmatprep.subr.bf16.mxu0 0
        %7357 = vmatpush2.bf16.xpose.msra.mxu0 0
        %7358 = vmatprep.subr.bf16.mxu0 0
        %7359 = vmatpush2.bf16.xpose.msra.mxu0 0
        %7360 = vmatprep.subr.bf16.mxu0 0
        %7361 = vmatpush2.bf16.xpose.msra.mxu0 0
        %7362 = vmatprep.subr.bf16.mxu0 0
        %7363 = vmatpush2.bf16.xpose.msra.mxu0 0
        %7364 = vmatprep.subr.bf16.mxu0 0
        %7365 = vmatpush2.bf16.xpose.msra.mxu0 0
        %7366 = vmatprep.subr.bf16.mxu0 0
        %7367 = vmatpush2.bf16.xpose.msra.mxu0 0
        %7368 = vmatprep.subr.bf16.mxu0 0
        %7369 = vmatpush2.bf16.xpose.msra.mxu0 0
        %7370 = vmatprep.subr.bf16.mxu0 0
        %7371 = vmatpush2.bf16.xpose.msra.mxu0 0
        %7372 = vmatprep.mubr.bf16.mxu0 %v1584
        %7373 = vmatmul.mubr.bf16.gmra.mxu0 %v1582
        %v7374 = vpop.f32.mrf.mxu0
        %v7375 = vadd.f32 %v7335, %v7374
        %v7376 = vpop.f32.mrf.mxu0
        %v7377 = vpop.f32.mrf.mxu0
        %v7378 = vpop.f32.mrf.mxu0
        %7379 = vdwg.mxu0
        %7380 = vmatprep.subr.bf16.mxu0 0
        %7381 = vmatpush1.bf16.xpose.msra.mxu0 0
        %7382 = vmatprep.subr.bf16.mxu0 0
        %7383 = vmatpush1.bf16.xpose.msra.mxu0 0
        %7384 = vmatprep.subr.bf16.mxu0 0
        %7385 = vmatpush1.bf16.xpose.msra.mxu0 0
        %7386 = vmatprep.subr.bf16.mxu0 0
        %7387 = vmatpush1.bf16.xpose.msra.mxu0 0
        %7388 = vmatprep.subr.bf16.mxu0 0
        %7389 = vmatpush1.bf16.xpose.msra.mxu0 0
        %7390 = vmatprep.subr.bf16.mxu0 0
        %7391 = vmatpush1.bf16.xpose.msra.mxu0 0
        %7392 = vmatprep.subr.bf16.mxu0 0
        %7393 = vmatpush1.bf16.xpose.msra.mxu0 0
        %7394 = vmatprep.subr.bf16.mxu0 %v3753
        %7395 = vmatpush1.bf16.xpose.msra.mxu0 %v3752
        %7396 = vmatprep.subr.bf16.mxu0 0
        %7397 = vmatpush2.bf16.xpose.msra.mxu0 0
        %7398 = vmatprep.subr.bf16.mxu0 0
        %7399 = vmatpush2.bf16.xpose.msra.mxu0 0
        %7400 = vmatprep.subr.bf16.mxu0 0
        %7401 = vmatpush2.bf16.xpose.msra.mxu0 0
        %7402 = vmatprep.subr.bf16.mxu0 0
        %7403 = vmatpush2.bf16.xpose.msra.mxu0 0
        %7404 = vmatprep.subr.bf16.mxu0 0
        %7405 = vmatpush2.bf16.xpose.msra.mxu0 0
        %7406 = vmatprep.subr.bf16.mxu0 0
        %7407 = vmatpush2.bf16.xpose.msra.mxu0 0
        %7408 = vmatprep.subr.bf16.mxu0 0
        %7409 = vmatpush2.bf16.xpose.msra.mxu0 0
        %7410 = vmatprep.subr.bf16.mxu0 0
        %7411 = vmatpush2.bf16.xpose.msra.mxu0 0
        %7412 = vmatprep.mubr.bf16.mxu0 %v1622
        %7413 = vmatmul.mubr.bf16.gmra.mxu0 %v1608
        %v7414 = vpop.f32.mrf.mxu0
        %v7415 = vadd.f32 %v7375, %v7414
        %v7416 = vpop.f32.mrf.mxu0
        %v7417 = vpop.f32.mrf.mxu0
        %v7418 = vpop.f32.mrf.mxu0
        %7419 = vdwg.mxu0
        %7420 = vmatprep.subr.bf16.mxu0 0
        %7421 = vmatpush1.bf16.xpose.msra.mxu0 0
        %7422 = vmatprep.subr.bf16.mxu0 0
        %7423 = vmatpush1.bf16.xpose.msra.mxu0 0
        %7424 = vmatprep.subr.bf16.mxu0 0
        %7425 = vmatpush1.bf16.xpose.msra.mxu0 0
        %7426 = vmatprep.subr.bf16.mxu0 0
        %7427 = vmatpush1.bf16.xpose.msra.mxu0 0
        %7428 = vmatprep.subr.bf16.mxu0 0
        %7429 = vmatpush1.bf16.xpose.msra.mxu0 0
        %7430 = vmatprep.subr.bf16.mxu0 0
        %7431 = vmatpush1.bf16.xpose.msra.mxu0 0
        %7432 = vmatprep.subr.bf16.mxu0 0
        %7433 = vmatpush1.bf16.xpose.msra.mxu0 0
        %7434 = vmatprep.subr.bf16.mxu0 %v3755
        %7435 = vmatpush1.bf16.xpose.msra.mxu0 %v3754
        %7436 = vmatprep.subr.bf16.mxu0 0
        %7437 = vmatpush2.bf16.xpose.msra.mxu0 0
        %7438 = vmatprep.subr.bf16.mxu0 0
        %7439 = vmatpush2.bf16.xpose.msra.mxu0 0
        %7440 = vmatprep.subr.bf16.mxu0 0
        %7441 = vmatpush2.bf16.xpose.msra.mxu0 0
        %7442 = vmatprep.subr.bf16.mxu0 0
        %7443 = vmatpush2.bf16.xpose.msra.mxu0 0
        %7444 = vmatprep.subr.bf16.mxu0 0
        %7445 = vmatpush2.bf16.xpose.msra.mxu0 0
        %7446 = vmatprep.subr.bf16.mxu0 0
        %7447 = vmatpush2.bf16.xpose.msra.mxu0 0
        %7448 = vmatprep.subr.bf16.mxu0 0
        %7449 = vmatpush2.bf16.xpose.msra.mxu0 0
        %7450 = vmatprep.subr.bf16.mxu0 0
        %7451 = vmatpush2.bf16.xpose.msra.mxu0 0
        %7452 = vmatprep.mubr.bf16.mxu0 %v1632
        %7453 = vmatmul.mubr.bf16.gmra.mxu0 %v1630
        %v7454 = vpop.f32.mrf.mxu0
        %v7455 = vadd.f32 %v7415, %v7454
        %v7456 = vpop.f32.mrf.mxu0
        %v7457 = vpop.f32.mrf.mxu0
        %v7458 = vpop.f32.mrf.mxu0
        %7459 = vdwg.mxu0
        %7460 = vmatprep.subr.bf16.mxu0 0
        %7461 = vmatpush1.bf16.xpose.msra.mxu0 0
        %7462 = vmatprep.subr.bf16.mxu0 0
        %7463 = vmatpush1.bf16.xpose.msra.mxu0 0
        %7464 = vmatprep.subr.bf16.mxu0 0
        %7465 = vmatpush1.bf16.xpose.msra.mxu0 0
        %7466 = vmatprep.subr.bf16.mxu0 0
        %7467 = vmatpush1.bf16.xpose.msra.mxu0 0
        %7468 = vmatprep.subr.bf16.mxu0 0
        %7469 = vmatpush1.bf16.xpose.msra.mxu0 0
        %7470 = vmatprep.subr.bf16.mxu0 0
        %7471 = vmatpush1.bf16.xpose.msra.mxu0 0
        %7472 = vmatprep.subr.bf16.mxu0 0
        %7473 = vmatpush1.bf16.xpose.msra.mxu0 0
        %7474 = vmatprep.subr.bf16.mxu0 %v3757
        %7475 = vmatpush1.bf16.xpose.msra.mxu0 %v3756
        %7476 = vmatprep.subr.bf16.mxu0 0
        %7477 = vmatpush2.bf16.xpose.msra.mxu0 0
        %7478 = vmatprep.subr.bf16.mxu0 0
        %7479 = vmatpush2.bf16.xpose.msra.mxu0 0
        %7480 = vmatprep.subr.bf16.mxu0 0
        %7481 = vmatpush2.bf16.xpose.msra.mxu0 0
        %7482 = vmatprep.subr.bf16.mxu0 0
        %7483 = vmatpush2.bf16.xpose.msra.mxu0 0
        %7484 = vmatprep.subr.bf16.mxu0 0
        %7485 = vmatpush2.bf16.xpose.msra.mxu0 0
        %7486 = vmatprep.subr.bf16.mxu0 0
        %7487 = vmatpush2.bf16.xpose.msra.mxu0 0
        %7488 = vmatprep.subr.bf16.mxu0 0
        %7489 = vmatpush2.bf16.xpose.msra.mxu0 0
        %7490 = vmatprep.subr.bf16.mxu0 0
        %7491 = vmatpush2.bf16.xpose.msra.mxu0 0
        %7492 = vmatprep.mubr.bf16.mxu0 %v1629
        %7493 = vmatmul.mubr.bf16.gmra.mxu0 %v1615
        %v7494 = vpop.f32.mrf.mxu0
        %v7495 = vadd.f32 %v7455, %v7494
        %v7496 = vpop.f32.mrf.mxu0
        %v7497 = vpop.f32.mrf.mxu0
        %v7498 = vpop.f32.mrf.mxu0
        %7499 = vdwg.mxu0
        %7500 = vmatprep.subr.bf16.mxu0 0
        %7501 = vmatpush1.bf16.xpose.msra.mxu0 0
        %7502 = vmatprep.subr.bf16.mxu0 0
        %7503 = vmatpush1.bf16.xpose.msra.mxu0 0
        %7504 = vmatprep.subr.bf16.mxu0 0
        %7505 = vmatpush1.bf16.xpose.msra.mxu0 0
        %7506 = vmatprep.subr.bf16.mxu0 0
        %7507 = vmatpush1.bf16.xpose.msra.mxu0 0
        %7508 = vmatprep.subr.bf16.mxu0 0
        %7509 = vmatpush1.bf16.xpose.msra.mxu0 0
        %7510 = vmatprep.subr.bf16.mxu0 0
        %7511 = vmatpush1.bf16.xpose.msra.mxu0 0
        %7512 = vmatprep.subr.bf16.mxu0 0
        %7513 = vmatpush1.bf16.xpose.msra.mxu0 0
        %7514 = vmatprep.subr.bf16.mxu0 %v3759
        %7515 = vmatpush1.bf16.xpose.msra.mxu0 %v3758
        %7516 = vmatprep.subr.bf16.mxu0 0
        %7517 = vmatpush2.bf16.xpose.msra.mxu0 0
        %7518 = vmatprep.subr.bf16.mxu0 0
        %7519 = vmatpush2.bf16.xpose.msra.mxu0 0
        %7520 = vmatprep.subr.bf16.mxu0 0
        %7521 = vmatpush2.bf16.xpose.msra.mxu0 0
        %7522 = vmatprep.subr.bf16.mxu0 0
        %7523 = vmatpush2.bf16.xpose.msra.mxu0 0
        %7524 = vmatprep.subr.bf16.mxu0 0
        %7525 = vmatpush2.bf16.xpose.msra.mxu0 0
        %7526 = vmatprep.subr.bf16.mxu0 0
        %7527 = vmatpush2.bf16.xpose.msra.mxu0 0
        %7528 = vmatprep.subr.bf16.mxu0 0
        %7529 = vmatpush2.bf16.xpose.msra.mxu0 0
        %7530 = vmatprep.subr.bf16.mxu0 0
        %7531 = vmatpush2.bf16.xpose.msra.mxu0 0
        %7532 = vmatprep.mubr.bf16.mxu0 %v1633
        %7533 = vmatmul.mubr.bf16.gmra.mxu0 %v1631
        %v7534 = vpop.f32.mrf.mxu0
        %v7535 = vadd.f32 %v7495, %v7534
        %v7536 = vpop.f32.mrf.mxu0
        %v7537 = vpop.f32.mrf.mxu0
        %v7538 = vpop.f32.mrf.mxu0
        %7539 = vdwg.mxu0
        %7540 = vmatprep.subr.bf16.mxu0 0
        %7541 = vmatpush1.bf16.xpose.msra.mxu0 0
        %7542 = vmatprep.subr.bf16.mxu0 0
        %7543 = vmatpush1.bf16.xpose.msra.mxu0 0
        %7544 = vmatprep.subr.bf16.mxu0 0
        %7545 = vmatpush1.bf16.xpose.msra.mxu0 0
        %7546 = vmatprep.subr.bf16.mxu0 0
        %7547 = vmatpush1.bf16.xpose.msra.mxu0 0
        %7548 = vmatprep.subr.bf16.mxu0 0
        %7549 = vmatpush1.bf16.xpose.msra.mxu0 0
        %7550 = vmatprep.subr.bf16.mxu0 0
        %7551 = vmatpush1.bf16.xpose.msra.mxu0 0
        %7552 = vmatprep.subr.bf16.mxu0 0
        %7553 = vmatpush1.bf16.xpose.msra.mxu0 0
        %7554 = vmatprep.subr.bf16.mxu0 %v3761
        %7555 = vmatpush1.bf16.xpose.msra.mxu0 %v3760
        %7556 = vmatprep.subr.bf16.mxu0 0
        %7557 = vmatpush2.bf16.xpose.msra.mxu0 0
        %7558 = vmatprep.subr.bf16.mxu0 0
        %7559 = vmatpush2.bf16.xpose.msra.mxu0 0
        %7560 = vmatprep.subr.bf16.mxu0 0
        %7561 = vmatpush2.bf16.xpose.msra.mxu0 0
        %7562 = vmatprep.subr.bf16.mxu0 0
        %7563 = vmatpush2.bf16.xpose.msra.mxu0 0
        %7564 = vmatprep.subr.bf16.mxu0 0
        %7565 = vmatpush2.bf16.xpose.msra.mxu0 0
        %7566 = vmatprep.subr.bf16.mxu0 0
        %7567 = vmatpush2.bf16.xpose.msra.mxu0 0
        %7568 = vmatprep.subr.bf16.mxu0 0
        %7569 = vmatpush2.bf16.xpose.msra.mxu0 0
        %7570 = vmatprep.subr.bf16.mxu0 0
        %7571 = vmatpush2.bf16.xpose.msra.mxu0 0
        %7572 = vmatprep.mubr.bf16.mxu0 %v1671
        %7573 = vmatmul.mubr.bf16.gmra.mxu0 %v1657
        %v7574 = vpop.f32.mrf.mxu0
        %v7575 = vadd.f32 %v7535, %v7574
        %v7576 = vpop.f32.mrf.mxu0
        %v7577 = vpop.f32.mrf.mxu0
        %v7578 = vpop.f32.mrf.mxu0
        %7579 = vdwg.mxu0
        %7580 = vmatprep.subr.bf16.mxu0 0
        %7581 = vmatpush1.bf16.xpose.msra.mxu0 0
        %7582 = vmatprep.subr.bf16.mxu0 0
        %7583 = vmatpush1.bf16.xpose.msra.mxu0 0
        %7584 = vmatprep.subr.bf16.mxu0 0
        %7585 = vmatpush1.bf16.xpose.msra.mxu0 0
        %7586 = vmatprep.subr.bf16.mxu0 0
        %7587 = vmatpush1.bf16.xpose.msra.mxu0 0
        %7588 = vmatprep.subr.bf16.mxu0 0
        %7589 = vmatpush1.bf16.xpose.msra.mxu0 0
        %7590 = vmatprep.subr.bf16.mxu0 0
        %7591 = vmatpush1.bf16.xpose.msra.mxu0 0
        %7592 = vmatprep.subr.bf16.mxu0 0
        %7593 = vmatpush1.bf16.xpose.msra.mxu0 0
        %7594 = vmatprep.subr.bf16.mxu0 %v3763
        %7595 = vmatpush1.bf16.xpose.msra.mxu0 %v3762
        %7596 = vmatprep.subr.bf16.mxu0 0
        %7597 = vmatpush2.bf16.xpose.msra.mxu0 0
        %7598 = vmatprep.subr.bf16.mxu0 0
        %7599 = vmatpush2.bf16.xpose.msra.mxu0 0
        %7600 = vmatprep.subr.bf16.mxu0 0
        %7601 = vmatpush2.bf16.xpose.msra.mxu0 0
        %7602 = vmatprep.subr.bf16.mxu0 0
        %7603 = vmatpush2.bf16.xpose.msra.mxu0 0
        %7604 = vmatprep.subr.bf16.mxu0 0
        %7605 = vmatpush2.bf16.xpose.msra.mxu0 0
        %7606 = vmatprep.subr.bf16.mxu0 0
        %7607 = vmatpush2.bf16.xpose.msra.mxu0 0
        %7608 = vmatprep.subr.bf16.mxu0 0
        %7609 = vmatpush2.bf16.xpose.msra.mxu0 0
        %7610 = vmatprep.subr.bf16.mxu0 0
        %7611 = vmatpush2.bf16.xpose.msra.mxu0 0
        %7612 = vmatprep.mubr.bf16.mxu0 %v1681
        %7613 = vmatmul.mubr.bf16.gmra.mxu0 %v1679
        %v7614 = vpop.f32.mrf.mxu0
        %v7615 = vadd.f32 %v7575, %v7614
        %v7616 = vpop.f32.mrf.mxu0
        %v7617 = vpop.f32.mrf.mxu0
        %v7618 = vpop.f32.mrf.mxu0
        %7619 = vdwg.mxu0
        %7620 = vmatprep.subr.bf16.mxu0 0
        %7621 = vmatpush1.bf16.xpose.msra.mxu0 0
        %7622 = vmatprep.subr.bf16.mxu0 0
        %7623 = vmatpush1.bf16.xpose.msra.mxu0 0
        %7624 = vmatprep.subr.bf16.mxu0 0
        %7625 = vmatpush1.bf16.xpose.msra.mxu0 0
        %7626 = vmatprep.subr.bf16.mxu0 0
        %7627 = vmatpush1.bf16.xpose.msra.mxu0 0
        %7628 = vmatprep.subr.bf16.mxu0 0
        %7629 = vmatpush1.bf16.xpose.msra.mxu0 0
        %7630 = vmatprep.subr.bf16.mxu0 0
        %7631 = vmatpush1.bf16.xpose.msra.mxu0 0
        %7632 = vmatprep.subr.bf16.mxu0 0
        %7633 = vmatpush1.bf16.xpose.msra.mxu0 0
        %7634 = vmatprep.subr.bf16.mxu0 %v3765
        %7635 = vmatpush1.bf16.xpose.msra.mxu0 %v3764
        %7636 = vmatprep.subr.bf16.mxu0 0
        %7637 = vmatpush2.bf16.xpose.msra.mxu0 0
        %7638 = vmatprep.subr.bf16.mxu0 0
        %7639 = vmatpush2.bf16.xpose.msra.mxu0 0
        %7640 = vmatprep.subr.bf16.mxu0 0
        %7641 = vmatpush2.bf16.xpose.msra.mxu0 0
        %7642 = vmatprep.subr.bf16.mxu0 0
        %7643 = vmatpush2.bf16.xpose.msra.mxu0 0
        %7644 = vmatprep.subr.bf16.mxu0 0
        %7645 = vmatpush2.bf16.xpose.msra.mxu0 0
        %7646 = vmatprep.subr.bf16.mxu0 0
        %7647 = vmatpush2.bf16.xpose.msra.mxu0 0
        %7648 = vmatprep.subr.bf16.mxu0 0
        %7649 = vmatpush2.bf16.xpose.msra.mxu0 0
        %7650 = vmatprep.subr.bf16.mxu0 0
        %7651 = vmatpush2.bf16.xpose.msra.mxu0 0
        %7652 = vmatprep.mubr.bf16.mxu0 %v1678
        %7653 = vmatmul.mubr.bf16.gmra.mxu0 %v1664
        %v7654 = vpop.f32.mrf.mxu0
        %v7655 = vadd.f32 %v7615, %v7654
        %v7656 = vpop.f32.mrf.mxu0
        %v7657 = vpop.f32.mrf.mxu0
        %v7658 = vpop.f32.mrf.mxu0
        %7659 = vdwg.mxu0
        %7660 = vmatprep.subr.bf16.mxu0 0
        %7661 = vmatpush1.bf16.xpose.msra.mxu0 0
        %7662 = vmatprep.subr.bf16.mxu0 0
        %7663 = vmatpush1.bf16.xpose.msra.mxu0 0
        %7664 = vmatprep.subr.bf16.mxu0 0
        %7665 = vmatpush1.bf16.xpose.msra.mxu0 0
        %7666 = vmatprep.subr.bf16.mxu0 0
        %7667 = vmatpush1.bf16.xpose.msra.mxu0 0
        %7668 = vmatprep.subr.bf16.mxu0 0
        %7669 = vmatpush1.bf16.xpose.msra.mxu0 0
        %7670 = vmatprep.subr.bf16.mxu0 0
        %7671 = vmatpush1.bf16.xpose.msra.mxu0 0
        %7672 = vmatprep.subr.bf16.mxu0 0
        %7673 = vmatpush1.bf16.xpose.msra.mxu0 0
        %7674 = vmatprep.subr.bf16.mxu0 %v3767
        %7675 = vmatpush1.bf16.xpose.msra.mxu0 %v3766
        %7676 = vmatprep.subr.bf16.mxu0 0
        %7677 = vmatpush2.bf16.xpose.msra.mxu0 0
        %7678 = vmatprep.subr.bf16.mxu0 0
        %7679 = vmatpush2.bf16.xpose.msra.mxu0 0
        %7680 = vmatprep.subr.bf16.mxu0 0
        %7681 = vmatpush2.bf16.xpose.msra.mxu0 0
        %7682 = vmatprep.subr.bf16.mxu0 0
        %7683 = vmatpush2.bf16.xpose.msra.mxu0 0
        %7684 = vmatprep.subr.bf16.mxu0 0
        %7685 = vmatpush2.bf16.xpose.msra.mxu0 0
        %7686 = vmatprep.subr.bf16.mxu0 0
        %7687 = vmatpush2.bf16.xpose.msra.mxu0 0
        %7688 = vmatprep.subr.bf16.mxu0 0
        %7689 = vmatpush2.bf16.xpose.msra.mxu0 0
        %7690 = vmatprep.subr.bf16.mxu0 0
        %7691 = vmatpush2.bf16.xpose.msra.mxu0 0
        %7692 = vmatprep.mubr.bf16.mxu0 %v1682
        %7693 = vmatmul.mubr.bf16.gmra.mxu0 %v1680
        %v7694 = vpop.f32.mrf.mxu0
        %v7695 = vadd.f32 %v7655, %v7694
        %v7696 = vpop.f32.mrf.mxu0
        %v7697 = vpop.f32.mrf.mxu0
        %v7698 = vpop.f32.mrf.mxu0
        %7699 = vdwg.mxu0
        %7700 = vmatprep.subr.bf16.mxu0 0
        %7701 = vmatpush1.bf16.xpose.msra.mxu0 0
        %7702 = vmatprep.subr.bf16.mxu0 0
        %7703 = vmatpush1.bf16.xpose.msra.mxu0 0
        %7704 = vmatprep.subr.bf16.mxu0 0
        %7705 = vmatpush1.bf16.xpose.msra.mxu0 0
        %7706 = vmatprep.subr.bf16.mxu0 0
        %7707 = vmatpush1.bf16.xpose.msra.mxu0 0
        %7708 = vmatprep.subr.bf16.mxu0 0
        %7709 = vmatpush1.bf16.xpose.msra.mxu0 0
        %7710 = vmatprep.subr.bf16.mxu0 0
        %7711 = vmatpush1.bf16.xpose.msra.mxu0 0
        %7712 = vmatprep.subr.bf16.mxu0 0
        %7713 = vmatpush1.bf16.xpose.msra.mxu0 0
        %7714 = vmatprep.subr.bf16.mxu0 %v3769
        %7715 = vmatpush1.bf16.xpose.msra.mxu0 %v3768
        %7716 = vmatprep.subr.bf16.mxu0 0
        %7717 = vmatpush2.bf16.xpose.msra.mxu0 0
        %7718 = vmatprep.subr.bf16.mxu0 0
        %7719 = vmatpush2.bf16.xpose.msra.mxu0 0
        %7720 = vmatprep.subr.bf16.mxu0 0
        %7721 = vmatpush2.bf16.xpose.msra.mxu0 0
        %7722 = vmatprep.subr.bf16.mxu0 0
        %7723 = vmatpush2.bf16.xpose.msra.mxu0 0
        %7724 = vmatprep.subr.bf16.mxu0 0
        %7725 = vmatpush2.bf16.xpose.msra.mxu0 0
        %7726 = vmatprep.subr.bf16.mxu0 0
        %7727 = vmatpush2.bf16.xpose.msra.mxu0 0
        %7728 = vmatprep.subr.bf16.mxu0 0
        %7729 = vmatpush2.bf16.xpose.msra.mxu0 0
        %7730 = vmatprep.subr.bf16.mxu0 0
        %7731 = vmatpush2.bf16.xpose.msra.mxu0 0
        %7732 = vmatprep.mubr.bf16.mxu0 %v1720
        %7733 = vmatmul.mubr.bf16.gmra.mxu0 %v1706
        %v7734 = vpop.f32.mrf.mxu0
        %v7735 = vadd.f32 %v7695, %v7734
        %v7736 = vpop.f32.mrf.mxu0
        %v7737 = vpop.f32.mrf.mxu0
        %v7738 = vpop.f32.mrf.mxu0
        %7739 = vdwg.mxu0
        %7740 = vmatprep.subr.bf16.mxu0 0
        %7741 = vmatpush1.bf16.xpose.msra.mxu0 0
        %7742 = vmatprep.subr.bf16.mxu0 0
        %7743 = vmatpush1.bf16.xpose.msra.mxu0 0
        %7744 = vmatprep.subr.bf16.mxu0 0
        %7745 = vmatpush1.bf16.xpose.msra.mxu0 0
        %7746 = vmatprep.subr.bf16.mxu0 0
        %7747 = vmatpush1.bf16.xpose.msra.mxu0 0
        %7748 = vmatprep.subr.bf16.mxu0 0
        %7749 = vmatpush1.bf16.xpose.msra.mxu0 0
        %7750 = vmatprep.subr.bf16.mxu0 0
        %7751 = vmatpush1.bf16.xpose.msra.mxu0 0
        %7752 = vmatprep.subr.bf16.mxu0 0
        %7753 = vmatpush1.bf16.xpose.msra.mxu0 0
        %7754 = vmatprep.subr.bf16.mxu0 %v3771
        %7755 = vmatpush1.bf16.xpose.msra.mxu0 %v3770
        %7756 = vmatprep.subr.bf16.mxu0 0
        %7757 = vmatpush2.bf16.xpose.msra.mxu0 0
        %7758 = vmatprep.subr.bf16.mxu0 0
        %7759 = vmatpush2.bf16.xpose.msra.mxu0 0
        %7760 = vmatprep.subr.bf16.mxu0 0
        %7761 = vmatpush2.bf16.xpose.msra.mxu0 0
        %7762 = vmatprep.subr.bf16.mxu0 0
        %7763 = vmatpush2.bf16.xpose.msra.mxu0 0
        %7764 = vmatprep.subr.bf16.mxu0 0
        %7765 = vmatpush2.bf16.xpose.msra.mxu0 0
        %7766 = vmatprep.subr.bf16.mxu0 0
        %7767 = vmatpush2.bf16.xpose.msra.mxu0 0
        %7768 = vmatprep.subr.bf16.mxu0 0
        %7769 = vmatpush2.bf16.xpose.msra.mxu0 0
        %7770 = vmatprep.subr.bf16.mxu0 0
        %7771 = vmatpush2.bf16.xpose.msra.mxu0 0
        %7772 = vmatprep.mubr.bf16.mxu0 %v1730
        %7773 = vmatmul.mubr.bf16.gmra.mxu0 %v1728
        %v7774 = vpop.f32.mrf.mxu0
        %v7775 = vadd.f32 %v7735, %v7774
        %v7776 = vpop.f32.mrf.mxu0
        %v7777 = vpop.f32.mrf.mxu0
        %v7778 = vpop.f32.mrf.mxu0
        %7779 = vdwg.mxu0
        %7780 = vmatprep.subr.bf16.mxu0 0
        %7781 = vmatpush1.bf16.xpose.msra.mxu0 0
        %7782 = vmatprep.subr.bf16.mxu0 0
        %7783 = vmatpush1.bf16.xpose.msra.mxu0 0
        %7784 = vmatprep.subr.bf16.mxu0 0
        %7785 = vmatpush1.bf16.xpose.msra.mxu0 0
        %7786 = vmatprep.subr.bf16.mxu0 0
        %7787 = vmatpush1.bf16.xpose.msra.mxu0 0
        %7788 = vmatprep.subr.bf16.mxu0 0
        %7789 = vmatpush1.bf16.xpose.msra.mxu0 0
        %7790 = vmatprep.subr.bf16.mxu0 0
        %7791 = vmatpush1.bf16.xpose.msra.mxu0 0
        %7792 = vmatprep.subr.bf16.mxu0 0
        %7793 = vmatpush1.bf16.xpose.msra.mxu0 0
        %7794 = vmatprep.subr.bf16.mxu0 %v3773
        %7795 = vmatpush1.bf16.xpose.msra.mxu0 %v3772
        %7796 = vmatprep.subr.bf16.mxu0 0
        %7797 = vmatpush2.bf16.xpose.msra.mxu0 0
        %7798 = vmatprep.subr.bf16.mxu0 0
        %7799 = vmatpush2.bf16.xpose.msra.mxu0 0
        %7800 = vmatprep.subr.bf16.mxu0 0
        %7801 = vmatpush2.bf16.xpose.msra.mxu0 0
        %7802 = vmatprep.subr.bf16.mxu0 0
        %7803 = vmatpush2.bf16.xpose.msra.mxu0 0
        %7804 = vmatprep.subr.bf16.mxu0 0
        %7805 = vmatpush2.bf16.xpose.msra.mxu0 0
        %7806 = vmatprep.subr.bf16.mxu0 0
        %7807 = vmatpush2.bf16.xpose.msra.mxu0 0
        %7808 = vmatprep.subr.bf16.mxu0 0
        %7809 = vmatpush2.bf16.xpose.msra.mxu0 0
        %7810 = vmatprep.subr.bf16.mxu0 0
        %7811 = vmatpush2.bf16.xpose.msra.mxu0 0
        %7812 = vmatprep.mubr.bf16.mxu0 %v1727
        %7813 = vmatmul.mubr.bf16.gmra.mxu0 %v1713
        %v7814 = vpop.f32.mrf.mxu0
        %v7815 = vadd.f32 %v7775, %v7814
        %v7816 = vpop.f32.mrf.mxu0
        %v7817 = vpop.f32.mrf.mxu0
        %v7818 = vpop.f32.mrf.mxu0
        %7819 = vdwg.mxu0
        %7820 = vmatprep.subr.bf16.mxu0 0
        %7821 = vmatpush1.bf16.xpose.msra.mxu0 0
        %7822 = vmatprep.subr.bf16.mxu0 0
        %7823 = vmatpush1.bf16.xpose.msra.mxu0 0
        %7824 = vmatprep.subr.bf16.mxu0 0
        %7825 = vmatpush1.bf16.xpose.msra.mxu0 0
        %7826 = vmatprep.subr.bf16.mxu0 0
        %7827 = vmatpush1.bf16.xpose.msra.mxu0 0
        %7828 = vmatprep.subr.bf16.mxu0 0
        %7829 = vmatpush1.bf16.xpose.msra.mxu0 0
        %7830 = vmatprep.subr.bf16.mxu0 0
        %7831 = vmatpush1.bf16.xpose.msra.mxu0 0
        %7832 = vmatprep.subr.bf16.mxu0 0
        %7833 = vmatpush1.bf16.xpose.msra.mxu0 0
        %7834 = vmatprep.subr.bf16.mxu0 %v3775
        %7835 = vmatpush1.bf16.xpose.msra.mxu0 %v3774
        %7836 = vmatprep.subr.bf16.mxu0 0
        %7837 = vmatpush2.bf16.xpose.msra.mxu0 0
        %7838 = vmatprep.subr.bf16.mxu0 0
        %7839 = vmatpush2.bf16.xpose.msra.mxu0 0
        %7840 = vmatprep.subr.bf16.mxu0 0
        %7841 = vmatpush2.bf16.xpose.msra.mxu0 0
        %7842 = vmatprep.subr.bf16.mxu0 0
        %7843 = vmatpush2.bf16.xpose.msra.mxu0 0
        %7844 = vmatprep.subr.bf16.mxu0 0
        %7845 = vmatpush2.bf16.xpose.msra.mxu0 0
        %7846 = vmatprep.subr.bf16.mxu0 0
        %7847 = vmatpush2.bf16.xpose.msra.mxu0 0
        %7848 = vmatprep.subr.bf16.mxu0 0
        %7849 = vmatpush2.bf16.xpose.msra.mxu0 0
        %7850 = vmatprep.subr.bf16.mxu0 0
        %7851 = vmatpush2.bf16.xpose.msra.mxu0 0
        %7852 = vmatprep.mubr.bf16.mxu0 %v1731
        %7853 = vmatmul.mubr.bf16.gmra.mxu0 %v1729
        %v7854 = vpop.f32.mrf.mxu0
        %v7855 = vadd.f32 %v7815, %v7854
        %v7856 = vpop.f32.mrf.mxu0
        %v7857 = vpop.f32.mrf.mxu0
        %v7858 = vpop.f32.mrf.mxu0
        %7859 = vdwg.mxu0
        %7860 = vmatprep.subr.bf16.mxu0 0
        %7861 = vmatpush1.bf16.xpose.msra.mxu0 0
        %7862 = vmatprep.subr.bf16.mxu0 0
        %7863 = vmatpush1.bf16.xpose.msra.mxu0 0
        %7864 = vmatprep.subr.bf16.mxu0 0
        %7865 = vmatpush1.bf16.xpose.msra.mxu0 0
        %7866 = vmatprep.subr.bf16.mxu0 0
        %7867 = vmatpush1.bf16.xpose.msra.mxu0 0
        %7868 = vmatprep.subr.bf16.mxu0 0
        %7869 = vmatpush1.bf16.xpose.msra.mxu0 0
        %7870 = vmatprep.subr.bf16.mxu0 0
        %7871 = vmatpush1.bf16.xpose.msra.mxu0 0
        %7872 = vmatprep.subr.bf16.mxu0 0
        %7873 = vmatpush1.bf16.xpose.msra.mxu0 0
        %7874 = vmatprep.subr.bf16.mxu0 %v3777
        %7875 = vmatpush1.bf16.xpose.msra.mxu0 %v3776
        %7876 = vmatprep.subr.bf16.mxu0 0
        %7877 = vmatpush2.bf16.xpose.msra.mxu0 0
        %7878 = vmatprep.subr.bf16.mxu0 0
        %7879 = vmatpush2.bf16.xpose.msra.mxu0 0
        %7880 = vmatprep.subr.bf16.mxu0 0
        %7881 = vmatpush2.bf16.xpose.msra.mxu0 0
        %7882 = vmatprep.subr.bf16.mxu0 0
        %7883 = vmatpush2.bf16.xpose.msra.mxu0 0
        %7884 = vmatprep.subr.bf16.mxu0 0
        %7885 = vmatpush2.bf16.xpose.msra.mxu0 0
        %7886 = vmatprep.subr.bf16.mxu0 0
        %7887 = vmatpush2.bf16.xpose.msra.mxu0 0
        %7888 = vmatprep.subr.bf16.mxu0 0
        %7889 = vmatpush2.bf16.xpose.msra.mxu0 0
        %7890 = vmatprep.subr.bf16.mxu0 0
        %7891 = vmatpush2.bf16.xpose.msra.mxu0 0
        %7892 = vmatprep.mubr.bf16.mxu0 %v1769
        %7893 = vmatmul.mubr.bf16.gmra.mxu0 %v1755
        %v7894 = vpop.f32.mrf.mxu0
        %v7895 = vadd.f32 %v7855, %v7894
        %v7896 = vpop.f32.mrf.mxu0
        %v7897 = vpop.f32.mrf.mxu0
        %v7898 = vpop.f32.mrf.mxu0
        %7899 = vdwg.mxu0
        %7900 = vmatprep.subr.bf16.mxu0 0
        %7901 = vmatpush1.bf16.xpose.msra.mxu0 0
        %7902 = vmatprep.subr.bf16.mxu0 0
        %7903 = vmatpush1.bf16.xpose.msra.mxu0 0
        %7904 = vmatprep.subr.bf16.mxu0 0
        %7905 = vmatpush1.bf16.xpose.msra.mxu0 0
        %7906 = vmatprep.subr.bf16.mxu0 0
        %7907 = vmatpush1.bf16.xpose.msra.mxu0 0
        %7908 = vmatprep.subr.bf16.mxu0 0
        %7909 = vmatpush1.bf16.xpose.msra.mxu0 0
        %7910 = vmatprep.subr.bf16.mxu0 0
        %7911 = vmatpush1.bf16.xpose.msra.mxu0 0
        %7912 = vmatprep.subr.bf16.mxu0 0
        %7913 = vmatpush1.bf16.xpose.msra.mxu0 0
        %7914 = vmatprep.subr.bf16.mxu0 %v3779
        %7915 = vmatpush1.bf16.xpose.msra.mxu0 %v3778
        %7916 = vmatprep.subr.bf16.mxu0 0
        %7917 = vmatpush2.bf16.xpose.msra.mxu0 0
        %7918 = vmatprep.subr.bf16.mxu0 0
        %7919 = vmatpush2.bf16.xpose.msra.mxu0 0
        %7920 = vmatprep.subr.bf16.mxu0 0
        %7921 = vmatpush2.bf16.xpose.msra.mxu0 0
        %7922 = vmatprep.subr.bf16.mxu0 0
        %7923 = vmatpush2.bf16.xpose.msra.mxu0 0
        %7924 = vmatprep.subr.bf16.mxu0 0
        %7925 = vmatpush2.bf16.xpose.msra.mxu0 0
        %7926 = vmatprep.subr.bf16.mxu0 0
        %7927 = vmatpush2.bf16.xpose.msra.mxu0 0
        %7928 = vmatprep.subr.bf16.mxu0 0
        %7929 = vmatpush2.bf16.xpose.msra.mxu0 0
        %7930 = vmatprep.subr.bf16.mxu0 0
        %7931 = vmatpush2.bf16.xpose.msra.mxu0 0
        %7932 = vmatprep.mubr.bf16.mxu0 %v1779
        %7933 = vmatmul.mubr.bf16.gmra.mxu0 %v1777
        %v7934 = vpop.f32.mrf.mxu0
        %v7935 = vadd.f32 %v7895, %v7934
        %v7936 = vpop.f32.mrf.mxu0
        %v7937 = vpop.f32.mrf.mxu0
        %v7938 = vpop.f32.mrf.mxu0
        %7939 = vdwg.mxu0
        %7940 = vmatprep.subr.bf16.mxu0 0
        %7941 = vmatpush1.bf16.xpose.msra.mxu0 0
        %7942 = vmatprep.subr.bf16.mxu0 0
        %7943 = vmatpush1.bf16.xpose.msra.mxu0 0
        %7944 = vmatprep.subr.bf16.mxu0 0
        %7945 = vmatpush1.bf16.xpose.msra.mxu0 0
        %7946 = vmatprep.subr.bf16.mxu0 0
        %7947 = vmatpush1.bf16.xpose.msra.mxu0 0
        %7948 = vmatprep.subr.bf16.mxu0 0
        %7949 = vmatpush1.bf16.xpose.msra.mxu0 0
        %7950 = vmatprep.subr.bf16.mxu0 0
        %7951 = vmatpush1.bf16.xpose.msra.mxu0 0
        %7952 = vmatprep.subr.bf16.mxu0 0
        %7953 = vmatpush1.bf16.xpose.msra.mxu0 0
        %7954 = vmatprep.subr.bf16.mxu0 %v3781
        %7955 = vmatpush1.bf16.xpose.msra.mxu0 %v3780
        %7956 = vmatprep.subr.bf16.mxu0 0
        %7957 = vmatpush2.bf16.xpose.msra.mxu0 0
        %7958 = vmatprep.subr.bf16.mxu0 0
        %7959 = vmatpush2.bf16.xpose.msra.mxu0 0
        %7960 = vmatprep.subr.bf16.mxu0 0
        %7961 = vmatpush2.bf16.xpose.msra.mxu0 0
        %7962 = vmatprep.subr.bf16.mxu0 0
        %7963 = vmatpush2.bf16.xpose.msra.mxu0 0
        %7964 = vmatprep.subr.bf16.mxu0 0
        %7965 = vmatpush2.bf16.xpose.msra.mxu0 0
        %7966 = vmatprep.subr.bf16.mxu0 0
        %7967 = vmatpush2.bf16.xpose.msra.mxu0 0
        %7968 = vmatprep.subr.bf16.mxu0 0
        %7969 = vmatpush2.bf16.xpose.msra.mxu0 0
        %7970 = vmatprep.subr.bf16.mxu0 0
        %7971 = vmatpush2.bf16.xpose.msra.mxu0 0
        %7972 = vmatprep.mubr.bf16.mxu0 %v1776
        %7973 = vmatmul.mubr.bf16.gmra.mxu0 %v1762
        %v7974 = vpop.f32.mrf.mxu0
        %v7975 = vadd.f32 %v7935, %v7974
        %v7976 = vpop.f32.mrf.mxu0
        %v7977 = vpop.f32.mrf.mxu0
        %v7978 = vpop.f32.mrf.mxu0
        %7979 = vdwg.mxu0
        %7980 = vmatprep.subr.bf16.mxu0 0
        %7981 = vmatpush1.bf16.xpose.msra.mxu0 0
        %7982 = vmatprep.subr.bf16.mxu0 0
        %7983 = vmatpush1.bf16.xpose.msra.mxu0 0
        %7984 = vmatprep.subr.bf16.mxu0 0
        %7985 = vmatpush1.bf16.xpose.msra.mxu0 0
        %7986 = vmatprep.subr.bf16.mxu0 0
        %7987 = vmatpush1.bf16.xpose.msra.mxu0 0
        %7988 = vmatprep.subr.bf16.mxu0 0
        %7989 = vmatpush1.bf16.xpose.msra.mxu0 0
        %7990 = vmatprep.subr.bf16.mxu0 0
        %7991 = vmatpush1.bf16.xpose.msra.mxu0 0
        %7992 = vmatprep.subr.bf16.mxu0 0
        %7993 = vmatpush1.bf16.xpose.msra.mxu0 0
        %7994 = vmatprep.subr.bf16.mxu0 %v3783
        %7995 = vmatpush1.bf16.xpose.msra.mxu0 %v3782
        %7996 = vmatprep.subr.bf16.mxu0 0
        %7997 = vmatpush2.bf16.xpose.msra.mxu0 0
        %7998 = vmatprep.subr.bf16.mxu0 0
        %7999 = vmatpush2.bf16.xpose.msra.mxu0 0
        %8000 = vmatprep.subr.bf16.mxu0 0
        %8001 = vmatpush2.bf16.xpose.msra.mxu0 0
        %8002 = vmatprep.subr.bf16.mxu0 0
        %8003 = vmatpush2.bf16.xpose.msra.mxu0 0
        %8004 = vmatprep.subr.bf16.mxu0 0
        %8005 = vmatpush2.bf16.xpose.msra.mxu0 0
        %8006 = vmatprep.subr.bf16.mxu0 0
        %8007 = vmatpush2.bf16.xpose.msra.mxu0 0
        %8008 = vmatprep.subr.bf16.mxu0 0
        %8009 = vmatpush2.bf16.xpose.msra.mxu0 0
        %8010 = vmatprep.subr.bf16.mxu0 0
        %8011 = vmatpush2.bf16.xpose.msra.mxu0 0
        %8012 = vmatprep.mubr.bf16.mxu0 %v1780
        %8013 = vmatmul.mubr.bf16.gmra.mxu0 %v1778
        %v8014 = vpop.f32.mrf.mxu0
        %v8015 = vadd.f32 %v7975, %v8014
        %v8016 = vpop.f32.mrf.mxu0
        %v8017 = vpop.f32.mrf.mxu0
        %v8018 = vpop.f32.mrf.mxu0
        %8019 = vdwg.mxu0
        %8020 = vmatprep.subr.bf16.mxu0 0
        %8021 = vmatpush1.bf16.xpose.msra.mxu0 0
        %8022 = vmatprep.subr.bf16.mxu0 0
        %8023 = vmatpush1.bf16.xpose.msra.mxu0 0
        %8024 = vmatprep.subr.bf16.mxu0 0
        %8025 = vmatpush1.bf16.xpose.msra.mxu0 0
        %8026 = vmatprep.subr.bf16.mxu0 0
        %8027 = vmatpush1.bf16.xpose.msra.mxu0 0
        %8028 = vmatprep.subr.bf16.mxu0 0
        %8029 = vmatpush1.bf16.xpose.msra.mxu0 0
        %8030 = vmatprep.subr.bf16.mxu0 0
        %8031 = vmatpush1.bf16.xpose.msra.mxu0 0
        %8032 = vmatprep.subr.bf16.mxu0 0
        %8033 = vmatpush1.bf16.xpose.msra.mxu0 0
        %8034 = vmatprep.subr.bf16.mxu0 %v3785
        %8035 = vmatpush1.bf16.xpose.msra.mxu0 %v3784
        %8036 = vmatprep.subr.bf16.mxu0 0
        %8037 = vmatpush2.bf16.xpose.msra.mxu0 0
        %8038 = vmatprep.subr.bf16.mxu0 0
        %8039 = vmatpush2.bf16.xpose.msra.mxu0 0
        %8040 = vmatprep.subr.bf16.mxu0 0
        %8041 = vmatpush2.bf16.xpose.msra.mxu0 0
        %8042 = vmatprep.subr.bf16.mxu0 0
        %8043 = vmatpush2.bf16.xpose.msra.mxu0 0
        %8044 = vmatprep.subr.bf16.mxu0 0
        %8045 = vmatpush2.bf16.xpose.msra.mxu0 0
        %8046 = vmatprep.subr.bf16.mxu0 0
        %8047 = vmatpush2.bf16.xpose.msra.mxu0 0
        %8048 = vmatprep.subr.bf16.mxu0 0
        %8049 = vmatpush2.bf16.xpose.msra.mxu0 0
        %8050 = vmatprep.subr.bf16.mxu0 0
        %8051 = vmatpush2.bf16.xpose.msra.mxu0 0
        %8052 = vmatprep.mubr.bf16.mxu0 %v1818
        %8053 = vmatmul.mubr.bf16.gmra.mxu0 %v1804
        %v8054 = vpop.f32.mrf.mxu0
        %v8055 = vadd.f32 %v8015, %v8054
        %v8056 = vpop.f32.mrf.mxu0
        %v8057 = vpop.f32.mrf.mxu0
        %v8058 = vpop.f32.mrf.mxu0
        %8059 = vdwg.mxu0
        %8060 = vmatprep.subr.bf16.mxu0 0
        %8061 = vmatpush1.bf16.xpose.msra.mxu0 0
        %8062 = vmatprep.subr.bf16.mxu0 0
        %8063 = vmatpush1.bf16.xpose.msra.mxu0 0
        %8064 = vmatprep.subr.bf16.mxu0 0
        %8065 = vmatpush1.bf16.xpose.msra.mxu0 0
        %8066 = vmatprep.subr.bf16.mxu0 0
        %8067 = vmatpush1.bf16.xpose.msra.mxu0 0
        %8068 = vmatprep.subr.bf16.mxu0 0
        %8069 = vmatpush1.bf16.xpose.msra.mxu0 0
        %8070 = vmatprep.subr.bf16.mxu0 0
        %8071 = vmatpush1.bf16.xpose.msra.mxu0 0
        %8072 = vmatprep.subr.bf16.mxu0 0
        %8073 = vmatpush1.bf16.xpose.msra.mxu0 0
        %8074 = vmatprep.subr.bf16.mxu0 %v3787
        %8075 = vmatpush1.bf16.xpose.msra.mxu0 %v3786
        %8076 = vmatprep.subr.bf16.mxu0 0
        %8077 = vmatpush2.bf16.xpose.msra.mxu0 0
        %8078 = vmatprep.subr.bf16.mxu0 0
        %8079 = vmatpush2.bf16.xpose.msra.mxu0 0
        %8080 = vmatprep.subr.bf16.mxu0 0
        %8081 = vmatpush2.bf16.xpose.msra.mxu0 0
        %8082 = vmatprep.subr.bf16.mxu0 0
        %8083 = vmatpush2.bf16.xpose.msra.mxu0 0
        %8084 = vmatprep.subr.bf16.mxu0 0
        %8085 = vmatpush2.bf16.xpose.msra.mxu0 0
        %8086 = vmatprep.subr.bf16.mxu0 0
        %8087 = vmatpush2.bf16.xpose.msra.mxu0 0
        %8088 = vmatprep.subr.bf16.mxu0 0
        %8089 = vmatpush2.bf16.xpose.msra.mxu0 0
        %8090 = vmatprep.subr.bf16.mxu0 0
        %8091 = vmatpush2.bf16.xpose.msra.mxu0 0
        %8092 = vmatprep.mubr.bf16.mxu0 %v1828
        %8093 = vmatmul.mubr.bf16.gmra.mxu0 %v1826
        %v8094 = vpop.f32.mrf.mxu0
        %v8095 = vadd.f32 %v8055, %v8094
        %v8096 = vpop.f32.mrf.mxu0
        %v8097 = vpop.f32.mrf.mxu0
        %v8098 = vpop.f32.mrf.mxu0
        %8099 = vdwg.mxu0
        %8100 = vmatprep.subr.bf16.mxu0 0
        %8101 = vmatpush1.bf16.xpose.msra.mxu0 0
        %8102 = vmatprep.subr.bf16.mxu0 0
        %8103 = vmatpush1.bf16.xpose.msra.mxu0 0
        %8104 = vmatprep.subr.bf16.mxu0 0
        %8105 = vmatpush1.bf16.xpose.msra.mxu0 0
        %8106 = vmatprep.subr.bf16.mxu0 0
        %8107 = vmatpush1.bf16.xpose.msra.mxu0 0
        %8108 = vmatprep.subr.bf16.mxu0 0
        %8109 = vmatpush1.bf16.xpose.msra.mxu0 0
        %8110 = vmatprep.subr.bf16.mxu0 0
        %8111 = vmatpush1.bf16.xpose.msra.mxu0 0
        %8112 = vmatprep.subr.bf16.mxu0 0
        %8113 = vmatpush1.bf16.xpose.msra.mxu0 0
        %8114 = vmatprep.subr.bf16.mxu0 %v3789
        %8115 = vmatpush1.bf16.xpose.msra.mxu0 %v3788
        %8116 = vmatprep.subr.bf16.mxu0 0
        %8117 = vmatpush2.bf16.xpose.msra.mxu0 0
        %8118 = vmatprep.subr.bf16.mxu0 0
        %8119 = vmatpush2.bf16.xpose.msra.mxu0 0
        %8120 = vmatprep.subr.bf16.mxu0 0
        %8121 = vmatpush2.bf16.xpose.msra.mxu0 0
        %8122 = vmatprep.subr.bf16.mxu0 0
        %8123 = vmatpush2.bf16.xpose.msra.mxu0 0
        %8124 = vmatprep.subr.bf16.mxu0 0
        %8125 = vmatpush2.bf16.xpose.msra.mxu0 0
        %8126 = vmatprep.subr.bf16.mxu0 0
        %8127 = vmatpush2.bf16.xpose.msra.mxu0 0
        %8128 = vmatprep.subr.bf16.mxu0 0
        %8129 = vmatpush2.bf16.xpose.msra.mxu0 0
        %8130 = vmatprep.subr.bf16.mxu0 0
        %8131 = vmatpush2.bf16.xpose.msra.mxu0 0
        %8132 = vmatprep.mubr.bf16.mxu0 %v1825
        %8133 = vmatmul.mubr.bf16.gmra.mxu0 %v1811
        %v8134 = vpop.f32.mrf.mxu0
        %v8135 = vadd.f32 %v8095, %v8134
        %v8136 = vpop.f32.mrf.mxu0
        %v8137 = vpop.f32.mrf.mxu0
        %v8138 = vpop.f32.mrf.mxu0
        %8139 = vdwg.mxu0
        %8140 = vmatprep.subr.bf16.mxu0 0
        %8141 = vmatpush1.bf16.xpose.msra.mxu0 0
        %8142 = vmatprep.subr.bf16.mxu0 0
        %8143 = vmatpush1.bf16.xpose.msra.mxu0 0
        %8144 = vmatprep.subr.bf16.mxu0 0
        %8145 = vmatpush1.bf16.xpose.msra.mxu0 0
        %8146 = vmatprep.subr.bf16.mxu0 0
        %8147 = vmatpush1.bf16.xpose.msra.mxu0 0
        %8148 = vmatprep.subr.bf16.mxu0 0
        %8149 = vmatpush1.bf16.xpose.msra.mxu0 0
        %8150 = vmatprep.subr.bf16.mxu0 0
        %8151 = vmatpush1.bf16.xpose.msra.mxu0 0
        %8152 = vmatprep.subr.bf16.mxu0 0
        %8153 = vmatpush1.bf16.xpose.msra.mxu0 0
        %8154 = vmatprep.subr.bf16.mxu0 %v3791
        %8155 = vmatpush1.bf16.xpose.msra.mxu0 %v3790
        %8156 = vmatprep.subr.bf16.mxu0 0
        %8157 = vmatpush2.bf16.xpose.msra.mxu0 0
        %8158 = vmatprep.subr.bf16.mxu0 0
        %8159 = vmatpush2.bf16.xpose.msra.mxu0 0
        %8160 = vmatprep.subr.bf16.mxu0 0
        %8161 = vmatpush2.bf16.xpose.msra.mxu0 0
        %8162 = vmatprep.subr.bf16.mxu0 0
        %8163 = vmatpush2.bf16.xpose.msra.mxu0 0
        %8164 = vmatprep.subr.bf16.mxu0 0
        %8165 = vmatpush2.bf16.xpose.msra.mxu0 0
        %8166 = vmatprep.subr.bf16.mxu0 0
        %8167 = vmatpush2.bf16.xpose.msra.mxu0 0
        %8168 = vmatprep.subr.bf16.mxu0 0
        %8169 = vmatpush2.bf16.xpose.msra.mxu0 0
        %8170 = vmatprep.subr.bf16.mxu0 0
        %8171 = vmatpush2.bf16.xpose.msra.mxu0 0
        %8172 = vmatprep.mubr.bf16.mxu0 %v1829
        %8173 = vmatmul.mubr.bf16.gmra.mxu0 %v1827
        %v8174 = vpop.f32.mrf.mxu0
        %v8175 = vadd.f32 %v8135, %v8174
        %v8176 = vpop.f32.mrf.mxu0
        %v8177 = vpop.f32.mrf.mxu0
        %v8178 = vpop.f32.mrf.mxu0
        %8179 = vdwg.mxu0
        %8180 = vmatprep.subr.bf16.mxu0 0
        %8181 = vmatpush1.bf16.xpose.msra.mxu0 0
        %8182 = vmatprep.subr.bf16.mxu0 0
        %8183 = vmatpush1.bf16.xpose.msra.mxu0 0
        %8184 = vmatprep.subr.bf16.mxu0 0
        %8185 = vmatpush1.bf16.xpose.msra.mxu0 0
        %8186 = vmatprep.subr.bf16.mxu0 0
        %8187 = vmatpush1.bf16.xpose.msra.mxu0 0
        %8188 = vmatprep.subr.bf16.mxu0 0
        %8189 = vmatpush1.bf16.xpose.msra.mxu0 0
        %8190 = vmatprep.subr.bf16.mxu0 0
        %8191 = vmatpush1.bf16.xpose.msra.mxu0 0
        %8192 = vmatprep.subr.bf16.mxu0 0
        %8193 = vmatpush1.bf16.xpose.msra.mxu0 0
        %8194 = vmatprep.subr.bf16.mxu0 %v3793
        %8195 = vmatpush1.bf16.xpose.msra.mxu0 %v3792
        %8196 = vmatprep.subr.bf16.mxu0 0
        %8197 = vmatpush2.bf16.xpose.msra.mxu0 0
        %8198 = vmatprep.subr.bf16.mxu0 0
        %8199 = vmatpush2.bf16.xpose.msra.mxu0 0
        %8200 = vmatprep.subr.bf16.mxu0 0
        %8201 = vmatpush2.bf16.xpose.msra.mxu0 0
        %8202 = vmatprep.subr.bf16.mxu0 0
        %8203 = vmatpush2.bf16.xpose.msra.mxu0 0
        %8204 = vmatprep.subr.bf16.mxu0 0
        %8205 = vmatpush2.bf16.xpose.msra.mxu0 0
        %8206 = vmatprep.subr.bf16.mxu0 0
        %8207 = vmatpush2.bf16.xpose.msra.mxu0 0
        %8208 = vmatprep.subr.bf16.mxu0 0
        %8209 = vmatpush2.bf16.xpose.msra.mxu0 0
        %8210 = vmatprep.subr.bf16.mxu0 0
        %8211 = vmatpush2.bf16.xpose.msra.mxu0 0
        %8212 = vmatprep.mubr.bf16.mxu0 %v1867
        %8213 = vmatmul.mubr.bf16.gmra.mxu0 %v1853
        %v8214 = vpop.f32.mrf.mxu0
        %v8215 = vadd.f32 %v8175, %v8214
        %v8216 = vpop.f32.mrf.mxu0
        %v8217 = vpop.f32.mrf.mxu0
        %v8218 = vpop.f32.mrf.mxu0
        %8219 = vdwg.mxu0
        %8220 = vmatprep.subr.bf16.mxu0 0
        %8221 = vmatpush1.bf16.xpose.msra.mxu0 0
        %8222 = vmatprep.subr.bf16.mxu0 0
        %8223 = vmatpush1.bf16.xpose.msra.mxu0 0
        %8224 = vmatprep.subr.bf16.mxu0 0
        %8225 = vmatpush1.bf16.xpose.msra.mxu0 0
        %8226 = vmatprep.subr.bf16.mxu0 0
        %8227 = vmatpush1.bf16.xpose.msra.mxu0 0
        %8228 = vmatprep.subr.bf16.mxu0 0
        %8229 = vmatpush1.bf16.xpose.msra.mxu0 0
        %8230 = vmatprep.subr.bf16.mxu0 0
        %8231 = vmatpush1.bf16.xpose.msra.mxu0 0
        %8232 = vmatprep.subr.bf16.mxu0 0
        %8233 = vmatpush1.bf16.xpose.msra.mxu0 0
        %8234 = vmatprep.subr.bf16.mxu0 %v3795
        %8235 = vmatpush1.bf16.xpose.msra.mxu0 %v3794
        %8236 = vmatprep.subr.bf16.mxu0 0
        %8237 = vmatpush2.bf16.xpose.msra.mxu0 0
        %8238 = vmatprep.subr.bf16.mxu0 0
        %8239 = vmatpush2.bf16.xpose.msra.mxu0 0
        %8240 = vmatprep.subr.bf16.mxu0 0
        %8241 = vmatpush2.bf16.xpose.msra.mxu0 0
        %8242 = vmatprep.subr.bf16.mxu0 0
        %8243 = vmatpush2.bf16.xpose.msra.mxu0 0
        %8244 = vmatprep.subr.bf16.mxu0 0
        %8245 = vmatpush2.bf16.xpose.msra.mxu0 0
        %8246 = vmatprep.subr.bf16.mxu0 0
        %8247 = vmatpush2.bf16.xpose.msra.mxu0 0
        %8248 = vmatprep.subr.bf16.mxu0 0
        %8249 = vmatpush2.bf16.xpose.msra.mxu0 0
        %8250 = vmatprep.subr.bf16.mxu0 0
        %8251 = vmatpush2.bf16.xpose.msra.mxu0 0
        %8252 = vmatprep.mubr.bf16.mxu0 %v1877
        %8253 = vmatmul.mubr.bf16.gmra.mxu0 %v1875
        %v8254 = vpop.f32.mrf.mxu0
        %v8255 = vadd.f32 %v8215, %v8254
        %v8256 = vpop.f32.mrf.mxu0
        %v8257 = vpop.f32.mrf.mxu0
        %v8258 = vpop.f32.mrf.mxu0
        %8259 = vdwg.mxu0
        %8260 = vmatprep.subr.bf16.mxu0 0
        %8261 = vmatpush1.bf16.xpose.msra.mxu0 0
        %8262 = vmatprep.subr.bf16.mxu0 0
        %8263 = vmatpush1.bf16.xpose.msra.mxu0 0
        %8264 = vmatprep.subr.bf16.mxu0 0
        %8265 = vmatpush1.bf16.xpose.msra.mxu0 0
        %8266 = vmatprep.subr.bf16.mxu0 0
        %8267 = vmatpush1.bf16.xpose.msra.mxu0 0
        %8268 = vmatprep.subr.bf16.mxu0 0
        %8269 = vmatpush1.bf16.xpose.msra.mxu0 0
        %8270 = vmatprep.subr.bf16.mxu0 0
        %8271 = vmatpush1.bf16.xpose.msra.mxu0 0
        %8272 = vmatprep.subr.bf16.mxu0 0
        %8273 = vmatpush1.bf16.xpose.msra.mxu0 0
        %8274 = vmatprep.subr.bf16.mxu0 %v3797
        %8275 = vmatpush1.bf16.xpose.msra.mxu0 %v3796
        %8276 = vmatprep.subr.bf16.mxu0 0
        %8277 = vmatpush2.bf16.xpose.msra.mxu0 0
        %8278 = vmatprep.subr.bf16.mxu0 0
        %8279 = vmatpush2.bf16.xpose.msra.mxu0 0
        %8280 = vmatprep.subr.bf16.mxu0 0
        %8281 = vmatpush2.bf16.xpose.msra.mxu0 0
        %8282 = vmatprep.subr.bf16.mxu0 0
        %8283 = vmatpush2.bf16.xpose.msra.mxu0 0
        %8284 = vmatprep.subr.bf16.mxu0 0
        %8285 = vmatpush2.bf16.xpose.msra.mxu0 0
        %8286 = vmatprep.subr.bf16.mxu0 0
        %8287 = vmatpush2.bf16.xpose.msra.mxu0 0
        %8288 = vmatprep.subr.bf16.mxu0 0
        %8289 = vmatpush2.bf16.xpose.msra.mxu0 0
        %8290 = vmatprep.subr.bf16.mxu0 0
        %8291 = vmatpush2.bf16.xpose.msra.mxu0 0
        %8292 = vmatprep.mubr.bf16.mxu0 %v1874
        %8293 = vmatmul.mubr.bf16.gmra.mxu0 %v1860
        %v8294 = vpop.f32.mrf.mxu0
        %v8295 = vadd.f32 %v8255, %v8294
        %v8296 = vpop.f32.mrf.mxu0
        %v8297 = vpop.f32.mrf.mxu0
        %v8298 = vpop.f32.mrf.mxu0
        %8299 = vdwg.mxu0
        %8300 = vmatprep.subr.bf16.mxu0 0
        %8301 = vmatpush1.bf16.xpose.msra.mxu0 0
        %8302 = vmatprep.subr.bf16.mxu0 0
        %8303 = vmatpush1.bf16.xpose.msra.mxu0 0
        %8304 = vmatprep.subr.bf16.mxu0 0
        %8305 = vmatpush1.bf16.xpose.msra.mxu0 0
        %8306 = vmatprep.subr.bf16.mxu0 0
        %8307 = vmatpush1.bf16.xpose.msra.mxu0 0
        %8308 = vmatprep.subr.bf16.mxu0 0
        %8309 = vmatpush1.bf16.xpose.msra.mxu0 0
        %8310 = vmatprep.subr.bf16.mxu0 0
        %8311 = vmatpush1.bf16.xpose.msra.mxu0 0
        %8312 = vmatprep.subr.bf16.mxu0 0
        %8313 = vmatpush1.bf16.xpose.msra.mxu0 0
        %8314 = vmatprep.subr.bf16.mxu0 %v3799
        %8315 = vmatpush1.bf16.xpose.msra.mxu0 %v3798
        %8316 = vmatprep.subr.bf16.mxu0 0
        %8317 = vmatpush2.bf16.xpose.msra.mxu0 0
        %8318 = vmatprep.subr.bf16.mxu0 0
        %8319 = vmatpush2.bf16.xpose.msra.mxu0 0
        %8320 = vmatprep.subr.bf16.mxu0 0
        %8321 = vmatpush2.bf16.xpose.msra.mxu0 0
        %8322 = vmatprep.subr.bf16.mxu0 0
        %8323 = vmatpush2.bf16.xpose.msra.mxu0 0
        %8324 = vmatprep.subr.bf16.mxu0 0
        %8325 = vmatpush2.bf16.xpose.msra.mxu0 0
        %8326 = vmatprep.subr.bf16.mxu0 0
        %8327 = vmatpush2.bf16.xpose.msra.mxu0 0
        %8328 = vmatprep.subr.bf16.mxu0 0
        %8329 = vmatpush2.bf16.xpose.msra.mxu0 0
        %8330 = vmatprep.subr.bf16.mxu0 0
        %8331 = vmatpush2.bf16.xpose.msra.mxu0 0
        %8332 = vmatprep.mubr.bf16.mxu0 %v1878
        %8333 = vmatmul.mubr.bf16.gmra.mxu0 %v1876
        %v8334 = vpop.f32.mrf.mxu0
        %v8335 = vadd.f32 %v8295, %v8334
        %v8336 = vpop.f32.mrf.mxu0
        %v8337 = vpop.f32.mrf.mxu0
        %v8338 = vpop.f32.mrf.mxu0
        %8339 = vdwg.mxu0
        %8340 = vmatprep.subr.bf16.mxu0 0
        %8341 = vmatpush1.bf16.xpose.msra.mxu0 0
        %8342 = vmatprep.subr.bf16.mxu0 0
        %8343 = vmatpush1.bf16.xpose.msra.mxu0 0
        %8344 = vmatprep.subr.bf16.mxu0 0
        %8345 = vmatpush1.bf16.xpose.msra.mxu0 0
        %8346 = vmatprep.subr.bf16.mxu0 0
        %8347 = vmatpush1.bf16.xpose.msra.mxu0 0
        %8348 = vmatprep.subr.bf16.mxu0 0
        %8349 = vmatpush1.bf16.xpose.msra.mxu0 0
        %8350 = vmatprep.subr.bf16.mxu0 0
        %8351 = vmatpush1.bf16.xpose.msra.mxu0 0
        %8352 = vmatprep.subr.bf16.mxu0 0
        %8353 = vmatpush1.bf16.xpose.msra.mxu0 0
        %8354 = vmatprep.subr.bf16.mxu0 %v3801
        %8355 = vmatpush1.bf16.xpose.msra.mxu0 %v3800
        %8356 = vmatprep.subr.bf16.mxu0 0
        %8357 = vmatpush2.bf16.xpose.msra.mxu0 0
        %8358 = vmatprep.subr.bf16.mxu0 0
        %8359 = vmatpush2.bf16.xpose.msra.mxu0 0
        %8360 = vmatprep.subr.bf16.mxu0 0
        %8361 = vmatpush2.bf16.xpose.msra.mxu0 0
        %8362 = vmatprep.subr.bf16.mxu0 0
        %8363 = vmatpush2.bf16.xpose.msra.mxu0 0
        %8364 = vmatprep.subr.bf16.mxu0 0
        %8365 = vmatpush2.bf16.xpose.msra.mxu0 0
        %8366 = vmatprep.subr.bf16.mxu0 0
        %8367 = vmatpush2.bf16.xpose.msra.mxu0 0
        %8368 = vmatprep.subr.bf16.mxu0 0
        %8369 = vmatpush2.bf16.xpose.msra.mxu0 0
        %8370 = vmatprep.subr.bf16.mxu0 0
        %8371 = vmatpush2.bf16.xpose.msra.mxu0 0
        %8372 = vmatprep.mubr.bf16.mxu0 %v1916
        %8373 = vmatmul.mubr.bf16.gmra.mxu0 %v1902
        %v8374 = vpop.f32.mrf.mxu0
        %v8375 = vadd.f32 %v8335, %v8374
        %v8376 = vpop.f32.mrf.mxu0
        %v8377 = vpop.f32.mrf.mxu0
        %v8378 = vpop.f32.mrf.mxu0
        %8379 = vdwg.mxu0
        %8380 = vmatprep.subr.bf16.mxu0 0
        %8381 = vmatpush1.bf16.xpose.msra.mxu0 0
        %8382 = vmatprep.subr.bf16.mxu0 0
        %8383 = vmatpush1.bf16.xpose.msra.mxu0 0
        %8384 = vmatprep.subr.bf16.mxu0 0
        %8385 = vmatpush1.bf16.xpose.msra.mxu0 0
        %8386 = vmatprep.subr.bf16.mxu0 0
        %8387 = vmatpush1.bf16.xpose.msra.mxu0 0
        %8388 = vmatprep.subr.bf16.mxu0 0
        %8389 = vmatpush1.bf16.xpose.msra.mxu0 0
        %8390 = vmatprep.subr.bf16.mxu0 0
        %8391 = vmatpush1.bf16.xpose.msra.mxu0 0
        %8392 = vmatprep.subr.bf16.mxu0 0
        %8393 = vmatpush1.bf16.xpose.msra.mxu0 0
        %8394 = vmatprep.subr.bf16.mxu0 %v3803
        %8395 = vmatpush1.bf16.xpose.msra.mxu0 %v3802
        %8396 = vmatprep.subr.bf16.mxu0 0
        %8397 = vmatpush2.bf16.xpose.msra.mxu0 0
        %8398 = vmatprep.subr.bf16.mxu0 0
        %8399 = vmatpush2.bf16.xpose.msra.mxu0 0
        %8400 = vmatprep.subr.bf16.mxu0 0
        %8401 = vmatpush2.bf16.xpose.msra.mxu0 0
        %8402 = vmatprep.subr.bf16.mxu0 0
        %8403 = vmatpush2.bf16.xpose.msra.mxu0 0
        %8404 = vmatprep.subr.bf16.mxu0 0
        %8405 = vmatpush2.bf16.xpose.msra.mxu0 0
        %8406 = vmatprep.subr.bf16.mxu0 0
        %8407 = vmatpush2.bf16.xpose.msra.mxu0 0
        %8408 = vmatprep.subr.bf16.mxu0 0
        %8409 = vmatpush2.bf16.xpose.msra.mxu0 0
        %8410 = vmatprep.subr.bf16.mxu0 0
        %8411 = vmatpush2.bf16.xpose.msra.mxu0 0
        %8412 = vmatprep.mubr.bf16.mxu0 %v1926
        %8413 = vmatmul.mubr.bf16.gmra.mxu0 %v1924
        %v8414 = vpop.f32.mrf.mxu0
        %v8415 = vadd.f32 %v8375, %v8414
        %v8416 = vpop.f32.mrf.mxu0
        %v8417 = vpop.f32.mrf.mxu0
        %v8418 = vpop.f32.mrf.mxu0
        %8419 = vdwg.mxu0
        %8420 = vmatprep.subr.bf16.mxu0 0
        %8421 = vmatpush1.bf16.xpose.msra.mxu0 0
        %8422 = vmatprep.subr.bf16.mxu0 0
        %8423 = vmatpush1.bf16.xpose.msra.mxu0 0
        %8424 = vmatprep.subr.bf16.mxu0 0
        %8425 = vmatpush1.bf16.xpose.msra.mxu0 0
        %8426 = vmatprep.subr.bf16.mxu0 0
        %8427 = vmatpush1.bf16.xpose.msra.mxu0 0
        %8428 = vmatprep.subr.bf16.mxu0 0
        %8429 = vmatpush1.bf16.xpose.msra.mxu0 0
        %8430 = vmatprep.subr.bf16.mxu0 0
        %8431 = vmatpush1.bf16.xpose.msra.mxu0 0
        %8432 = vmatprep.subr.bf16.mxu0 0
        %8433 = vmatpush1.bf16.xpose.msra.mxu0 0
        %8434 = vmatprep.subr.bf16.mxu0 %v3805
        %8435 = vmatpush1.bf16.xpose.msra.mxu0 %v3804
        %8436 = vmatprep.subr.bf16.mxu0 0
        %8437 = vmatpush2.bf16.xpose.msra.mxu0 0
        %8438 = vmatprep.subr.bf16.mxu0 0
        %8439 = vmatpush2.bf16.xpose.msra.mxu0 0
        %8440 = vmatprep.subr.bf16.mxu0 0
        %8441 = vmatpush2.bf16.xpose.msra.mxu0 0
        %8442 = vmatprep.subr.bf16.mxu0 0
        %8443 = vmatpush2.bf16.xpose.msra.mxu0 0
        %8444 = vmatprep.subr.bf16.mxu0 0
        %8445 = vmatpush2.bf16.xpose.msra.mxu0 0
        %8446 = vmatprep.subr.bf16.mxu0 0
        %8447 = vmatpush2.bf16.xpose.msra.mxu0 0
        %8448 = vmatprep.subr.bf16.mxu0 0
        %8449 = vmatpush2.bf16.xpose.msra.mxu0 0
        %8450 = vmatprep.subr.bf16.mxu0 0
        %8451 = vmatpush2.bf16.xpose.msra.mxu0 0
        %8452 = vmatprep.mubr.bf16.mxu0 %v1923
        %8453 = vmatmul.mubr.bf16.gmra.mxu0 %v1909
        %v8454 = vpop.f32.mrf.mxu0
        %v8455 = vadd.f32 %v8415, %v8454
        %v8456 = vpop.f32.mrf.mxu0
        %v8457 = vpop.f32.mrf.mxu0
        %v8458 = vpop.f32.mrf.mxu0
        %8459 = vdwg.mxu0
        %8460 = vmatprep.subr.bf16.mxu0 0
        %8461 = vmatpush1.bf16.xpose.msra.mxu0 0
        %8462 = vmatprep.subr.bf16.mxu0 0
        %8463 = vmatpush1.bf16.xpose.msra.mxu0 0
        %8464 = vmatprep.subr.bf16.mxu0 0
        %8465 = vmatpush1.bf16.xpose.msra.mxu0 0
        %8466 = vmatprep.subr.bf16.mxu0 0
        %8467 = vmatpush1.bf16.xpose.msra.mxu0 0
        %8468 = vmatprep.subr.bf16.mxu0 0
        %8469 = vmatpush1.bf16.xpose.msra.mxu0 0
        %8470 = vmatprep.subr.bf16.mxu0 0
        %8471 = vmatpush1.bf16.xpose.msra.mxu0 0
        %8472 = vmatprep.subr.bf16.mxu0 0
        %8473 = vmatpush1.bf16.xpose.msra.mxu0 0
        %8474 = vmatprep.subr.bf16.mxu0 %v3807
        %8475 = vmatpush1.bf16.xpose.msra.mxu0 %v3806
        %8476 = vmatprep.subr.bf16.mxu0 0
        %8477 = vmatpush2.bf16.xpose.msra.mxu0 0
        %8478 = vmatprep.subr.bf16.mxu0 0
        %8479 = vmatpush2.bf16.xpose.msra.mxu0 0
        %8480 = vmatprep.subr.bf16.mxu0 0
        %8481 = vmatpush2.bf16.xpose.msra.mxu0 0
        %8482 = vmatprep.subr.bf16.mxu0 0
        %8483 = vmatpush2.bf16.xpose.msra.mxu0 0
        %8484 = vmatprep.subr.bf16.mxu0 0
        %8485 = vmatpush2.bf16.xpose.msra.mxu0 0
        %8486 = vmatprep.subr.bf16.mxu0 0
        %8487 = vmatpush2.bf16.xpose.msra.mxu0 0
        %8488 = vmatprep.subr.bf16.mxu0 0
        %8489 = vmatpush2.bf16.xpose.msra.mxu0 0
        %8490 = vmatprep.subr.bf16.mxu0 0
        %8491 = vmatpush2.bf16.xpose.msra.mxu0 0
        %8492 = vmatprep.mubr.bf16.mxu0 %v1927
        %8493 = vmatmul.mubr.bf16.gmra.mxu0 %v1925
        %v8494 = vpop.f32.mrf.mxu0
        %v8495 = vadd.f32 %v8455, %v8494
        %v8496 = vpop.f32.mrf.mxu0
        %v8497 = vpop.f32.mrf.mxu0
        %v8498 = vpop.f32.mrf.mxu0
        %8499 = vdwg.mxu0
        %8500 = vmatprep.subr.bf16.mxu0 0
        %8501 = vmatpush1.bf16.xpose.msra.mxu0 0
        %8502 = vmatprep.subr.bf16.mxu0 0
        %8503 = vmatpush1.bf16.xpose.msra.mxu0 0
        %8504 = vmatprep.subr.bf16.mxu0 0
        %8505 = vmatpush1.bf16.xpose.msra.mxu0 0
        %8506 = vmatprep.subr.bf16.mxu0 0
        %8507 = vmatpush1.bf16.xpose.msra.mxu0 0
        %8508 = vmatprep.subr.bf16.mxu0 0
        %8509 = vmatpush1.bf16.xpose.msra.mxu0 0
        %8510 = vmatprep.subr.bf16.mxu0 0
        %8511 = vmatpush1.bf16.xpose.msra.mxu0 0
        %8512 = vmatprep.subr.bf16.mxu0 0
        %8513 = vmatpush1.bf16.xpose.msra.mxu0 0
        %8514 = vmatprep.subr.bf16.mxu0 %v3809
        %8515 = vmatpush1.bf16.xpose.msra.mxu0 %v3808
        %8516 = vmatprep.subr.bf16.mxu0 0
        %8517 = vmatpush2.bf16.xpose.msra.mxu0 0
        %8518 = vmatprep.subr.bf16.mxu0 0
        %8519 = vmatpush2.bf16.xpose.msra.mxu0 0
        %8520 = vmatprep.subr.bf16.mxu0 0
        %8521 = vmatpush2.bf16.xpose.msra.mxu0 0
        %8522 = vmatprep.subr.bf16.mxu0 0
        %8523 = vmatpush2.bf16.xpose.msra.mxu0 0
        %8524 = vmatprep.subr.bf16.mxu0 0
        %8525 = vmatpush2.bf16.xpose.msra.mxu0 0
        %8526 = vmatprep.subr.bf16.mxu0 0
        %8527 = vmatpush2.bf16.xpose.msra.mxu0 0
        %8528 = vmatprep.subr.bf16.mxu0 0
        %8529 = vmatpush2.bf16.xpose.msra.mxu0 0
        %8530 = vmatprep.subr.bf16.mxu0 0
        %8531 = vmatpush2.bf16.xpose.msra.mxu0 0
        %8532 = vmatprep.mubr.bf16.mxu0 %v1965
        %8533 = vmatmul.mubr.bf16.gmra.mxu0 %v1951
        %v8534 = vpop.f32.mrf.mxu0
        %v8535 = vadd.f32 %v8495, %v8534
        %v8536 = vpop.f32.mrf.mxu0
        %v8537 = vpop.f32.mrf.mxu0
        %v8538 = vpop.f32.mrf.mxu0
        %8539 = vdwg.mxu0
        %8540 = vmatprep.subr.bf16.mxu0 0
        %8541 = vmatpush1.bf16.xpose.msra.mxu0 0
        %8542 = vmatprep.subr.bf16.mxu0 0
        %8543 = vmatpush1.bf16.xpose.msra.mxu0 0
        %8544 = vmatprep.subr.bf16.mxu0 0
        %8545 = vmatpush1.bf16.xpose.msra.mxu0 0
        %8546 = vmatprep.subr.bf16.mxu0 0
        %8547 = vmatpush1.bf16.xpose.msra.mxu0 0
        %8548 = vmatprep.subr.bf16.mxu0 0
        %8549 = vmatpush1.bf16.xpose.msra.mxu0 0
        %8550 = vmatprep.subr.bf16.mxu0 0
        %8551 = vmatpush1.bf16.xpose.msra.mxu0 0
        %8552 = vmatprep.subr.bf16.mxu0 0
        %8553 = vmatpush1.bf16.xpose.msra.mxu0 0
        %8554 = vmatprep.subr.bf16.mxu0 %v3811
        %8555 = vmatpush1.bf16.xpose.msra.mxu0 %v3810
        %8556 = vmatprep.subr.bf16.mxu0 0
        %8557 = vmatpush2.bf16.xpose.msra.mxu0 0
        %8558 = vmatprep.subr.bf16.mxu0 0
        %8559 = vmatpush2.bf16.xpose.msra.mxu0 0
        %8560 = vmatprep.subr.bf16.mxu0 0
        %8561 = vmatpush2.bf16.xpose.msra.mxu0 0
        %8562 = vmatprep.subr.bf16.mxu0 0
        %8563 = vmatpush2.bf16.xpose.msra.mxu0 0
        %8564 = vmatprep.subr.bf16.mxu0 0
        %8565 = vmatpush2.bf16.xpose.msra.mxu0 0
        %8566 = vmatprep.subr.bf16.mxu0 0
        %8567 = vmatpush2.bf16.xpose.msra.mxu0 0
        %8568 = vmatprep.subr.bf16.mxu0 0
        %8569 = vmatpush2.bf16.xpose.msra.mxu0 0
        %8570 = vmatprep.subr.bf16.mxu0 0
        %8571 = vmatpush2.bf16.xpose.msra.mxu0 0
        %8572 = vmatprep.mubr.bf16.mxu0 %v1975
        %8573 = vmatmul.mubr.bf16.gmra.mxu0 %v1973
        %v8574 = vpop.f32.mrf.mxu0
        %v8575 = vadd.f32 %v8535, %v8574
        %v8576 = vpop.f32.mrf.mxu0
        %v8577 = vpop.f32.mrf.mxu0
        %v8578 = vpop.f32.mrf.mxu0
        %8579 = vdwg.mxu0
        %8580 = vmatprep.subr.bf16.mxu0 0
        %8581 = vmatpush1.bf16.xpose.msra.mxu0 0
        %8582 = vmatprep.subr.bf16.mxu0 0
        %8583 = vmatpush1.bf16.xpose.msra.mxu0 0
        %8584 = vmatprep.subr.bf16.mxu0 0
        %8585 = vmatpush1.bf16.xpose.msra.mxu0 0
        %8586 = vmatprep.subr.bf16.mxu0 0
        %8587 = vmatpush1.bf16.xpose.msra.mxu0 0
        %8588 = vmatprep.subr.bf16.mxu0 0
        %8589 = vmatpush1.bf16.xpose.msra.mxu0 0
        %8590 = vmatprep.subr.bf16.mxu0 0
        %8591 = vmatpush1.bf16.xpose.msra.mxu0 0
        %8592 = vmatprep.subr.bf16.mxu0 0
        %8593 = vmatpush1.bf16.xpose.msra.mxu0 0
        %8594 = vmatprep.subr.bf16.mxu0 %v3813
        %8595 = vmatpush1.bf16.xpose.msra.mxu0 %v3812
        %8596 = vmatprep.subr.bf16.mxu0 0
        %8597 = vmatpush2.bf16.xpose.msra.mxu0 0
        %8598 = vmatprep.subr.bf16.mxu0 0
        %8599 = vmatpush2.bf16.xpose.msra.mxu0 0
        %8600 = vmatprep.subr.bf16.mxu0 0
        %8601 = vmatpush2.bf16.xpose.msra.mxu0 0
        %8602 = vmatprep.subr.bf16.mxu0 0
        %8603 = vmatpush2.bf16.xpose.msra.mxu0 0
        %8604 = vmatprep.subr.bf16.mxu0 0
        %8605 = vmatpush2.bf16.xpose.msra.mxu0 0
        %8606 = vmatprep.subr.bf16.mxu0 0
        %8607 = vmatpush2.bf16.xpose.msra.mxu0 0
        %8608 = vmatprep.subr.bf16.mxu0 0
        %8609 = vmatpush2.bf16.xpose.msra.mxu0 0
        %8610 = vmatprep.subr.bf16.mxu0 0
        %8611 = vmatpush2.bf16.xpose.msra.mxu0 0
        %8612 = vmatprep.mubr.bf16.mxu0 %v1972
        %8613 = vmatmul.mubr.bf16.gmra.mxu0 %v1958
        %v8614 = vpop.f32.mrf.mxu0
        %v8615 = vadd.f32 %v8575, %v8614
        %v8616 = vpop.f32.mrf.mxu0
        %v8617 = vpop.f32.mrf.mxu0
        %v8618 = vpop.f32.mrf.mxu0
        %8619 = vdwg.mxu0
        %8620 = vmatprep.subr.bf16.mxu0 0
        %8621 = vmatpush1.bf16.xpose.msra.mxu0 0
        %8622 = vmatprep.subr.bf16.mxu0 0
        %8623 = vmatpush1.bf16.xpose.msra.mxu0 0
        %8624 = vmatprep.subr.bf16.mxu0 0
        %8625 = vmatpush1.bf16.xpose.msra.mxu0 0
        %8626 = vmatprep.subr.bf16.mxu0 0
        %8627 = vmatpush1.bf16.xpose.msra.mxu0 0
        %8628 = vmatprep.subr.bf16.mxu0 0
        %8629 = vmatpush1.bf16.xpose.msra.mxu0 0
        %8630 = vmatprep.subr.bf16.mxu0 0
        %8631 = vmatpush1.bf16.xpose.msra.mxu0 0
        %8632 = vmatprep.subr.bf16.mxu0 0
        %8633 = vmatpush1.bf16.xpose.msra.mxu0 0
        %8634 = vmatprep.subr.bf16.mxu0 %v3815
        %8635 = vmatpush1.bf16.xpose.msra.mxu0 %v3814
        %8636 = vmatprep.subr.bf16.mxu0 0
        %8637 = vmatpush2.bf16.xpose.msra.mxu0 0
        %8638 = vmatprep.subr.bf16.mxu0 0
        %8639 = vmatpush2.bf16.xpose.msra.mxu0 0
        %8640 = vmatprep.subr.bf16.mxu0 0
        %8641 = vmatpush2.bf16.xpose.msra.mxu0 0
        %8642 = vmatprep.subr.bf16.mxu0 0
        %8643 = vmatpush2.bf16.xpose.msra.mxu0 0
        %8644 = vmatprep.subr.bf16.mxu0 0
        %8645 = vmatpush2.bf16.xpose.msra.mxu0 0
        %8646 = vmatprep.subr.bf16.mxu0 0
        %8647 = vmatpush2.bf16.xpose.msra.mxu0 0
        %8648 = vmatprep.subr.bf16.mxu0 0
        %8649 = vmatpush2.bf16.xpose.msra.mxu0 0
        %8650 = vmatprep.subr.bf16.mxu0 0
        %8651 = vmatpush2.bf16.xpose.msra.mxu0 0
        %8652 = vmatprep.mubr.bf16.mxu0 %v1976
        %8653 = vmatmul.mubr.bf16.gmra.mxu0 %v1974
        %v8654 = vpop.f32.mrf.mxu0
        %v8655 = vadd.f32 %v8615, %v8654
        %v8656 = vpop.f32.mrf.mxu0
        %v8657 = vpop.f32.mrf.mxu0
        %v8658 = vpop.f32.mrf.mxu0
        %8659 = vdwg.mxu0
        %8660 = vmatprep.subr.bf16.mxu0 0
        %8661 = vmatpush1.bf16.xpose.msra.mxu0 0
        %8662 = vmatprep.subr.bf16.mxu0 0
        %8663 = vmatpush1.bf16.xpose.msra.mxu0 0
        %8664 = vmatprep.subr.bf16.mxu0 0
        %8665 = vmatpush1.bf16.xpose.msra.mxu0 0
        %8666 = vmatprep.subr.bf16.mxu0 0
        %8667 = vmatpush1.bf16.xpose.msra.mxu0 0
        %8668 = vmatprep.subr.bf16.mxu0 0
        %8669 = vmatpush1.bf16.xpose.msra.mxu0 0
        %8670 = vmatprep.subr.bf16.mxu0 0
        %8671 = vmatpush1.bf16.xpose.msra.mxu0 0
        %8672 = vmatprep.subr.bf16.mxu0 0
        %8673 = vmatpush1.bf16.xpose.msra.mxu0 0
        %8674 = vmatprep.subr.bf16.mxu0 %v3817
        %8675 = vmatpush1.bf16.xpose.msra.mxu0 %v3816
        %8676 = vmatprep.subr.bf16.mxu0 0
        %8677 = vmatpush2.bf16.xpose.msra.mxu0 0
        %8678 = vmatprep.subr.bf16.mxu0 0
        %8679 = vmatpush2.bf16.xpose.msra.mxu0 0
        %8680 = vmatprep.subr.bf16.mxu0 0
        %8681 = vmatpush2.bf16.xpose.msra.mxu0 0
        %8682 = vmatprep.subr.bf16.mxu0 0
        %8683 = vmatpush2.bf16.xpose.msra.mxu0 0
        %8684 = vmatprep.subr.bf16.mxu0 0
        %8685 = vmatpush2.bf16.xpose.msra.mxu0 0
        %8686 = vmatprep.subr.bf16.mxu0 0
        %8687 = vmatpush2.bf16.xpose.msra.mxu0 0
        %8688 = vmatprep.subr.bf16.mxu0 0
        %8689 = vmatpush2.bf16.xpose.msra.mxu0 0
        %8690 = vmatprep.subr.bf16.mxu0 0
        %8691 = vmatpush2.bf16.xpose.msra.mxu0 0
        %8692 = vmatprep.mubr.bf16.mxu0 %v2014
        %8693 = vmatmul.mubr.bf16.gmra.mxu0 %v2000
        %v8694 = vpop.f32.mrf.mxu0
        %v8695 = vadd.f32 %v8655, %v8694
        %v8696 = vpop.f32.mrf.mxu0
        %v8697 = vpop.f32.mrf.mxu0
        %v8698 = vpop.f32.mrf.mxu0
        %8699 = vdwg.mxu0
        %8700 = vmatprep.subr.bf16.mxu0 0
        %8701 = vmatpush1.bf16.xpose.msra.mxu0 0
        %8702 = vmatprep.subr.bf16.mxu0 0
        %8703 = vmatpush1.bf16.xpose.msra.mxu0 0
        %8704 = vmatprep.subr.bf16.mxu0 0
        %8705 = vmatpush1.bf16.xpose.msra.mxu0 0
        %8706 = vmatprep.subr.bf16.mxu0 0
        %8707 = vmatpush1.bf16.xpose.msra.mxu0 0
        %8708 = vmatprep.subr.bf16.mxu0 0
        %8709 = vmatpush1.bf16.xpose.msra.mxu0 0
        %8710 = vmatprep.subr.bf16.mxu0 0
        %8711 = vmatpush1.bf16.xpose.msra.mxu0 0
        %8712 = vmatprep.subr.bf16.mxu0 0
        %8713 = vmatpush1.bf16.xpose.msra.mxu0 0
        %8714 = vmatprep.subr.bf16.mxu0 %v3819
        %8715 = vmatpush1.bf16.xpose.msra.mxu0 %v3818
        %8716 = vmatprep.subr.bf16.mxu0 0
        %8717 = vmatpush2.bf16.xpose.msra.mxu0 0
        %8718 = vmatprep.subr.bf16.mxu0 0
        %8719 = vmatpush2.bf16.xpose.msra.mxu0 0
        %8720 = vmatprep.subr.bf16.mxu0 0
        %8721 = vmatpush2.bf16.xpose.msra.mxu0 0
        %8722 = vmatprep.subr.bf16.mxu0 0
        %8723 = vmatpush2.bf16.xpose.msra.mxu0 0
        %8724 = vmatprep.subr.bf16.mxu0 0
        %8725 = vmatpush2.bf16.xpose.msra.mxu0 0
        %8726 = vmatprep.subr.bf16.mxu0 0
        %8727 = vmatpush2.bf16.xpose.msra.mxu0 0
        %8728 = vmatprep.subr.bf16.mxu0 0
        %8729 = vmatpush2.bf16.xpose.msra.mxu0 0
        %8730 = vmatprep.subr.bf16.mxu0 0
        %8731 = vmatpush2.bf16.xpose.msra.mxu0 0
        %8732 = vmatprep.mubr.bf16.mxu0 %v2024
        %8733 = vmatmul.mubr.bf16.gmra.mxu0 %v2022
        %v8734 = vpop.f32.mrf.mxu0
        %v8735 = vadd.f32 %v8695, %v8734
        %v8736 = vpop.f32.mrf.mxu0
        %v8737 = vpop.f32.mrf.mxu0
        %v8738 = vpop.f32.mrf.mxu0
        %8739 = vdwg.mxu0
        %8740 = vmatprep.subr.bf16.mxu0 0
        %8741 = vmatpush1.bf16.xpose.msra.mxu0 0
        %8742 = vmatprep.subr.bf16.mxu0 0
        %8743 = vmatpush1.bf16.xpose.msra.mxu0 0
        %8744 = vmatprep.subr.bf16.mxu0 0
        %8745 = vmatpush1.bf16.xpose.msra.mxu0 0
        %8746 = vmatprep.subr.bf16.mxu0 0
        %8747 = vmatpush1.bf16.xpose.msra.mxu0 0
        %8748 = vmatprep.subr.bf16.mxu0 0
        %8749 = vmatpush1.bf16.xpose.msra.mxu0 0
        %8750 = vmatprep.subr.bf16.mxu0 0
        %8751 = vmatpush1.bf16.xpose.msra.mxu0 0
        %8752 = vmatprep.subr.bf16.mxu0 0
        %8753 = vmatpush1.bf16.xpose.msra.mxu0 0
        %8754 = vmatprep.subr.bf16.mxu0 %v3821
        %8755 = vmatpush1.bf16.xpose.msra.mxu0 %v3820
        %8756 = vmatprep.subr.bf16.mxu0 0
        %8757 = vmatpush2.bf16.xpose.msra.mxu0 0
        %8758 = vmatprep.subr.bf16.mxu0 0
        %8759 = vmatpush2.bf16.xpose.msra.mxu0 0
        %8760 = vmatprep.subr.bf16.mxu0 0
        %8761 = vmatpush2.bf16.xpose.msra.mxu0 0
        %8762 = vmatprep.subr.bf16.mxu0 0
        %8763 = vmatpush2.bf16.xpose.msra.mxu0 0
        %8764 = vmatprep.subr.bf16.mxu0 0
        %8765 = vmatpush2.bf16.xpose.msra.mxu0 0
        %8766 = vmatprep.subr.bf16.mxu0 0
        %8767 = vmatpush2.bf16.xpose.msra.mxu0 0
        %8768 = vmatprep.subr.bf16.mxu0 0
        %8769 = vmatpush2.bf16.xpose.msra.mxu0 0
        %8770 = vmatprep.subr.bf16.mxu0 0
        %8771 = vmatpush2.bf16.xpose.msra.mxu0 0
        %8772 = vmatprep.mubr.bf16.mxu0 %v2021
        %8773 = vmatmul.mubr.bf16.gmra.mxu0 %v2007
        %v8774 = vpop.f32.mrf.mxu0
        %v8775 = vadd.f32 %v8735, %v8774
        %v8776 = vpop.f32.mrf.mxu0
        %v8777 = vpop.f32.mrf.mxu0
        %v8778 = vpop.f32.mrf.mxu0
        %8779 = vdwg.mxu0
        %8780 = vmatprep.subr.bf16.mxu0 0
        %8781 = vmatpush1.bf16.xpose.msra.mxu0 0
        %8782 = vmatprep.subr.bf16.mxu0 0
        %8783 = vmatpush1.bf16.xpose.msra.mxu0 0
        %8784 = vmatprep.subr.bf16.mxu0 0
        %8785 = vmatpush1.bf16.xpose.msra.mxu0 0
        %8786 = vmatprep.subr.bf16.mxu0 0
        %8787 = vmatpush1.bf16.xpose.msra.mxu0 0
        %8788 = vmatprep.subr.bf16.mxu0 0
        %8789 = vmatpush1.bf16.xpose.msra.mxu0 0
        %8790 = vmatprep.subr.bf16.mxu0 0
        %8791 = vmatpush1.bf16.xpose.msra.mxu0 0
        %8792 = vmatprep.subr.bf16.mxu0 0
        %8793 = vmatpush1.bf16.xpose.msra.mxu0 0
        %8794 = vmatprep.subr.bf16.mxu0 %v3823
        %8795 = vmatpush1.bf16.xpose.msra.mxu0 %v3822
        %8796 = vmatprep.subr.bf16.mxu0 0
        %8797 = vmatpush2.bf16.xpose.msra.mxu0 0
        %8798 = vmatprep.subr.bf16.mxu0 0
        %8799 = vmatpush2.bf16.xpose.msra.mxu0 0
        %8800 = vmatprep.subr.bf16.mxu0 0
        %8801 = vmatpush2.bf16.xpose.msra.mxu0 0
        %8802 = vmatprep.subr.bf16.mxu0 0
        %8803 = vmatpush2.bf16.xpose.msra.mxu0 0
        %8804 = vmatprep.subr.bf16.mxu0 0
        %8805 = vmatpush2.bf16.xpose.msra.mxu0 0
        %8806 = vmatprep.subr.bf16.mxu0 0
        %8807 = vmatpush2.bf16.xpose.msra.mxu0 0
        %8808 = vmatprep.subr.bf16.mxu0 0
        %8809 = vmatpush2.bf16.xpose.msra.mxu0 0
        %8810 = vmatprep.subr.bf16.mxu0 0
        %8811 = vmatpush2.bf16.xpose.msra.mxu0 0
        %8812 = vmatprep.mubr.bf16.mxu0 %v2025
        %8813 = vmatmul.mubr.bf16.gmra.mxu0 %v2023
        %v8814 = vpop.f32.mrf.mxu0
        %v8815 = vadd.f32 %v8775, %v8814
        %v8816 = vpop.f32.mrf.mxu0
        %v8817 = vpop.f32.mrf.mxu0
        %v8818 = vpop.f32.mrf.mxu0
        %8819 = vdwg.mxu0
        %8820 = vmatprep.subr.bf16.mxu0 0
        %8821 = vmatpush1.bf16.xpose.msra.mxu0 0
        %8822 = vmatprep.subr.bf16.mxu0 0
        %8823 = vmatpush1.bf16.xpose.msra.mxu0 0
        %8824 = vmatprep.subr.bf16.mxu0 0
        %8825 = vmatpush1.bf16.xpose.msra.mxu0 0
        %8826 = vmatprep.subr.bf16.mxu0 0
        %8827 = vmatpush1.bf16.xpose.msra.mxu0 0
        %8828 = vmatprep.subr.bf16.mxu0 0
        %8829 = vmatpush1.bf16.xpose.msra.mxu0 0
        %8830 = vmatprep.subr.bf16.mxu0 0
        %8831 = vmatpush1.bf16.xpose.msra.mxu0 0
        %8832 = vmatprep.subr.bf16.mxu0 0
        %8833 = vmatpush1.bf16.xpose.msra.mxu0 0
        %8834 = vmatprep.subr.bf16.mxu0 %v3825
        %8835 = vmatpush1.bf16.xpose.msra.mxu0 %v3824
        %8836 = vmatprep.subr.bf16.mxu0 0
        %8837 = vmatpush2.bf16.xpose.msra.mxu0 0
        %8838 = vmatprep.subr.bf16.mxu0 0
        %8839 = vmatpush2.bf16.xpose.msra.mxu0 0
        %8840 = vmatprep.subr.bf16.mxu0 0
        %8841 = vmatpush2.bf16.xpose.msra.mxu0 0
        %8842 = vmatprep.subr.bf16.mxu0 0
        %8843 = vmatpush2.bf16.xpose.msra.mxu0 0
        %8844 = vmatprep.subr.bf16.mxu0 0
        %8845 = vmatpush2.bf16.xpose.msra.mxu0 0
        %8846 = vmatprep.subr.bf16.mxu0 0
        %8847 = vmatpush2.bf16.xpose.msra.mxu0 0
        %8848 = vmatprep.subr.bf16.mxu0 0
        %8849 = vmatpush2.bf16.xpose.msra.mxu0 0
        %8850 = vmatprep.subr.bf16.mxu0 0
        %8851 = vmatpush2.bf16.xpose.msra.mxu0 0
        %8852 = vmatprep.mubr.bf16.mxu0 %v2063
        %8853 = vmatmul.mubr.bf16.gmra.mxu0 %v2049
        %v8854 = vpop.f32.mrf.mxu0
        %v8855 = vadd.f32 %v8815, %v8854
        %v8856 = vpop.f32.mrf.mxu0
        %v8857 = vpop.f32.mrf.mxu0
        %v8858 = vpop.f32.mrf.mxu0
        %8859 = vdwg.mxu0
        %8860 = vmatprep.subr.bf16.mxu0 0
        %8861 = vmatpush1.bf16.xpose.msra.mxu0 0
        %8862 = vmatprep.subr.bf16.mxu0 0
        %8863 = vmatpush1.bf16.xpose.msra.mxu0 0
        %8864 = vmatprep.subr.bf16.mxu0 0
        %8865 = vmatpush1.bf16.xpose.msra.mxu0 0
        %8866 = vmatprep.subr.bf16.mxu0 0
        %8867 = vmatpush1.bf16.xpose.msra.mxu0 0
        %8868 = vmatprep.subr.bf16.mxu0 0
        %8869 = vmatpush1.bf16.xpose.msra.mxu0 0
        %8870 = vmatprep.subr.bf16.mxu0 0
        %8871 = vmatpush1.bf16.xpose.msra.mxu0 0
        %8872 = vmatprep.subr.bf16.mxu0 0
        %8873 = vmatpush1.bf16.xpose.msra.mxu0 0
        %8874 = vmatprep.subr.bf16.mxu0 %v3827
        %8875 = vmatpush1.bf16.xpose.msra.mxu0 %v3826
        %8876 = vmatprep.subr.bf16.mxu0 0
        %8877 = vmatpush2.bf16.xpose.msra.mxu0 0
        %8878 = vmatprep.subr.bf16.mxu0 0
        %8879 = vmatpush2.bf16.xpose.msra.mxu0 0
        %8880 = vmatprep.subr.bf16.mxu0 0
        %8881 = vmatpush2.bf16.xpose.msra.mxu0 0
        %8882 = vmatprep.subr.bf16.mxu0 0
        %8883 = vmatpush2.bf16.xpose.msra.mxu0 0
        %8884 = vmatprep.subr.bf16.mxu0 0
        %8885 = vmatpush2.bf16.xpose.msra.mxu0 0
        %8886 = vmatprep.subr.bf16.mxu0 0
        %8887 = vmatpush2.bf16.xpose.msra.mxu0 0
        %8888 = vmatprep.subr.bf16.mxu0 0
        %8889 = vmatpush2.bf16.xpose.msra.mxu0 0
        %8890 = vmatprep.subr.bf16.mxu0 0
        %8891 = vmatpush2.bf16.xpose.msra.mxu0 0
        %8892 = vmatprep.mubr.bf16.mxu0 %v2073
        %8893 = vmatmul.mubr.bf16.gmra.mxu0 %v2071
        %v8894 = vpop.f32.mrf.mxu0
        %v8895 = vadd.f32 %v8855, %v8894
        %v8896 = vpop.f32.mrf.mxu0
        %v8897 = vpop.f32.mrf.mxu0
        %v8898 = vpop.f32.mrf.mxu0
        %8899 = vdwg.mxu0
        %8900 = vmatprep.subr.bf16.mxu0 0
        %8901 = vmatpush1.bf16.xpose.msra.mxu0 0
        %8902 = vmatprep.subr.bf16.mxu0 0
        %8903 = vmatpush1.bf16.xpose.msra.mxu0 0
        %8904 = vmatprep.subr.bf16.mxu0 0
        %8905 = vmatpush1.bf16.xpose.msra.mxu0 0
        %8906 = vmatprep.subr.bf16.mxu0 0
        %8907 = vmatpush1.bf16.xpose.msra.mxu0 0
        %8908 = vmatprep.subr.bf16.mxu0 0
        %8909 = vmatpush1.bf16.xpose.msra.mxu0 0
        %8910 = vmatprep.subr.bf16.mxu0 0
        %8911 = vmatpush1.bf16.xpose.msra.mxu0 0
        %8912 = vmatprep.subr.bf16.mxu0 0
        %8913 = vmatpush1.bf16.xpose.msra.mxu0 0
        %8914 = vmatprep.subr.bf16.mxu0 %v3829
        %8915 = vmatpush1.bf16.xpose.msra.mxu0 %v3828
        %8916 = vmatprep.subr.bf16.mxu0 0
        %8917 = vmatpush2.bf16.xpose.msra.mxu0 0
        %8918 = vmatprep.subr.bf16.mxu0 0
        %8919 = vmatpush2.bf16.xpose.msra.mxu0 0
        %8920 = vmatprep.subr.bf16.mxu0 0
        %8921 = vmatpush2.bf16.xpose.msra.mxu0 0
        %8922 = vmatprep.subr.bf16.mxu0 0
        %8923 = vmatpush2.bf16.xpose.msra.mxu0 0
        %8924 = vmatprep.subr.bf16.mxu0 0
        %8925 = vmatpush2.bf16.xpose.msra.mxu0 0
        %8926 = vmatprep.subr.bf16.mxu0 0
        %8927 = vmatpush2.bf16.xpose.msra.mxu0 0
        %8928 = vmatprep.subr.bf16.mxu0 0
        %8929 = vmatpush2.bf16.xpose.msra.mxu0 0
        %8930 = vmatprep.subr.bf16.mxu0 0
        %8931 = vmatpush2.bf16.xpose.msra.mxu0 0
        %8932 = vmatprep.mubr.bf16.mxu0 %v2070
        %8933 = vmatmul.mubr.bf16.gmra.mxu0 %v2056
        %v8934 = vpop.f32.mrf.mxu0
        %v8935 = vadd.f32 %v8895, %v8934
        %v8936 = vpop.f32.mrf.mxu0
        %v8937 = vpop.f32.mrf.mxu0
        %v8938 = vpop.f32.mrf.mxu0
        %8939 = vdwg.mxu0
        %8940 = vmatprep.subr.bf16.mxu0 0
        %8941 = vmatpush1.bf16.xpose.msra.mxu0 0
        %8942 = vmatprep.subr.bf16.mxu0 0
        %8943 = vmatpush1.bf16.xpose.msra.mxu0 0
        %8944 = vmatprep.subr.bf16.mxu0 0
        %8945 = vmatpush1.bf16.xpose.msra.mxu0 0
        %8946 = vmatprep.subr.bf16.mxu0 0
        %8947 = vmatpush1.bf16.xpose.msra.mxu0 0
        %8948 = vmatprep.subr.bf16.mxu0 0
        %8949 = vmatpush1.bf16.xpose.msra.mxu0 0
        %8950 = vmatprep.subr.bf16.mxu0 0
        %8951 = vmatpush1.bf16.xpose.msra.mxu0 0
        %8952 = vmatprep.subr.bf16.mxu0 0
        %8953 = vmatpush1.bf16.xpose.msra.mxu0 0
        %8954 = vmatprep.subr.bf16.mxu0 %v3831
        %8955 = vmatpush1.bf16.xpose.msra.mxu0 %v3830
        %8956 = vmatprep.subr.bf16.mxu0 0
        %8957 = vmatpush2.bf16.xpose.msra.mxu0 0
        %8958 = vmatprep.subr.bf16.mxu0 0
        %8959 = vmatpush2.bf16.xpose.msra.mxu0 0
        %8960 = vmatprep.subr.bf16.mxu0 0
        %8961 = vmatpush2.bf16.xpose.msra.mxu0 0
        %8962 = vmatprep.subr.bf16.mxu0 0
        %8963 = vmatpush2.bf16.xpose.msra.mxu0 0
        %8964 = vmatprep.subr.bf16.mxu0 0
        %8965 = vmatpush2.bf16.xpose.msra.mxu0 0
        %8966 = vmatprep.subr.bf16.mxu0 0
        %8967 = vmatpush2.bf16.xpose.msra.mxu0 0
        %8968 = vmatprep.subr.bf16.mxu0 0
        %8969 = vmatpush2.bf16.xpose.msra.mxu0 0
        %8970 = vmatprep.subr.bf16.mxu0 0
        %8971 = vmatpush2.bf16.xpose.msra.mxu0 0
        %8972 = vmatprep.mubr.bf16.mxu0 %v2074
        %8973 = vmatmul.mubr.bf16.gmra.mxu0 %v2072
        %v8974 = vpop.f32.mrf.mxu0
        %v8975 = vadd.f32 %v8935, %v8974
        %v8976 = vpop.f32.mrf.mxu0
        %v8977 = vpop.f32.mrf.mxu0
        %v8978 = vpop.f32.mrf.mxu0
        %8979 = vdwg.mxu0
        %8980 = vmatprep.subr.bf16.mxu0 0
        %8981 = vmatpush1.bf16.xpose.msra.mxu0 0
        %8982 = vmatprep.subr.bf16.mxu0 0
        %8983 = vmatpush1.bf16.xpose.msra.mxu0 0
        %8984 = vmatprep.subr.bf16.mxu0 0
        %8985 = vmatpush1.bf16.xpose.msra.mxu0 0
        %8986 = vmatprep.subr.bf16.mxu0 0
        %8987 = vmatpush1.bf16.xpose.msra.mxu0 0
        %8988 = vmatprep.subr.bf16.mxu0 0
        %8989 = vmatpush1.bf16.xpose.msra.mxu0 0
        %8990 = vmatprep.subr.bf16.mxu0 0
        %8991 = vmatpush1.bf16.xpose.msra.mxu0 0
        %8992 = vmatprep.subr.bf16.mxu0 0
        %8993 = vmatpush1.bf16.xpose.msra.mxu0 0
        %8994 = vmatprep.subr.bf16.mxu0 %v3833
        %8995 = vmatpush1.bf16.xpose.msra.mxu0 %v3832
        %8996 = vmatprep.subr.bf16.mxu0 0
        %8997 = vmatpush2.bf16.xpose.msra.mxu0 0
        %8998 = vmatprep.subr.bf16.mxu0 0
        %8999 = vmatpush2.bf16.xpose.msra.mxu0 0
        %9000 = vmatprep.subr.bf16.mxu0 0
        %9001 = vmatpush2.bf16.xpose.msra.mxu0 0
        %9002 = vmatprep.subr.bf16.mxu0 0
        %9003 = vmatpush2.bf16.xpose.msra.mxu0 0
        %9004 = vmatprep.subr.bf16.mxu0 0
        %9005 = vmatpush2.bf16.xpose.msra.mxu0 0
        %9006 = vmatprep.subr.bf16.mxu0 0
        %9007 = vmatpush2.bf16.xpose.msra.mxu0 0
        %9008 = vmatprep.subr.bf16.mxu0 0
        %9009 = vmatpush2.bf16.xpose.msra.mxu0 0
        %9010 = vmatprep.subr.bf16.mxu0 0
        %9011 = vmatpush2.bf16.xpose.msra.mxu0 0
        %9012 = vmatprep.mubr.bf16.mxu0 %v2112
        %9013 = vmatmul.mubr.bf16.gmra.mxu0 %v2098
        %v9014 = vpop.f32.mrf.mxu0
        %v9015 = vadd.f32 %v8975, %v9014
        %v9016 = vpop.f32.mrf.mxu0
        %v9017 = vpop.f32.mrf.mxu0
        %v9018 = vpop.f32.mrf.mxu0
        %9019 = vdwg.mxu0
        %9020 = vmatprep.subr.bf16.mxu0 0
        %9021 = vmatpush1.bf16.xpose.msra.mxu0 0
        %9022 = vmatprep.subr.bf16.mxu0 0
        %9023 = vmatpush1.bf16.xpose.msra.mxu0 0
        %9024 = vmatprep.subr.bf16.mxu0 0
        %9025 = vmatpush1.bf16.xpose.msra.mxu0 0
        %9026 = vmatprep.subr.bf16.mxu0 0
        %9027 = vmatpush1.bf16.xpose.msra.mxu0 0
        %9028 = vmatprep.subr.bf16.mxu0 0
        %9029 = vmatpush1.bf16.xpose.msra.mxu0 0
        %9030 = vmatprep.subr.bf16.mxu0 0
        %9031 = vmatpush1.bf16.xpose.msra.mxu0 0
        %9032 = vmatprep.subr.bf16.mxu0 0
        %9033 = vmatpush1.bf16.xpose.msra.mxu0 0
        %9034 = vmatprep.subr.bf16.mxu0 %v3835
        %9035 = vmatpush1.bf16.xpose.msra.mxu0 %v3834
        %9036 = vmatprep.subr.bf16.mxu0 0
        %9037 = vmatpush2.bf16.xpose.msra.mxu0 0
        %9038 = vmatprep.subr.bf16.mxu0 0
        %9039 = vmatpush2.bf16.xpose.msra.mxu0 0
        %9040 = vmatprep.subr.bf16.mxu0 0
        %9041 = vmatpush2.bf16.xpose.msra.mxu0 0
        %9042 = vmatprep.subr.bf16.mxu0 0
        %9043 = vmatpush2.bf16.xpose.msra.mxu0 0
        %9044 = vmatprep.subr.bf16.mxu0 0
        %9045 = vmatpush2.bf16.xpose.msra.mxu0 0
        %9046 = vmatprep.subr.bf16.mxu0 0
        %9047 = vmatpush2.bf16.xpose.msra.mxu0 0
        %9048 = vmatprep.subr.bf16.mxu0 0
        %9049 = vmatpush2.bf16.xpose.msra.mxu0 0
        %9050 = vmatprep.subr.bf16.mxu0 0
        %9051 = vmatpush2.bf16.xpose.msra.mxu0 0
        %9052 = vmatprep.mubr.bf16.mxu0 %v2122
        %9053 = vmatmul.mubr.bf16.gmra.mxu0 %v2120
        %v9054 = vpop.f32.mrf.mxu0
        %v9055 = vadd.f32 %v9015, %v9054
        %v9056 = vpop.f32.mrf.mxu0
        %v9057 = vpop.f32.mrf.mxu0
        %v9058 = vpop.f32.mrf.mxu0
        %9059 = vdwg.mxu0
        %9060 = vmatprep.subr.bf16.mxu0 0
        %9061 = vmatpush1.bf16.xpose.msra.mxu0 0
        %9062 = vmatprep.subr.bf16.mxu0 0
        %9063 = vmatpush1.bf16.xpose.msra.mxu0 0
        %9064 = vmatprep.subr.bf16.mxu0 0
        %9065 = vmatpush1.bf16.xpose.msra.mxu0 0
        %9066 = vmatprep.subr.bf16.mxu0 0
        %9067 = vmatpush1.bf16.xpose.msra.mxu0 0
        %9068 = vmatprep.subr.bf16.mxu0 0
        %9069 = vmatpush1.bf16.xpose.msra.mxu0 0
        %9070 = vmatprep.subr.bf16.mxu0 0
        %9071 = vmatpush1.bf16.xpose.msra.mxu0 0
        %9072 = vmatprep.subr.bf16.mxu0 0
        %9073 = vmatpush1.bf16.xpose.msra.mxu0 0
        %9074 = vmatprep.subr.bf16.mxu0 %v3837
        %9075 = vmatpush1.bf16.xpose.msra.mxu0 %v3836
        %9076 = vmatprep.subr.bf16.mxu0 0
        %9077 = vmatpush2.bf16.xpose.msra.mxu0 0
        %9078 = vmatprep.subr.bf16.mxu0 0
        %9079 = vmatpush2.bf16.xpose.msra.mxu0 0
        %9080 = vmatprep.subr.bf16.mxu0 0
        %9081 = vmatpush2.bf16.xpose.msra.mxu0 0
        %9082 = vmatprep.subr.bf16.mxu0 0
        %9083 = vmatpush2.bf16.xpose.msra.mxu0 0
        %9084 = vmatprep.subr.bf16.mxu0 0
        %9085 = vmatpush2.bf16.xpose.msra.mxu0 0
        %9086 = vmatprep.subr.bf16.mxu0 0
        %9087 = vmatpush2.bf16.xpose.msra.mxu0 0
        %9088 = vmatprep.subr.bf16.mxu0 0
        %9089 = vmatpush2.bf16.xpose.msra.mxu0 0
        %9090 = vmatprep.subr.bf16.mxu0 0
        %9091 = vmatpush2.bf16.xpose.msra.mxu0 0
        %9092 = vmatprep.mubr.bf16.mxu0 %v2119
        %9093 = vmatmul.mubr.bf16.gmra.mxu0 %v2105
        %v9094 = vpop.f32.mrf.mxu0
        %v9095 = vadd.f32 %v9055, %v9094
        %v9096 = vpop.f32.mrf.mxu0
        %v9097 = vpop.f32.mrf.mxu0
        %v9098 = vpop.f32.mrf.mxu0
        %9099 = vdwg.mxu0
        %9100 = vmatprep.subr.bf16.mxu0 0
        %9101 = vmatpush1.bf16.xpose.msra.mxu0 0
        %9102 = vmatprep.subr.bf16.mxu0 0
        %9103 = vmatpush1.bf16.xpose.msra.mxu0 0
        %9104 = vmatprep.subr.bf16.mxu0 0
        %9105 = vmatpush1.bf16.xpose.msra.mxu0 0
        %9106 = vmatprep.subr.bf16.mxu0 0
        %9107 = vmatpush1.bf16.xpose.msra.mxu0 0
        %9108 = vmatprep.subr.bf16.mxu0 0
        %9109 = vmatpush1.bf16.xpose.msra.mxu0 0
        %9110 = vmatprep.subr.bf16.mxu0 0
        %9111 = vmatpush1.bf16.xpose.msra.mxu0 0
        %9112 = vmatprep.subr.bf16.mxu0 0
        %9113 = vmatpush1.bf16.xpose.msra.mxu0 0
        %9114 = vmatprep.subr.bf16.mxu0 %v3839
        %9115 = vmatpush1.bf16.xpose.msra.mxu0 %v3838
        %9116 = vmatprep.subr.bf16.mxu0 0
        %9117 = vmatpush2.bf16.xpose.msra.mxu0 0
        %9118 = vmatprep.subr.bf16.mxu0 0
        %9119 = vmatpush2.bf16.xpose.msra.mxu0 0
        %9120 = vmatprep.subr.bf16.mxu0 0
        %9121 = vmatpush2.bf16.xpose.msra.mxu0 0
        %9122 = vmatprep.subr.bf16.mxu0 0
        %9123 = vmatpush2.bf16.xpose.msra.mxu0 0
        %9124 = vmatprep.subr.bf16.mxu0 0
        %9125 = vmatpush2.bf16.xpose.msra.mxu0 0
        %9126 = vmatprep.subr.bf16.mxu0 0
        %9127 = vmatpush2.bf16.xpose.msra.mxu0 0
        %9128 = vmatprep.subr.bf16.mxu0 0
        %9129 = vmatpush2.bf16.xpose.msra.mxu0 0
        %9130 = vmatprep.subr.bf16.mxu0 0
        %9131 = vmatpush2.bf16.xpose.msra.mxu0 0
        %9132 = vmatprep.mubr.bf16.mxu0 %v2123
        %9133 = vmatmul.mubr.bf16.gmra.mxu0 %v2121
        %v9134 = vpop.f32.mrf.mxu0
        %v9135 = vadd.f32 %v9095, %v9134
        %v9136 = vpop.f32.mrf.mxu0
        %v9137 = vpop.f32.mrf.mxu0
        %v9138 = vpop.f32.mrf.mxu0
        %9139 = vdwg.mxu0
        %9140 = vmatprep.subr.bf16.mxu0 0
        %9141 = vmatpush1.bf16.xpose.msra.mxu0 0
        %9142 = vmatprep.subr.bf16.mxu0 0
        %9143 = vmatpush1.bf16.xpose.msra.mxu0 0
        %9144 = vmatprep.subr.bf16.mxu0 0
        %9145 = vmatpush1.bf16.xpose.msra.mxu0 0
        %9146 = vmatprep.subr.bf16.mxu0 0
        %9147 = vmatpush1.bf16.xpose.msra.mxu0 0
        %9148 = vmatprep.subr.bf16.mxu0 0
        %9149 = vmatpush1.bf16.xpose.msra.mxu0 0
        %9150 = vmatprep.subr.bf16.mxu0 0
        %9151 = vmatpush1.bf16.xpose.msra.mxu0 0
        %9152 = vmatprep.subr.bf16.mxu0 0
        %9153 = vmatpush1.bf16.xpose.msra.mxu0 0
        %9154 = vmatprep.subr.bf16.mxu0 %v3841
        %9155 = vmatpush1.bf16.xpose.msra.mxu0 %v3840
        %9156 = vmatprep.subr.bf16.mxu0 0
        %9157 = vmatpush2.bf16.xpose.msra.mxu0 0
        %9158 = vmatprep.subr.bf16.mxu0 0
        %9159 = vmatpush2.bf16.xpose.msra.mxu0 0
        %9160 = vmatprep.subr.bf16.mxu0 0
        %9161 = vmatpush2.bf16.xpose.msra.mxu0 0
        %9162 = vmatprep.subr.bf16.mxu0 0
        %9163 = vmatpush2.bf16.xpose.msra.mxu0 0
        %9164 = vmatprep.subr.bf16.mxu0 0
        %9165 = vmatpush2.bf16.xpose.msra.mxu0 0
        %9166 = vmatprep.subr.bf16.mxu0 0
        %9167 = vmatpush2.bf16.xpose.msra.mxu0 0
        %9168 = vmatprep.subr.bf16.mxu0 0
        %9169 = vmatpush2.bf16.xpose.msra.mxu0 0
        %9170 = vmatprep.subr.bf16.mxu0 0
        %9171 = vmatpush2.bf16.xpose.msra.mxu0 0
        %9172 = vmatprep.mubr.bf16.mxu0 %v2161
        %9173 = vmatmul.mubr.bf16.gmra.mxu0 %v2147
        %v9174 = vpop.f32.mrf.mxu0
        %v9175 = vadd.f32 %v9135, %v9174
        %v9176 = vpop.f32.mrf.mxu0
        %v9177 = vpop.f32.mrf.mxu0
        %v9178 = vpop.f32.mrf.mxu0
        %9179 = vdwg.mxu0
        %9180 = vmatprep.subr.bf16.mxu0 0
        %9181 = vmatpush1.bf16.xpose.msra.mxu0 0
        %9182 = vmatprep.subr.bf16.mxu0 0
        %9183 = vmatpush1.bf16.xpose.msra.mxu0 0
        %9184 = vmatprep.subr.bf16.mxu0 0
        %9185 = vmatpush1.bf16.xpose.msra.mxu0 0
        %9186 = vmatprep.subr.bf16.mxu0 0
        %9187 = vmatpush1.bf16.xpose.msra.mxu0 0
        %9188 = vmatprep.subr.bf16.mxu0 0
        %9189 = vmatpush1.bf16.xpose.msra.mxu0 0
        %9190 = vmatprep.subr.bf16.mxu0 0
        %9191 = vmatpush1.bf16.xpose.msra.mxu0 0
        %9192 = vmatprep.subr.bf16.mxu0 0
        %9193 = vmatpush1.bf16.xpose.msra.mxu0 0
        %9194 = vmatprep.subr.bf16.mxu0 %v3843
        %9195 = vmatpush1.bf16.xpose.msra.mxu0 %v3842
        %9196 = vmatprep.subr.bf16.mxu0 0
        %9197 = vmatpush2.bf16.xpose.msra.mxu0 0
        %9198 = vmatprep.subr.bf16.mxu0 0
        %9199 = vmatpush2.bf16.xpose.msra.mxu0 0
        %9200 = vmatprep.subr.bf16.mxu0 0
        %9201 = vmatpush2.bf16.xpose.msra.mxu0 0
        %9202 = vmatprep.subr.bf16.mxu0 0
        %9203 = vmatpush2.bf16.xpose.msra.mxu0 0
        %9204 = vmatprep.subr.bf16.mxu0 0
        %9205 = vmatpush2.bf16.xpose.msra.mxu0 0
        %9206 = vmatprep.subr.bf16.mxu0 0
        %9207 = vmatpush2.bf16.xpose.msra.mxu0 0
        %9208 = vmatprep.subr.bf16.mxu0 0
        %9209 = vmatpush2.bf16.xpose.msra.mxu0 0
        %9210 = vmatprep.subr.bf16.mxu0 0
        %9211 = vmatpush2.bf16.xpose.msra.mxu0 0
        %9212 = vmatprep.mubr.bf16.mxu0 %v2171
        %9213 = vmatmul.mubr.bf16.gmra.mxu0 %v2169
        %v9214 = vpop.f32.mrf.mxu0
        %v9215 = vadd.f32 %v9175, %v9214
        %v9216 = vpop.f32.mrf.mxu0
        %v9217 = vpop.f32.mrf.mxu0
        %v9218 = vpop.f32.mrf.mxu0
        %9219 = vdwg.mxu0
        %9220 = vmatprep.subr.bf16.mxu0 0
        %9221 = vmatpush1.bf16.xpose.msra.mxu0 0
        %9222 = vmatprep.subr.bf16.mxu0 0
        %9223 = vmatpush1.bf16.xpose.msra.mxu0 0
        %9224 = vmatprep.subr.bf16.mxu0 0
        %9225 = vmatpush1.bf16.xpose.msra.mxu0 0
        %9226 = vmatprep.subr.bf16.mxu0 0
        %9227 = vmatpush1.bf16.xpose.msra.mxu0 0
        %9228 = vmatprep.subr.bf16.mxu0 0
        %9229 = vmatpush1.bf16.xpose.msra.mxu0 0
        %9230 = vmatprep.subr.bf16.mxu0 0
        %9231 = vmatpush1.bf16.xpose.msra.mxu0 0
        %9232 = vmatprep.subr.bf16.mxu0 0
        %9233 = vmatpush1.bf16.xpose.msra.mxu0 0
        %9234 = vmatprep.subr.bf16.mxu0 %v3845
        %9235 = vmatpush1.bf16.xpose.msra.mxu0 %v3844
        %9236 = vmatprep.subr.bf16.mxu0 0
        %9237 = vmatpush2.bf16.xpose.msra.mxu0 0
        %9238 = vmatprep.subr.bf16.mxu0 0
        %9239 = vmatpush2.bf16.xpose.msra.mxu0 0
        %9240 = vmatprep.subr.bf16.mxu0 0
        %9241 = vmatpush2.bf16.xpose.msra.mxu0 0
        %9242 = vmatprep.subr.bf16.mxu0 0
        %9243 = vmatpush2.bf16.xpose.msra.mxu0 0
        %9244 = vmatprep.subr.bf16.mxu0 0
        %9245 = vmatpush2.bf16.xpose.msra.mxu0 0
        %9246 = vmatprep.subr.bf16.mxu0 0
        %9247 = vmatpush2.bf16.xpose.msra.mxu0 0
        %9248 = vmatprep.subr.bf16.mxu0 0
        %9249 = vmatpush2.bf16.xpose.msra.mxu0 0
        %9250 = vmatprep.subr.bf16.mxu0 0
        %9251 = vmatpush2.bf16.xpose.msra.mxu0 0
        %9252 = vmatprep.mubr.bf16.mxu0 %v2168
        %9253 = vmatmul.mubr.bf16.gmra.mxu0 %v2154
        %v9254 = vpop.f32.mrf.mxu0
        %v9255 = vadd.f32 %v9215, %v9254
        %v9256 = vpop.f32.mrf.mxu0
        %v9257 = vpop.f32.mrf.mxu0
        %v9258 = vpop.f32.mrf.mxu0
        %9259 = vdwg.mxu0
        %9260 = vmatprep.subr.bf16.mxu0 0
        %9261 = vmatpush1.bf16.xpose.msra.mxu0 0
        %9262 = vmatprep.subr.bf16.mxu0 0
        %9263 = vmatpush1.bf16.xpose.msra.mxu0 0
        %9264 = vmatprep.subr.bf16.mxu0 0
        %9265 = vmatpush1.bf16.xpose.msra.mxu0 0
        %9266 = vmatprep.subr.bf16.mxu0 0
        %9267 = vmatpush1.bf16.xpose.msra.mxu0 0
        %9268 = vmatprep.subr.bf16.mxu0 0
        %9269 = vmatpush1.bf16.xpose.msra.mxu0 0
        %9270 = vmatprep.subr.bf16.mxu0 0
        %9271 = vmatpush1.bf16.xpose.msra.mxu0 0
        %9272 = vmatprep.subr.bf16.mxu0 0
        %9273 = vmatpush1.bf16.xpose.msra.mxu0 0
        %9274 = vmatprep.subr.bf16.mxu0 %v3847
        %9275 = vmatpush1.bf16.xpose.msra.mxu0 %v3846
        %9276 = vmatprep.subr.bf16.mxu0 0
        %9277 = vmatpush2.bf16.xpose.msra.mxu0 0
        %9278 = vmatprep.subr.bf16.mxu0 0
        %9279 = vmatpush2.bf16.xpose.msra.mxu0 0
        %9280 = vmatprep.subr.bf16.mxu0 0
        %9281 = vmatpush2.bf16.xpose.msra.mxu0 0
        %9282 = vmatprep.subr.bf16.mxu0 0
        %9283 = vmatpush2.bf16.xpose.msra.mxu0 0
        %9284 = vmatprep.subr.bf16.mxu0 0
        %9285 = vmatpush2.bf16.xpose.msra.mxu0 0
        %9286 = vmatprep.subr.bf16.mxu0 0
        %9287 = vmatpush2.bf16.xpose.msra.mxu0 0
        %9288 = vmatprep.subr.bf16.mxu0 0
        %9289 = vmatpush2.bf16.xpose.msra.mxu0 0
        %9290 = vmatprep.subr.bf16.mxu0 0
        %9291 = vmatpush2.bf16.xpose.msra.mxu0 0
        %9292 = vmatprep.mubr.bf16.mxu0 %v2172
        %9293 = vmatmul.mubr.bf16.gmra.mxu0 %v2170
        %v9294 = vpop.f32.mrf.mxu0
        %v9295 = vadd.f32 %v9255, %v9294
        %v9296 = vpop.f32.mrf.mxu0
        %v9297 = vpop.f32.mrf.mxu0
        %v9298 = vpop.f32.mrf.mxu0
        %9299 = vdwg.mxu0
        %9300 = vmatprep.subr.bf16.mxu0 0
        %9301 = vmatpush1.bf16.xpose.msra.mxu0 0
        %9302 = vmatprep.subr.bf16.mxu0 0
        %9303 = vmatpush1.bf16.xpose.msra.mxu0 0
        %9304 = vmatprep.subr.bf16.mxu0 0
        %9305 = vmatpush1.bf16.xpose.msra.mxu0 0
        %9306 = vmatprep.subr.bf16.mxu0 0
        %9307 = vmatpush1.bf16.xpose.msra.mxu0 0
        %9308 = vmatprep.subr.bf16.mxu0 0
        %9309 = vmatpush1.bf16.xpose.msra.mxu0 0
        %9310 = vmatprep.subr.bf16.mxu0 0
        %9311 = vmatpush1.bf16.xpose.msra.mxu0 0
        %9312 = vmatprep.subr.bf16.mxu0 0
        %9313 = vmatpush1.bf16.xpose.msra.mxu0 0
        %9314 = vmatprep.subr.bf16.mxu0 %v3849
        %9315 = vmatpush1.bf16.xpose.msra.mxu0 %v3848
        %9316 = vmatprep.subr.bf16.mxu0 0
        %9317 = vmatpush2.bf16.xpose.msra.mxu0 0
        %9318 = vmatprep.subr.bf16.mxu0 0
        %9319 = vmatpush2.bf16.xpose.msra.mxu0 0
        %9320 = vmatprep.subr.bf16.mxu0 0
        %9321 = vmatpush2.bf16.xpose.msra.mxu0 0
        %9322 = vmatprep.subr.bf16.mxu0 0
        %9323 = vmatpush2.bf16.xpose.msra.mxu0 0
        %9324 = vmatprep.subr.bf16.mxu0 0
        %9325 = vmatpush2.bf16.xpose.msra.mxu0 0
        %9326 = vmatprep.subr.bf16.mxu0 0
        %9327 = vmatpush2.bf16.xpose.msra.mxu0 0
        %9328 = vmatprep.subr.bf16.mxu0 0
        %9329 = vmatpush2.bf16.xpose.msra.mxu0 0
        %9330 = vmatprep.subr.bf16.mxu0 0
        %9331 = vmatpush2.bf16.xpose.msra.mxu0 0
        %9332 = vmatprep.mubr.bf16.mxu0 %v2210
        %9333 = vmatmul.mubr.bf16.gmra.mxu0 %v2196
        %v9334 = vpop.f32.mrf.mxu0
        %v9335 = vadd.f32 %v9295, %v9334
        %v9336 = vpop.f32.mrf.mxu0
        %v9337 = vpop.f32.mrf.mxu0
        %v9338 = vpop.f32.mrf.mxu0
        %9339 = vdwg.mxu0
        %9340 = vmatprep.subr.bf16.mxu0 0
        %9341 = vmatpush1.bf16.xpose.msra.mxu0 0
        %9342 = vmatprep.subr.bf16.mxu0 0
        %9343 = vmatpush1.bf16.xpose.msra.mxu0 0
        %9344 = vmatprep.subr.bf16.mxu0 0
        %9345 = vmatpush1.bf16.xpose.msra.mxu0 0
        %9346 = vmatprep.subr.bf16.mxu0 0
        %9347 = vmatpush1.bf16.xpose.msra.mxu0 0
        %9348 = vmatprep.subr.bf16.mxu0 0
        %9349 = vmatpush1.bf16.xpose.msra.mxu0 0
        %9350 = vmatprep.subr.bf16.mxu0 0
        %9351 = vmatpush1.bf16.xpose.msra.mxu0 0
        %9352 = vmatprep.subr.bf16.mxu0 0
        %9353 = vmatpush1.bf16.xpose.msra.mxu0 0
        %9354 = vmatprep.subr.bf16.mxu0 %v3851
        %9355 = vmatpush1.bf16.xpose.msra.mxu0 %v3850
        %9356 = vmatprep.subr.bf16.mxu0 0
        %9357 = vmatpush2.bf16.xpose.msra.mxu0 0
        %9358 = vmatprep.subr.bf16.mxu0 0
        %9359 = vmatpush2.bf16.xpose.msra.mxu0 0
        %9360 = vmatprep.subr.bf16.mxu0 0
        %9361 = vmatpush2.bf16.xpose.msra.mxu0 0
        %9362 = vmatprep.subr.bf16.mxu0 0
        %9363 = vmatpush2.bf16.xpose.msra.mxu0 0
        %9364 = vmatprep.subr.bf16.mxu0 0
        %9365 = vmatpush2.bf16.xpose.msra.mxu0 0
        %9366 = vmatprep.subr.bf16.mxu0 0
        %9367 = vmatpush2.bf16.xpose.msra.mxu0 0
        %9368 = vmatprep.subr.bf16.mxu0 0
        %9369 = vmatpush2.bf16.xpose.msra.mxu0 0
        %9370 = vmatprep.subr.bf16.mxu0 0
        %9371 = vmatpush2.bf16.xpose.msra.mxu0 0
        %9372 = vmatprep.mubr.bf16.mxu0 %v2220
        %9373 = vmatmul.mubr.bf16.gmra.mxu0 %v2218
        %v9374 = vpop.f32.mrf.mxu0
        %v9375 = vadd.f32 %v9335, %v9374
        %v9376 = vpop.f32.mrf.mxu0
        %v9377 = vpop.f32.mrf.mxu0
        %v9378 = vpop.f32.mrf.mxu0
        %9379 = vdwg.mxu0
        %9380 = vmatprep.subr.bf16.mxu0 0
        %9381 = vmatpush1.bf16.xpose.msra.mxu0 0
        %9382 = vmatprep.subr.bf16.mxu0 0
        %9383 = vmatpush1.bf16.xpose.msra.mxu0 0
        %9384 = vmatprep.subr.bf16.mxu0 0
        %9385 = vmatpush1.bf16.xpose.msra.mxu0 0
        %9386 = vmatprep.subr.bf16.mxu0 0
        %9387 = vmatpush1.bf16.xpose.msra.mxu0 0
        %9388 = vmatprep.subr.bf16.mxu0 0
        %9389 = vmatpush1.bf16.xpose.msra.mxu0 0
        %9390 = vmatprep.subr.bf16.mxu0 0
        %9391 = vmatpush1.bf16.xpose.msra.mxu0 0
        %9392 = vmatprep.subr.bf16.mxu0 0
        %9393 = vmatpush1.bf16.xpose.msra.mxu0 0
        %9394 = vmatprep.subr.bf16.mxu0 %v3853
        %9395 = vmatpush1.bf16.xpose.msra.mxu0 %v3852
        %9396 = vmatprep.subr.bf16.mxu0 0
        %9397 = vmatpush2.bf16.xpose.msra.mxu0 0
        %9398 = vmatprep.subr.bf16.mxu0 0
        %9399 = vmatpush2.bf16.xpose.msra.mxu0 0
        %9400 = vmatprep.subr.bf16.mxu0 0
        %9401 = vmatpush2.bf16.xpose.msra.mxu0 0
        %9402 = vmatprep.subr.bf16.mxu0 0
        %9403 = vmatpush2.bf16.xpose.msra.mxu0 0
        %9404 = vmatprep.subr.bf16.mxu0 0
        %9405 = vmatpush2.bf16.xpose.msra.mxu0 0
        %9406 = vmatprep.subr.bf16.mxu0 0
        %9407 = vmatpush2.bf16.xpose.msra.mxu0 0
        %9408 = vmatprep.subr.bf16.mxu0 0
        %9409 = vmatpush2.bf16.xpose.msra.mxu0 0
        %9410 = vmatprep.subr.bf16.mxu0 0
        %9411 = vmatpush2.bf16.xpose.msra.mxu0 0
        %9412 = vmatprep.mubr.bf16.mxu0 %v2217
        %9413 = vmatmul.mubr.bf16.gmra.mxu0 %v2203
        %v9414 = vpop.f32.mrf.mxu0
        %v9415 = vadd.f32 %v9375, %v9414
        %v9416 = vpop.f32.mrf.mxu0
        %v9417 = vpop.f32.mrf.mxu0
        %v9418 = vpop.f32.mrf.mxu0
        %9419 = vdwg.mxu0
        %9420 = vmatprep.subr.bf16.mxu0 0
        %9421 = vmatpush1.bf16.xpose.msra.mxu0 0
        %9422 = vmatprep.subr.bf16.mxu0 0
        %9423 = vmatpush1.bf16.xpose.msra.mxu0 0
        %9424 = vmatprep.subr.bf16.mxu0 0
        %9425 = vmatpush1.bf16.xpose.msra.mxu0 0
        %9426 = vmatprep.subr.bf16.mxu0 0
        %9427 = vmatpush1.bf16.xpose.msra.mxu0 0
        %9428 = vmatprep.subr.bf16.mxu0 0
        %9429 = vmatpush1.bf16.xpose.msra.mxu0 0
        %9430 = vmatprep.subr.bf16.mxu0 0
        %9431 = vmatpush1.bf16.xpose.msra.mxu0 0
        %9432 = vmatprep.subr.bf16.mxu0 0
        %9433 = vmatpush1.bf16.xpose.msra.mxu0 0
        %9434 = vmatprep.subr.bf16.mxu0 %v3855
        %9435 = vmatpush1.bf16.xpose.msra.mxu0 %v3854
        %9436 = vmatprep.subr.bf16.mxu0 0
        %9437 = vmatpush2.bf16.xpose.msra.mxu0 0
        %9438 = vmatprep.subr.bf16.mxu0 0
        %9439 = vmatpush2.bf16.xpose.msra.mxu0 0
        %9440 = vmatprep.subr.bf16.mxu0 0
        %9441 = vmatpush2.bf16.xpose.msra.mxu0 0
        %9442 = vmatprep.subr.bf16.mxu0 0
        %9443 = vmatpush2.bf16.xpose.msra.mxu0 0
        %9444 = vmatprep.subr.bf16.mxu0 0
        %9445 = vmatpush2.bf16.xpose.msra.mxu0 0
        %9446 = vmatprep.subr.bf16.mxu0 0
        %9447 = vmatpush2.bf16.xpose.msra.mxu0 0
        %9448 = vmatprep.subr.bf16.mxu0 0
        %9449 = vmatpush2.bf16.xpose.msra.mxu0 0
        %9450 = vmatprep.subr.bf16.mxu0 0
        %9451 = vmatpush2.bf16.xpose.msra.mxu0 0
        %9452 = vmatprep.mubr.bf16.mxu0 %v2221
        %9453 = vmatmul.mubr.bf16.gmra.mxu0 %v2219
        %v9454 = vpop.f32.mrf.mxu0
        %v9455 = vadd.f32 %v9415, %v9454
        %v9456 = vpop.f32.mrf.mxu0
        %v9457 = vpop.f32.mrf.mxu0
        %v9458 = vpop.f32.mrf.mxu0
        %9459 = vdwg.mxu0
        %9460 = vmatprep.subr.bf16.mxu0 0
        %9461 = vmatpush1.bf16.xpose.msra.mxu0 0
        %9462 = vmatprep.subr.bf16.mxu0 0
        %9463 = vmatpush1.bf16.xpose.msra.mxu0 0
        %9464 = vmatprep.subr.bf16.mxu0 0
        %9465 = vmatpush1.bf16.xpose.msra.mxu0 0
        %9466 = vmatprep.subr.bf16.mxu0 0
        %9467 = vmatpush1.bf16.xpose.msra.mxu0 0
        %9468 = vmatprep.subr.bf16.mxu0 0
        %9469 = vmatpush1.bf16.xpose.msra.mxu0 0
        %9470 = vmatprep.subr.bf16.mxu0 0
        %9471 = vmatpush1.bf16.xpose.msra.mxu0 0
        %9472 = vmatprep.subr.bf16.mxu0 0
        %9473 = vmatpush1.bf16.xpose.msra.mxu0 0
        %9474 = vmatprep.subr.bf16.mxu0 %v3857
        %9475 = vmatpush1.bf16.xpose.msra.mxu0 %v3856
        %9476 = vmatprep.subr.bf16.mxu0 0
        %9477 = vmatpush2.bf16.xpose.msra.mxu0 0
        %9478 = vmatprep.subr.bf16.mxu0 0
        %9479 = vmatpush2.bf16.xpose.msra.mxu0 0
        %9480 = vmatprep.subr.bf16.mxu0 0
        %9481 = vmatpush2.bf16.xpose.msra.mxu0 0
        %9482 = vmatprep.subr.bf16.mxu0 0
        %9483 = vmatpush2.bf16.xpose.msra.mxu0 0
        %9484 = vmatprep.subr.bf16.mxu0 0
        %9485 = vmatpush2.bf16.xpose.msra.mxu0 0
        %9486 = vmatprep.subr.bf16.mxu0 0
        %9487 = vmatpush2.bf16.xpose.msra.mxu0 0
        %9488 = vmatprep.subr.bf16.mxu0 0
        %9489 = vmatpush2.bf16.xpose.msra.mxu0 0
        %9490 = vmatprep.subr.bf16.mxu0 0
        %9491 = vmatpush2.bf16.xpose.msra.mxu0 0
        %9492 = vmatprep.mubr.bf16.mxu0 %v2259
        %9493 = vmatmul.mubr.bf16.gmra.mxu0 %v2245
        %v9494 = vpop.f32.mrf.mxu0
        %v9495 = vadd.f32 %v9455, %v9494
        %v9496 = vpop.f32.mrf.mxu0
        %v9497 = vpop.f32.mrf.mxu0
        %v9498 = vpop.f32.mrf.mxu0
        %9499 = vdwg.mxu0
        %9500 = vmatprep.subr.bf16.mxu0 0
        %9501 = vmatpush1.bf16.xpose.msra.mxu0 0
        %9502 = vmatprep.subr.bf16.mxu0 0
        %9503 = vmatpush1.bf16.xpose.msra.mxu0 0
        %9504 = vmatprep.subr.bf16.mxu0 0
        %9505 = vmatpush1.bf16.xpose.msra.mxu0 0
        %9506 = vmatprep.subr.bf16.mxu0 0
        %9507 = vmatpush1.bf16.xpose.msra.mxu0 0
        %9508 = vmatprep.subr.bf16.mxu0 0
        %9509 = vmatpush1.bf16.xpose.msra.mxu0 0
        %9510 = vmatprep.subr.bf16.mxu0 0
        %9511 = vmatpush1.bf16.xpose.msra.mxu0 0
        %9512 = vmatprep.subr.bf16.mxu0 0
        %9513 = vmatpush1.bf16.xpose.msra.mxu0 0
        %9514 = vmatprep.subr.bf16.mxu0 %v3859
        %9515 = vmatpush1.bf16.xpose.msra.mxu0 %v3858
        %9516 = vmatprep.subr.bf16.mxu0 0
        %9517 = vmatpush2.bf16.xpose.msra.mxu0 0
        %9518 = vmatprep.subr.bf16.mxu0 0
        %9519 = vmatpush2.bf16.xpose.msra.mxu0 0
        %9520 = vmatprep.subr.bf16.mxu0 0
        %9521 = vmatpush2.bf16.xpose.msra.mxu0 0
        %9522 = vmatprep.subr.bf16.mxu0 0
        %9523 = vmatpush2.bf16.xpose.msra.mxu0 0
        %9524 = vmatprep.subr.bf16.mxu0 0
        %9525 = vmatpush2.bf16.xpose.msra.mxu0 0
        %9526 = vmatprep.subr.bf16.mxu0 0
        %9527 = vmatpush2.bf16.xpose.msra.mxu0 0
        %9528 = vmatprep.subr.bf16.mxu0 0
        %9529 = vmatpush2.bf16.xpose.msra.mxu0 0
        %9530 = vmatprep.subr.bf16.mxu0 0
        %9531 = vmatpush2.bf16.xpose.msra.mxu0 0
        %9532 = vmatprep.mubr.bf16.mxu0 %v2269
        %9533 = vmatmul.mubr.bf16.gmra.mxu0 %v2267
        %v9534 = vpop.f32.mrf.mxu0
        %v9535 = vadd.f32 %v9495, %v9534
        %v9536 = vpop.f32.mrf.mxu0
        %v9537 = vpop.f32.mrf.mxu0
        %v9538 = vpop.f32.mrf.mxu0
        %9539 = vdwg.mxu0
        %9540 = vmatprep.subr.bf16.mxu0 0
        %9541 = vmatpush1.bf16.xpose.msra.mxu0 0
        %9542 = vmatprep.subr.bf16.mxu0 0
        %9543 = vmatpush1.bf16.xpose.msra.mxu0 0
        %9544 = vmatprep.subr.bf16.mxu0 0
        %9545 = vmatpush1.bf16.xpose.msra.mxu0 0
        %9546 = vmatprep.subr.bf16.mxu0 0
        %9547 = vmatpush1.bf16.xpose.msra.mxu0 0
        %9548 = vmatprep.subr.bf16.mxu0 0
        %9549 = vmatpush1.bf16.xpose.msra.mxu0 0
        %9550 = vmatprep.subr.bf16.mxu0 0
        %9551 = vmatpush1.bf16.xpose.msra.mxu0 0
        %9552 = vmatprep.subr.bf16.mxu0 0
        %9553 = vmatpush1.bf16.xpose.msra.mxu0 0
        %9554 = vmatprep.subr.bf16.mxu0 %v3861
        %9555 = vmatpush1.bf16.xpose.msra.mxu0 %v3860
        %9556 = vmatprep.subr.bf16.mxu0 0
        %9557 = vmatpush2.bf16.xpose.msra.mxu0 0
        %9558 = vmatprep.subr.bf16.mxu0 0
        %9559 = vmatpush2.bf16.xpose.msra.mxu0 0
        %9560 = vmatprep.subr.bf16.mxu0 0
        %9561 = vmatpush2.bf16.xpose.msra.mxu0 0
        %9562 = vmatprep.subr.bf16.mxu0 0
        %9563 = vmatpush2.bf16.xpose.msra.mxu0 0
        %9564 = vmatprep.subr.bf16.mxu0 0
        %9565 = vmatpush2.bf16.xpose.msra.mxu0 0
        %9566 = vmatprep.subr.bf16.mxu0 0
        %9567 = vmatpush2.bf16.xpose.msra.mxu0 0
        %9568 = vmatprep.subr.bf16.mxu0 0
        %9569 = vmatpush2.bf16.xpose.msra.mxu0 0
        %9570 = vmatprep.subr.bf16.mxu0 0
        %9571 = vmatpush2.bf16.xpose.msra.mxu0 0
        %9572 = vmatprep.mubr.bf16.mxu0 %v2266
        %9573 = vmatmul.mubr.bf16.gmra.mxu0 %v2252
        %v9574 = vpop.f32.mrf.mxu0
        %v9575 = vadd.f32 %v9535, %v9574
        %v9576 = vpop.f32.mrf.mxu0
        %v9577 = vpop.f32.mrf.mxu0
        %v9578 = vpop.f32.mrf.mxu0
        %9579 = vdwg.mxu0
        %9580 = vmatprep.subr.bf16.mxu0 0
        %9581 = vmatpush1.bf16.xpose.msra.mxu0 0
        %9582 = vmatprep.subr.bf16.mxu0 0
        %9583 = vmatpush1.bf16.xpose.msra.mxu0 0
        %9584 = vmatprep.subr.bf16.mxu0 0
        %9585 = vmatpush1.bf16.xpose.msra.mxu0 0
        %9586 = vmatprep.subr.bf16.mxu0 0
        %9587 = vmatpush1.bf16.xpose.msra.mxu0 0
        %9588 = vmatprep.subr.bf16.mxu0 0
        %9589 = vmatpush1.bf16.xpose.msra.mxu0 0
        %9590 = vmatprep.subr.bf16.mxu0 0
        %9591 = vmatpush1.bf16.xpose.msra.mxu0 0
        %9592 = vmatprep.subr.bf16.mxu0 0
        %9593 = vmatpush1.bf16.xpose.msra.mxu0 0
        %9594 = vmatprep.subr.bf16.mxu0 %v3863
        %9595 = vmatpush1.bf16.xpose.msra.mxu0 %v3862
        %9596 = vmatprep.subr.bf16.mxu0 0
        %9597 = vmatpush2.bf16.xpose.msra.mxu0 0
        %9598 = vmatprep.subr.bf16.mxu0 0
        %9599 = vmatpush2.bf16.xpose.msra.mxu0 0
        %9600 = vmatprep.subr.bf16.mxu0 0
        %9601 = vmatpush2.bf16.xpose.msra.mxu0 0
        %9602 = vmatprep.subr.bf16.mxu0 0
        %9603 = vmatpush2.bf16.xpose.msra.mxu0 0
        %9604 = vmatprep.subr.bf16.mxu0 0
        %9605 = vmatpush2.bf16.xpose.msra.mxu0 0
        %9606 = vmatprep.subr.bf16.mxu0 0
        %9607 = vmatpush2.bf16.xpose.msra.mxu0 0
        %9608 = vmatprep.subr.bf16.mxu0 0
        %9609 = vmatpush2.bf16.xpose.msra.mxu0 0
        %9610 = vmatprep.subr.bf16.mxu0 0
        %9611 = vmatpush2.bf16.xpose.msra.mxu0 0
        %9612 = vmatprep.mubr.bf16.mxu0 %v2270
        %9613 = vmatmul.mubr.bf16.gmra.mxu0 %v2268
        %v9614 = vpop.f32.mrf.mxu0
        %v9615 = vadd.f32 %v9575, %v9614
        %v9616 = vpop.f32.mrf.mxu0
        %v9617 = vpop.f32.mrf.mxu0
        %v9618 = vpop.f32.mrf.mxu0
        %9619 = vdwg.mxu0
        %9620 = vmatprep.subr.bf16.mxu0 0
        %9621 = vmatpush1.bf16.xpose.msra.mxu0 0
        %9622 = vmatprep.subr.bf16.mxu0 0
        %9623 = vmatpush1.bf16.xpose.msra.mxu0 0
        %9624 = vmatprep.subr.bf16.mxu0 0
        %9625 = vmatpush1.bf16.xpose.msra.mxu0 0
        %9626 = vmatprep.subr.bf16.mxu0 0
        %9627 = vmatpush1.bf16.xpose.msra.mxu0 0
        %9628 = vmatprep.subr.bf16.mxu0 0
        %9629 = vmatpush1.bf16.xpose.msra.mxu0 0
        %9630 = vmatprep.subr.bf16.mxu0 0
        %9631 = vmatpush1.bf16.xpose.msra.mxu0 0
        %9632 = vmatprep.subr.bf16.mxu0 0
        %9633 = vmatpush1.bf16.xpose.msra.mxu0 0
        %9634 = vmatprep.subr.bf16.mxu0 %v3865
        %9635 = vmatpush1.bf16.xpose.msra.mxu0 %v3864
        %9636 = vmatprep.subr.bf16.mxu0 0
        %9637 = vmatpush2.bf16.xpose.msra.mxu0 0
        %9638 = vmatprep.subr.bf16.mxu0 0
        %9639 = vmatpush2.bf16.xpose.msra.mxu0 0
        %9640 = vmatprep.subr.bf16.mxu0 0
        %9641 = vmatpush2.bf16.xpose.msra.mxu0 0
        %9642 = vmatprep.subr.bf16.mxu0 0
        %9643 = vmatpush2.bf16.xpose.msra.mxu0 0
        %9644 = vmatprep.subr.bf16.mxu0 0
        %9645 = vmatpush2.bf16.xpose.msra.mxu0 0
        %9646 = vmatprep.subr.bf16.mxu0 0
        %9647 = vmatpush2.bf16.xpose.msra.mxu0 0
        %9648 = vmatprep.subr.bf16.mxu0 0
        %9649 = vmatpush2.bf16.xpose.msra.mxu0 0
        %9650 = vmatprep.subr.bf16.mxu0 0
        %9651 = vmatpush2.bf16.xpose.msra.mxu0 0
        %9652 = vmatprep.mubr.bf16.mxu0 %v2308
        %9653 = vmatmul.mubr.bf16.gmra.mxu0 %v2294
        %v9654 = vpop.f32.mrf.mxu0
        %v9655 = vadd.f32 %v9615, %v9654
        %v9656 = vpop.f32.mrf.mxu0
        %v9657 = vpop.f32.mrf.mxu0
        %v9658 = vpop.f32.mrf.mxu0
        %9659 = vdwg.mxu0
        %9660 = vmatprep.subr.bf16.mxu0 0
        %9661 = vmatpush1.bf16.xpose.msra.mxu0 0
        %9662 = vmatprep.subr.bf16.mxu0 0
        %9663 = vmatpush1.bf16.xpose.msra.mxu0 0
        %9664 = vmatprep.subr.bf16.mxu0 0
        %9665 = vmatpush1.bf16.xpose.msra.mxu0 0
        %9666 = vmatprep.subr.bf16.mxu0 0
        %9667 = vmatpush1.bf16.xpose.msra.mxu0 0
        %9668 = vmatprep.subr.bf16.mxu0 0
        %9669 = vmatpush1.bf16.xpose.msra.mxu0 0
        %9670 = vmatprep.subr.bf16.mxu0 0
        %9671 = vmatpush1.bf16.xpose.msra.mxu0 0
        %9672 = vmatprep.subr.bf16.mxu0 0
        %9673 = vmatpush1.bf16.xpose.msra.mxu0 0
        %9674 = vmatprep.subr.bf16.mxu0 %v3867
        %9675 = vmatpush1.bf16.xpose.msra.mxu0 %v3866
        %9676 = vmatprep.subr.bf16.mxu0 0
        %9677 = vmatpush2.bf16.xpose.msra.mxu0 0
        %9678 = vmatprep.subr.bf16.mxu0 0
        %9679 = vmatpush2.bf16.xpose.msra.mxu0 0
        %9680 = vmatprep.subr.bf16.mxu0 0
        %9681 = vmatpush2.bf16.xpose.msra.mxu0 0
        %9682 = vmatprep.subr.bf16.mxu0 0
        %9683 = vmatpush2.bf16.xpose.msra.mxu0 0
        %9684 = vmatprep.subr.bf16.mxu0 0
        %9685 = vmatpush2.bf16.xpose.msra.mxu0 0
        %9686 = vmatprep.subr.bf16.mxu0 0
        %9687 = vmatpush2.bf16.xpose.msra.mxu0 0
        %9688 = vmatprep.subr.bf16.mxu0 0
        %9689 = vmatpush2.bf16.xpose.msra.mxu0 0
        %9690 = vmatprep.subr.bf16.mxu0 0
        %9691 = vmatpush2.bf16.xpose.msra.mxu0 0
        %9692 = vmatprep.mubr.bf16.mxu0 %v2318
        %9693 = vmatmul.mubr.bf16.gmra.mxu0 %v2316
        %v9694 = vpop.f32.mrf.mxu0
        %v9695 = vadd.f32 %v9655, %v9694
        %v9696 = vpop.f32.mrf.mxu0
        %v9697 = vpop.f32.mrf.mxu0
        %v9698 = vpop.f32.mrf.mxu0
        %9699 = vdwg.mxu0
        %9700 = vmatprep.subr.bf16.mxu0 0
        %9701 = vmatpush1.bf16.xpose.msra.mxu0 0
        %9702 = vmatprep.subr.bf16.mxu0 0
        %9703 = vmatpush1.bf16.xpose.msra.mxu0 0
        %9704 = vmatprep.subr.bf16.mxu0 0
        %9705 = vmatpush1.bf16.xpose.msra.mxu0 0
        %9706 = vmatprep.subr.bf16.mxu0 0
        %9707 = vmatpush1.bf16.xpose.msra.mxu0 0
        %9708 = vmatprep.subr.bf16.mxu0 0
        %9709 = vmatpush1.bf16.xpose.msra.mxu0 0
        %9710 = vmatprep.subr.bf16.mxu0 0
        %9711 = vmatpush1.bf16.xpose.msra.mxu0 0
        %9712 = vmatprep.subr.bf16.mxu0 0
        %9713 = vmatpush1.bf16.xpose.msra.mxu0 0
        %9714 = vmatprep.subr.bf16.mxu0 %v3869
        %9715 = vmatpush1.bf16.xpose.msra.mxu0 %v3868
        %9716 = vmatprep.subr.bf16.mxu0 0
        %9717 = vmatpush2.bf16.xpose.msra.mxu0 0
        %9718 = vmatprep.subr.bf16.mxu0 0
        %9719 = vmatpush2.bf16.xpose.msra.mxu0 0
        %9720 = vmatprep.subr.bf16.mxu0 0
        %9721 = vmatpush2.bf16.xpose.msra.mxu0 0
        %9722 = vmatprep.subr.bf16.mxu0 0
        %9723 = vmatpush2.bf16.xpose.msra.mxu0 0
        %9724 = vmatprep.subr.bf16.mxu0 0
        %9725 = vmatpush2.bf16.xpose.msra.mxu0 0
        %9726 = vmatprep.subr.bf16.mxu0 0
        %9727 = vmatpush2.bf16.xpose.msra.mxu0 0
        %9728 = vmatprep.subr.bf16.mxu0 0
        %9729 = vmatpush2.bf16.xpose.msra.mxu0 0
        %9730 = vmatprep.subr.bf16.mxu0 0
        %9731 = vmatpush2.bf16.xpose.msra.mxu0 0
        %9732 = vmatprep.mubr.bf16.mxu0 %v2315
        %9733 = vmatmul.mubr.bf16.gmra.mxu0 %v2301
        %v9734 = vpop.f32.mrf.mxu0
        %v9735 = vadd.f32 %v9695, %v9734
        %v9736 = vpop.f32.mrf.mxu0
        %v9737 = vpop.f32.mrf.mxu0
        %v9738 = vpop.f32.mrf.mxu0
        %9739 = vdwg.mxu0
        %9740 = vmatprep.subr.bf16.mxu0 0
        %9741 = vmatpush1.bf16.xpose.msra.mxu0 0
        %9742 = vmatprep.subr.bf16.mxu0 0
        %9743 = vmatpush1.bf16.xpose.msra.mxu0 0
        %9744 = vmatprep.subr.bf16.mxu0 0
        %9745 = vmatpush1.bf16.xpose.msra.mxu0 0
        %9746 = vmatprep.subr.bf16.mxu0 0
        %9747 = vmatpush1.bf16.xpose.msra.mxu0 0
        %9748 = vmatprep.subr.bf16.mxu0 0
        %9749 = vmatpush1.bf16.xpose.msra.mxu0 0
        %9750 = vmatprep.subr.bf16.mxu0 0
        %9751 = vmatpush1.bf16.xpose.msra.mxu0 0
        %9752 = vmatprep.subr.bf16.mxu0 0
        %9753 = vmatpush1.bf16.xpose.msra.mxu0 0
        %9754 = vmatprep.subr.bf16.mxu0 %v3871
        %9755 = vmatpush1.bf16.xpose.msra.mxu0 %v3870
        %9756 = vmatprep.subr.bf16.mxu0 0
        %9757 = vmatpush2.bf16.xpose.msra.mxu0 0
        %9758 = vmatprep.subr.bf16.mxu0 0
        %9759 = vmatpush2.bf16.xpose.msra.mxu0 0
        %9760 = vmatprep.subr.bf16.mxu0 0
        %9761 = vmatpush2.bf16.xpose.msra.mxu0 0
        %9762 = vmatprep.subr.bf16.mxu0 0
        %9763 = vmatpush2.bf16.xpose.msra.mxu0 0
        %9764 = vmatprep.subr.bf16.mxu0 0
        %9765 = vmatpush2.bf16.xpose.msra.mxu0 0
        %9766 = vmatprep.subr.bf16.mxu0 0
        %9767 = vmatpush2.bf16.xpose.msra.mxu0 0
        %9768 = vmatprep.subr.bf16.mxu0 0
        %9769 = vmatpush2.bf16.xpose.msra.mxu0 0
        %9770 = vmatprep.subr.bf16.mxu0 0
        %9771 = vmatpush2.bf16.xpose.msra.mxu0 0
        %9772 = vmatprep.mubr.bf16.mxu0 %v2319
        %9773 = vmatmul.mubr.bf16.gmra.mxu0 %v2317
        %v9774 = vpop.f32.mrf.mxu0
        %v9775 = vadd.f32 %v9735, %v9774
        %v9776 = vpop.f32.mrf.mxu0
        %v9777 = vpop.f32.mrf.mxu0
        %v9778 = vpop.f32.mrf.mxu0
        %9779 = vdwg.mxu0
        %9780 = vmatprep.subr.bf16.mxu0 0
        %9781 = vmatpush1.bf16.xpose.msra.mxu0 0
        %9782 = vmatprep.subr.bf16.mxu0 0
        %9783 = vmatpush1.bf16.xpose.msra.mxu0 0
        %9784 = vmatprep.subr.bf16.mxu0 0
        %9785 = vmatpush1.bf16.xpose.msra.mxu0 0
        %9786 = vmatprep.subr.bf16.mxu0 0
        %9787 = vmatpush1.bf16.xpose.msra.mxu0 0
        %9788 = vmatprep.subr.bf16.mxu0 0
        %9789 = vmatpush1.bf16.xpose.msra.mxu0 0
        %9790 = vmatprep.subr.bf16.mxu0 0
        %9791 = vmatpush1.bf16.xpose.msra.mxu0 0
        %9792 = vmatprep.subr.bf16.mxu0 0
        %9793 = vmatpush1.bf16.xpose.msra.mxu0 0
        %9794 = vmatprep.subr.bf16.mxu0 %v3873
        %9795 = vmatpush1.bf16.xpose.msra.mxu0 %v3872
        %9796 = vmatprep.subr.bf16.mxu0 0
        %9797 = vmatpush2.bf16.xpose.msra.mxu0 0
        %9798 = vmatprep.subr.bf16.mxu0 0
        %9799 = vmatpush2.bf16.xpose.msra.mxu0 0
        %9800 = vmatprep.subr.bf16.mxu0 0
        %9801 = vmatpush2.bf16.xpose.msra.mxu0 0
        %9802 = vmatprep.subr.bf16.mxu0 0
        %9803 = vmatpush2.bf16.xpose.msra.mxu0 0
        %9804 = vmatprep.subr.bf16.mxu0 0
        %9805 = vmatpush2.bf16.xpose.msra.mxu0 0
        %9806 = vmatprep.subr.bf16.mxu0 0
        %9807 = vmatpush2.bf16.xpose.msra.mxu0 0
        %9808 = vmatprep.subr.bf16.mxu0 0
        %9809 = vmatpush2.bf16.xpose.msra.mxu0 0
        %9810 = vmatprep.subr.bf16.mxu0 0
        %9811 = vmatpush2.bf16.xpose.msra.mxu0 0
        %9812 = vmatprep.mubr.bf16.mxu0 %v2357
        %9813 = vmatmul.mubr.bf16.gmra.mxu0 %v2343
        %v9814 = vpop.f32.mrf.mxu0
        %v9815 = vadd.f32 %v9775, %v9814
        %v9816 = vpop.f32.mrf.mxu0
        %v9817 = vpop.f32.mrf.mxu0
        %v9818 = vpop.f32.mrf.mxu0
        %9819 = vdwg.mxu0
        %9820 = vmatprep.subr.bf16.mxu0 0
        %9821 = vmatpush1.bf16.xpose.msra.mxu0 0
        %9822 = vmatprep.subr.bf16.mxu0 0
        %9823 = vmatpush1.bf16.xpose.msra.mxu0 0
        %9824 = vmatprep.subr.bf16.mxu0 0
        %9825 = vmatpush1.bf16.xpose.msra.mxu0 0
        %9826 = vmatprep.subr.bf16.mxu0 0
        %9827 = vmatpush1.bf16.xpose.msra.mxu0 0
        %9828 = vmatprep.subr.bf16.mxu0 0
        %9829 = vmatpush1.bf16.xpose.msra.mxu0 0
        %9830 = vmatprep.subr.bf16.mxu0 0
        %9831 = vmatpush1.bf16.xpose.msra.mxu0 0
        %9832 = vmatprep.subr.bf16.mxu0 0
        %9833 = vmatpush1.bf16.xpose.msra.mxu0 0
        %9834 = vmatprep.subr.bf16.mxu0 %v3875
        %9835 = vmatpush1.bf16.xpose.msra.mxu0 %v3874
        %9836 = vmatprep.subr.bf16.mxu0 0
        %9837 = vmatpush2.bf16.xpose.msra.mxu0 0
        %9838 = vmatprep.subr.bf16.mxu0 0
        %9839 = vmatpush2.bf16.xpose.msra.mxu0 0
        %9840 = vmatprep.subr.bf16.mxu0 0
        %9841 = vmatpush2.bf16.xpose.msra.mxu0 0
        %9842 = vmatprep.subr.bf16.mxu0 0
        %9843 = vmatpush2.bf16.xpose.msra.mxu0 0
        %9844 = vmatprep.subr.bf16.mxu0 0
        %9845 = vmatpush2.bf16.xpose.msra.mxu0 0
        %9846 = vmatprep.subr.bf16.mxu0 0
        %9847 = vmatpush2.bf16.xpose.msra.mxu0 0
        %9848 = vmatprep.subr.bf16.mxu0 0
        %9849 = vmatpush2.bf16.xpose.msra.mxu0 0
        %9850 = vmatprep.subr.bf16.mxu0 0
        %9851 = vmatpush2.bf16.xpose.msra.mxu0 0
        %9852 = vmatprep.mubr.bf16.mxu0 %v2367
        %9853 = vmatmul.mubr.bf16.gmra.mxu0 %v2365
        %v9854 = vpop.f32.mrf.mxu0
        %v9855 = vadd.f32 %v9815, %v9854
        %v9856 = vpop.f32.mrf.mxu0
        %v9857 = vpop.f32.mrf.mxu0
        %v9858 = vpop.f32.mrf.mxu0
        %9859 = vdwg.mxu0
        %9860 = vmatprep.subr.bf16.mxu0 0
        %9861 = vmatpush1.bf16.xpose.msra.mxu0 0
        %9862 = vmatprep.subr.bf16.mxu0 0
        %9863 = vmatpush1.bf16.xpose.msra.mxu0 0
        %9864 = vmatprep.subr.bf16.mxu0 0
        %9865 = vmatpush1.bf16.xpose.msra.mxu0 0
        %9866 = vmatprep.subr.bf16.mxu0 0
        %9867 = vmatpush1.bf16.xpose.msra.mxu0 0
        %9868 = vmatprep.subr.bf16.mxu0 0
        %9869 = vmatpush1.bf16.xpose.msra.mxu0 0
        %9870 = vmatprep.subr.bf16.mxu0 0
        %9871 = vmatpush1.bf16.xpose.msra.mxu0 0
        %9872 = vmatprep.subr.bf16.mxu0 0
        %9873 = vmatpush1.bf16.xpose.msra.mxu0 0
        %9874 = vmatprep.subr.bf16.mxu0 %v3877
        %9875 = vmatpush1.bf16.xpose.msra.mxu0 %v3876
        %9876 = vmatprep.subr.bf16.mxu0 0
        %9877 = vmatpush2.bf16.xpose.msra.mxu0 0
        %9878 = vmatprep.subr.bf16.mxu0 0
        %9879 = vmatpush2.bf16.xpose.msra.mxu0 0
        %9880 = vmatprep.subr.bf16.mxu0 0
        %9881 = vmatpush2.bf16.xpose.msra.mxu0 0
        %9882 = vmatprep.subr.bf16.mxu0 0
        %9883 = vmatpush2.bf16.xpose.msra.mxu0 0
        %9884 = vmatprep.subr.bf16.mxu0 0
        %9885 = vmatpush2.bf16.xpose.msra.mxu0 0
        %9886 = vmatprep.subr.bf16.mxu0 0
        %9887 = vmatpush2.bf16.xpose.msra.mxu0 0
        %9888 = vmatprep.subr.bf16.mxu0 0
        %9889 = vmatpush2.bf16.xpose.msra.mxu0 0
        %9890 = vmatprep.subr.bf16.mxu0 0
        %9891 = vmatpush2.bf16.xpose.msra.mxu0 0
        %9892 = vmatprep.mubr.bf16.mxu0 %v2364
        %9893 = vmatmul.mubr.bf16.gmra.mxu0 %v2350
        %v9894 = vpop.f32.mrf.mxu0
        %v9895 = vadd.f32 %v9855, %v9894
        %v9896 = vpop.f32.mrf.mxu0
        %v9897 = vpop.f32.mrf.mxu0
        %v9898 = vpop.f32.mrf.mxu0
        %9899 = vdwg.mxu0
        %9900 = vmatprep.subr.bf16.mxu0 0
        %9901 = vmatpush1.bf16.xpose.msra.mxu0 0
        %9902 = vmatprep.subr.bf16.mxu0 0
        %9903 = vmatpush1.bf16.xpose.msra.mxu0 0
        %9904 = vmatprep.subr.bf16.mxu0 0
        %9905 = vmatpush1.bf16.xpose.msra.mxu0 0
        %9906 = vmatprep.subr.bf16.mxu0 0
        %9907 = vmatpush1.bf16.xpose.msra.mxu0 0
        %9908 = vmatprep.subr.bf16.mxu0 0
        %9909 = vmatpush1.bf16.xpose.msra.mxu0 0
        %9910 = vmatprep.subr.bf16.mxu0 0
        %9911 = vmatpush1.bf16.xpose.msra.mxu0 0
        %9912 = vmatprep.subr.bf16.mxu0 0
        %9913 = vmatpush1.bf16.xpose.msra.mxu0 0
        %9914 = vmatprep.subr.bf16.mxu0 %v3879
        %9915 = vmatpush1.bf16.xpose.msra.mxu0 %v3878
        %9916 = vmatprep.subr.bf16.mxu0 0
        %9917 = vmatpush2.bf16.xpose.msra.mxu0 0
        %9918 = vmatprep.subr.bf16.mxu0 0
        %9919 = vmatpush2.bf16.xpose.msra.mxu0 0
        %9920 = vmatprep.subr.bf16.mxu0 0
        %9921 = vmatpush2.bf16.xpose.msra.mxu0 0
        %9922 = vmatprep.subr.bf16.mxu0 0
        %9923 = vmatpush2.bf16.xpose.msra.mxu0 0
        %9924 = vmatprep.subr.bf16.mxu0 0
        %9925 = vmatpush2.bf16.xpose.msra.mxu0 0
        %9926 = vmatprep.subr.bf16.mxu0 0
        %9927 = vmatpush2.bf16.xpose.msra.mxu0 0
        %9928 = vmatprep.subr.bf16.mxu0 0
        %9929 = vmatpush2.bf16.xpose.msra.mxu0 0
        %9930 = vmatprep.subr.bf16.mxu0 0
        %9931 = vmatpush2.bf16.xpose.msra.mxu0 0
        %9932 = vmatprep.mubr.bf16.mxu0 %v2368
        %9933 = vmatmul.mubr.bf16.gmra.mxu0 %v2366
        %v9934 = vpop.f32.mrf.mxu0
        %v9935 = vadd.f32 %v9895, %v9934
        %v9936 = vpop.f32.mrf.mxu0
        %v9937 = vpop.f32.mrf.mxu0
        %v9938 = vpop.f32.mrf.mxu0
        %9939 = vdwg.mxu0
        %9940 = vmatprep.subr.bf16.mxu0 0
        %9941 = vmatpush1.bf16.xpose.msra.mxu0 0
        %9942 = vmatprep.subr.bf16.mxu0 0
        %9943 = vmatpush1.bf16.xpose.msra.mxu0 0
        %9944 = vmatprep.subr.bf16.mxu0 0
        %9945 = vmatpush1.bf16.xpose.msra.mxu0 0
        %9946 = vmatprep.subr.bf16.mxu0 0
        %9947 = vmatpush1.bf16.xpose.msra.mxu0 0
        %9948 = vmatprep.subr.bf16.mxu0 0
        %9949 = vmatpush1.bf16.xpose.msra.mxu0 0
        %9950 = vmatprep.subr.bf16.mxu0 0
        %9951 = vmatpush1.bf16.xpose.msra.mxu0 0
        %9952 = vmatprep.subr.bf16.mxu0 0
        %9953 = vmatpush1.bf16.xpose.msra.mxu0 0
        %9954 = vmatprep.subr.bf16.mxu0 %v3881
        %9955 = vmatpush1.bf16.xpose.msra.mxu0 %v3880
        %9956 = vmatprep.subr.bf16.mxu0 0
        %9957 = vmatpush2.bf16.xpose.msra.mxu0 0
        %9958 = vmatprep.subr.bf16.mxu0 0
        %9959 = vmatpush2.bf16.xpose.msra.mxu0 0
        %9960 = vmatprep.subr.bf16.mxu0 0
        %9961 = vmatpush2.bf16.xpose.msra.mxu0 0
        %9962 = vmatprep.subr.bf16.mxu0 0
        %9963 = vmatpush2.bf16.xpose.msra.mxu0 0
        %9964 = vmatprep.subr.bf16.mxu0 0
        %9965 = vmatpush2.bf16.xpose.msra.mxu0 0
        %9966 = vmatprep.subr.bf16.mxu0 0
        %9967 = vmatpush2.bf16.xpose.msra.mxu0 0
        %9968 = vmatprep.subr.bf16.mxu0 0
        %9969 = vmatpush2.bf16.xpose.msra.mxu0 0
        %9970 = vmatprep.subr.bf16.mxu0 0
        %9971 = vmatpush2.bf16.xpose.msra.mxu0 0
        %9972 = vmatprep.mubr.bf16.mxu0 %v2406
        %9973 = vmatmul.mubr.bf16.gmra.mxu0 %v2392
        %v9974 = vpop.f32.mrf.mxu0
        %v9975 = vadd.f32 %v9935, %v9974
        %v9976 = vpop.f32.mrf.mxu0
        %v9977 = vpop.f32.mrf.mxu0
        %v9978 = vpop.f32.mrf.mxu0
        %9979 = vdwg.mxu0
        %9980 = vmatprep.subr.bf16.mxu0 0
        %9981 = vmatpush1.bf16.xpose.msra.mxu0 0
        %9982 = vmatprep.subr.bf16.mxu0 0
        %9983 = vmatpush1.bf16.xpose.msra.mxu0 0
        %9984 = vmatprep.subr.bf16.mxu0 0
        %9985 = vmatpush1.bf16.xpose.msra.mxu0 0
        %9986 = vmatprep.subr.bf16.mxu0 0
        %9987 = vmatpush1.bf16.xpose.msra.mxu0 0
        %9988 = vmatprep.subr.bf16.mxu0 0
        %9989 = vmatpush1.bf16.xpose.msra.mxu0 0
        %9990 = vmatprep.subr.bf16.mxu0 0
        %9991 = vmatpush1.bf16.xpose.msra.mxu0 0
        %9992 = vmatprep.subr.bf16.mxu0 0
        %9993 = vmatpush1.bf16.xpose.msra.mxu0 0
        %9994 = vmatprep.subr.bf16.mxu0 %v3883
        %9995 = vmatpush1.bf16.xpose.msra.mxu0 %v3882
        %9996 = vmatprep.subr.bf16.mxu0 0
        %9997 = vmatpush2.bf16.xpose.msra.mxu0 0
        %9998 = vmatprep.subr.bf16.mxu0 0
        %9999 = vmatpush2.bf16.xpose.msra.mxu0 0
        %10000 = vmatprep.subr.bf16.mxu0 0
        %10001 = vmatpush2.bf16.xpose.msra.mxu0 0
        %10002 = vmatprep.subr.bf16.mxu0 0
        %10003 = vmatpush2.bf16.xpose.msra.mxu0 0
        %10004 = vmatprep.subr.bf16.mxu0 0
        %10005 = vmatpush2.bf16.xpose.msra.mxu0 0
        %10006 = vmatprep.subr.bf16.mxu0 0
        %10007 = vmatpush2.bf16.xpose.msra.mxu0 0
        %10008 = vmatprep.subr.bf16.mxu0 0
        %10009 = vmatpush2.bf16.xpose.msra.mxu0 0
        %10010 = vmatprep.subr.bf16.mxu0 0
        %10011 = vmatpush2.bf16.xpose.msra.mxu0 0
        %10012 = vmatprep.mubr.bf16.mxu0 %v2415
        %10013 = vmatmul.mubr.bf16.gmra.mxu0 %v2414
        %v10014 = vpop.f32.mrf.mxu0
        %v10015 = vadd.f32 %v9975, %v10014
        %v10016 = vpop.f32.mrf.mxu0
        %v10017 = vpop.f32.mrf.mxu0
        %v10018 = vpop.f32.mrf.mxu0
        %10019 = vdwg.mxu0
        %10020 = vmatprep.subr.bf16.mxu0 0
        %10021 = vmatpush1.bf16.xpose.msra.mxu0 0
        %10022 = vmatprep.subr.bf16.mxu0 0
        %10023 = vmatpush1.bf16.xpose.msra.mxu0 0
        %10024 = vmatprep.subr.bf16.mxu0 0
        %10025 = vmatpush1.bf16.xpose.msra.mxu0 0
        %10026 = vmatprep.subr.bf16.mxu0 0
        %10027 = vmatpush1.bf16.xpose.msra.mxu0 0
        %10028 = vmatprep.subr.bf16.mxu0 0
        %10029 = vmatpush1.bf16.xpose.msra.mxu0 0
        %10030 = vmatprep.subr.bf16.mxu0 0
        %10031 = vmatpush1.bf16.xpose.msra.mxu0 0
        %10032 = vmatprep.subr.bf16.mxu0 0
        %10033 = vmatpush1.bf16.xpose.msra.mxu0 0
        %10034 = vmatprep.subr.bf16.mxu0 %v3885
        %10035 = vmatpush1.bf16.xpose.msra.mxu0 %v3884
        %10036 = vmatprep.subr.bf16.mxu0 0
        %10037 = vmatpush2.bf16.xpose.msra.mxu0 0
        %10038 = vmatprep.subr.bf16.mxu0 0
        %10039 = vmatpush2.bf16.xpose.msra.mxu0 0
        %10040 = vmatprep.subr.bf16.mxu0 0
        %10041 = vmatpush2.bf16.xpose.msra.mxu0 0
        %10042 = vmatprep.subr.bf16.mxu0 0
        %10043 = vmatpush2.bf16.xpose.msra.mxu0 0
        %10044 = vmatprep.subr.bf16.mxu0 0
        %10045 = vmatpush2.bf16.xpose.msra.mxu0 0
        %10046 = vmatprep.subr.bf16.mxu0 0
        %10047 = vmatpush2.bf16.xpose.msra.mxu0 0
        %10048 = vmatprep.subr.bf16.mxu0 0
        %10049 = vmatpush2.bf16.xpose.msra.mxu0 0
        %10050 = vmatprep.subr.bf16.mxu0 0
        %10051 = vmatpush2.bf16.xpose.msra.mxu0 0
        %10052 = vmatprep.mubr.bf16.mxu0 %v2413
        %10053 = vmatmul.mubr.bf16.gmra.mxu0 %v2399
        %v10054 = vpop.f32.mrf.mxu0
        %v10055 = vadd.f32 %v10015, %v10054
        %v10056 = vpop.f32.mrf.mxu0
        %v10057 = vpop.f32.mrf.mxu0
        %v10058 = vpop.f32.mrf.mxu0
        %10059 = vdwg.mxu0
        %v10060 = vadd.f32 %v236, %v10055
        %vm10061 = vcmask 123904
        %10062 = vst.msk [vmem:[#allocation8] sm:$0x3] %vm10061, %v10060
        %p10063 = scmp.eq.s32.totalorder %s21, 3
        // Predicated region
        $region49: #{_predictor_core.1} parent=31 // pred_check
          %p10064 = pneg %p10063
        $region50: #{_predictor_core.1} parent=31 // pred_check_branch
          %10066 = sbr.rel (%p10064) target = $region52
        $region51: #{_predictor_core.1} parent=31 // pred_region
          %v10067 = vld [vmem:[#allocation8] sm:$0x3]
          %v10068 = vld [vmem:[#allocation7] sm:$0x1]
          %v10070 = vlaneseq
          %v10071 = vshrl.u32 %v10070, 7
          %v10072 = vsub.s32 0, %v10071
          %v10073 = vrot.slane %v10068, %v10072
          %v10075 = vadd.f32 %v10067, %v10073
          %v10076 = vsel %vm10061, %v10075, -inf
          %10077 = vmax.xlane.f32.xlu0 %v10076
          %v10078 = vpop.xlane.xlu0 %10077
          %v10079 = vsub.f32 %v10075, %v10078
          %v10080 = vmul.f32 %v10079, 1.442695
          %v10081 = vpow.pop %v10080
          %v10082 = vsel %vm10061, %v10081, 0.0
          %10083 = vadd.xlane.f32.xlu0 %v10082
          %v10084 = vpop.xlane.xlu0 %10083
          %v10085 = vrcp.pop %v10084
          %v10086 = vmul.f32 %v10081, %v10085
          %10087 = vst.msk [vmem:[#allocation8] sm:$0x3] %vm10061, %v10086
        $region52: #{_predictor_core.1} parent=31 // pred_fallthru
          _
        // Predicated region
        $region53: #{_predictor_core.1} parent=31 // pred_check
          %p10088 = pneg %p107
        $region54: #{_predictor_core.1} parent=31 // pred_check_branch
          %10090 = sbr.rel (%p10088) target = $region56
        $region55: #{_predictor_core.1} parent=31 // pred_region
          %s10092 = ssub.s32 32, 32
          %10093 = vsyncadd [#allocation4], %s10092
          %s10095 = sshll.u32 [#allocation8], 4
          %s10096 = int_to_ptr.vmem [resolvable:$true] %s10095
          %10098 = dma.vmem_to_hbm [thread:$0]  %s10096, 32, %s3, [#allocation4]
        $region56: #{_predictor_core.1} parent=31 // pred_fallthru
          _
        // Predicated region
        $region57: #{_predictor_core.1} parent=31 // pred_check
          %p10099 = pneg %p107
        $region58: #{_predictor_core.1} parent=31 // pred_check_branch
          %10101 = sbr.rel (%p10099) target = $region60
        $region59: #{_predictor_core.1} parent=31 // pred_region
          %10102 = dma.done [#allocation4], 32
        $region60: #{_predictor_core.1} parent=31 // pred_fallthru
          _
      $region32: #{_predictor_core.1} parent=5 // pred_fallthru
        _
      %p10103 = scmp.le.s32.totalorder 2, %s16
      // Predicated region
      $region61: #{_predictor_core.1} parent=5 // pred_check
        %p10104 = pneg %p10103
      $region62: #{_predictor_core.1} parent=5 // pred_check_branch
        %10106 = sbr.rel (%p10104) target = $region64
      $region63: #{_predictor_core.1} parent=5 // pred_region
        %s10107 = ssub.s32 %s16, 2
      $region64: #{_predictor_core.1} parent=5 // pred_fallthru
        _
    $region6: #{_predictor_core.1} parent=1 // loop_footer
      %s20 = sadd.s32 1, %s16
    $region7: #{_predictor_core.1} parent=1 // loop_footer_branch
      %15 = sbr.rel target = $region3
    $region8: #{_predictor_core.1} parent=1 // loop_exit
      _
    %10108 = vsyncpa [#allocation3], 1
    %s10109 = scalar_lea.sflag [#allocation3], 1
    %10110 = vsyncpa %s10109, 1
    %10111 = vsyncpa [#allocation6], 1
    %s10112 = scalar_lea.sflag [#allocation6], 1
    %10113 = vsyncpa %s10112, 1
    %10114 = vsyncpa [#allocation4], 1
    %s10115 = scalar_lea.sflag [#allocation4], 1
    %10116 = vsyncpa %s10115, 1

</llo_original>
